<compile_context>
chip_gen: v6e
topology: v6e:2x2x1
jax: 0.10.0
libtpu: 0.0.40
codegen_flags: <defaults>
</compile_context>

<pallas_src>
import math

import jax
import jax.numpy as jnp
from jax.experimental import pallas as pl
from jax.experimental.pallas import tpu as pltpu

# ----------------------------- config (small, lane-dense) --------------------
B = 2              # batch (num captions) — raise for real runs (weight-BW bound)
S = 8              # model_max_length (77 in real SDXL -> pad to a multiple of 8)
VOCAB = 64
D1, H1 = 128, 4    # text_encoder_one hidden / heads (768/12 in real SDXL)
D2, H2 = 256, 8    # text_encoder_two hidden / heads (1280/20 in real SDXL)
P2 = 128           # text_encoder_two projection_dim
N_LAYERS = 2
MLP_RATIO = 4
LN_EPS = 1e-5

PARAM_DTYPE = jnp.bfloat16   # storage dtype for weights / embeddings / penult out

_STACKED_ORDER = ("ln1_w", "ln1_b", "wqkv", "bqkv", "wo", "bo",
                  "ln2_w", "ln2_b", "w1", "b1", "w2", "b2")


# ----------------------------- in-kernel helpers ------------------------------
def _layer_norm(v, w, b):
    """f32 LayerNorm over the last axis; w/b may be bf16 (cast up)."""
    mu = jnp.mean(v, axis=-1, keepdims=True)
    var = jnp.mean(jnp.square(v - mu), axis=-1, keepdims=True)
    return (v - mu) * jax.lax.rsqrt(var + LN_EPS) * w.astype(jnp.float32) + b.astype(jnp.float32)


def _attention(qkv, d, num_heads, b_sz, s_len, cdt):
    """Causal MHA with a single (H*B)-batched scores einsum and a single p·v einsum.

    qkv: (B*S, 3D) f32 (already bias-added).  Head blocks are extracted with lane
    slices and stacked along the LEADING axis (cheap), so the MXU sees exactly two
    batched matmuls instead of 2*H tiny ones, and softmax runs once over (H*B,S,S).
    """
    dh = d // num_heads
    scale = dh ** -0.5

    qi = jax.lax.broadcasted_iota(jnp.int32, (s_len, s_len), 0)
    ki = jax.lax.broadcasted_iota(jnp.int32, (s_len, s_len), 1)
    causal = (ki <= qi)[None, :, :]                       # (1, S, S) broadcasts over H*B

    qs, ks, vs = [], [], []
    for h in range(num_heads):                            # data movement only (no matmuls)
        lo = h * dh
        qs.append(qkv[:, lo:lo + dh].reshape(b_sz, s_len, dh))
        ks.append(qkv[:, d + lo:d + lo + dh].reshape(b_sz, s_len, dh))
        vs.append(qkv[:, 2 * d + lo:2 * d + lo + dh].reshape(b_sz, s_len, dh))
    qh = jnp.concatenate(qs, axis=0).astype(cdt)          # (H*B, S, dh), head-major
    kh = jnp.concatenate(ks, axis=0).astype(cdt)
    vh = jnp.concatenate(vs, axis=0).astype(cdt)

    s = jnp.einsum('nqd,nkd->nqk', qh, kh,
                   preferred_element_type=jnp.float32) * scale   # one batched MXU op
    s = jnp.where(causal, s, -1e30)                        # f32 scores -> safe mask const
    m = jnp.max(s, axis=-1, keepdims=True)
    e = jnp.exp(s - m)
    p = e * pl.reciprocal(jnp.sum(e, axis=-1, keepdims=True), approx=True)
    o = jnp.einsum('nqk,nkd->nqd', p.astype(cdt), vh,
                   preferred_element_type=jnp.float32)     # one batched MXU op

    outs = [o[h * b_sz:(h + 1) * b_sz].reshape(b_sz * s_len, dh)
            for h in range(num_heads)]
    return jnp.concatenate(outs, axis=-1)                  # (B*S, D)


def _clip_layer_step(x, ln1_w, ln1_b, wqkv, bqkv, wo, bo,
                     ln2_w, ln2_b, w1, b1, w2, b2, *, num_heads):
    """One pre-LN CLIP block applied to the full (B, S, D) f32 residual stream."""
    b_sz, s_len, d = x.shape
    cdt = wqkv.dtype                         # bf16 compute dtype for MXU operands
    x2 = x.reshape(b_sz * s_len, d)          # lane-dense 2-D activation

    # ---- self-attention (pre-LN, causal), fused QKV ----
    h = _layer_norm(x2, ln1_w, ln1_b).astype(cdt)
    qkv = jnp.dot(h, wqkv, preferred_element_type=jnp.float32) + bqkv.astype(jnp.float32)
    attn = _attention(qkv, d, num_heads, b_sz, s_len, cdt).astype(cdt)
    attn = jnp.dot(attn, wo, preferred_element_type=jnp.float32) + bo.astype(jnp.float32)
    x2 = x2 + attn

    # ---- MLP (quick_gelu) ----
    # NOTE(v7x): at real SDXL D=1280 the double-buffered w1/w2 blocks dominate VMEM;
    # tile their output columns (~1024-wide) via an extra grid axis so 2-deep
    # buffering fits the 64 MiB budget instead of single-buffering (DMA-exposed).
    h2 = _layer_norm(x2, ln2_w, ln2_b).astype(cdt)
    m1 = jnp.dot(h2, w1, preferred_element_type=jnp.float32) + b1.astype(jnp.float32)
    m1 = m1 * jax.nn.sigmoid(1.702 * m1)     # CLIP quick_gelu (EUP)
    m2 = jnp.dot(m1.astype(cdt), w2, preferred_element_type=jnp.float32) + b2.astype(jnp.float32)
    x2 = x2 + m2
    return x2.reshape(b_sz, s_len, d)


def _vmem_limit_bytes(weights, b_sz, s_len, d):
    """Explicit scoped-VMEM budget (review item): 2x (double-buffered) per-layer
    stacked-weight blocks + resident f32 activation + f32 layer temporaries
    (qkv / MLP hidden / scores) + headroom.  Clamped to [32 MiB, 100 MiB]; on v7x
    (64 MiB physical) pair this with weight-column tiling at real SDXL sizes."""
    per_layer_w = sum(math.prod(w.shape[1:]) * w.dtype.itemsize for w in weights)
    rows = b_sz * s_len
    act = rows * d * 4                                   # resident activation scratch
    tmp = rows * (3 * d + MLP_RATIO * d) * 4             # qkv + MLP-hidden f32 temporaries
    est = 2 * per_layer_w + 2 * act + tmp + (8 << 20)
    return int(min(max(est, 32 << 20), 100 << 20))


# ------------------- fused encoder: all layers in one pallas_call -------------
def clip_encoder_forward(x_emb, stacked, num_heads, *,
                         final_ln_w=None, final_ln_b=None,
                         text_proj=None, eos_pos=None):
    """Runs the transformer stack; returns hidden_states[-2] (bf16) and, if the
    projection weights are supplied, the projected pooled output (f32)."""
    b_sz, s_len, d = x_emb.shape
    n_layers = stacked["wqkv"].shape[0]
    assert n_layers >= 2
    with_pooled = text_proj is not None
    weights = [stacked[k] for k in _STACKED_ORDER]
    n_w = len(weights)

    def kernel(*refs):
        refs = list(refs)
        if with_pooled:
            eos_ref = refs.pop(0)                    # SMEM scalar-prefetch (B,) int32
        x_ref = refs[0]
        w_refs = refs[1:1 + n_w]
        pos = 1 + n_w
        if with_pooled:
            flnw_ref, flnb_ref, proj_ref = refs[pos:pos + 3]
            pos += 3
        penult_ref = refs[pos]; pos += 1
        if with_pooled:
            pooled_ref = refs[pos]; pos += 1
        x_scr = refs[pos]                            # f32 (B,S,D) resident activation

        l = pl.program_id(0)

        @pl.when(l == 0)
        def _():
            x_scr[...] = x_ref[...].astype(jnp.float32)

        layer_w = [wr[0] for wr in w_refs]           # drop stacked layer dim
        x_new = _clip_layer_step(x_scr[...], *layer_w, num_heads=num_heads)
        x_scr[...] = x_new

        # hidden_states[-2]: activation after layer index n_layers-2 (bf16 writeback)
        @pl.when(l == n_layers - 2)
        def _():
            penult_ref[...] = x_new.astype(penult_ref.dtype)

        if with_pooled:
            # Fused epilogue on the last layer: EOS gather + final LN + projection.
            @pl.when(l == n_layers - 1)
            def _():
                row_ids = jax.lax.broadcasted_iota(jnp.int32, (s_len, 1), 0)
                rows = []
                for bb in range(b_sz):
                    sel = (row_ids == eos_ref[bb]).astype(jnp.float32)      # (S,1)
                    rows.append(jnp.sum(x_new[bb] * sel, axis=0, keepdims=True))
                pooled_pre = jnp.concatenate(rows, axis=0)                  # (B, D)
                xn = _layer_norm(pooled_pre, flnw_ref[...], flnb_ref[...])
                pooled_ref[...] = jnp.dot(xn.astype(proj_ref.dtype), proj_ref[...],
                                          preferred_element_type=jnp.float32)

    # --------- specs ---------
    def _full3(i, *_):
        return (0, 0, 0)

    def _full2(i, *_):
        return (0, 0)

    def _wspec(arr):
        block = (1,) + arr.shape[1:]
        zeros = (0,) * (arr.ndim - 1)

        def imap(i, *_):
            return (i,) + zeros
        return pl.BlockSpec(block, imap)

    in_specs = [pl.BlockSpec(x_emb.shape, _full3)]       # grid-invariant activation input
    in_specs += [_wspec(w) for w in weights]             # per-layer stacked weights
    operands = [x_emb, *weights]
    if with_pooled:
        in_specs += [pl.BlockSpec(final_ln_w.shape, _full2),
                     pl.BlockSpec(final_ln_b.shape, _full2),
                     pl.BlockSpec(text_proj.shape, _full2)]
        operands += [final_ln_w, final_ln_b, text_proj]

    out_specs = [pl.BlockSpec((b_sz, s_len, d), _full3)]
    out_shapes = [jax.ShapeDtypeStruct((b_sz, s_len, d), PARAM_DTYPE)]   # bf16 penult
    if with_pooled:
        p_dim = text_proj.shape[1]
        out_specs.append(pl.BlockSpec((b_sz, p_dim), _full2))
        out_shapes.append(jax.ShapeDtypeStruct((b_sz, p_dim), jnp.float32))

    # Encoder one never needs the last layer's output -> skip it entirely.
    grid = (n_layers,) if with_pooled else (n_layers - 1,)

    grid_spec = pltpu.PrefetchScalarGridSpec(
        num_scalar_prefetch=1 if with_pooled else 0,
        grid=grid,
        in_specs=in_specs,
        out_specs=out_specs,
        scratch_shapes=[pltpu.VMEM((b_sz, s_len, d), jnp.float32)],
    )
    call = pl.pallas_call(
        kernel,
        grid_spec=grid_spec,
        out_shape=out_shapes,
        # Layer axis is sequential (activation carried in VMEM scratch).  Scoped
        # VMEM is budgeted explicitly so the per-layer weight stream stays
        # double-buffered at real sizes (defaults: 16 MiB v5e / 32 MiB v6e,v7x).
        compiler_params=pltpu.CompilerParams(
            dimension_semantics=("arbitrary",),
            vmem_limit_bytes=_vmem_limit_bytes(weights, b_sz, s_len, d),
        ),
    )

    if with_pooled:
        penult, pooled = call(eos_pos, *operands)
        return penult, pooled
    res = call(*operands)
    return res[0] if isinstance(res, (list, tuple)) else res


# ----------------------------- parameter init --------------------------------
def init_layer_params(key, d):
    ks = jax.random.split(key, 4)
    s = 0.02
    dm = d * MLP_RATIO
    dt = PARAM_DTYPE

    def rnd(k, shape):
        return (jax.random.normal(k, shape, jnp.float32) * s).astype(dt)

    return {
        "ln1_w": jnp.ones((1, d), dt), "ln1_b": jnp.zeros((1, d), dt),
        "wqkv": rnd(ks[0], (d, 3 * d)), "bqkv": jnp.zeros((1, 3 * d), dt),
        "wo": rnd(ks[1], (d, d)), "bo": jnp.zeros((1, d), dt),
        "ln2_w": jnp.ones((1, d), dt), "ln2_b": jnp.zeros((1, d), dt),
        "w1": rnd(ks[2], (d, dm)), "b1": jnp.zeros((1, dm), dt),
        "w2": rnd(ks[3], (dm, d)), "b2": jnp.zeros((1, d), dt),
    }


def init_encoder(key, d, *, with_projection, proj_dim=None):
    ks = jax.random.split(key, N_LAYERS + 3)
    layers = [init_layer_params(ks[2 + i], d) for i in range(N_LAYERS)]
    stacked = {k: jnp.stack([lp[k] for lp in layers], axis=0) for k in _STACKED_ORDER}
    params = {
        "tok_emb": (jax.random.normal(ks[0], (VOCAB, d), jnp.float32) * 0.02).astype(PARAM_DTYPE),
        "pos_emb": (jax.random.normal(ks[1], (S, d), jnp.float32) * 0.02).astype(PARAM_DTYPE),
        "stacked": stacked,
    }
    if with_projection:
        params["final_ln_w"] = jnp.ones((1, d), PARAM_DTYPE)
        params["final_ln_b"] = jnp.zeros((1, d), PARAM_DTYPE)
        params["text_proj"] = (jax.random.normal(ks[-1], (d, proj_dim), jnp.float32)
                               * 0.02).astype(PARAM_DTYPE)
    return params


# ------------------------------- forward pass --------------------------------
def embed(ids, params):
    # Embedding gather + positional add: plain-JAX glue (gather has no clean tile form here).
    return jnp.take(params["tok_emb"], ids, axis=0) + params["pos_emb"][None, :, :]


@jax.jit
def xl_text_encoder_forward(ids1, ids2, params_one, params_two):
    x1 = embed(ids1, params_one)
    x2 = embed(ids2, params_two)

    penult1 = clip_encoder_forward(x1, params_one["stacked"], H1)

    # CLIP pooled-output convention: EOS token has the highest id.
    # TODO(synk): HF's newer CLIP uses (ids == eos_token_id).argmax; swap if needed.
    eos_pos = jnp.argmax(ids2, axis=-1).astype(jnp.int32)
    penult2, pooled = clip_encoder_forward(
        x2, params_two["stacked"], H2,
        final_ln_w=params_two["final_ln_w"],
        final_ln_b=params_two["final_ln_b"],
        text_proj=params_two["text_proj"],
        eos_pos=eos_pos)

    # prompt_embeds = concat(hidden_states1[-2], hidden_states2[-2], dim=-1)
    prompt_embeds = jnp.concatenate([penult1, penult2], axis=-1)
    return prompt_embeds, pooled


# ------------------------------------ main ------------------------------------
if __name__ == "__main__":
    root = jax.random.PRNGKey(0)
    k_ids1, k_ids2, k_enc1, k_enc2 = jax.random.split(root, 4)

    # synthetic "tokenized captions" (EOS = highest id at last position)
    ids1 = jax.random.randint(k_ids1, (B, S), 1, VOCAB - 1, dtype=jnp.int32)
    ids2 = jax.random.randint(k_ids2, (B, S), 1, VOCAB - 1, dtype=jnp.int32)
    ids1 = ids1.at[:, -1].set(VOCAB - 1)
    ids2 = ids2.at[:, -1].set(VOCAB - 1)

    params_one = init_encoder(k_enc1, D1, with_projection=False)
    params_two = init_encoder(k_enc2, D2, with_projection=True, proj_dim=P2)

    prompt_embeds, pooled = xl_text_encoder_forward(ids1, ids2, params_one, params_two)
    jax.block_until_ready((prompt_embeds, pooled))

    assert prompt_embeds.shape == (B, S, D1 + D2), prompt_embeds.shape
    assert pooled.shape == (B, P2), pooled.shape
    assert bool(jnp.all(jnp.isfinite(prompt_embeds.astype(jnp.float32))))
    assert bool(jnp.all(jnp.isfinite(pooled)))
    print("KERNEL_OK")
</pallas_src>

<mosaic_0001>
module attributes {stable_mosaic.version = 11 : i64} {
  func.func @kernel(%arg0: i32, %arg1: memref<2xi32, #tpu.memory_space<smem>>, %arg2: memref<2x8x256xbf16, #tpu.memory_space<vmem>>, %arg3: memref<1x1x256xbf16, #tpu.memory_space<vmem>>, %arg4: memref<1x1x256xbf16, #tpu.memory_space<vmem>>, %arg5: memref<1x256x768xbf16, #tpu.memory_space<vmem>>, %arg6: memref<1x1x768xbf16, #tpu.memory_space<vmem>>, %arg7: memref<1x256x256xbf16, #tpu.memory_space<vmem>>, %arg8: memref<1x1x256xbf16, #tpu.memory_space<vmem>>, %arg9: memref<1x1x256xbf16, #tpu.memory_space<vmem>>, %arg10: memref<1x1x256xbf16, #tpu.memory_space<vmem>>, %arg11: memref<1x256x1024xbf16, #tpu.memory_space<vmem>>, %arg12: memref<1x1x1024xbf16, #tpu.memory_space<vmem>>, %arg13: memref<1x1024x256xbf16, #tpu.memory_space<vmem>>, %arg14: memref<1x1x256xbf16, #tpu.memory_space<vmem>>, %arg15: memref<1x256xbf16, #tpu.memory_space<vmem>>, %arg16: memref<1x256xbf16, #tpu.memory_space<vmem>>, %arg17: memref<256x128xbf16, #tpu.memory_space<vmem>>, %arg18: memref<2x8x256xbf16, #tpu.memory_space<vmem>>, %arg19: memref<2x128xf32, #tpu.memory_space<vmem>>, %arg20: memref<2x8x256xf32, #tpu.memory_space<vmem>>) attributes {dimension_semantics = [#tpu.dimension_semantics<arbitrary>], iteration_bounds = array<i64: 2>, scalar_prefetch = 1 : i64, scratch_operands = 1 : i64, tpu.core_type = #tpu.core_type<tc>, window_params = [{pipeline_mode = #tpu.pipeline_mode<synchronous>, transform_indices = @transform_0, window_bounds = array<i64: 2, 8, 256>}, {transform_indices = @transform_1, window_bounds = array<i64: 1, 1, 256>}, {transform_indices = @transform_2, window_bounds = array<i64: 1, 1, 256>}, {transform_indices = @transform_3, window_bounds = array<i64: 1, 256, 768>}, {transform_indices = @transform_4, window_bounds = array<i64: 1, 1, 768>}, {transform_indices = @transform_5, window_bounds = array<i64: 1, 256, 256>}, {transform_indices = @transform_6, window_bounds = array<i64: 1, 1, 256>}, {transform_indices = @transform_7, window_bounds = array<i64: 1, 1, 256>}, {transform_indices = @transform_8, window_bounds = array<i64: 1, 1, 256>}, {transform_indices = @transform_9, window_bounds = array<i64: 1, 256, 1024>}, {transform_indices = @transform_10, window_bounds = array<i64: 1, 1, 1024>}, {transform_indices = @transform_11, window_bounds = array<i64: 1, 1024, 256>}, {transform_indices = @transform_12, window_bounds = array<i64: 1, 1, 256>}, {pipeline_mode = #tpu.pipeline_mode<synchronous>, transform_indices = @transform_13, window_bounds = array<i64: 1, 256>}, {pipeline_mode = #tpu.pipeline_mode<synchronous>, transform_indices = @transform_14, window_bounds = array<i64: 1, 256>}, {pipeline_mode = #tpu.pipeline_mode<synchronous>, transform_indices = @transform_15, window_bounds = array<i64: 256, 128>}, {pipeline_mode = #tpu.pipeline_mode<synchronous>, transform_indices = @transform_16, window_bounds = array<i64: 2, 8, 256>}, {pipeline_mode = #tpu.pipeline_mode<synchronous>, transform_indices = @transform_17, window_bounds = array<i64: 2, 128>}]} {
    %c0_i32 = arith.constant 0 : i32
    %0 = arith.cmpi eq, %arg0, %c0_i32 : i32
    %1 = arith.extui %0 : i1 to i32
    %c0_i32_0 = arith.constant 0 : i32
    %2 = arith.cmpi ne, %1, %c0_i32_0 : i32
    scf.if %2 {
      %c0_66 = arith.constant 0 : index
      %c0_67 = arith.constant 0 : index
      %c0_68 = arith.constant 0 : index
      %209 = vector.load %arg2[%c0_66, %c0_67, %c0_68] : memref<2x8x256xbf16, #tpu.memory_space<vmem>>, vector<2x8x256xbf16>
      %210 = arith.extf %209 : vector<2x8x256xbf16> to vector<2x8x256xf32>
      %c0_69 = arith.constant 0 : index
      %c0_70 = arith.constant 0 : index
      %c0_71 = arith.constant 0 : index
      %211 = vector.load %arg20[%c0_69, %c0_70, %c0_71] : memref<2x8x256xf32, #tpu.memory_space<vmem>>, vector<2x8x256xf32>
      tpu.vector_store %arg20[%c0_69, %c0_70, %c0_71], %210 {strides = array<i32>} : memref<2x8x256xf32, #tpu.memory_space<vmem>>, vector<2x8x256xf32>,
    } else {
    }
    %c0 = arith.constant 0 : index
    %c0_1 = arith.constant 0 : index
    %c0_2 = arith.constant 0 : index
    %3 = vector.load %arg3[%c0, %c0_1, %c0_2] : memref<1x1x256xbf16, #tpu.memory_space<vmem>>, vector<1x1x256xbf16>
    %4 = vector.shape_cast %3 : vector<1x1x256xbf16> to vector<1x256xbf16>
    %c0_3 = arith.constant 0 : index
    %c0_4 = arith.constant 0 : index
    %c0_5 = arith.constant 0 : index
    %5 = vector.load %arg4[%c0_3, %c0_4, %c0_5] : memref<1x1x256xbf16, #tpu.memory_space<vmem>>, vector<1x1x256xbf16>
    %6 = vector.shape_cast %5 : vector<1x1x256xbf16> to vector<1x256xbf16>
    %c0_6 = arith.constant 0 : index
    %c0_7 = arith.constant 0 : index
    %c0_8 = arith.constant 0 : index
    %7 = vector.load %arg5[%c0_6, %c0_7, %c0_8] : memref<1x256x768xbf16, #tpu.memory_space<vmem>>, vector<1x256x768xbf16>
    %8 = vector.shape_cast %7 : vector<1x256x768xbf16> to vector<256x768xbf16>
    %c0_9 = arith.constant 0 : index
    %c0_10 = arith.constant 0 : index
    %c0_11 = arith.constant 0 : index
    %9 = vector.load %arg6[%c0_9, %c0_10, %c0_11] : memref<1x1x768xbf16, #tpu.memory_space<vmem>>, vector<1x1x768xbf16>
    %10 = vector.shape_cast %9 : vector<1x1x768xbf16> to vector<1x768xbf16>
    %c0_12 = arith.constant 0 : index
    %c0_13 = arith.constant 0 : index
    %c0_14 = arith.constant 0 : index
    %11 = vector.load %arg7[%c0_12, %c0_13, %c0_14] : memref<1x256x256xbf16, #tpu.memory_space<vmem>>, vector<1x256x256xbf16>
    %12 = vector.shape_cast %11 : vector<1x256x256xbf16> to vector<256x256xbf16>
    %c0_15 = arith.constant 0 : index
    %c0_16 = arith.constant 0 : index
    %c0_17 = arith.constant 0 : index
    %13 = vector.load %arg8[%c0_15, %c0_16, %c0_17] : memref<1x1x256xbf16, #tpu.memory_space<vmem>>, vector<1x1x256xbf16>
    %14 = vector.shape_cast %13 : vector<1x1x256xbf16> to vector<1x256xbf16>
    %c0_18 = arith.constant 0 : index
    %c0_19 = arith.constant 0 : index
    %c0_20 = arith.constant 0 : index
    %15 = vector.load %arg9[%c0_18, %c0_19, %c0_20] : memref<1x1x256xbf16, #tpu.memory_space<vmem>>, vector<1x1x256xbf16>
    %16 = vector.shape_cast %15 : vector<1x1x256xbf16> to vector<1x256xbf16>
    %c0_21 = arith.constant 0 : index
    %c0_22 = arith.constant 0 : index
    %c0_23 = arith.constant 0 : index
    %17 = vector.load %arg10[%c0_21, %c0_22, %c0_23] : memref<1x1x256xbf16, #tpu.memory_space<vmem>>, vector<1x1x256xbf16>
    %18 = vector.shape_cast %17 : vector<1x1x256xbf16> to vector<1x256xbf16>
    %c0_24 = arith.constant 0 : index
    %c0_25 = arith.constant 0 : index
    %c0_26 = arith.constant 0 : index
    %19 = vector.load %arg11[%c0_24, %c0_25, %c0_26] : memref<1x256x1024xbf16, #tpu.memory_space<vmem>>, vector<1x256x1024xbf16>
    %20 = vector.shape_cast %19 : vector<1x256x1024xbf16> to vector<256x1024xbf16>
    %c0_27 = arith.constant 0 : index
    %c0_28 = arith.constant 0 : index
    %c0_29 = arith.constant 0 : index
    %21 = vector.load %arg12[%c0_27, %c0_28, %c0_29] : memref<1x1x1024xbf16, #tpu.memory_space<vmem>>, vector<1x1x1024xbf16>
    %22 = vector.shape_cast %21 : vector<1x1x1024xbf16> to vector<1x1024xbf16>
    %c0_30 = arith.constant 0 : index
    %c0_31 = arith.constant 0 : index
    %c0_32 = arith.constant 0 : index
    %23 = vector.load %arg13[%c0_30, %c0_31, %c0_32] : memref<1x1024x256xbf16, #tpu.memory_space<vmem>>, vector<1x1024x256xbf16>
    %24 = vector.shape_cast %23 : vector<1x1024x256xbf16> to vector<1024x256xbf16>
    %c0_33 = arith.constant 0 : index
    %c0_34 = arith.constant 0 : index
    %c0_35 = arith.constant 0 : index
    %25 = vector.load %arg14[%c0_33, %c0_34, %c0_35] : memref<1x1x256xbf16, #tpu.memory_space<vmem>>, vector<1x1x256xbf16>
    %26 = vector.shape_cast %25 : vector<1x1x256xbf16> to vector<1x256xbf16>
    %c0_36 = arith.constant 0 : index
    %c0_37 = arith.constant 0 : index
    %c0_38 = arith.constant 0 : index
    %27 = vector.load %arg20[%c0_36, %c0_37, %c0_38] : memref<2x8x256xf32, #tpu.memory_space<vmem>>, vector<2x8x256xf32>
    %28 = vector.shape_cast %27 : vector<2x8x256xf32> to vector<16x256xf32>
    %cst = arith.constant dense<0.000000e+00> : vector<16xf32>
    %29 = vector.multi_reduction <add>, %28, %cst [1] : vector<16x256xf32> to vector<16xf32>
    %30 = vector.shape_cast %29 : vector<16xf32> to vector<16x1xf32>
    %cst_39 = arith.constant 2.560000e+02 : f32
    %31 = vector.broadcast %cst_39 : f32 to vector<16x1xf32>
    %32 = arith.divf %30, %31 : vector<16x1xf32>
    %33 = vector.broadcast %32 : vector<16x1xf32> to vector<16x256xf32>
    %34 = arith.subf %28, %33 : vector<16x256xf32>
    %35 = arith.mulf %34, %34 : vector<16x256xf32>
    %cst_40 = arith.constant dense<0.000000e+00> : vector<16xf32>
    %36 = vector.multi_reduction <add>, %35, %cst_40 [1] : vector<16x256xf32> to vector<16xf32>
    %37 = vector.shape_cast %36 : vector<16xf32> to vector<16x1xf32>
    %cst_41 = arith.constant 2.560000e+02 : f32
    %38 = vector.broadcast %cst_41 : f32 to vector<16x1xf32>
    %39 = arith.divf %37, %38 : vector<16x1xf32>
    %40 = vector.broadcast %32 : vector<16x1xf32> to vector<16x256xf32>
    %41 = arith.subf %28, %40 : vector<16x256xf32>
    %cst_42 = arith.constant 9.99999974E-6 : f32
    %42 = vector.broadcast %cst_42 : f32 to vector<16x1xf32>
    %43 = arith.addf %39, %42 : vector<16x1xf32>
    %44 = math.rsqrt %43 : vector<16x1xf32>
    %45 = vector.broadcast %44 : vector<16x1xf32> to vector<16x256xf32>
    %46 = arith.mulf %41, %45 : vector<16x256xf32>
    %47 = arith.extf %4 : vector<1x256xbf16> to vector<1x256xf32>
    %48 = vector.broadcast %47 : vector<1x256xf32> to vector<16x256xf32>
    %49 = arith.mulf %46, %48 : vector<16x256xf32>
    %50 = arith.extf %6 : vector<1x256xbf16> to vector<1x256xf32>
    %51 = vector.broadcast %50 : vector<1x256xf32> to vector<16x256xf32>
    %52 = arith.addf %49, %51 : vector<16x256xf32>
    %53 = arith.truncf %52 : vector<16x256xf32> to vector<16x256xbf16>
    %cst_43 = arith.constant dense<0.000000e+00> : vector<16x768xf32>
    %54 = tpu.matmul %53, %8, %cst_43 {dimension_numbers = #tpu.dot_dimension_numbers<[1], [0], [0], [1], [0, 0, 1, 1], [], []>} : vector<16x256xbf16>, vector<256x768xbf16>, vector<16x768xf32> -> vector<16x768xf32>
    %55 = arith.extf %10 : vector<1x768xbf16> to vector<1x768xf32>
    %56 = vector.broadcast %55 : vector<1x768xf32> to vector<16x768xf32>
    %57 = arith.addf %54, %56 : vector<16x768xf32>
    %58 = tpu.iota {dimensions = array<i32: 0>} : vector<8x8xi32>
    %59 = tpu.iota {dimensions = array<i32: 1>} : vector<8x8xi32>
    %60 = arith.cmpi sle, %59, %58 : vector<8x8xi32>
    %61 = vector.shape_cast %60 : vector<8x8xi1> to vector<1x8x8xi1>
    %62 = vector.extract_strided_slice %57 {offsets = [0, 0], sizes = [16, 32], strides = [1, 1]} : vector<16x768xf32> to vector<16x32xf32>
    %63 = vector.shape_cast %62 : vector<16x32xf32> to vector<2x8x32xf32>
    %64 = vector.extract_strided_slice %57 {offsets = [0, 256], sizes = [16, 32], strides = [1, 1]} : vector<16x768xf32> to vector<16x32xf32>
    %65 = vector.shape_cast %64 : vector<16x32xf32> to vector<2x8x32xf32>
    %66 = vector.extract_strided_slice %57 {offsets = [0, 512], sizes = [16, 32], strides = [1, 1]} : vector<16x768xf32> to vector<16x32xf32>
    %67 = vector.shape_cast %66 : vector<16x32xf32> to vector<2x8x32xf32>
    %68 = vector.extract_strided_slice %57 {offsets = [0, 32], sizes = [16, 32], strides = [1, 1]} : vector<16x768xf32> to vector<16x32xf32>
    %69 = vector.shape_cast %68 : vector<16x32xf32> to vector<2x8x32xf32>
    %70 = vector.extract_strided_slice %57 {offsets = [0, 288], sizes = [16, 32], strides = [1, 1]} : vector<16x768xf32> to vector<16x32xf32>
    %71 = vector.shape_cast %70 : vector<16x32xf32> to vector<2x8x32xf32>
    %72 = vector.extract_strided_slice %57 {offsets = [0, 544], sizes = [16, 32], strides = [1, 1]} : vector<16x768xf32> to vector<16x32xf32>
    %73 = vector.shape_cast %72 : vector<16x32xf32> to vector<2x8x32xf32>
    %74 = vector.extract_strided_slice %57 {offsets = [0, 64], sizes = [16, 32], strides = [1, 1]} : vector<16x768xf32> to vector<16x32xf32>
    %75 = vector.shape_cast %74 : vector<16x32xf32> to vector<2x8x32xf32>
    %76 = vector.extract_strided_slice %57 {offsets = [0, 320], sizes = [16, 32], strides = [1, 1]} : vector<16x768xf32> to vector<16x32xf32>
    %77 = vector.shape_cast %76 : vector<16x32xf32> to vector<2x8x32xf32>
    %78 = vector.extract_strided_slice %57 {offsets = [0, 576], sizes = [16, 32], strides = [1, 1]} : vector<16x768xf32> to vector<16x32xf32>
    %79 = vector.shape_cast %78 : vector<16x32xf32> to vector<2x8x32xf32>
    %80 = vector.extract_strided_slice %57 {offsets = [0, 96], sizes = [16, 32], strides = [1, 1]} : vector<16x768xf32> to vector<16x32xf32>
    %81 = vector.shape_cast %80 : vector<16x32xf32> to vector<2x8x32xf32>
    %82 = vector.extract_strided_slice %57 {offsets = [0, 352], sizes = [16, 32], strides = [1, 1]} : vector<16x768xf32> to vector<16x32xf32>
    %83 = vector.shape_cast %82 : vector<16x32xf32> to vector<2x8x32xf32>
    %84 = vector.extract_strided_slice %57 {offsets = [0, 608], sizes = [16, 32], strides = [1, 1]} : vector<16x768xf32> to vector<16x32xf32>
    %85 = vector.shape_cast %84 : vector<16x32xf32> to vector<2x8x32xf32>
    %86 = vector.extract_strided_slice %57 {offsets = [0, 128], sizes = [16, 32], strides = [1, 1]} : vector<16x768xf32> to vector<16x32xf32>
    %87 = vector.shape_cast %86 : vector<16x32xf32> to vector<2x8x32xf32>
    %88 = vector.extract_strided_slice %57 {offsets = [0, 384], sizes = [16, 32], strides = [1, 1]} : vector<16x768xf32> to vector<16x32xf32>
    %89 = vector.shape_cast %88 : vector<16x32xf32> to vector<2x8x32xf32>
    %90 = vector.extract_strided_slice %57 {offsets = [0, 640], sizes = [16, 32], strides = [1, 1]} : vector<16x768xf32> to vector<16x32xf32>
    %91 = vector.shape_cast %90 : vector<16x32xf32> to vector<2x8x32xf32>
    %92 = vector.extract_strided_slice %57 {offsets = [0, 160], sizes = [16, 32], strides = [1, 1]} : vector<16x768xf32> to vector<16x32xf32>
    %93 = vector.shape_cast %92 : vector<16x32xf32> to vector<2x8x32xf32>
    %94 = vector.extract_strided_slice %57 {offsets = [0, 416], sizes = [16, 32], strides = [1, 1]} : vector<16x768xf32> to vector<16x32xf32>
    %95 = vector.shape_cast %94 : vector<16x32xf32> to vector<2x8x32xf32>
    %96 = vector.extract_strided_slice %57 {offsets = [0, 672], sizes = [16, 32], strides = [1, 1]} : vector<16x768xf32> to vector<16x32xf32>
    %97 = vector.shape_cast %96 : vector<16x32xf32> to vector<2x8x32xf32>
    %98 = vector.extract_strided_slice %57 {offsets = [0, 192], sizes = [16, 32], strides = [1, 1]} : vector<16x768xf32> to vector<16x32xf32>
    %99 = vector.shape_cast %98 : vector<16x32xf32> to vector<2x8x32xf32>
    %100 = vector.extract_strided_slice %57 {offsets = [0, 448], sizes = [16, 32], strides = [1, 1]} : vector<16x768xf32> to vector<16x32xf32>
    %101 = vector.shape_cast %100 : vector<16x32xf32> to vector<2x8x32xf32>
    %102 = vector.extract_strided_slice %57 {offsets = [0, 704], sizes = [16, 32], strides = [1, 1]} : vector<16x768xf32> to vector<16x32xf32>
    %103 = vector.shape_cast %102 : vector<16x32xf32> to vector<2x8x32xf32>
    %104 = vector.extract_strided_slice %57 {offsets = [0, 224], sizes = [16, 32], strides = [1, 1]} : vector<16x768xf32> to vector<16x32xf32>
    %105 = vector.shape_cast %104 : vector<16x32xf32> to vector<2x8x32xf32>
    %106 = vector.extract_strided_slice %57 {offsets = [0, 480], sizes = [16, 32], strides = [1, 1]} : vector<16x768xf32> to vector<16x32xf32>
    %107 = vector.shape_cast %106 : vector<16x32xf32> to vector<2x8x32xf32>
    %108 = vector.extract_strided_slice %57 {offsets = [0, 736], sizes = [16, 32], strides = [1, 1]} : vector<16x768xf32> to vector<16x32xf32>
    %109 = vector.shape_cast %108 : vector<16x32xf32> to vector<2x8x32xf32>
    %110 = tpu.concatenate %63, %69, %75, %81, %87, %93, %99, %105 in 0 : vector<2x8x32xf32>, vector<2x8x32xf32>, vector<2x8x32xf32>, vector<2x8x32xf32>, vector<2x8x32xf32>, vector<2x8x32xf32>, vector<2x8x32xf32>, vector<2x8x32xf32> -> vector<16x8x32xf32>
    %111 = arith.truncf %110 : vector<16x8x32xf32> to vector<16x8x32xbf16>
    %112 = tpu.concatenate %65, %71, %77, %83, %89, %95, %101, %107 in 0 : vector<2x8x32xf32>, vector<2x8x32xf32>, vector<2x8x32xf32>, vector<2x8x32xf32>, vector<2x8x32xf32>, vector<2x8x32xf32>, vector<2x8x32xf32>, vector<2x8x32xf32> -> vector<16x8x32xf32>
    %113 = arith.truncf %112 : vector<16x8x32xf32> to vector<16x8x32xbf16>
    %114 = tpu.concatenate %67, %73, %79, %85, %91, %97, %103, %109 in 0 : vector<2x8x32xf32>, vector<2x8x32xf32>, vector<2x8x32xf32>, vector<2x8x32xf32>, vector<2x8x32xf32>, vector<2x8x32xf32>, vector<2x8x32xf32>, vector<2x8x32xf32> -> vector<16x8x32xf32>
    %115 = arith.truncf %114 : vector<16x8x32xf32> to vector<16x8x32xbf16>
    "tpu.trace_start"() <{level = 10 : i32, message = "nqd,nkd->nqk"}> : () -> ()
    %cst_44 = arith.constant dense<0.000000e+00> : vector<16x8x8xf32>
    %116 = tpu.matmul %111, %113, %cst_44 {dimension_numbers = #tpu.dot_dimension_numbers<[2], [2], [1], [1], [0, 0, 0, 1, 1, 1], [0], [0]>} : vector<16x8x32xbf16>, vector<16x8x32xbf16>, vector<16x8x8xf32> -> vector<16x8x8xf32>
    "tpu.trace_stop"() : () -> ()
    %cst_45 = arith.constant 0.176776692 : f32
    %117 = vector.broadcast %cst_45 : f32 to vector<16x8x8xf32>
    %118 = arith.mulf %116, %117 : vector<16x8x8xf32>
    %cst_46 = arith.constant -1.000000e+30 : f32
    %119 = vector.shape_cast %61 : vector<1x8x8xi1> to vector<1x8x8xi1>
    %120 = vector.broadcast %119 : vector<1x8x8xi1> to vector<16x8x8xi1>
    %121 = vector.broadcast %cst_46 : f32 to vector<16x8x8xf32>
    %122 = arith.select %120, %118, %121 : vector<16x8x8xi1>, vector<16x8x8xf32>
    %cst_47 = arith.constant dense<0xFF800000> : vector<16x8xf32>
    %123 = vector.multi_reduction <maximumf>, %122, %cst_47 [2] : vector<16x8x8xf32> to vector<16x8xf32>
    %124 = vector.shape_cast %123 : vector<16x8xf32> to vector<16x8x1xf32>
    %125 = vector.broadcast %124 : vector<16x8x1xf32> to vector<16x8x8xf32>
    %126 = arith.subf %122, %125 : vector<16x8x8xf32>
    %127 = math.exp %126 : vector<16x8x8xf32>
    %cst_48 = arith.constant dense<0.000000e+00> : vector<16x8xf32>
    %128 = vector.multi_reduction <add>, %127, %cst_48 [2] : vector<16x8x8xf32> to vector<16x8xf32>
    %129 = vector.shape_cast %128 : vector<16x8xf32> to vector<16x8x1xf32>
    %130 = tpu.reciprocal %129 {approx = true} : vector<16x8x1xf32> -> vector<16x8x1xf32>
    %131 = vector.broadcast %130 : vector<16x8x1xf32> to vector<16x8x8xf32>
    %132 = arith.mulf %127, %131 : vector<16x8x8xf32>
    %133 = arith.truncf %132 : vector<16x8x8xf32> to vector<16x8x8xbf16>
    "tpu.trace_start"() <{level = 10 : i32, message = "nqk,nkd->nqd"}> : () -> ()
    %cst_49 = arith.constant dense<0.000000e+00> : vector<16x8x32xf32>
    %134 = tpu.matmul %133, %115, %cst_49 {dimension_numbers = #tpu.dot_dimension_numbers<[2], [1], [1], [2], [0, 0, 0, 1, 1, 2], [0], [0]>} : vector<16x8x8xbf16>, vector<16x8x32xbf16>, vector<16x8x32xf32> -> vector<16x8x32xf32>
    "tpu.trace_stop"() : () -> ()
    %135 = vector.extract_strided_slice %134 {offsets = [0, 0, 0], sizes = [2, 8, 32], strides = [1, 1, 1]} : vector<16x8x32xf32> to vector<2x8x32xf32>
    %136 = vector.shape_cast %135 : vector<2x8x32xf32> to vector<16x32xf32>
    %137 = vector.extract_strided_slice %134 {offsets = [2, 0, 0], sizes = [2, 8, 32], strides = [1, 1, 1]} : vector<16x8x32xf32> to vector<2x8x32xf32>
    %138 = vector.shape_cast %137 : vector<2x8x32xf32> to vector<16x32xf32>
    %139 = vector.extract_strided_slice %134 {offsets = [4, 0, 0], sizes = [2, 8, 32], strides = [1, 1, 1]} : vector<16x8x32xf32> to vector<2x8x32xf32>
    %140 = vector.shape_cast %139 : vector<2x8x32xf32> to vector<16x32xf32>
    %141 = vector.extract_strided_slice %134 {offsets = [6, 0, 0], sizes = [2, 8, 32], strides = [1, 1, 1]} : vector<16x8x32xf32> to vector<2x8x32xf32>
    %142 = vector.shape_cast %141 : vector<2x8x32xf32> to vector<16x32xf32>
    %143 = vector.extract_strided_slice %134 {offsets = [8, 0, 0], sizes = [2, 8, 32], strides = [1, 1, 1]} : vector<16x8x32xf32> to vector<2x8x32xf32>
    %144 = vector.shape_cast %143 : vector<2x8x32xf32> to vector<16x32xf32>
    %145 = vector.extract_strided_slice %134 {offsets = [10, 0, 0], sizes = [2, 8, 32], strides = [1, 1, 1]} : vector<16x8x32xf32> to vector<2x8x32xf32>
    %146 = vector.shape_cast %145 : vector<2x8x32xf32> to vector<16x32xf32>
    %147 = vector.extract_strided_slice %134 {offsets = [12, 0, 0], sizes = [2, 8, 32], strides = [1, 1, 1]} : vector<16x8x32xf32> to vector<2x8x32xf32>
    %148 = vector.shape_cast %147 : vector<2x8x32xf32> to vector<16x32xf32>
    %149 = vector.extract_strided_slice %134 {offsets = [14, 0, 0], sizes = [2, 8, 32], strides = [1, 1, 1]} : vector<16x8x32xf32> to vector<2x8x32xf32>
    %150 = vector.shape_cast %149 : vector<2x8x32xf32> to vector<16x32xf32>
    %151 = tpu.concatenate %136, %138, %140, %142, %144, %146, %148, %150 in 1 : vector<16x32xf32>, vector<16x32xf32>, vector<16x32xf32>, vector<16x32xf32>, vector<16x32xf32>, vector<16x32xf32>, vector<16x32xf32>, vector<16x32xf32> -> vector<16x256xf32>
    %152 = arith.truncf %151 : vector<16x256xf32> to vector<16x256xbf16>
    %cst_50 = arith.constant dense<0.000000e+00> : vector<16x256xf32>
    %153 = tpu.matmul %152, %12, %cst_50 {dimension_numbers = #tpu.dot_dimension_numbers<[1], [0], [0], [1], [0, 0, 1, 1], [], []>} : vector<16x256xbf16>, vector<256x256xbf16>, vector<16x256xf32> -> vector<16x256xf32>
    %154 = arith.extf %14 : vector<1x256xbf16> to vector<1x256xf32>
    %155 = vector.broadcast %154 : vector<1x256xf32> to vector<16x256xf32>
    %156 = arith.addf %153, %155 : vector<16x256xf32>
    %157 = arith.addf %28, %156 : vector<16x256xf32>
    %cst_51 = arith.constant dense<0.000000e+00> : vector<16xf32>
    %158 = vector.multi_reduction <add>, %157, %cst_51 [1] : vector<16x256xf32> to vector<16xf32>
    %159 = vector.shape_cast %158 : vector<16xf32> to vector<16x1xf32>
    %cst_52 = arith.constant 2.560000e+02 : f32
    %160 = vector.broadcast %cst_52 : f32 to vector<16x1xf32>
    %161 = arith.divf %159, %160 : vector<16x1xf32>
    %162 = vector.broadcast %161 : vector<16x1xf32> to vector<16x256xf32>
    %163 = arith.subf %157, %162 : vector<16x256xf32>
    %164 = arith.mulf %163, %163 : vector<16x256xf32>
    %cst_53 = arith.constant dense<0.000000e+00> : vector<16xf32>
    %165 = vector.multi_reduction <add>, %164, %cst_53 [1] : vector<16x256xf32> to vector<16xf32>
    %166 = vector.shape_cast %165 : vector<16xf32> to vector<16x1xf32>
    %cst_54 = arith.constant 2.560000e+02 : f32
    %167 = vector.broadcast %cst_54 : f32 to vector<16x1xf32>
    %168 = arith.divf %166, %167 : vector<16x1xf32>
    %169 = vector.broadcast %161 : vector<16x1xf32> to vector<16x256xf32>
    %170 = arith.subf %157, %169 : vector<16x256xf32>
    %cst_55 = arith.constant 9.99999974E-6 : f32
    %171 = vector.broadcast %cst_55 : f32 to vector<16x1xf32>
    %172 = arith.addf %168, %171 : vector<16x1xf32>
    %173 = math.rsqrt %172 : vector<16x1xf32>
    %174 = vector.broadcast %173 : vector<16x1xf32> to vector<16x256xf32>
    %175 = arith.mulf %170, %174 : vector<16x256xf32>
    %176 = arith.extf %16 : vector<1x256xbf16> to vector<1x256xf32>
    %177 = vector.broadcast %176 : vector<1x256xf32> to vector<16x256xf32>
    %178 = arith.mulf %175, %177 : vector<16x256xf32>
    %179 = arith.extf %18 : vector<1x256xbf16> to vector<1x256xf32>
    %180 = vector.broadcast %179 : vector<1x256xf32> to vector<16x256xf32>
    %181 = arith.addf %178, %180 : vector<16x256xf32>
    %182 = arith.truncf %181 : vector<16x256xf32> to vector<16x256xbf16>
    %cst_56 = arith.constant dense<0.000000e+00> : vector<16x1024xf32>
    %183 = tpu.matmul %182, %20, %cst_56 {dimension_numbers = #tpu.dot_dimension_numbers<[1], [0], [0], [1], [0, 0, 1, 1], [], []>} : vector<16x256xbf16>, vector<256x1024xbf16>, vector<16x1024xf32> -> vector<16x1024xf32>
    %184 = arith.extf %22 : vector<1x1024xbf16> to vector<1x1024xf32>
    %185 = vector.broadcast %184 : vector<1x1024xf32> to vector<16x1024xf32>
    %186 = arith.addf %183, %185 : vector<16x1024xf32>
    %cst_57 = arith.constant 1.702000e+00 : f32
    %187 = vector.broadcast %cst_57 : f32 to vector<16x1024xf32>
    %188 = arith.mulf %187, %186 : vector<16x1024xf32>
    %189 = arith.negf %188 : vector<16x1024xf32>
    %190 = math.exp %189 : vector<16x1024xf32>
    %cst_58 = arith.constant 1.000000e+00 : f32
    %191 = vector.broadcast %cst_58 : f32 to vector<16x1024xf32>
    %192 = arith.addf %191, %190 : vector<16x1024xf32>
    %193 = arith.divf %191, %192 : vector<16x1024xf32>
    %194 = arith.mulf %186, %193 : vector<16x1024xf32>
    %195 = arith.truncf %194 : vector<16x1024xf32> to vector<16x1024xbf16>
    %cst_59 = arith.constant dense<0.000000e+00> : vector<16x256xf32>
    %196 = tpu.matmul %195, %24, %cst_59 {dimension_numbers = #tpu.dot_dimension_numbers<[1], [0], [0], [1], [0, 0, 1, 1], [], []>} : vector<16x1024xbf16>, vector<1024x256xbf16>, vector<16x256xf32> -> vector<16x256xf32>
    %197 = arith.extf %26 : vector<1x256xbf16> to vector<1x256xf32>
    %198 = vector.broadcast %197 : vector<1x256xf32> to vector<16x256xf32>
    %199 = arith.addf %196, %198 : vector<16x256xf32>
    %200 = arith.addf %157, %199 : vector<16x256xf32>
    %201 = vector.shape_cast %200 : vector<16x256xf32> to vector<2x8x256xf32>
    %c0_60 = arith.constant 0 : index
    %c0_61 = arith.constant 0 : index
    %c0_62 = arith.constant 0 : index
    %202 = vector.load %arg20[%c0_60, %c0_61, %c0_62] : memref<2x8x256xf32, #tpu.memory_space<vmem>>, vector<2x8x256xf32>
    tpu.vector_store %arg20[%c0_60, %c0_61, %c0_62], %201 {strides = array<i32>} : memref<2x8x256xf32, #tpu.memory_space<vmem>>, vector<2x8x256xf32>,
    %c0_i32_63 = arith.constant 0 : i32
    %203 = arith.cmpi eq, %arg0, %c0_i32_63 : i32
    %204 = arith.extui %203 : i1 to i32
    %c0_i32_64 = arith.constant 0 : i32
    %205 = arith.cmpi ne, %204, %c0_i32_64 : i32
    scf.if %205 {
      %209 = arith.truncf %201 : vector<2x8x256xf32> to vector<2x8x256xbf16>
      %c0_66 = arith.constant 0 : index
      %c0_67 = arith.constant 0 : index
      %c0_68 = arith.constant 0 : index
      %210 = vector.load %arg18[%c0_66, %c0_67, %c0_68] : memref<2x8x256xbf16, #tpu.memory_space<vmem>>, vector<2x8x256xbf16>
      tpu.vector_store %arg18[%c0_66, %c0_67, %c0_68], %209 {strides = array<i32>} : memref<2x8x256xbf16, #tpu.memory_space<vmem>>, vector<2x8x256xbf16>,
    } else {
    }
    %c1_i32 = arith.constant 1 : i32
    %206 = arith.cmpi eq, %arg0, %c1_i32 : i32
    %207 = arith.extui %206 : i1 to i32
    %c0_i32_65 = arith.constant 0 : i32
    %208 = arith.cmpi ne, %207, %c0_i32_65 : i32
    scf.if %208 {
      %209 = tpu.iota {dimensions = array<i32: 0>} : vector<8x1xi32>
      %c0_66 = arith.constant 0 : index
      %210 = memref.load %arg1[%c0_66] : memref<2xi32, #tpu.memory_space<smem>>
      %211 = vector.broadcast %210 : i32 to vector<8x1xi32>
      %212 = arith.cmpi eq, %209, %211 : vector<8x1xi32>
      %213 = arith.extui %212 : vector<8x1xi1> to vector<8x1xi32>
      %214 = arith.sitofp %213 : vector<8x1xi32> to vector<8x1xf32>
      %215 = vector.extract_strided_slice %201 {offsets = [0, 0, 0], sizes = [1, 8, 256], strides = [1, 1, 1]} : vector<2x8x256xf32> to vector<1x8x256xf32>
      %216 = vector.shape_cast %215 : vector<1x8x256xf32> to vector<8x256xf32>
      %217 = vector.broadcast %214 : vector<8x1xf32> to vector<8x256xf32>
      %218 = arith.mulf %216, %217 : vector<8x256xf32>
      %cst_67 = arith.constant dense<0.000000e+00> : vector<256xf32>
      %219 = vector.multi_reduction <add>, %218, %cst_67 [0] : vector<8x256xf32> to vector<256xf32>
      %220 = vector.shape_cast %219 : vector<256xf32> to vector<1x256xf32>
      %c1 = arith.constant 1 : index
      %221 = memref.load %arg1[%c1] : memref<2xi32, #tpu.memory_space<smem>>
      %222 = vector.broadcast %221 : i32 to vector<8x1xi32>
      %223 = arith.cmpi eq, %209, %222 : vector<8x1xi32>
      %224 = arith.extui %223 : vector<8x1xi1> to vector<8x1xi32>
      %225 = arith.sitofp %224 : vector<8x1xi32> to vector<8x1xf32>
      %226 = vector.extract_strided_slice %201 {offsets = [1, 0, 0], sizes = [1, 8, 256], strides = [1, 1, 1]} : vector<2x8x256xf32> to vector<1x8x256xf32>
      %227 = vector.shape_cast %226 : vector<1x8x256xf32> to vector<8x256xf32>
      %228 = vector.broadcast %225 : vector<8x1xf32> to vector<8x256xf32>
      %229 = arith.mulf %227, %228 : vector<8x256xf32>
      %cst_68 = arith.constant dense<0.000000e+00> : vector<256xf32>
      %230 = vector.multi_reduction <add>, %229, %cst_68 [0] : vector<8x256xf32> to vector<256xf32>
      %231 = vector.shape_cast %230 : vector<256xf32> to vector<1x256xf32>
      %232 = tpu.concatenate %220, %231 in 0 : vector<1x256xf32>, vector<1x256xf32> -> vector<2x256xf32>
      %c0_69 = arith.constant 0 : index
      %c0_70 = arith.constant 0 : index
      %233 = vector.load %arg15[%c0_69, %c0_70] : memref<1x256xbf16, #tpu.memory_space<vmem>>, vector<1x256xbf16>
      %c0_71 = arith.constant 0 : index
      %c0_72 = arith.constant 0 : index
      %234 = vector.load %arg16[%c0_71, %c0_72] : memref<1x256xbf16, #tpu.memory_space<vmem>>, vector<1x256xbf16>
      %cst_73 = arith.constant dense<0.000000e+00> : vector<2xf32>
      %235 = vector.multi_reduction <add>, %232, %cst_73 [1] : vector<2x256xf32> to vector<2xf32>
      %236 = vector.shape_cast %235 : vector<2xf32> to vector<2x1xf32>
      %cst_74 = arith.constant 2.560000e+02 : f32
      %237 = vector.broadcast %cst_74 : f32 to vector<2x1xf32>
      %238 = arith.divf %236, %237 : vector<2x1xf32>
      %239 = vector.broadcast %238 : vector<2x1xf32> to vector<2x256xf32>
      %240 = arith.subf %232, %239 : vector<2x256xf32>
      %241 = arith.mulf %240, %240 : vector<2x256xf32>
      %cst_75 = arith.constant dense<0.000000e+00> : vector<2xf32>
      %242 = vector.multi_reduction <add>, %241, %cst_75 [1] : vector<2x256xf32> to vector<2xf32>
      %243 = vector.shape_cast %242 : vector<2xf32> to vector<2x1xf32>
      %cst_76 = arith.constant 2.560000e+02 : f32
      %244 = vector.broadcast %cst_76 : f32 to vector<2x1xf32>
      %245 = arith.divf %243, %244 : vector<2x1xf32>
      %246 = vector.broadcast %238 : vector<2x1xf32> to vector<2x256xf32>
      %247 = arith.subf %232, %246 : vector<2x256xf32>
      %cst_77 = arith.constant 9.99999974E-6 : f32
      %248 = vector.broadcast %cst_77 : f32 to vector<2x1xf32>
      %249 = arith.addf %245, %248 : vector<2x1xf32>
      %250 = math.rsqrt %249 : vector<2x1xf32>
      %251 = vector.broadcast %250 : vector<2x1xf32> to vector<2x256xf32>
      %252 = arith.mulf %247, %251 : vector<2x256xf32>
      %253 = arith.extf %233 : vector<1x256xbf16> to vector<1x256xf32>
      %254 = vector.broadcast %253 : vector<1x256xf32> to vector<2x256xf32>
      %255 = arith.mulf %252, %254 : vector<2x256xf32>
      %256 = arith.extf %234 : vector<1x256xbf16> to vector<1x256xf32>
      %257 = vector.broadcast %256 : vector<1x256xf32> to vector<2x256xf32>
      %258 = arith.addf %255, %257 : vector<2x256xf32>
      %259 = arith.truncf %258 : vector<2x256xf32> to vector<2x256xbf16>
      %c0_78 = arith.constant 0 : index
      %c0_79 = arith.constant 0 : index
      %260 = vector.load %arg17[%c0_78, %c0_79] : memref<256x128xbf16, #tpu.memory_space<vmem>>, vector<256x128xbf16>
      %cst_80 = arith.constant dense<0.000000e+00> : vector<2x128xf32>
      %261 = tpu.matmul %259, %260, %cst_80 {dimension_numbers = #tpu.dot_dimension_numbers<[1], [0], [0], [1], [0, 0, 1, 1], [], []>} : vector<2x256xbf16>, vector<256x128xbf16>, vector<2x128xf32> -> vector<2x128xf32>
      %c0_81 = arith.constant 0 : index
      %c0_82 = arith.constant 0 : index
      %262 = vector.load %arg19[%c0_81, %c0_82] : memref<2x128xf32, #tpu.memory_space<vmem>>, vector<2x128xf32>
      tpu.vector_store %arg19[%c0_81, %c0_82], %261 {strides = array<i32>} : memref<2x128xf32, #tpu.memory_space<vmem>>, vector<2x128xf32>,
    } else {
    }
    return
  }
  func.func @transform_0(%arg0: i32, %arg1: memref<2xi32, #tpu.memory_space<smem>>) -> (i32, i32, i32) {
    %c0_i32 = arith.constant 0 : i32
    %c0_i32_0 = arith.constant 0 : i32
    %c0_i32_1 = arith.constant 0 : i32
    %c0_i32_2 = arith.constant 0 : i32
    return %c0_i32, %c0_i32_0, %c0_i32_1 : i32, i32, i32
  }
  func.func @transform_1(%arg0: i32, %arg1: memref<2xi32, #tpu.memory_space<smem>>) -> (i32, i32, i32) {
    %c0_i32 = arith.constant 0 : i32
    %c0_i32_0 = arith.constant 0 : i32
    %c0_i32_1 = arith.constant 0 : i32
    return %arg0, %c0_i32, %c0_i32_0 : i32, i32, i32
  }
  func.func @transform_2(%arg0: i32, %arg1: memref<2xi32, #tpu.memory_space<smem>>) -> (i32, i32, i32) {
    %c0_i32 = arith.constant 0 : i32
    %c0_i32_0 = arith.constant 0 : i32
    %c0_i32_1 = arith.constant 0 : i32
    return %arg0, %c0_i32, %c0_i32_0 : i32, i32, i32
  }
  func.func @transform_3(%arg0: i32, %arg1: memref<2xi32, #tpu.memory_space<smem>>) -> (i32, i32, i32) {
    %c0_i32 = arith.constant 0 : i32
    %c0_i32_0 = arith.constant 0 : i32
    %c0_i32_1 = arith.constant 0 : i32
    return %arg0, %c0_i32, %c0_i32_0 : i32, i32, i32
  }
  func.func @transform_4(%arg0: i32, %arg1: memref<2xi32, #tpu.memory_space<smem>>) -> (i32, i32, i32) {
    %c0_i32 = arith.constant 0 : i32
    %c0_i32_0 = arith.constant 0 : i32
    %c0_i32_1 = arith.constant 0 : i32
    return %arg0, %c0_i32, %c0_i32_0 : i32, i32, i32
  }
  func.func @transform_5(%arg0: i32, %arg1: memref<2xi32, #tpu.memory_space<smem>>) -> (i32, i32, i32) {
    %c0_i32 = arith.constant 0 : i32
    %c0_i32_0 = arith.constant 0 : i32
    %c0_i32_1 = arith.constant 0 : i32
    return %arg0, %c0_i32, %c0_i32_0 : i32, i32, i32
  }
  func.func @transform_6(%arg0: i32, %arg1: memref<2xi32, #tpu.memory_space<smem>>) -> (i32, i32, i32) {
    %c0_i32 = arith.constant 0 : i32
    %c0_i32_0 = arith.constant 0 : i32
    %c0_i32_1 = arith.constant 0 : i32
    return %arg0, %c0_i32, %c0_i32_0 : i32, i32, i32
  }
  func.func @transform_7(%arg0: i32, %arg1: memref<2xi32, #tpu.memory_space<smem>>) -> (i32, i32, i32) {
    %c0_i32 = arith.constant 0 : i32
    %c0_i32_0 = arith.constant 0 : i32
    %c0_i32_1 = arith.constant 0 : i32
    return %arg0, %c0_i32, %c0_i32_0 : i32, i32, i32
  }
  func.func @transform_8(%arg0: i32, %arg1: memref<2xi32, #tpu.memory_space<smem>>) -> (i32, i32, i32) {
    %c0_i32 = arith.constant 0 : i32
    %c0_i32_0 = arith.constant 0 : i32
    %c0_i32_1 = arith.constant 0 : i32
    return %arg0, %c0_i32, %c0_i32_0 : i32, i32, i32
  }
  func.func @transform_9(%arg0: i32, %arg1: memref<2xi32, #tpu.memory_space<smem>>) -> (i32, i32, i32) {
    %c0_i32 = arith.constant 0 : i32
    %c0_i32_0 = arith.constant 0 : i32
    %c0_i32_1 = arith.constant 0 : i32
    return %arg0, %c0_i32, %c0_i32_0 : i32, i32, i32
  }
  func.func @transform_10(%arg0: i32, %arg1: memref<2xi32, #tpu.memory_space<smem>>) -> (i32, i32, i32) {
    %c0_i32 = arith.constant 0 : i32
    %c0_i32_0 = arith.constant 0 : i32
    %c0_i32_1 = arith.constant 0 : i32
    return %arg0, %c0_i32, %c0_i32_0 : i32, i32, i32
  }
  func.func @transform_11(%arg0: i32, %arg1: memref<2xi32, #tpu.memory_space<smem>>) -> (i32, i32, i32) {
    %c0_i32 = arith.constant 0 : i32
    %c0_i32_0 = arith.constant 0 : i32
    %c0_i32_1 = arith.constant 0 : i32
    return %arg0, %c0_i32, %c0_i32_0 : i32, i32, i32
  }
  func.func @transform_12(%arg0: i32, %arg1: memref<2xi32, #tpu.memory_space<smem>>) -> (i32, i32, i32) {
    %c0_i32 = arith.constant 0 : i32
    %c0_i32_0 = arith.constant 0 : i32
    %c0_i32_1 = arith.constant 0 : i32
    return %arg0, %c0_i32, %c0_i32_0 : i32, i32, i32
  }
  func.func @transform_13(%arg0: i32, %arg1: memref<2xi32, #tpu.memory_space<smem>>) -> (i32, i32) {
    %c0_i32 = arith.constant 0 : i32
    %c0_i32_0 = arith.constant 0 : i32
    %c0_i32_1 = arith.constant 0 : i32
    return %c0_i32, %c0_i32_0 : i32, i32
  }
  func.func @transform_14(%arg0: i32, %arg1: memref<2xi32, #tpu.memory_space<smem>>) -> (i32, i32) {
    %c0_i32 = arith.constant 0 : i32
    %c0_i32_0 = arith.constant 0 : i32
    %c0_i32_1 = arith.constant 0 : i32
    return %c0_i32, %c0_i32_0 : i32, i32
  }
  func.func @transform_15(%arg0: i32, %arg1: memref<2xi32, #tpu.memory_space<smem>>) -> (i32, i32) {
    %c0_i32 = arith.constant 0 : i32
    %c0_i32_0 = arith.constant 0 : i32
    %c0_i32_1 = arith.constant 0 : i32
    return %c0_i32, %c0_i32_0 : i32, i32
  }
  func.func @transform_16(%arg0: i32, %arg1: memref<2xi32, #tpu.memory_space<smem>>) -> (i32, i32, i32) {
    %c0_i32 = arith.constant 0 : i32
    %c0_i32_0 = arith.constant 0 : i32
    %c0_i32_1 = arith.constant 0 : i32
    %c0_i32_2 = arith.constant 0 : i32
    return %c0_i32, %c0_i32_0, %c0_i32_1 : i32, i32, i32
  }
  func.func @transform_17(%arg0: i32, %arg1: memref<2xi32, #tpu.memory_space<smem>>) -> (i32, i32) {
    %c0_i32 = arith.constant 0 : i32
    %c0_i32_0 = arith.constant 0 : i32
    %c0_i32_1 = arith.constant 0 : i32
    return %c0_i32, %c0_i32_0 : i32, i32
  }
}

module attributes {stable_mosaic.version = 11 : i64} {
  func.func @kernel(%arg0: i32, %arg1: memref<2x8x128xbf16, #tpu.memory_space<vmem>>, %arg2: memref<1x1x128xbf16, #tpu.memory_space<vmem>>, %arg3: memref<1x1x128xbf16, #tpu.memory_space<vmem>>, %arg4: memref<1x128x384xbf16, #tpu.memory_space<vmem>>, %arg5: memref<1x1x384xbf16, #tpu.memory_space<vmem>>, %arg6: memref<1x128x128xbf16, #tpu.memory_space<vmem>>, %arg7: memref<1x1x128xbf16, #tpu.memory_space<vmem>>, %arg8: memref<1x1x128xbf16, #tpu.memory_space<vmem>>, %arg9: memref<1x1x128xbf16, #tpu.memory_space<vmem>>, %arg10: memref<1x128x512xbf16, #tpu.memory_space<vmem>>, %arg11: memref<1x1x512xbf16, #tpu.memory_space<vmem>>, %arg12: memref<1x512x128xbf16, #tpu.memory_space<vmem>>, %arg13: memref<1x1x128xbf16, #tpu.memory_space<vmem>>, %arg14: memref<2x8x128xbf16, #tpu.memory_space<vmem>>, %arg15: memref<2x8x128xf32, #tpu.memory_space<vmem>>) attributes {dimension_semantics = [#tpu.dimension_semantics<arbitrary>], iteration_bounds = array<i64: 1>, scalar_prefetch = 0 : i64, scratch_operands = 1 : i64, tpu.core_type = #tpu.core_type<tc>, window_params = [{pipeline_mode = #tpu.pipeline_mode<synchronous>, transform_indices = @transform_0, window_bounds = array<i64: 2, 8, 128>}, {transform_indices = @transform_1, window_bounds = array<i64: 1, 1, 128>}, {transform_indices = @transform_2, window_bounds = array<i64: 1, 1, 128>}, {transform_indices = @transform_3, window_bounds = array<i64: 1, 128, 384>}, {transform_indices = @transform_4, window_bounds = array<i64: 1, 1, 384>}, {transform_indices = @transform_5, window_bounds = array<i64: 1, 128, 128>}, {transform_indices = @transform_6, window_bounds = array<i64: 1, 1, 128>}, {transform_indices = @transform_7, window_bounds = array<i64: 1, 1, 128>}, {transform_indices = @transform_8, window_bounds = array<i64: 1, 1, 128>}, {transform_indices = @transform_9, window_bounds = array<i64: 1, 128, 512>}, {transform_indices = @transform_10, window_bounds = array<i64: 1, 1, 512>}, {transform_indices = @transform_11, window_bounds = array<i64: 1, 512, 128>}, {transform_indices = @transform_12, window_bounds = array<i64: 1, 1, 128>}, {pipeline_mode = #tpu.pipeline_mode<synchronous>, transform_indices = @transform_13, window_bounds = array<i64: 2, 8, 128>}]} {
    %c0_i32 = arith.constant 0 : i32
    %0 = arith.cmpi eq, %arg0, %c0_i32 : i32
    %1 = arith.extui %0 : i1 to i32
    %c0_i32_0 = arith.constant 0 : i32
    %2 = arith.cmpi ne, %1, %c0_i32_0 : i32
    scf.if %2 {
      %c0_65 = arith.constant 0 : index
      %c0_66 = arith.constant 0 : index
      %c0_67 = arith.constant 0 : index
      %174 = vector.load %arg1[%c0_65, %c0_66, %c0_67] : memref<2x8x128xbf16, #tpu.memory_space<vmem>>, vector<2x8x128xbf16>
      %175 = arith.extf %174 : vector<2x8x128xbf16> to vector<2x8x128xf32>
      %c0_68 = arith.constant 0 : index
      %c0_69 = arith.constant 0 : index
      %c0_70 = arith.constant 0 : index
      %176 = vector.load %arg15[%c0_68, %c0_69, %c0_70] : memref<2x8x128xf32, #tpu.memory_space<vmem>>, vector<2x8x128xf32>
      tpu.vector_store %arg15[%c0_68, %c0_69, %c0_70], %175 {strides = array<i32>} : memref<2x8x128xf32, #tpu.memory_space<vmem>>, vector<2x8x128xf32>,
    } else {
    }
    %c0 = arith.constant 0 : index
    %c0_1 = arith.constant 0 : index
    %c0_2 = arith.constant 0 : index
    %3 = vector.load %arg2[%c0, %c0_1, %c0_2] : memref<1x1x128xbf16, #tpu.memory_space<vmem>>, vector<1x1x128xbf16>
    %4 = vector.shape_cast %3 : vector<1x1x128xbf16> to vector<1x128xbf16>
    %c0_3 = arith.constant 0 : index
    %c0_4 = arith.constant 0 : index
    %c0_5 = arith.constant 0 : index
    %5 = vector.load %arg3[%c0_3, %c0_4, %c0_5] : memref<1x1x128xbf16, #tpu.memory_space<vmem>>, vector<1x1x128xbf16>
    %6 = vector.shape_cast %5 : vector<1x1x128xbf16> to vector<1x128xbf16>
    %c0_6 = arith.constant 0 : index
    %c0_7 = arith.constant 0 : index
    %c0_8 = arith.constant 0 : index
    %7 = vector.load %arg4[%c0_6, %c0_7, %c0_8] : memref<1x128x384xbf16, #tpu.memory_space<vmem>>, vector<1x128x384xbf16>
    %8 = vector.shape_cast %7 : vector<1x128x384xbf16> to vector<128x384xbf16>
    %c0_9 = arith.constant 0 : index
    %c0_10 = arith.constant 0 : index
    %c0_11 = arith.constant 0 : index
    %9 = vector.load %arg5[%c0_9, %c0_10, %c0_11] : memref<1x1x384xbf16, #tpu.memory_space<vmem>>, vector<1x1x384xbf16>
    %10 = vector.shape_cast %9 : vector<1x1x384xbf16> to vector<1x384xbf16>
    %c0_12 = arith.constant 0 : index
    %c0_13 = arith.constant 0 : index
    %c0_14 = arith.constant 0 : index
    %11 = vector.load %arg6[%c0_12, %c0_13, %c0_14] : memref<1x128x128xbf16, #tpu.memory_space<vmem>>, vector<1x128x128xbf16>
    %12 = vector.shape_cast %11 : vector<1x128x128xbf16> to vector<128x128xbf16>
    %c0_15 = arith.constant 0 : index
    %c0_16 = arith.constant 0 : index
    %c0_17 = arith.constant 0 : index
    %13 = vector.load %arg7[%c0_15, %c0_16, %c0_17] : memref<1x1x128xbf16, #tpu.memory_space<vmem>>, vector<1x1x128xbf16>
    %14 = vector.shape_cast %13 : vector<1x1x128xbf16> to vector<1x128xbf16>
    %c0_18 = arith.constant 0 : index
    %c0_19 = arith.constant 0 : index
    %c0_20 = arith.constant 0 : index
    %15 = vector.load %arg8[%c0_18, %c0_19, %c0_20] : memref<1x1x128xbf16, #tpu.memory_space<vmem>>, vector<1x1x128xbf16>
    %16 = vector.shape_cast %15 : vector<1x1x128xbf16> to vector<1x128xbf16>
    %c0_21 = arith.constant 0 : index
    %c0_22 = arith.constant 0 : index
    %c0_23 = arith.constant 0 : index
    %17 = vector.load %arg9[%c0_21, %c0_22, %c0_23] : memref<1x1x128xbf16, #tpu.memory_space<vmem>>, vector<1x1x128xbf16>
    %18 = vector.shape_cast %17 : vector<1x1x128xbf16> to vector<1x128xbf16>
    %c0_24 = arith.constant 0 : index
    %c0_25 = arith.constant 0 : index
    %c0_26 = arith.constant 0 : index
    %19 = vector.load %arg10[%c0_24, %c0_25, %c0_26] : memref<1x128x512xbf16, #tpu.memory_space<vmem>>, vector<1x128x512xbf16>
    %20 = vector.shape_cast %19 : vector<1x128x512xbf16> to vector<128x512xbf16>
    %c0_27 = arith.constant 0 : index
    %c0_28 = arith.constant 0 : index
    %c0_29 = arith.constant 0 : index
    %21 = vector.load %arg11[%c0_27, %c0_28, %c0_29] : memref<1x1x512xbf16, #tpu.memory_space<vmem>>, vector<1x1x512xbf16>
    %22 = vector.shape_cast %21 : vector<1x1x512xbf16> to vector<1x512xbf16>
    %c0_30 = arith.constant 0 : index
    %c0_31 = arith.constant 0 : index
    %c0_32 = arith.constant 0 : index
    %23 = vector.load %arg12[%c0_30, %c0_31, %c0_32] : memref<1x512x128xbf16, #tpu.memory_space<vmem>>, vector<1x512x128xbf16>
    %24 = vector.shape_cast %23 : vector<1x512x128xbf16> to vector<512x128xbf16>
    %c0_33 = arith.constant 0 : index
    %c0_34 = arith.constant 0 : index
    %c0_35 = arith.constant 0 : index
    %25 = vector.load %arg13[%c0_33, %c0_34, %c0_35] : memref<1x1x128xbf16, #tpu.memory_space<vmem>>, vector<1x1x128xbf16>
    %26 = vector.shape_cast %25 : vector<1x1x128xbf16> to vector<1x128xbf16>
    %c0_36 = arith.constant 0 : index
    %c0_37 = arith.constant 0 : index
    %c0_38 = arith.constant 0 : index
    %27 = vector.load %arg15[%c0_36, %c0_37, %c0_38] : memref<2x8x128xf32, #tpu.memory_space<vmem>>, vector<2x8x128xf32>
    %28 = vector.shape_cast %27 : vector<2x8x128xf32> to vector<16x128xf32>
    %cst = arith.constant dense<0.000000e+00> : vector<16xf32>
    %29 = vector.multi_reduction <add>, %28, %cst [1] : vector<16x128xf32> to vector<16xf32>
    %30 = vector.shape_cast %29 : vector<16xf32> to vector<16x1xf32>
    %cst_39 = arith.constant 1.280000e+02 : f32
    %31 = vector.broadcast %cst_39 : f32 to vector<16x1xf32>
    %32 = arith.divf %30, %31 : vector<16x1xf32>
    %33 = vector.broadcast %32 : vector<16x1xf32> to vector<16x128xf32>
    %34 = arith.subf %28, %33 : vector<16x128xf32>
    %35 = arith.mulf %34, %34 : vector<16x128xf32>
    %cst_40 = arith.constant dense<0.000000e+00> : vector<16xf32>
    %36 = vector.multi_reduction <add>, %35, %cst_40 [1] : vector<16x128xf32> to vector<16xf32>
    %37 = vector.shape_cast %36 : vector<16xf32> to vector<16x1xf32>
    %cst_41 = arith.constant 1.280000e+02 : f32
    %38 = vector.broadcast %cst_41 : f32 to vector<16x1xf32>
    %39 = arith.divf %37, %38 : vector<16x1xf32>
    %40 = vector.broadcast %32 : vector<16x1xf32> to vector<16x128xf32>
    %41 = arith.subf %28, %40 : vector<16x128xf32>
    %cst_42 = arith.constant 9.99999974E-6 : f32
    %42 = vector.broadcast %cst_42 : f32 to vector<16x1xf32>
    %43 = arith.addf %39, %42 : vector<16x1xf32>
    %44 = math.rsqrt %43 : vector<16x1xf32>
    %45 = vector.broadcast %44 : vector<16x1xf32> to vector<16x128xf32>
    %46 = arith.mulf %41, %45 : vector<16x128xf32>
    %47 = arith.extf %4 : vector<1x128xbf16> to vector<1x128xf32>
    %48 = vector.broadcast %47 : vector<1x128xf32> to vector<16x128xf32>
    %49 = arith.mulf %46, %48 : vector<16x128xf32>
    %50 = arith.extf %6 : vector<1x128xbf16> to vector<1x128xf32>
    %51 = vector.broadcast %50 : vector<1x128xf32> to vector<16x128xf32>
    %52 = arith.addf %49, %51 : vector<16x128xf32>
    %53 = arith.truncf %52 : vector<16x128xf32> to vector<16x128xbf16>
    %cst_43 = arith.constant dense<0.000000e+00> : vector<16x384xf32>
    %54 = tpu.matmul %53, %8, %cst_43 {dimension_numbers = #tpu.dot_dimension_numbers<[1], [0], [0], [1], [0, 0, 1, 1], [], []>} : vector<16x128xbf16>, vector<128x384xbf16>, vector<16x384xf32> -> vector<16x384xf32>
    %55 = arith.extf %10 : vector<1x384xbf16> to vector<1x384xf32>
    %56 = vector.broadcast %55 : vector<1x384xf32> to vector<16x384xf32>
    %57 = arith.addf %54, %56 : vector<16x384xf32>
    %58 = tpu.iota {dimensions = array<i32: 0>} : vector<8x8xi32>
    %59 = tpu.iota {dimensions = array<i32: 1>} : vector<8x8xi32>
    %60 = arith.cmpi sle, %59, %58 : vector<8x8xi32>
    %61 = vector.shape_cast %60 : vector<8x8xi1> to vector<1x8x8xi1>
    %62 = vector.extract_strided_slice %57 {offsets = [0, 0], sizes = [16, 32], strides = [1, 1]} : vector<16x384xf32> to vector<16x32xf32>
    %63 = vector.shape_cast %62 : vector<16x32xf32> to vector<2x8x32xf32>
    %64 = vector.extract_strided_slice %57 {offsets = [0, 128], sizes = [16, 32], strides = [1, 1]} : vector<16x384xf32> to vector<16x32xf32>
    %65 = vector.shape_cast %64 : vector<16x32xf32> to vector<2x8x32xf32>
    %66 = vector.extract_strided_slice %57 {offsets = [0, 256], sizes = [16, 32], strides = [1, 1]} : vector<16x384xf32> to vector<16x32xf32>
    %67 = vector.shape_cast %66 : vector<16x32xf32> to vector<2x8x32xf32>
    %68 = vector.extract_strided_slice %57 {offsets = [0, 32], sizes = [16, 32], strides = [1, 1]} : vector<16x384xf32> to vector<16x32xf32>
    %69 = vector.shape_cast %68 : vector<16x32xf32> to vector<2x8x32xf32>
    %70 = vector.extract_strided_slice %57 {offsets = [0, 160], sizes = [16, 32], strides = [1, 1]} : vector<16x384xf32> to vector<16x32xf32>
    %71 = vector.shape_cast %70 : vector<16x32xf32> to vector<2x8x32xf32>
    %72 = vector.extract_strided_slice %57 {offsets = [0, 288], sizes = [16, 32], strides = [1, 1]} : vector<16x384xf32> to vector<16x32xf32>
    %73 = vector.shape_cast %72 : vector<16x32xf32> to vector<2x8x32xf32>
    %74 = vector.extract_strided_slice %57 {offsets = [0, 64], sizes = [16, 32], strides = [1, 1]} : vector<16x384xf32> to vector<16x32xf32>
    %75 = vector.shape_cast %74 : vector<16x32xf32> to vector<2x8x32xf32>
    %76 = vector.extract_strided_slice %57 {offsets = [0, 192], sizes = [16, 32], strides = [1, 1]} : vector<16x384xf32> to vector<16x32xf32>
    %77 = vector.shape_cast %76 : vector<16x32xf32> to vector<2x8x32xf32>
    %78 = vector.extract_strided_slice %57 {offsets = [0, 320], sizes = [16, 32], strides = [1, 1]} : vector<16x384xf32> to vector<16x32xf32>
    %79 = vector.shape_cast %78 : vector<16x32xf32> to vector<2x8x32xf32>
    %80 = vector.extract_strided_slice %57 {offsets = [0, 96], sizes = [16, 32], strides = [1, 1]} : vector<16x384xf32> to vector<16x32xf32>
    %81 = vector.shape_cast %80 : vector<16x32xf32> to vector<2x8x32xf32>
    %82 = vector.extract_strided_slice %57 {offsets = [0, 224], sizes = [16, 32], strides = [1, 1]} : vector<16x384xf32> to vector<16x32xf32>
    %83 = vector.shape_cast %82 : vector<16x32xf32> to vector<2x8x32xf32>
    %84 = vector.extract_strided_slice %57 {offsets = [0, 352], sizes = [16, 32], strides = [1, 1]} : vector<16x384xf32> to vector<16x32xf32>
    %85 = vector.shape_cast %84 : vector<16x32xf32> to vector<2x8x32xf32>
    %86 = tpu.concatenate %63, %69, %75, %81 in 0 : vector<2x8x32xf32>, vector<2x8x32xf32>, vector<2x8x32xf32>, vector<2x8x32xf32> -> vector<8x8x32xf32>
    %87 = arith.truncf %86 : vector<8x8x32xf32> to vector<8x8x32xbf16>
    %88 = tpu.concatenate %65, %71, %77, %83 in 0 : vector<2x8x32xf32>, vector<2x8x32xf32>, vector<2x8x32xf32>, vector<2x8x32xf32> -> vector<8x8x32xf32>
    %89 = arith.truncf %88 : vector<8x8x32xf32> to vector<8x8x32xbf16>
    %90 = tpu.concatenate %67, %73, %79, %85 in 0 : vector<2x8x32xf32>, vector<2x8x32xf32>, vector<2x8x32xf32>, vector<2x8x32xf32> -> vector<8x8x32xf32>
    %91 = arith.truncf %90 : vector<8x8x32xf32> to vector<8x8x32xbf16>
    "tpu.trace_start"() <{level = 10 : i32, message = "nqd,nkd->nqk"}> : () -> ()
    %cst_44 = arith.constant dense<0.000000e+00> : vector<8x8x8xf32>
    %92 = tpu.matmul %87, %89, %cst_44 {dimension_numbers = #tpu.dot_dimension_numbers<[2], [2], [1], [1], [0, 0, 0, 1, 1, 1], [0], [0]>} : vector<8x8x32xbf16>, vector<8x8x32xbf16>, vector<8x8x8xf32> -> vector<8x8x8xf32>
    "tpu.trace_stop"() : () -> ()
    %cst_45 = arith.constant 0.176776692 : f32
    %93 = vector.broadcast %cst_45 : f32 to vector<8x8x8xf32>
    %94 = arith.mulf %92, %93 : vector<8x8x8xf32>
    %cst_46 = arith.constant -1.000000e+30 : f32
    %95 = vector.shape_cast %61 : vector<1x8x8xi1> to vector<1x8x8xi1>
    %96 = vector.broadcast %95 : vector<1x8x8xi1> to vector<8x8x8xi1>
    %97 = vector.broadcast %cst_46 : f32 to vector<8x8x8xf32>
    %98 = arith.select %96, %94, %97 : vector<8x8x8xi1>, vector<8x8x8xf32>
    %cst_47 = arith.constant dense<0xFF800000> : vector<8x8xf32>
    %99 = vector.multi_reduction <maximumf>, %98, %cst_47 [2] : vector<8x8x8xf32> to vector<8x8xf32>
    %100 = vector.shape_cast %99 : vector<8x8xf32> to vector<8x8x1xf32>
    %101 = vector.broadcast %100 : vector<8x8x1xf32> to vector<8x8x8xf32>
    %102 = arith.subf %98, %101 : vector<8x8x8xf32>
    %103 = math.exp %102 : vector<8x8x8xf32>
    %cst_48 = arith.constant dense<0.000000e+00> : vector<8x8xf32>
    %104 = vector.multi_reduction <add>, %103, %cst_48 [2] : vector<8x8x8xf32> to vector<8x8xf32>
    %105 = vector.shape_cast %104 : vector<8x8xf32> to vector<8x8x1xf32>
    %106 = tpu.reciprocal %105 {approx = true} : vector<8x8x1xf32> -> vector<8x8x1xf32>
    %107 = vector.broadcast %106 : vector<8x8x1xf32> to vector<8x8x8xf32>
    %108 = arith.mulf %103, %107 : vector<8x8x8xf32>
    %109 = arith.truncf %108 : vector<8x8x8xf32> to vector<8x8x8xbf16>
    "tpu.trace_start"() <{level = 10 : i32, message = "nqk,nkd->nqd"}> : () -> ()
    %cst_49 = arith.constant dense<0.000000e+00> : vector<8x8x32xf32>
    %110 = tpu.matmul %109, %91, %cst_49 {dimension_numbers = #tpu.dot_dimension_numbers<[2], [1], [1], [2], [0, 0, 0, 1, 1, 2], [0], [0]>} : vector<8x8x8xbf16>, vector<8x8x32xbf16>, vector<8x8x32xf32> -> vector<8x8x32xf32>
    "tpu.trace_stop"() : () -> ()
    %111 = vector.extract_strided_slice %110 {offsets = [0, 0, 0], sizes = [2, 8, 32], strides = [1, 1, 1]} : vector<8x8x32xf32> to vector<2x8x32xf32>
    %112 = vector.shape_cast %111 : vector<2x8x32xf32> to vector<16x32xf32>
    %113 = vector.extract_strided_slice %110 {offsets = [2, 0, 0], sizes = [2, 8, 32], strides = [1, 1, 1]} : vector<8x8x32xf32> to vector<2x8x32xf32>
    %114 = vector.shape_cast %113 : vector<2x8x32xf32> to vector<16x32xf32>
    %115 = vector.extract_strided_slice %110 {offsets = [4, 0, 0], sizes = [2, 8, 32], strides = [1, 1, 1]} : vector<8x8x32xf32> to vector<2x8x32xf32>
    %116 = vector.shape_cast %115 : vector<2x8x32xf32> to vector<16x32xf32>
    %117 = vector.extract_strided_slice %110 {offsets = [6, 0, 0], sizes = [2, 8, 32], strides = [1, 1, 1]} : vector<8x8x32xf32> to vector<2x8x32xf32>
    %118 = vector.shape_cast %117 : vector<2x8x32xf32> to vector<16x32xf32>
    %119 = tpu.concatenate %112, %114, %116, %118 in 1 : vector<16x32xf32>, vector<16x32xf32>, vector<16x32xf32>, vector<16x32xf32> -> vector<16x128xf32>
    %120 = arith.truncf %119 : vector<16x128xf32> to vector<16x128xbf16>
    %cst_50 = arith.constant dense<0.000000e+00> : vector<16x128xf32>
    %121 = tpu.matmul %120, %12, %cst_50 {dimension_numbers = #tpu.dot_dimension_numbers<[1], [0], [0], [1], [0, 0, 1, 1], [], []>} : vector<16x128xbf16>, vector<128x128xbf16>, vector<16x128xf32> -> vector<16x128xf32>
    %122 = arith.extf %14 : vector<1x128xbf16> to vector<1x128xf32>
    %123 = vector.broadcast %122 : vector<1x128xf32> to vector<16x128xf32>
    %124 = arith.addf %121, %123 : vector<16x128xf32>
    %125 = arith.addf %28, %124 : vector<16x128xf32>
    %cst_51 = arith.constant dense<0.000000e+00> : vector<16xf32>
    %126 = vector.multi_reduction <add>, %125, %cst_51 [1] : vector<16x128xf32> to vector<16xf32>
    %127 = vector.shape_cast %126 : vector<16xf32> to vector<16x1xf32>
    %cst_52 = arith.constant 1.280000e+02 : f32
    %128 = vector.broadcast %cst_52 : f32 to vector<16x1xf32>
    %129 = arith.divf %127, %128 : vector<16x1xf32>
    %130 = vector.broadcast %129 : vector<16x1xf32> to vector<16x128xf32>
    %131 = arith.subf %125, %130 : vector<16x128xf32>
    %132 = arith.mulf %131, %131 : vector<16x128xf32>
    %cst_53 = arith.constant dense<0.000000e+00> : vector<16xf32>
    %133 = vector.multi_reduction <add>, %132, %cst_53 [1] : vector<16x128xf32> to vector<16xf32>
    %134 = vector.shape_cast %133 : vector<16xf32> to vector<16x1xf32>
    %cst_54 = arith.constant 1.280000e+02 : f32
    %135 = vector.broadcast %cst_54 : f32 to vector<16x1xf32>
    %136 = arith.divf %134, %135 : vector<16x1xf32>
    %137 = vector.broadcast %129 : vector<16x1xf32> to vector<16x128xf32>
    %138 = arith.subf %125, %137 : vector<16x128xf32>
    %cst_55 = arith.constant 9.99999974E-6 : f32
    %139 = vector.broadcast %cst_55 : f32 to vector<16x1xf32>
    %140 = arith.addf %136, %139 : vector<16x1xf32>
    %141 = math.rsqrt %140 : vector<16x1xf32>
    %142 = vector.broadcast %141 : vector<16x1xf32> to vector<16x128xf32>
    %143 = arith.mulf %138, %142 : vector<16x128xf32>
    %144 = arith.extf %16 : vector<1x128xbf16> to vector<1x128xf32>
    %145 = vector.broadcast %144 : vector<1x128xf32> to vector<16x128xf32>
    %146 = arith.mulf %143, %145 : vector<16x128xf32>
    %147 = arith.extf %18 : vector<1x128xbf16> to vector<1x128xf32>
    %148 = vector.broadcast %147 : vector<1x128xf32> to vector<16x128xf32>
    %149 = arith.addf %146, %148 : vector<16x128xf32>
    %150 = arith.truncf %149 : vector<16x128xf32> to vector<16x128xbf16>
    %cst_56 = arith.constant dense<0.000000e+00> : vector<16x512xf32>
    %151 = tpu.matmul %150, %20, %cst_56 {dimension_numbers = #tpu.dot_dimension_numbers<[1], [0], [0], [1], [0, 0, 1, 1], [], []>} : vector<16x128xbf16>, vector<128x512xbf16>, vector<16x512xf32> -> vector<16x512xf32>
    %152 = arith.extf %22 : vector<1x512xbf16> to vector<1x512xf32>
    %153 = vector.broadcast %152 : vector<1x512xf32> to vector<16x512xf32>
    %154 = arith.addf %151, %153 : vector<16x512xf32>
    %cst_57 = arith.constant 1.702000e+00 : f32
    %155 = vector.broadcast %cst_57 : f32 to vector<16x512xf32>
    %156 = arith.mulf %155, %154 : vector<16x512xf32>
    %157 = arith.negf %156 : vector<16x512xf32>
    %158 = math.exp %157 : vector<16x512xf32>
    %cst_58 = arith.constant 1.000000e+00 : f32
    %159 = vector.broadcast %cst_58 : f32 to vector<16x512xf32>
    %160 = arith.addf %159, %158 : vector<16x512xf32>
    %161 = arith.divf %159, %160 : vector<16x512xf32>
    %162 = arith.mulf %154, %161 : vector<16x512xf32>
    %163 = arith.truncf %162 : vector<16x512xf32> to vector<16x512xbf16>
    %cst_59 = arith.constant dense<0.000000e+00> : vector<16x128xf32>
    %164 = tpu.matmul %163, %24, %cst_59 {dimension_numbers = #tpu.dot_dimension_numbers<[1], [0], [0], [1], [0, 0, 1, 1], [], []>} : vector<16x512xbf16>, vector<512x128xbf16>, vector<16x128xf32> -> vector<16x128xf32>
    %165 = arith.extf %26 : vector<1x128xbf16> to vector<1x128xf32>
    %166 = vector.broadcast %165 : vector<1x128xf32> to vector<16x128xf32>
    %167 = arith.addf %164, %166 : vector<16x128xf32>
    %168 = arith.addf %125, %167 : vector<16x128xf32>
    %169 = vector.shape_cast %168 : vector<16x128xf32> to vector<2x8x128xf32>
    %c0_60 = arith.constant 0 : index
    %c0_61 = arith.constant 0 : index
    %c0_62 = arith.constant 0 : index
    %170 = vector.load %arg15[%c0_60, %c0_61, %c0_62] : memref<2x8x128xf32, #tpu.memory_space<vmem>>, vector<2x8x128xf32>
    tpu.vector_store %arg15[%c0_60, %c0_61, %c0_62], %169 {strides = array<i32>} : memref<2x8x128xf32, #tpu.memory_space<vmem>>, vector<2x8x128xf32>,
    %c0_i32_63 = arith.constant 0 : i32
    %171 = arith.cmpi eq, %arg0, %c0_i32_63 : i32
    %172 = arith.extui %171 : i1 to i32
    %c0_i32_64 = arith.constant 0 : i32
    %173 = arith.cmpi ne, %172, %c0_i32_64 : i32
    scf.if %173 {
      %174 = arith.truncf %169 : vector<2x8x128xf32> to vector<2x8x128xbf16>
      %c0_65 = arith.constant 0 : index
      %c0_66 = arith.constant 0 : index
      %c0_67 = arith.constant 0 : index
      %175 = vector.load %arg14[%c0_65, %c0_66, %c0_67] : memref<2x8x128xbf16, #tpu.memory_space<vmem>>, vector<2x8x128xbf16>
      tpu.vector_store %arg14[%c0_65, %c0_66, %c0_67], %174 {strides = array<i32>} : memref<2x8x128xbf16, #tpu.memory_space<vmem>>, vector<2x8x128xbf16>,
    } else {
    }
    return
  }
  func.func @transform_0(%arg0: i32) -> (i32, i32, i32) {
    %c0_i32 = arith.constant 0 : i32
    %c0_i32_0 = arith.constant 0 : i32
    %c0_i32_1 = arith.constant 0 : i32
    %c0_i32_2 = arith.constant 0 : i32
    return %c0_i32, %c0_i32_0, %c0_i32_1 : i32, i32, i32
  }
  func.func @transform_1(%arg0: i32) -> (i32, i32, i32) {
    %c0_i32 = arith.constant 0 : i32
    %c0_i32_0 = arith.constant 0 : i32
    %c0_i32_1 = arith.constant 0 : i32
    return %arg0, %c0_i32, %c0_i32_0 : i32, i32, i32
  }
  func.func @transform_2(%arg0: i32) -> (i32, i32, i32) {
    %c0_i32 = arith.constant 0 : i32
    %c0_i32_0 = arith.constant 0 : i32
    %c0_i32_1 = arith.constant 0 : i32
    return %arg0, %c0_i32, %c0_i32_0 : i32, i32, i32
  }
  func.func @transform_3(%arg0: i32) -> (i32, i32, i32) {
    %c0_i32 = arith.constant 0 : i32
    %c0_i32_0 = arith.constant 0 : i32
    %c0_i32_1 = arith.constant 0 : i32
    return %arg0, %c0_i32, %c0_i32_0 : i32, i32, i32
  }
  func.func @transform_4(%arg0: i32) -> (i32, i32, i32) {
    %c0_i32 = arith.constant 0 : i32
    %c0_i32_0 = arith.constant 0 : i32
    %c0_i32_1 = arith.constant 0 : i32
    return %arg0, %c0_i32, %c0_i32_0 : i32, i32, i32
  }
  func.func @transform_5(%arg0: i32) -> (i32, i32, i32) {
    %c0_i32 = arith.constant 0 : i32
    %c0_i32_0 = arith.constant 0 : i32
    %c0_i32_1 = arith.constant 0 : i32
    return %arg0, %c0_i32, %c0_i32_0 : i32, i32, i32
  }
  func.func @transform_6(%arg0: i32) -> (i32, i32, i32) {
    %c0_i32 = arith.constant 0 : i32
    %c0_i32_0 = arith.constant 0 : i32
    %c0_i32_1 = arith.constant 0 : i32
    return %arg0, %c0_i32, %c0_i32_0 : i32, i32, i32
  }
  func.func @transform_7(%arg0: i32) -> (i32, i32, i32) {
    %c0_i32 = arith.constant 0 : i32
    %c0_i32_0 = arith.constant 0 : i32
    %c0_i32_1 = arith.constant 0 : i32
    return %arg0, %c0_i32, %c0_i32_0 : i32, i32, i32
  }
  func.func @transform_8(%arg0: i32) -> (i32, i32, i32) {
    %c0_i32 = arith.constant 0 : i32
    %c0_i32_0 = arith.constant 0 : i32
    %c0_i32_1 = arith.constant 0 : i32
    return %arg0, %c0_i32, %c0_i32_0 : i32, i32, i32
  }
  func.func @transform_9(%arg0: i32) -> (i32, i32, i32) {
    %c0_i32 = arith.constant 0 : i32
    %c0_i32_0 = arith.constant 0 : i32
    %c0_i32_1 = arith.constant 0 : i32
    return %arg0, %c0_i32, %c0_i32_0 : i32, i32, i32
  }
  func.func @transform_10(%arg0: i32) -> (i32, i32, i32) {
    %c0_i32 = arith.constant 0 : i32
    %c0_i32_0 = arith.constant 0 : i32
    %c0_i32_1 = arith.constant 0 : i32
    return %arg0, %c0_i32, %c0_i32_0 : i32, i32, i32
  }
  func.func @transform_11(%arg0: i32) -> (i32, i32, i32) {
    %c0_i32 = arith.constant 0 : i32
    %c0_i32_0 = arith.constant 0 : i32
    %c0_i32_1 = arith.constant 0 : i32
    return %arg0, %c0_i32, %c0_i32_0 : i32, i32, i32
  }
  func.func @transform_12(%arg0: i32) -> (i32, i32, i32) {
    %c0_i32 = arith.constant 0 : i32
    %c0_i32_0 = arith.constant 0 : i32
    %c0_i32_1 = arith.constant 0 : i32
    return %arg0, %c0_i32, %c0_i32_0 : i32, i32, i32
  }
  func.func @transform_13(%arg0: i32) -> (i32, i32, i32) {
    %c0_i32 = arith.constant 0 : i32
    %c0_i32_0 = arith.constant 0 : i32
    %c0_i32_1 = arith.constant 0 : i32
    %c0_i32_2 = arith.constant 0 : i32
    return %c0_i32, %c0_i32_0, %c0_i32_1 : i32, i32, i32
  }
}

</mosaic_0001>

<llo_original>
// kernel: xl_text_encoder_forward.2
$region0: #{xl_text_encoder_forward.2}
  #allocation0 [shape = 'u32[]', space=smem, size = 0x4, offset = 0x4, fixed_abs, tag = 'smem constant byte address 0x4 - core index']
  #allocation1 [shape = 'u32[144,128]{1,0:T(1,128)}', space=vmem, size = 0x12000, scoped, tag = 'internal scratch']
  #allocation2 [shape = 'f32[2,8,128]{2,1,0:T(8,128)}', space=vmem, size = 0x2000, scoped, tag = 'scratch operand']
  %s0 = inlined_call_operand.vmem [shape: bf16[2,8,128], index: 0, kind: input, shape index: {}]
  %s1 = inlined_call_operand.vmem [shape: bf16[2,1,128], index: 1, kind: input, shape index: {}]
  %s2 = inlined_call_operand.vmem [shape: bf16[2,1,128], index: 2, kind: input, shape index: {}]
  %s3 = inlined_call_operand.vmem [shape: bf16[2,128,384], index: 3, kind: input, shape index: {}]
  %s4 = inlined_call_operand.vmem [shape: bf16[2,1,384], index: 4, kind: input, shape index: {}]
  %s5 = inlined_call_operand.vmem [shape: bf16[2,128,128], index: 5, kind: input, shape index: {}]
  %s6 = inlined_call_operand.vmem [shape: bf16[2,1,128], index: 6, kind: input, shape index: {}]
  %s7 = inlined_call_operand.vmem [shape: bf16[2,1,128], index: 7, kind: input, shape index: {}]
  %s8 = inlined_call_operand.vmem [shape: bf16[2,1,128], index: 8, kind: input, shape index: {}]
  %s9 = inlined_call_operand.vmem [shape: bf16[2,128,512], index: 9, kind: input, shape index: {}]
  %s10 = inlined_call_operand.vmem [shape: bf16[2,1,512], index: 10, kind: input, shape index: {}]
  %s11 = inlined_call_operand.vmem [shape: bf16[2,512,128], index: 11, kind: input, shape index: {}]
  %s12 = inlined_call_operand.vmem [shape: bf16[2,1,128], index: 12, kind: input, shape index: {}]
  %s13 = inlined_call_operand.vmem [shape: bf16[2,8,128], index: 13, kind: output, shape index: {}]
  %s14 = sld [smem:[#allocation0]]
  $region70: #{xl_text_encoder_forward.2} parent=0
    _
  %s16 = ssub.s32 1, %s14
  %s17 = scalar_select 0, %s16, %s14
  // Predicated region
  $region2: #{xl_text_encoder_forward.2} parent=0 // pred_check
    _
  $region3: #{xl_text_encoder_forward.2} parent=0 // pred_check_branch
    %19 = sbr.rel (0) target = $region5
  $region4: #{xl_text_encoder_forward.2} parent=0 // pred_region
    _
  $region5: #{xl_text_encoder_forward.2} parent=0 // pred_fallthru
    _
  // Predicated region
  $region6: #{xl_text_encoder_forward.2} parent=0 // pred_check
    _
  $region7: #{xl_text_encoder_forward.2} parent=0 // pred_check_branch
    %21 = sbr.rel (0) target = $region9
  $region8: #{xl_text_encoder_forward.2} parent=0 // pred_region
    _
  $region9: #{xl_text_encoder_forward.2} parent=0 // pred_fallthru
    _
  // Predicated region
  $region10: #{xl_text_encoder_forward.2} parent=0 // pred_check
    _
  $region11: #{xl_text_encoder_forward.2} parent=0 // pred_check_branch
    %23 = sbr.rel (0) target = $region13
  $region12: #{xl_text_encoder_forward.2} parent=0 // pred_region
    _
  $region13: #{xl_text_encoder_forward.2} parent=0 // pred_fallthru
    _
  // Predicated region
  $region14: #{xl_text_encoder_forward.2} parent=0 // pred_check
    _
  $region15: #{xl_text_encoder_forward.2} parent=0 // pred_check_branch
    %25 = sbr.rel (0) target = $region17
  $region16: #{xl_text_encoder_forward.2} parent=0 // pred_region
    _
  $region17: #{xl_text_encoder_forward.2} parent=0 // pred_fallthru
    _
  // Predicated region
  $region18: #{xl_text_encoder_forward.2} parent=0 // pred_check
    _
  $region19: #{xl_text_encoder_forward.2} parent=0 // pred_check_branch
    %27 = sbr.rel (0) target = $region21
  $region20: #{xl_text_encoder_forward.2} parent=0 // pred_region
    _
  $region21: #{xl_text_encoder_forward.2} parent=0 // pred_fallthru
    _
  // Predicated region
  $region22: #{xl_text_encoder_forward.2} parent=0 // pred_check
    _
  $region23: #{xl_text_encoder_forward.2} parent=0 // pred_check_branch
    %29 = sbr.rel (0) target = $region25
  $region24: #{xl_text_encoder_forward.2} parent=0 // pred_region
    _
  $region25: #{xl_text_encoder_forward.2} parent=0 // pred_fallthru
    _
  // Predicated region
  $region26: #{xl_text_encoder_forward.2} parent=0 // pred_check
    _
  $region27: #{xl_text_encoder_forward.2} parent=0 // pred_check_branch
    %31 = sbr.rel (0) target = $region29
  $region28: #{xl_text_encoder_forward.2} parent=0 // pred_region
    _
  $region29: #{xl_text_encoder_forward.2} parent=0 // pred_fallthru
    _
  // Predicated region
  $region30: #{xl_text_encoder_forward.2} parent=0 // pred_check
    _
  $region31: #{xl_text_encoder_forward.2} parent=0 // pred_check_branch
    %33 = sbr.rel (0) target = $region33
  $region32: #{xl_text_encoder_forward.2} parent=0 // pred_region
    _
  $region33: #{xl_text_encoder_forward.2} parent=0 // pred_fallthru
    _
  // Predicated region
  $region34: #{xl_text_encoder_forward.2} parent=0 // pred_check
    _
  $region35: #{xl_text_encoder_forward.2} parent=0 // pred_check_branch
    %35 = sbr.rel (0) target = $region37
  $region36: #{xl_text_encoder_forward.2} parent=0 // pred_region
    _
  $region37: #{xl_text_encoder_forward.2} parent=0 // pred_fallthru
    _
  // Predicated region
  $region38: #{xl_text_encoder_forward.2} parent=0 // pred_check
    _
  $region39: #{xl_text_encoder_forward.2} parent=0 // pred_check_branch
    %37 = sbr.rel (0) target = $region41
  $region40: #{xl_text_encoder_forward.2} parent=0 // pred_region
    _
  $region41: #{xl_text_encoder_forward.2} parent=0 // pred_fallthru
    _
  // Predicated region
  $region42: #{xl_text_encoder_forward.2} parent=0 // pred_check
    _
  $region43: #{xl_text_encoder_forward.2} parent=0 // pred_check_branch
    %39 = sbr.rel (0) target = $region45
  $region44: #{xl_text_encoder_forward.2} parent=0 // pred_region
    _
  $region45: #{xl_text_encoder_forward.2} parent=0 // pred_fallthru
    _
  // Predicated region
  $region46: #{xl_text_encoder_forward.2} parent=0 // pred_check
    _
  $region47: #{xl_text_encoder_forward.2} parent=0 // pred_check_branch
    %41 = sbr.rel (0) target = $region49
  $region48: #{xl_text_encoder_forward.2} parent=0 // pred_region
    _
  $region49: #{xl_text_encoder_forward.2} parent=0 // pred_fallthru
    _
  // Predicated region
  $region50: #{xl_text_encoder_forward.2} parent=0 // pred_check
    _
  $region51: #{xl_text_encoder_forward.2} parent=0 // pred_check_branch
    %43 = sbr.rel (0) target = $region53
  $region52: #{xl_text_encoder_forward.2} parent=0 // pred_region
    _
  $region53: #{xl_text_encoder_forward.2} parent=0 // pred_fallthru
    _
  %p45 = scmp.eq.s32.totalorder 0, 0
  // Predicated region
  $region54: #{xl_text_encoder_forward.2} parent=0 // pred_check
    %p46 = pneg %p45
  $region55: #{xl_text_encoder_forward.2} parent=0 // pred_check_branch
    %48 = sbr.rel (%p46) target = $region57
  $region56: #{xl_text_encoder_forward.2} parent=0 // pred_region
    %v49 = vld [vmem:[%s0] sm:$0xf]
    %v50 = vld [vmem:[%s0 + $0x4] sm:$0xf]
    %v51 = vunpack.c.l.bf16 %v49
    %v52 = vunpack.c.l.bf16 %v50
    %53 = vst [vmem:[#allocation2] sm:$0xff] %v51
    %54 = vst [vmem:[#allocation2 + $0x8] sm:$0xff] %v52
  $region57: #{xl_text_encoder_forward.2} parent=0 // pred_fallthru
    _
  %v55 = vld [vmem:[%s1] sm:$0x1]
  %v56 = vld [vmem:[%s2] sm:$0x1]
  %v57 = vld [vmem:[%s3] sm:$0xff]
  %v58 = vld [vmem:[%s3 + $0x8] sm:$0xf]
  %v59 = vld [vmem:[%s3 + $0xc] sm:$0xff]
  %v60 = vld [vmem:[%s3 + $0x14] sm:$0xf]
  %v61 = vld [vmem:[%s3 + $0x18] sm:$0xff]
  %v62 = vld [vmem:[%s3 + $0x20] sm:$0xf]
  %v63 = vld [vmem:[%s3 + $0x24] sm:$0xff]
  %v64 = vld [vmem:[%s3 + $0x2c] sm:$0xf]
  %v65 = vld [vmem:[%s3 + $0x30] sm:$0xff]
  %v66 = vld [vmem:[%s3 + $0x38] sm:$0xf]
  %v67 = vld [vmem:[%s3 + $0x3c] sm:$0xff]
  %v68 = vld [vmem:[%s3 + $0x44] sm:$0xf]
  %v69 = vld [vmem:[%s3 + $0x48] sm:$0xff]
  %v70 = vld [vmem:[%s3 + $0x50] sm:$0xf]
  %v71 = vld [vmem:[%s3 + $0x54] sm:$0xff]
  %v72 = vld [vmem:[%s3 + $0x5c] sm:$0xf]
  %v73 = vld [vmem:[%s3 + $0x60] sm:$0xff]
  %v74 = vld [vmem:[%s3 + $0x68] sm:$0xf]
  %v75 = vld [vmem:[%s3 + $0x6c] sm:$0xff]
  %v76 = vld [vmem:[%s3 + $0x74] sm:$0xf]
  %v77 = vld [vmem:[%s3 + $0x78] sm:$0xff]
  %v78 = vld [vmem:[%s3 + $0x80] sm:$0xf]
  %v79 = vld [vmem:[%s3 + $0x84] sm:$0xff]
  %v80 = vld [vmem:[%s3 + $0x8c] sm:$0xf]
  %v81 = vld [vmem:[%s3 + $0x90] sm:$0xff]
  %v82 = vld [vmem:[%s3 + $0x98] sm:$0xf]
  %v83 = vld [vmem:[%s3 + $0x9c] sm:$0xff]
  %v84 = vld [vmem:[%s3 + $0xa4] sm:$0xf]
  %v85 = vld [vmem:[%s3 + $0xa8] sm:$0xff]
  %v86 = vld [vmem:[%s3 + $0xb0] sm:$0xf]
  %v87 = vld [vmem:[%s3 + $0xb4] sm:$0xff]
  %v88 = vld [vmem:[%s3 + $0xbc] sm:$0xf]
  %v89 = vld [vmem:[%s4] sm:$0x7]
  %v90 = vld [vmem:[%s5] sm:$0xf]
  %v91 = vld [vmem:[%s5 + $0x4] sm:$0xf]
  %v92 = vld [vmem:[%s5 + $0x8] sm:$0xf]
  %v93 = vld [vmem:[%s5 + $0xc] sm:$0xf]
  %v94 = vld [vmem:[%s5 + $0x10] sm:$0xf]
  %v95 = vld [vmem:[%s5 + $0x14] sm:$0xf]
  %v96 = vld [vmem:[%s5 + $0x18] sm:$0xf]
  %v97 = vld [vmem:[%s5 + $0x1c] sm:$0xf]
  %v98 = vld [vmem:[%s5 + $0x20] sm:$0xf]
  %v99 = vld [vmem:[%s5 + $0x24] sm:$0xf]
  %v100 = vld [vmem:[%s5 + $0x28] sm:$0xf]
  %v101 = vld [vmem:[%s5 + $0x2c] sm:$0xf]
  %v102 = vld [vmem:[%s5 + $0x30] sm:$0xf]
  %v103 = vld [vmem:[%s5 + $0x34] sm:$0xf]
  %v104 = vld [vmem:[%s5 + $0x38] sm:$0xf]
  %v105 = vld [vmem:[%s5 + $0x3c] sm:$0xf]
  %v106 = vld [vmem:[%s6] sm:$0x1]
  %v107 = vld [vmem:[%s7] sm:$0x1]
  %v108 = vld [vmem:[%s8] sm:$0x1]
  %v109 = vld [vmem:[%s9] sm:$0xff]
  %v110 = vld [vmem:[%s9 + $0x8] sm:$0xff]
  %v111 = vld [vmem:[%s9 + $0x10] sm:$0xff]
  %v112 = vld [vmem:[%s9 + $0x18] sm:$0xff]
  %v113 = vld [vmem:[%s9 + $0x20] sm:$0xff]
  %v114 = vld [vmem:[%s9 + $0x28] sm:$0xff]
  %v115 = vld [vmem:[%s9 + $0x30] sm:$0xff]
  %v116 = vld [vmem:[%s9 + $0x38] sm:$0xff]
  %v117 = vld [vmem:[%s9 + $0x40] sm:$0xff]
  %v118 = vld [vmem:[%s9 + $0x48] sm:$0xff]
  %v119 = vld [vmem:[%s9 + $0x50] sm:$0xff]
  %v120 = vld [vmem:[%s9 + $0x58] sm:$0xff]
  %v121 = vld [vmem:[%s9 + $0x60] sm:$0xff]
  %v122 = vld [vmem:[%s9 + $0x68] sm:$0xff]
  %v123 = vld [vmem:[%s9 + $0x70] sm:$0xff]
  %v124 = vld [vmem:[%s9 + $0x78] sm:$0xff]
  %v125 = vld [vmem:[%s9 + $0x80] sm:$0xff]
  %v126 = vld [vmem:[%s9 + $0x88] sm:$0xff]
  %v127 = vld [vmem:[%s9 + $0x90] sm:$0xff]
  %v128 = vld [vmem:[%s9 + $0x98] sm:$0xff]
  %v129 = vld [vmem:[%s9 + $0xa0] sm:$0xff]
  %v130 = vld [vmem:[%s9 + $0xa8] sm:$0xff]
  %v131 = vld [vmem:[%s9 + $0xb0] sm:$0xff]
  %v132 = vld [vmem:[%s9 + $0xb8] sm:$0xff]
  %v133 = vld [vmem:[%s9 + $0xc0] sm:$0xff]
  %v134 = vld [vmem:[%s9 + $0xc8] sm:$0xff]
  %v135 = vld [vmem:[%s9 + $0xd0] sm:$0xff]
  %v136 = vld [vmem:[%s9 + $0xd8] sm:$0xff]
  %v137 = vld [vmem:[%s9 + $0xe0] sm:$0xff]
  %v138 = vld [vmem:[%s9 + $0xe8] sm:$0xff]
  %v139 = vld [vmem:[%s9 + $0xf0] sm:$0xff]
  %v140 = vld [vmem:[%s9 + $0xf8] sm:$0xff]
  %v141 = vld [vmem:[%s10] sm:$0xf]
  %v142 = vld [vmem:[%s11] sm:$0xf]
  %v143 = vld [vmem:[%s11 + $0x4] sm:$0xf]
  %v144 = vld [vmem:[%s11 + $0x8] sm:$0xf]
  %v145 = vld [vmem:[%s11 + $0xc] sm:$0xf]
  %v146 = vld [vmem:[%s11 + $0x10] sm:$0xf]
  %v147 = vld [vmem:[%s11 + $0x14] sm:$0xf]
  %v148 = vld [vmem:[%s11 + $0x18] sm:$0xf]
  %v149 = vld [vmem:[%s11 + $0x1c] sm:$0xf]
  %v150 = vld [vmem:[%s11 + $0x20] sm:$0xf]
  %v151 = vld [vmem:[%s11 + $0x24] sm:$0xf]
  %v152 = vld [vmem:[%s11 + $0x28] sm:$0xf]
  %v153 = vld [vmem:[%s11 + $0x2c] sm:$0xf]
  %v154 = vld [vmem:[%s11 + $0x30] sm:$0xf]
  %v155 = vld [vmem:[%s11 + $0x34] sm:$0xf]
  %v156 = vld [vmem:[%s11 + $0x38] sm:$0xf]
  %v157 = vld [vmem:[%s11 + $0x3c] sm:$0xf]
  %v158 = vld [vmem:[%s11 + $0x40] sm:$0xf]
  %v159 = vld [vmem:[%s11 + $0x44] sm:$0xf]
  %v160 = vld [vmem:[%s11 + $0x48] sm:$0xf]
  %v161 = vld [vmem:[%s11 + $0x4c] sm:$0xf]
  %v162 = vld [vmem:[%s11 + $0x50] sm:$0xf]
  %v163 = vld [vmem:[%s11 + $0x54] sm:$0xf]
  %v164 = vld [vmem:[%s11 + $0x58] sm:$0xf]
  %v165 = vld [vmem:[%s11 + $0x5c] sm:$0xf]
  %v166 = vld [vmem:[%s11 + $0x60] sm:$0xf]
  %v167 = vld [vmem:[%s11 + $0x64] sm:$0xf]
  %v168 = vld [vmem:[%s11 + $0x68] sm:$0xf]
  %v169 = vld [vmem:[%s11 + $0x6c] sm:$0xf]
  %v170 = vld [vmem:[%s11 + $0x70] sm:$0xf]
  %v171 = vld [vmem:[%s11 + $0x74] sm:$0xf]
  %v172 = vld [vmem:[%s11 + $0x78] sm:$0xf]
  %v173 = vld [vmem:[%s11 + $0x7c] sm:$0xf]
  %v174 = vld [vmem:[%s11 + $0x80] sm:$0xf]
  %v175 = vld [vmem:[%s11 + $0x84] sm:$0xf]
  %v176 = vld [vmem:[%s11 + $0x88] sm:$0xf]
  %v177 = vld [vmem:[%s11 + $0x8c] sm:$0xf]
  %v178 = vld [vmem:[%s11 + $0x90] sm:$0xf]
  %v179 = vld [vmem:[%s11 + $0x94] sm:$0xf]
  %v180 = vld [vmem:[%s11 + $0x98] sm:$0xf]
  %v181 = vld [vmem:[%s11 + $0x9c] sm:$0xf]
  %v182 = vld [vmem:[%s11 + $0xa0] sm:$0xf]
  %v183 = vld [vmem:[%s11 + $0xa4] sm:$0xf]
  %v184 = vld [vmem:[%s11 + $0xa8] sm:$0xf]
  %v185 = vld [vmem:[%s11 + $0xac] sm:$0xf]
  %v186 = vld [vmem:[%s11 + $0xb0] sm:$0xf]
  %v187 = vld [vmem:[%s11 + $0xb4] sm:$0xf]
  %v188 = vld [vmem:[%s11 + $0xb8] sm:$0xf]
  %v189 = vld [vmem:[%s11 + $0xbc] sm:$0xf]
  %v190 = vld [vmem:[%s11 + $0xc0] sm:$0xf]
  %v191 = vld [vmem:[%s11 + $0xc4] sm:$0xf]
  %v192 = vld [vmem:[%s11 + $0xc8] sm:$0xf]
  %v193 = vld [vmem:[%s11 + $0xcc] sm:$0xf]
  %v194 = vld [vmem:[%s11 + $0xd0] sm:$0xf]
  %v195 = vld [vmem:[%s11 + $0xd4] sm:$0xf]
  %v196 = vld [vmem:[%s11 + $0xd8] sm:$0xf]
  %v197 = vld [vmem:[%s11 + $0xdc] sm:$0xf]
  %v198 = vld [vmem:[%s11 + $0xe0] sm:$0xf]
  %v199 = vld [vmem:[%s11 + $0xe4] sm:$0xf]
  %v200 = vld [vmem:[%s11 + $0xe8] sm:$0xf]
  %v201 = vld [vmem:[%s11 + $0xec] sm:$0xf]
  %v202 = vld [vmem:[%s11 + $0xf0] sm:$0xf]
  %v203 = vld [vmem:[%s11 + $0xf4] sm:$0xf]
  %v204 = vld [vmem:[%s11 + $0xf8] sm:$0xf]
  %v205 = vld [vmem:[%s11 + $0xfc] sm:$0xf]
  %v206 = vld [vmem:[%s12] sm:$0x1]
  %v207 = vld [vmem:[#allocation2] sm:$0xff]
  %v208 = vld [vmem:[#allocation2 + $0x8] sm:$0xff]
  %209 = vadd.xlane.f32.xlu0 %v207
  %v210 = vpop.xlane.xlu0 %209
  %211 = vadd.xlane.f32.xlu0 %v208
  %v212 = vpop.xlane.xlu0 %211
  %v213 = vrcp.pop 128.0
  %v214 = vmul.f32 %v210, %v213
  %v215 = vmul.f32 %v212, %v213
  %v216 = vsub.f32 %v207, %v214
  %v217 = vsub.f32 %v208, %v215
  %v218 = vmul.f32 %v216, %v216
  %v219 = vmul.f32 %v217, %v217
  %220 = vadd.xlane.f32.xlu0 %v218
  %v221 = vpop.xlane.xlu0 %220
  %222 = vadd.xlane.f32.xlu0 %v219
  %v223 = vpop.xlane.xlu0 %222
  %v224 = vmul.f32 %v221, %v213
  %v225 = vmul.f32 %v223, %v213
  %v226 = vadd.f32 %v224, 1e-05
  %v227 = vadd.f32 %v225, 1e-05
  %v228 = vrsqrt.pop %v226
  %v229 = vrsqrt.pop %v227
  %v230 = vmul.f32 %v216, %v228
  %v231 = vmul.f32 %v217, %v229
  %v232 = vunpack.c.l.bf16 %v55
  %v233 = vlaneseq
  %v234 = vshrl.u32 %v233, 7
  %v235 = vsub.s32 0, %v234
  %v236 = vrot.slane %v232, %v235
  %v237 = vmul.f32 %v230, %v236
  %v238 = vmul.f32 %v231, %v236
  %v239 = vunpack.c.l.bf16 %v56
  %v240 = vlaneseq
  %v241 = vshrl.u32 %v240, 7
  %v242 = vsub.s32 0, %v241
  %v243 = vrot.slane %v239, %v242
  %v244 = vadd.f32 %v237, %v243
  %v245 = vadd.f32 %v238, %v243
  %v246 = vpack.c.bf16 %v245, %v244
  %v247 = vunpack.c.l.bf16 %v89
  %v249 = vlaneseq
  %v250 = vshrl.u32 %v249, 7
  %v251 = vsub.s32 0, %v250
  %v252 = vrot.slane %v247, %v251
  %v253 = vlaneseq
  %v254 = vshrl.u32 %v253, 7
  %v255 = vsub.s32 2, %v254
  %v256 = vrot.slane %v247, %v255
  %v257 = vlaneseq
  %v258 = vshrl.u32 %v257, 7
  %v259 = vsub.s32 4, %v258
  %v260 = vrot.slane %v247, %v259
  %v264 = vlaneseq
  %v265 = vshrl.u32 %v264, 7
  %v266 = vsub.s32 0, %v265
  %v267 = vrot.slane %v252, %v266
  %v268 = vlaneseq
  %v269 = vshrl.u32 %v268, 7
  %v270 = vsub.s32 0, %v269
  %v271 = vrot.slane %v256, %v270
  %v272 = vlaneseq
  %v273 = vshrl.u32 %v272, 7
  %v274 = vsub.s32 0, %v273
  %v275 = vrot.slane %v260, %v274
  %v308 = vunpack.c.l.b16 %v57
  %v309 = vunpack.c.h.b16 %v57
  %v310 = vunpack.c.l.b16 %v58
  %v311 = vunpack.c.l.b16 %v59
  %v312 = vunpack.c.h.b16 %v59
  %v313 = vunpack.c.l.b16 %v60
  %v314 = vunpack.c.l.b16 %v61
  %v315 = vunpack.c.h.b16 %v61
  %v316 = vunpack.c.l.b16 %v62
  %v317 = vunpack.c.l.b16 %v63
  %v318 = vunpack.c.h.b16 %v63
  %v319 = vunpack.c.l.b16 %v64
  %v320 = vunpack.c.l.b16 %v65
  %v321 = vunpack.c.h.b16 %v65
  %v322 = vunpack.c.l.b16 %v66
  %v323 = vunpack.c.l.b16 %v67
  %v324 = vunpack.c.h.b16 %v67
  %v325 = vunpack.c.l.b16 %v68
  %v326 = vunpack.c.l.b16 %v69
  %v327 = vunpack.c.h.b16 %v69
  %v328 = vunpack.c.l.b16 %v70
  %v329 = vunpack.c.l.b16 %v71
  %v330 = vunpack.c.h.b16 %v71
  %v331 = vunpack.c.l.b16 %v72
  %v332 = vunpack.c.l.b16 %v73
  %v333 = vunpack.c.h.b16 %v73
  %v334 = vunpack.c.l.b16 %v74
  %v335 = vunpack.c.l.b16 %v75
  %v336 = vunpack.c.h.b16 %v75
  %v337 = vunpack.c.l.b16 %v76
  %v338 = vunpack.c.l.b16 %v77
  %v339 = vunpack.c.h.b16 %v77
  %v340 = vunpack.c.l.b16 %v78
  %v341 = vunpack.c.l.b16 %v79
  %v342 = vunpack.c.h.b16 %v79
  %v343 = vunpack.c.l.b16 %v80
  %v344 = vunpack.c.l.b16 %v81
  %v345 = vunpack.c.h.b16 %v81
  %v346 = vunpack.c.l.b16 %v82
  %v347 = vunpack.c.l.b16 %v83
  %v348 = vunpack.c.h.b16 %v83
  %v349 = vunpack.c.l.b16 %v84
  %v350 = vunpack.c.l.b16 %v85
  %v351 = vunpack.c.h.b16 %v85
  %v352 = vunpack.c.l.b16 %v86
  %v353 = vunpack.c.l.b16 %v87
  %v354 = vunpack.c.h.b16 %v87
  %v355 = vunpack.c.l.b16 %v88
  %v356 = vpack.c.b16 %v311, %v308
  %v357 = vpack.c.b16 %v312, %v309
  %v358 = vpack.c.b16 %v313, %v310
  %v359 = vpack.c.b16 %v317, %v314
  %v360 = vpack.c.b16 %v318, %v315
  %v361 = vpack.c.b16 %v319, %v316
  %v362 = vpack.c.b16 %v323, %v320
  %v363 = vpack.c.b16 %v324, %v321
  %v364 = vpack.c.b16 %v325, %v322
  %v365 = vpack.c.b16 %v329, %v326
  %v366 = vpack.c.b16 %v330, %v327
  %v367 = vpack.c.b16 %v331, %v328
  %v368 = vpack.c.b16 %v335, %v332
  %v369 = vpack.c.b16 %v336, %v333
  %v370 = vpack.c.b16 %v337, %v334
  %v371 = vpack.c.b16 %v341, %v338
  %v372 = vpack.c.b16 %v342, %v339
  %v373 = vpack.c.b16 %v343, %v340
  %v374 = vpack.c.b16 %v347, %v344
  %v375 = vpack.c.b16 %v348, %v345
  %v376 = vpack.c.b16 %v349, %v346
  %v377 = vpack.c.b16 %v353, %v350
  %v378 = vpack.c.b16 %v354, %v351
  %v379 = vpack.c.b16 %v355, %v352
  %404 = vmatprep.subr.bf16.mxu0 %v378
  %405 = vmatpush1.bf16.msra.mxu0 %v377
  %406 = vmatprep.subr.bf16.mxu0 %v375
  %407 = vmatpush1.bf16.msra.mxu0 %v374
  %408 = vmatprep.subr.bf16.mxu0 %v372
  %409 = vmatpush1.bf16.msra.mxu0 %v371
  %410 = vmatprep.subr.bf16.mxu0 %v369
  %411 = vmatpush1.bf16.msra.mxu0 %v368
  %412 = vmatprep.subr.bf16.mxu0 %v366
  %413 = vmatpush1.bf16.msra.mxu0 %v365
  %414 = vmatprep.subr.bf16.mxu0 %v363
  %415 = vmatpush1.bf16.msra.mxu0 %v362
  %416 = vmatprep.subr.bf16.mxu0 %v360
  %417 = vmatpush1.bf16.msra.mxu0 %v359
  %418 = vmatprep.subr.bf16.mxu0 %v357
  %419 = vmatpush1.bf16.msra.mxu0 %v356
  %420 = vmatprep.subr.bf16.mxu0 0
  %421 = vmatpush2.bf16.msra.mxu0 0
  %422 = vmatprep.subr.bf16.mxu0 0
  %423 = vmatpush2.bf16.msra.mxu0 0
  %424 = vmatprep.subr.bf16.mxu0 0
  %425 = vmatpush2.bf16.msra.mxu0 0
  %426 = vmatprep.subr.bf16.mxu0 0
  %427 = vmatpush2.bf16.msra.mxu0 0
  %428 = vmatprep.subr.bf16.mxu0 0
  %429 = vmatpush2.bf16.msra.mxu0 0
  %430 = vmatprep.subr.bf16.mxu0 0
  %431 = vmatpush2.bf16.msra.mxu0 0
  %432 = vmatprep.subr.bf16.mxu0 0
  %433 = vmatpush2.bf16.msra.mxu0 0
  %434 = vmatprep.subr.bf16.mxu0 0
  %435 = vmatpush2.bf16.msra.mxu0 0
  %436 = vmatprep.mubr.bf16.mxu0 0
  %437 = vmatmul.mubr.bf16.gmra.mxu0 %v246
  %v438 = vpop.f32.mrf.mxu0
  %v439 = vadd.f32 %v267, %v438
  %v440 = vpop.f32.mrf.mxu0
  %v441 = vadd.f32 %v271, %v440
  %v442 = vpop.f32.mrf.mxu0
  %v443 = vadd.f32 %v267, %v442
  %v444 = vpop.f32.mrf.mxu0
  %v445 = vadd.f32 %v271, %v444
  %446 = vdwg.mxu0
  %447 = vmatprep.subr.bf16.mxu0 0
  %448 = vmatpush1.bf16.msra.mxu0 %v379
  %449 = vmatprep.subr.bf16.mxu0 0
  %450 = vmatpush1.bf16.msra.mxu0 %v376
  %451 = vmatprep.subr.bf16.mxu0 0
  %452 = vmatpush1.bf16.msra.mxu0 %v373
  %453 = vmatprep.subr.bf16.mxu0 0
  %454 = vmatpush1.bf16.msra.mxu0 %v370
  %455 = vmatprep.subr.bf16.mxu0 0
  %456 = vmatpush1.bf16.msra.mxu0 %v367
  %457 = vmatprep.subr.bf16.mxu0 0
  %458 = vmatpush1.bf16.msra.mxu0 %v364
  %459 = vmatprep.subr.bf16.mxu0 0
  %460 = vmatpush1.bf16.msra.mxu0 %v361
  %461 = vmatprep.subr.bf16.mxu0 0
  %462 = vmatpush1.bf16.msra.mxu0 %v358
  %463 = vmatprep.subr.bf16.mxu0 0
  %464 = vmatpush2.bf16.msra.mxu0 0
  %465 = vmatprep.subr.bf16.mxu0 0
  %466 = vmatpush2.bf16.msra.mxu0 0
  %467 = vmatprep.subr.bf16.mxu0 0
  %468 = vmatpush2.bf16.msra.mxu0 0
  %469 = vmatprep.subr.bf16.mxu0 0
  %470 = vmatpush2.bf16.msra.mxu0 0
  %471 = vmatprep.subr.bf16.mxu0 0
  %472 = vmatpush2.bf16.msra.mxu0 0
  %473 = vmatprep.subr.bf16.mxu0 0
  %474 = vmatpush2.bf16.msra.mxu0 0
  %475 = vmatprep.subr.bf16.mxu0 0
  %476 = vmatpush2.bf16.msra.mxu0 0
  %477 = vmatprep.subr.bf16.mxu0 0
  %478 = vmatpush2.bf16.msra.mxu0 0
  %479 = vmatprep.mubr.bf16.mxu0 0
  %480 = vmatmul.mubr.bf16.gmra.mxu0 %v246
  %v481 = vpop.f32.mrf.mxu0
  %v482 = vadd.f32 %v275, %v481
  %v483 = vpop.f32.mrf.mxu0
  %v484 = vpop.f32.mrf.mxu0
  %v485 = vadd.f32 %v275, %v484
  %v486 = vpop.f32.mrf.mxu0
  %487 = vdwg.mxu0
  %v488 = vlaneseq
  %v489 = vshrl.u32 %v488, 7
  %v490 = vlaneseq
  %v491 = vand.u32 %v490, 127
  %vm492 = vcmp.le.s32.totalorder %v491, %v489
  %495 = vrot.lane.b32.xlu0 %v439, 96
  %v496 = vpop.permute.xlu0 %495
  %497 = vrot.lane.b32.xlu0 %v443, 96
  %v498 = vpop.permute.xlu0 %497
  %501 = vrot.lane.b32.xlu0 %v439, 64
  %v502 = vpop.permute.xlu0 %501
  %503 = vrot.lane.b32.xlu0 %v443, 64
  %v504 = vpop.permute.xlu0 %503
  %507 = vrot.lane.b32.xlu0 %v439, 32
  %v508 = vpop.permute.xlu0 %507
  %509 = vrot.lane.b32.xlu0 %v443, 32
  %v510 = vpop.permute.xlu0 %509
  %v513 = vpack.c.bf16 %v439, %v439
  %v514 = vpack.c.bf16 %v443, %v443
  %v515 = vpack.c.bf16 %v496, %v496
  %v516 = vpack.c.bf16 %v498, %v498
  %v517 = vpack.c.bf16 %v502, %v502
  %v518 = vpack.c.bf16 %v504, %v504
  %v519 = vpack.c.bf16 %v508, %v508
  %v520 = vpack.c.bf16 %v510, %v510
  %523 = vrot.lane.b32.xlu0 %v441, 96
  %v524 = vpop.permute.xlu0 %523
  %525 = vrot.lane.b32.xlu0 %v445, 96
  %v526 = vpop.permute.xlu0 %525
  %529 = vrot.lane.b32.xlu0 %v441, 64
  %v530 = vpop.permute.xlu0 %529
  %531 = vrot.lane.b32.xlu0 %v445, 64
  %v532 = vpop.permute.xlu0 %531
  %535 = vrot.lane.b32.xlu0 %v441, 32
  %v536 = vpop.permute.xlu0 %535
  %537 = vrot.lane.b32.xlu0 %v445, 32
  %v538 = vpop.permute.xlu0 %537
  %v541 = vpack.c.bf16 %v441, %v441
  %v542 = vpack.c.bf16 %v445, %v445
  %v543 = vpack.c.bf16 %v524, %v524
  %v544 = vpack.c.bf16 %v526, %v526
  %v545 = vpack.c.bf16 %v530, %v530
  %v546 = vpack.c.bf16 %v532, %v532
  %v547 = vpack.c.bf16 %v536, %v536
  %v548 = vpack.c.bf16 %v538, %v538
  %551 = vrot.lane.b32.xlu0 %v482, 96
  %v552 = vpop.permute.xlu0 %551
  %553 = vrot.lane.b32.xlu0 %v485, 96
  %v554 = vpop.permute.xlu0 %553
  %557 = vrot.lane.b32.xlu0 %v482, 64
  %v558 = vpop.permute.xlu0 %557
  %559 = vrot.lane.b32.xlu0 %v485, 64
  %v560 = vpop.permute.xlu0 %559
  %563 = vrot.lane.b32.xlu0 %v482, 32
  %v564 = vpop.permute.xlu0 %563
  %565 = vrot.lane.b32.xlu0 %v485, 32
  %v566 = vpop.permute.xlu0 %565
  %v569 = vpack.c.bf16 %v482, %v482
  %v570 = vpack.c.bf16 %v485, %v485
  %v571 = vpack.c.bf16 %v552, %v552
  %v572 = vpack.c.bf16 %v554, %v554
  %v573 = vpack.c.bf16 %v558, %v558
  %v574 = vpack.c.bf16 %v560, %v560
  %v575 = vpack.c.bf16 %v564, %v564
  %v576 = vpack.c.bf16 %v566, %v566
  %vm577 = vcmask 261120
  %v579 = vsel %vm577, %v513, 0
  %v582 = vsel %vm577, %v541, 0
  %584 = vmatprep.subr.bf16.mxu0 0
  %585 = vmatpush1.bf16.xpose.msra.mxu0 0
  %586 = vmatprep.subr.bf16.mxu0 0
  %587 = vmatpush1.bf16.xpose.msra.mxu0 0
  %588 = vmatprep.subr.bf16.mxu0 0
  %589 = vmatpush1.bf16.xpose.msra.mxu0 0
  %590 = vmatprep.subr.bf16.mxu0 0
  %591 = vmatpush1.bf16.xpose.msra.mxu0 0
  %592 = vmatprep.subr.bf16.mxu0 0
  %593 = vmatpush1.bf16.xpose.msra.mxu0 0
  %594 = vmatprep.subr.bf16.mxu0 0
  %595 = vmatpush1.bf16.xpose.msra.mxu0 0
  %596 = vmatprep.subr.bf16.mxu0 0
  %597 = vmatpush1.bf16.xpose.msra.mxu0 0
  %598 = vmatprep.subr.bf16.mxu0 0
  %599 = vmatpush1.bf16.xpose.msra.mxu0 %v582
  %600 = vmatprep.subr.bf16.mxu0 0
  %601 = vmatpush2.bf16.xpose.msra.mxu0 0
  %602 = vmatprep.subr.bf16.mxu0 0
  %603 = vmatpush2.bf16.xpose.msra.mxu0 0
  %604 = vmatprep.subr.bf16.mxu0 0
  %605 = vmatpush2.bf16.xpose.msra.mxu0 0
  %606 = vmatprep.subr.bf16.mxu0 0
  %607 = vmatpush2.bf16.xpose.msra.mxu0 0
  %608 = vmatprep.subr.bf16.mxu0 0
  %609 = vmatpush2.bf16.xpose.msra.mxu0 0
  %610 = vmatprep.subr.bf16.mxu0 0
  %611 = vmatpush2.bf16.xpose.msra.mxu0 0
  %612 = vmatprep.subr.bf16.mxu0 0
  %613 = vmatpush2.bf16.xpose.msra.mxu0 0
  %614 = vmatprep.subr.bf16.mxu0 0
  %615 = vmatpush2.bf16.xpose.msra.mxu0 0
  %616 = vmatprep.mubr.bf16.mxu0 0
  %617 = vmatmul.mubr.bf16.gmra.mxu0 %v579
  %v618 = vpop.f32.mrf.mxu0
  %v619 = vadd.f32 0.0, %v618
  %v620 = vpop.f32.mrf.mxu0
  %v621 = vpop.f32.mrf.mxu0
  %v622 = vpop.f32.mrf.mxu0
  %623 = vdwg.mxu0
  %v625 = vsel %vm577, %v514, 0
  %v628 = vsel %vm577, %v542, 0
  %630 = vmatprep.subr.bf16.mxu0 0
  %631 = vmatpush1.bf16.xpose.msra.mxu0 0
  %632 = vmatprep.subr.bf16.mxu0 0
  %633 = vmatpush1.bf16.xpose.msra.mxu0 0
  %634 = vmatprep.subr.bf16.mxu0 0
  %635 = vmatpush1.bf16.xpose.msra.mxu0 0
  %636 = vmatprep.subr.bf16.mxu0 0
  %637 = vmatpush1.bf16.xpose.msra.mxu0 0
  %638 = vmatprep.subr.bf16.mxu0 0
  %639 = vmatpush1.bf16.xpose.msra.mxu0 0
  %640 = vmatprep.subr.bf16.mxu0 0
  %641 = vmatpush1.bf16.xpose.msra.mxu0 0
  %642 = vmatprep.subr.bf16.mxu0 0
  %643 = vmatpush1.bf16.xpose.msra.mxu0 0
  %644 = vmatprep.subr.bf16.mxu0 0
  %645 = vmatpush1.bf16.xpose.msra.mxu0 %v628
  %646 = vmatprep.subr.bf16.mxu0 0
  %647 = vmatpush2.bf16.xpose.msra.mxu0 0
  %648 = vmatprep.subr.bf16.mxu0 0
  %649 = vmatpush2.bf16.xpose.msra.mxu0 0
  %650 = vmatprep.subr.bf16.mxu0 0
  %651 = vmatpush2.bf16.xpose.msra.mxu0 0
  %652 = vmatprep.subr.bf16.mxu0 0
  %653 = vmatpush2.bf16.xpose.msra.mxu0 0
  %654 = vmatprep.subr.bf16.mxu0 0
  %655 = vmatpush2.bf16.xpose.msra.mxu0 0
  %656 = vmatprep.subr.bf16.mxu0 0
  %657 = vmatpush2.bf16.xpose.msra.mxu0 0
  %658 = vmatprep.subr.bf16.mxu0 0
  %659 = vmatpush2.bf16.xpose.msra.mxu0 0
  %660 = vmatprep.subr.bf16.mxu0 0
  %661 = vmatpush2.bf16.xpose.msra.mxu0 0
  %662 = vmatprep.mubr.bf16.mxu0 0
  %663 = vmatmul.mubr.bf16.gmra.mxu0 %v625
  %v664 = vpop.f32.mrf.mxu0
  %v665 = vadd.f32 0.0, %v664
  %v666 = vpop.f32.mrf.mxu0
  %v667 = vpop.f32.mrf.mxu0
  %v668 = vpop.f32.mrf.mxu0
  %669 = vdwg.mxu0
  %v671 = vsel %vm577, %v515, 0
  %v674 = vsel %vm577, %v543, 0
  %676 = vmatprep.subr.bf16.mxu0 0
  %677 = vmatpush1.bf16.xpose.msra.mxu0 0
  %678 = vmatprep.subr.bf16.mxu0 0
  %679 = vmatpush1.bf16.xpose.msra.mxu0 0
  %680 = vmatprep.subr.bf16.mxu0 0
  %681 = vmatpush1.bf16.xpose.msra.mxu0 0
  %682 = vmatprep.subr.bf16.mxu0 0
  %683 = vmatpush1.bf16.xpose.msra.mxu0 0
  %684 = vmatprep.subr.bf16.mxu0 0
  %685 = vmatpush1.bf16.xpose.msra.mxu0 0
  %686 = vmatprep.subr.bf16.mxu0 0
  %687 = vmatpush1.bf16.xpose.msra.mxu0 0
  %688 = vmatprep.subr.bf16.mxu0 0
  %689 = vmatpush1.bf16.xpose.msra.mxu0 0
  %690 = vmatprep.subr.bf16.mxu0 0
  %691 = vmatpush1.bf16.xpose.msra.mxu0 %v674
  %692 = vmatprep.subr.bf16.mxu0 0
  %693 = vmatpush2.bf16.xpose.msra.mxu0 0
  %694 = vmatprep.subr.bf16.mxu0 0
  %695 = vmatpush2.bf16.xpose.msra.mxu0 0
  %696 = vmatprep.subr.bf16.mxu0 0
  %697 = vmatpush2.bf16.xpose.msra.mxu0 0
  %698 = vmatprep.subr.bf16.mxu0 0
  %699 = vmatpush2.bf16.xpose.msra.mxu0 0
  %700 = vmatprep.subr.bf16.mxu0 0
  %701 = vmatpush2.bf16.xpose.msra.mxu0 0
  %702 = vmatprep.subr.bf16.mxu0 0
  %703 = vmatpush2.bf16.xpose.msra.mxu0 0
  %704 = vmatprep.subr.bf16.mxu0 0
  %705 = vmatpush2.bf16.xpose.msra.mxu0 0
  %706 = vmatprep.subr.bf16.mxu0 0
  %707 = vmatpush2.bf16.xpose.msra.mxu0 0
  %708 = vmatprep.mubr.bf16.mxu0 0
  %709 = vmatmul.mubr.bf16.gmra.mxu0 %v671
  %v710 = vpop.f32.mrf.mxu0
  %v711 = vadd.f32 0.0, %v710
  %v712 = vpop.f32.mrf.mxu0
  %v713 = vpop.f32.mrf.mxu0
  %v714 = vpop.f32.mrf.mxu0
  %715 = vdwg.mxu0
  %v717 = vsel %vm577, %v516, 0
  %v720 = vsel %vm577, %v544, 0
  %722 = vmatprep.subr.bf16.mxu0 0
  %723 = vmatpush1.bf16.xpose.msra.mxu0 0
  %724 = vmatprep.subr.bf16.mxu0 0
  %725 = vmatpush1.bf16.xpose.msra.mxu0 0
  %726 = vmatprep.subr.bf16.mxu0 0
  %727 = vmatpush1.bf16.xpose.msra.mxu0 0
  %728 = vmatprep.subr.bf16.mxu0 0
  %729 = vmatpush1.bf16.xpose.msra.mxu0 0
  %730 = vmatprep.subr.bf16.mxu0 0
  %731 = vmatpush1.bf16.xpose.msra.mxu0 0
  %732 = vmatprep.subr.bf16.mxu0 0
  %733 = vmatpush1.bf16.xpose.msra.mxu0 0
  %734 = vmatprep.subr.bf16.mxu0 0
  %735 = vmatpush1.bf16.xpose.msra.mxu0 0
  %736 = vmatprep.subr.bf16.mxu0 0
  %737 = vmatpush1.bf16.xpose.msra.mxu0 %v720
  %738 = vmatprep.subr.bf16.mxu0 0
  %739 = vmatpush2.bf16.xpose.msra.mxu0 0
  %740 = vmatprep.subr.bf16.mxu0 0
  %741 = vmatpush2.bf16.xpose.msra.mxu0 0
  %742 = vmatprep.subr.bf16.mxu0 0
  %743 = vmatpush2.bf16.xpose.msra.mxu0 0
  %744 = vmatprep.subr.bf16.mxu0 0
  %745 = vmatpush2.bf16.xpose.msra.mxu0 0
  %746 = vmatprep.subr.bf16.mxu0 0
  %747 = vmatpush2.bf16.xpose.msra.mxu0 0
  %748 = vmatprep.subr.bf16.mxu0 0
  %749 = vmatpush2.bf16.xpose.msra.mxu0 0
  %750 = vmatprep.subr.bf16.mxu0 0
  %751 = vmatpush2.bf16.xpose.msra.mxu0 0
  %752 = vmatprep.subr.bf16.mxu0 0
  %753 = vmatpush2.bf16.xpose.msra.mxu0 0
  %754 = vmatprep.mubr.bf16.mxu0 0
  %755 = vmatmul.mubr.bf16.gmra.mxu0 %v717
  %v756 = vpop.f32.mrf.mxu0
  %v757 = vadd.f32 0.0, %v756
  %v758 = vpop.f32.mrf.mxu0
  %v759 = vpop.f32.mrf.mxu0
  %v760 = vpop.f32.mrf.mxu0
  %761 = vdwg.mxu0
  %v763 = vsel %vm577, %v517, 0
  %v766 = vsel %vm577, %v545, 0
  %768 = vmatprep.subr.bf16.mxu0 0
  %769 = vmatpush1.bf16.xpose.msra.mxu0 0
  %770 = vmatprep.subr.bf16.mxu0 0
  %771 = vmatpush1.bf16.xpose.msra.mxu0 0
  %772 = vmatprep.subr.bf16.mxu0 0
  %773 = vmatpush1.bf16.xpose.msra.mxu0 0
  %774 = vmatprep.subr.bf16.mxu0 0
  %775 = vmatpush1.bf16.xpose.msra.mxu0 0
  %776 = vmatprep.subr.bf16.mxu0 0
  %777 = vmatpush1.bf16.xpose.msra.mxu0 0
  %778 = vmatprep.subr.bf16.mxu0 0
  %779 = vmatpush1.bf16.xpose.msra.mxu0 0
  %780 = vmatprep.subr.bf16.mxu0 0
  %781 = vmatpush1.bf16.xpose.msra.mxu0 0
  %782 = vmatprep.subr.bf16.mxu0 0
  %783 = vmatpush1.bf16.xpose.msra.mxu0 %v766
  %784 = vmatprep.subr.bf16.mxu0 0
  %785 = vmatpush2.bf16.xpose.msra.mxu0 0
  %786 = vmatprep.subr.bf16.mxu0 0
  %787 = vmatpush2.bf16.xpose.msra.mxu0 0
  %788 = vmatprep.subr.bf16.mxu0 0
  %789 = vmatpush2.bf16.xpose.msra.mxu0 0
  %790 = vmatprep.subr.bf16.mxu0 0
  %791 = vmatpush2.bf16.xpose.msra.mxu0 0
  %792 = vmatprep.subr.bf16.mxu0 0
  %793 = vmatpush2.bf16.xpose.msra.mxu0 0
  %794 = vmatprep.subr.bf16.mxu0 0
  %795 = vmatpush2.bf16.xpose.msra.mxu0 0
  %796 = vmatprep.subr.bf16.mxu0 0
  %797 = vmatpush2.bf16.xpose.msra.mxu0 0
  %798 = vmatprep.subr.bf16.mxu0 0
  %799 = vmatpush2.bf16.xpose.msra.mxu0 0
  %800 = vmatprep.mubr.bf16.mxu0 0
  %801 = vmatmul.mubr.bf16.gmra.mxu0 %v763
  %v802 = vpop.f32.mrf.mxu0
  %v803 = vadd.f32 0.0, %v802
  %v804 = vpop.f32.mrf.mxu0
  %v805 = vpop.f32.mrf.mxu0
  %v806 = vpop.f32.mrf.mxu0
  %807 = vdwg.mxu0
  %v809 = vsel %vm577, %v518, 0
  %v812 = vsel %vm577, %v546, 0
  %814 = vmatprep.subr.bf16.mxu0 0
  %815 = vmatpush1.bf16.xpose.msra.mxu0 0
  %816 = vmatprep.subr.bf16.mxu0 0
  %817 = vmatpush1.bf16.xpose.msra.mxu0 0
  %818 = vmatprep.subr.bf16.mxu0 0
  %819 = vmatpush1.bf16.xpose.msra.mxu0 0
  %820 = vmatprep.subr.bf16.mxu0 0
  %821 = vmatpush1.bf16.xpose.msra.mxu0 0
  %822 = vmatprep.subr.bf16.mxu0 0
  %823 = vmatpush1.bf16.xpose.msra.mxu0 0
  %824 = vmatprep.subr.bf16.mxu0 0
  %825 = vmatpush1.bf16.xpose.msra.mxu0 0
  %826 = vmatprep.subr.bf16.mxu0 0
  %827 = vmatpush1.bf16.xpose.msra.mxu0 0
  %828 = vmatprep.subr.bf16.mxu0 0
  %829 = vmatpush1.bf16.xpose.msra.mxu0 %v812
  %830 = vmatprep.subr.bf16.mxu0 0
  %831 = vmatpush2.bf16.xpose.msra.mxu0 0
  %832 = vmatprep.subr.bf16.mxu0 0
  %833 = vmatpush2.bf16.xpose.msra.mxu0 0
  %834 = vmatprep.subr.bf16.mxu0 0
  %835 = vmatpush2.bf16.xpose.msra.mxu0 0
  %836 = vmatprep.subr.bf16.mxu0 0
  %837 = vmatpush2.bf16.xpose.msra.mxu0 0
  %838 = vmatprep.subr.bf16.mxu0 0
  %839 = vmatpush2.bf16.xpose.msra.mxu0 0
  %840 = vmatprep.subr.bf16.mxu0 0
  %841 = vmatpush2.bf16.xpose.msra.mxu0 0
  %842 = vmatprep.subr.bf16.mxu0 0
  %843 = vmatpush2.bf16.xpose.msra.mxu0 0
  %844 = vmatprep.subr.bf16.mxu0 0
  %845 = vmatpush2.bf16.xpose.msra.mxu0 0
  %846 = vmatprep.mubr.bf16.mxu0 0
  %847 = vmatmul.mubr.bf16.gmra.mxu0 %v809
  %v848 = vpop.f32.mrf.mxu0
  %v849 = vadd.f32 0.0, %v848
  %v850 = vpop.f32.mrf.mxu0
  %v851 = vpop.f32.mrf.mxu0
  %v852 = vpop.f32.mrf.mxu0
  %853 = vdwg.mxu0
  %v855 = vsel %vm577, %v519, 0
  %v858 = vsel %vm577, %v547, 0
  %860 = vmatprep.subr.bf16.mxu0 0
  %861 = vmatpush1.bf16.xpose.msra.mxu0 0
  %862 = vmatprep.subr.bf16.mxu0 0
  %863 = vmatpush1.bf16.xpose.msra.mxu0 0
  %864 = vmatprep.subr.bf16.mxu0 0
  %865 = vmatpush1.bf16.xpose.msra.mxu0 0
  %866 = vmatprep.subr.bf16.mxu0 0
  %867 = vmatpush1.bf16.xpose.msra.mxu0 0
  %868 = vmatprep.subr.bf16.mxu0 0
  %869 = vmatpush1.bf16.xpose.msra.mxu0 0
  %870 = vmatprep.subr.bf16.mxu0 0
  %871 = vmatpush1.bf16.xpose.msra.mxu0 0
  %872 = vmatprep.subr.bf16.mxu0 0
  %873 = vmatpush1.bf16.xpose.msra.mxu0 0
  %874 = vmatprep.subr.bf16.mxu0 0
  %875 = vmatpush1.bf16.xpose.msra.mxu0 %v858
  %876 = vmatprep.subr.bf16.mxu0 0
  %877 = vmatpush2.bf16.xpose.msra.mxu0 0
  %878 = vmatprep.subr.bf16.mxu0 0
  %879 = vmatpush2.bf16.xpose.msra.mxu0 0
  %880 = vmatprep.subr.bf16.mxu0 0
  %881 = vmatpush2.bf16.xpose.msra.mxu0 0
  %882 = vmatprep.subr.bf16.mxu0 0
  %883 = vmatpush2.bf16.xpose.msra.mxu0 0
  %884 = vmatprep.subr.bf16.mxu0 0
  %885 = vmatpush2.bf16.xpose.msra.mxu0 0
  %886 = vmatprep.subr.bf16.mxu0 0
  %887 = vmatpush2.bf16.xpose.msra.mxu0 0
  %888 = vmatprep.subr.bf16.mxu0 0
  %889 = vmatpush2.bf16.xpose.msra.mxu0 0
  %890 = vmatprep.subr.bf16.mxu0 0
  %891 = vmatpush2.bf16.xpose.msra.mxu0 0
  %892 = vmatprep.mubr.bf16.mxu0 0
  %893 = vmatmul.mubr.bf16.gmra.mxu0 %v855
  %v894 = vpop.f32.mrf.mxu0
  %v895 = vadd.f32 0.0, %v894
  %v896 = vpop.f32.mrf.mxu0
  %v897 = vpop.f32.mrf.mxu0
  %v898 = vpop.f32.mrf.mxu0
  %899 = vdwg.mxu0
  %v901 = vsel %vm577, %v520, 0
  %v904 = vsel %vm577, %v548, 0
  %906 = vmatprep.subr.bf16.mxu0 0
  %907 = vmatpush1.bf16.xpose.msra.mxu0 0
  %908 = vmatprep.subr.bf16.mxu0 0
  %909 = vmatpush1.bf16.xpose.msra.mxu0 0
  %910 = vmatprep.subr.bf16.mxu0 0
  %911 = vmatpush1.bf16.xpose.msra.mxu0 0
  %912 = vmatprep.subr.bf16.mxu0 0
  %913 = vmatpush1.bf16.xpose.msra.mxu0 0
  %914 = vmatprep.subr.bf16.mxu0 0
  %915 = vmatpush1.bf16.xpose.msra.mxu0 0
  %916 = vmatprep.subr.bf16.mxu0 0
  %917 = vmatpush1.bf16.xpose.msra.mxu0 0
  %918 = vmatprep.subr.bf16.mxu0 0
  %919 = vmatpush1.bf16.xpose.msra.mxu0 0
  %920 = vmatprep.subr.bf16.mxu0 0
  %921 = vmatpush1.bf16.xpose.msra.mxu0 %v904
  %922 = vmatprep.subr.bf16.mxu0 0
  %923 = vmatpush2.bf16.xpose.msra.mxu0 0
  %924 = vmatprep.subr.bf16.mxu0 0
  %925 = vmatpush2.bf16.xpose.msra.mxu0 0
  %926 = vmatprep.subr.bf16.mxu0 0
  %927 = vmatpush2.bf16.xpose.msra.mxu0 0
  %928 = vmatprep.subr.bf16.mxu0 0
  %929 = vmatpush2.bf16.xpose.msra.mxu0 0
  %930 = vmatprep.subr.bf16.mxu0 0
  %931 = vmatpush2.bf16.xpose.msra.mxu0 0
  %932 = vmatprep.subr.bf16.mxu0 0
  %933 = vmatpush2.bf16.xpose.msra.mxu0 0
  %934 = vmatprep.subr.bf16.mxu0 0
  %935 = vmatpush2.bf16.xpose.msra.mxu0 0
  %936 = vmatprep.subr.bf16.mxu0 0
  %937 = vmatpush2.bf16.xpose.msra.mxu0 0
  %938 = vmatprep.mubr.bf16.mxu0 0
  %939 = vmatmul.mubr.bf16.gmra.mxu0 %v901
  %v940 = vpop.f32.mrf.mxu0
  %v941 = vadd.f32 0.0, %v940
  %v942 = vpop.f32.mrf.mxu0
  %v943 = vpop.f32.mrf.mxu0
  %v944 = vpop.f32.mrf.mxu0
  %945 = vdwg.mxu0
  %v946 = vmul.f32 %v619, 0.17677669
  %v947 = vmul.f32 %v665, 0.17677669
  %v948 = vmul.f32 %v711, 0.17677669
  %v949 = vmul.f32 %v757, 0.17677669
  %v950 = vmul.f32 %v803, 0.17677669
  %v951 = vmul.f32 %v849, 0.17677669
  %v952 = vmul.f32 %v895, 0.17677669
  %v953 = vmul.f32 %v941, 0.17677669
  %v954 = vsel %vm492, 1, 0
  %vm955 = vcmp.eq.s32.totalorder %v954, 1
  %v956 = vsel %vm955, %v946, -1e+30
  %v957 = vsel %vm955, %v947, -1e+30
  %v958 = vsel %vm955, %v948, -1e+30
  %v959 = vsel %vm955, %v949, -1e+30
  %v960 = vsel %vm955, %v950, -1e+30
  %v961 = vsel %vm955, %v951, -1e+30
  %v962 = vsel %vm955, %v952, -1e+30
  %v963 = vsel %vm955, %v953, -1e+30
  %vm964 = vcmask 64512
  %v965 = vsel %vm964, %v956, -inf
  %966 = vmax.xlane.f32.xlu0 %v965
  %v967 = vpop.xlane.xlu0 %966
  %v968 = vsel %vm964, %v957, -inf
  %969 = vmax.xlane.f32.xlu0 %v968
  %v970 = vpop.xlane.xlu0 %969
  %v971 = vsel %vm964, %v958, -inf
  %972 = vmax.xlane.f32.xlu0 %v971
  %v973 = vpop.xlane.xlu0 %972
  %v974 = vsel %vm964, %v959, -inf
  %975 = vmax.xlane.f32.xlu0 %v974
  %v976 = vpop.xlane.xlu0 %975
  %v977 = vsel %vm964, %v960, -inf
  %978 = vmax.xlane.f32.xlu0 %v977
  %v979 = vpop.xlane.xlu0 %978
  %v980 = vsel %vm964, %v961, -inf
  %981 = vmax.xlane.f32.xlu0 %v980
  %v982 = vpop.xlane.xlu0 %981
  %v983 = vsel %vm964, %v962, -inf
  %984 = vmax.xlane.f32.xlu0 %v983
  %v985 = vpop.xlane.xlu0 %984
  %v986 = vsel %vm964, %v963, -inf
  %987 = vmax.xlane.f32.xlu0 %v986
  %v988 = vpop.xlane.xlu0 %987
  %v989 = vsub.f32 %v956, %v967
  %v990 = vsub.f32 %v957, %v970
  %v991 = vsub.f32 %v958, %v973
  %v992 = vsub.f32 %v959, %v976
  %v993 = vsub.f32 %v960, %v979
  %v994 = vsub.f32 %v961, %v982
  %v995 = vsub.f32 %v962, %v985
  %v996 = vsub.f32 %v963, %v988
  %v997 = vmul.f32 %v989, 1.442695
  %v998 = vpow.pop %v997
  %v999 = vmul.f32 %v990, 1.442695
  %v1000 = vpow.pop %v999
  %v1001 = vmul.f32 %v991, 1.442695
  %v1002 = vpow.pop %v1001
  %v1003 = vmul.f32 %v992, 1.442695
  %v1004 = vpow.pop %v1003
  %v1005 = vmul.f32 %v993, 1.442695
  %v1006 = vpow.pop %v1005
  %v1007 = vmul.f32 %v994, 1.442695
  %v1008 = vpow.pop %v1007
  %v1009 = vmul.f32 %v995, 1.442695
  %v1010 = vpow.pop %v1009
  %v1011 = vmul.f32 %v996, 1.442695
  %v1012 = vpow.pop %v1011
  %v1013 = vsel %vm964, %v998, 0.0
  %1014 = vadd.xlane.f32.xlu0 %v1013
  %v1015 = vpop.xlane.xlu0 %1014
  %v1016 = vsel %vm964, %v1000, 0.0
  %1017 = vadd.xlane.f32.xlu0 %v1016
  %v1018 = vpop.xlane.xlu0 %1017
  %v1019 = vsel %vm964, %v1002, 0.0
  %1020 = vadd.xlane.f32.xlu0 %v1019
  %v1021 = vpop.xlane.xlu0 %1020
  %v1022 = vsel %vm964, %v1004, 0.0
  %1023 = vadd.xlane.f32.xlu0 %v1022
  %v1024 = vpop.xlane.xlu0 %1023
  %v1025 = vsel %vm964, %v1006, 0.0
  %1026 = vadd.xlane.f32.xlu0 %v1025
  %v1027 = vpop.xlane.xlu0 %1026
  %v1028 = vsel %vm964, %v1008, 0.0
  %1029 = vadd.xlane.f32.xlu0 %v1028
  %v1030 = vpop.xlane.xlu0 %1029
  %v1031 = vsel %vm964, %v1010, 0.0
  %1032 = vadd.xlane.f32.xlu0 %v1031
  %v1033 = vpop.xlane.xlu0 %1032
  %v1034 = vsel %vm964, %v1012, 0.0
  %1035 = vadd.xlane.f32.xlu0 %v1034
  %v1036 = vpop.xlane.xlu0 %1035
  %v1037 = vrcp.pop %v1015
  %v1038 = vrcp.pop %v1018
  %v1039 = vrcp.pop %v1021
  %v1040 = vrcp.pop %v1024
  %v1041 = vrcp.pop %v1027
  %v1042 = vrcp.pop %v1030
  %v1043 = vrcp.pop %v1033
  %v1044 = vrcp.pop %v1036
  %v1045 = vmul.f32 %v998, %v1037
  %v1046 = vmul.f32 %v1000, %v1038
  %v1047 = vmul.f32 %v1002, %v1039
  %v1048 = vmul.f32 %v1004, %v1040
  %v1049 = vmul.f32 %v1006, %v1041
  %v1050 = vmul.f32 %v1008, %v1042
  %v1051 = vmul.f32 %v1010, %v1043
  %v1052 = vmul.f32 %v1012, %v1044
  %v1053 = vpack.c.bf16 %v1045, %v1045
  %v1054 = vpack.c.bf16 %v1046, %v1046
  %v1055 = vpack.c.bf16 %v1047, %v1047
  %v1056 = vpack.c.bf16 %v1048, %v1048
  %v1057 = vpack.c.bf16 %v1049, %v1049
  %v1058 = vpack.c.bf16 %v1050, %v1050
  %v1059 = vpack.c.bf16 %v1051, %v1051
  %v1060 = vpack.c.bf16 %v1052, %v1052
  %v1062 = vsel %vm964, %v1053, 0
  %vm1064 = vcmask 1043456
  %v1066 = vsel %vm1064, %v569, 0
  %1068 = vmatprep.subr.bf16.mxu0 0
  %1069 = vmatpush1.bf16.msra.mxu0 0
  %1070 = vmatprep.subr.bf16.mxu0 0
  %1071 = vmatpush1.bf16.msra.mxu0 0
  %1072 = vmatprep.subr.bf16.mxu0 0
  %1073 = vmatpush1.bf16.msra.mxu0 0
  %1074 = vmatprep.subr.bf16.mxu0 0
  %1075 = vmatpush1.bf16.msra.mxu0 0
  %1076 = vmatprep.subr.bf16.mxu0 0
  %1077 = vmatpush1.bf16.msra.mxu0 0
  %1078 = vmatprep.subr.bf16.mxu0 0
  %1079 = vmatpush1.bf16.msra.mxu0 0
  %1080 = vmatprep.subr.bf16.mxu0 0
  %1081 = vmatpush1.bf16.msra.mxu0 0
  %1082 = vmatprep.subr.bf16.mxu0 0
  %1083 = vmatpush1.bf16.msra.mxu0 %v1066
  %1084 = vmatprep.subr.bf16.mxu0 0
  %1085 = vmatpush2.bf16.msra.mxu0 0
  %1086 = vmatprep.subr.bf16.mxu0 0
  %1087 = vmatpush2.bf16.msra.mxu0 0
  %1088 = vmatprep.subr.bf16.mxu0 0
  %1089 = vmatpush2.bf16.msra.mxu0 0
  %1090 = vmatprep.subr.bf16.mxu0 0
  %1091 = vmatpush2.bf16.msra.mxu0 0
  %1092 = vmatprep.subr.bf16.mxu0 0
  %1093 = vmatpush2.bf16.msra.mxu0 0
  %1094 = vmatprep.subr.bf16.mxu0 0
  %1095 = vmatpush2.bf16.msra.mxu0 0
  %1096 = vmatprep.subr.bf16.mxu0 0
  %1097 = vmatpush2.bf16.msra.mxu0 0
  %1098 = vmatprep.subr.bf16.mxu0 0
  %1099 = vmatpush2.bf16.msra.mxu0 0
  %1100 = vmatprep.mubr.bf16.mxu0 0
  %1101 = vmatmul.mubr.bf16.gmra.mxu0 %v1062
  %v1102 = vpop.f32.mrf.mxu0
  %v1103 = vadd.f32 0.0, %v1102
  %v1104 = vpop.f32.mrf.mxu0
  %v1105 = vpop.f32.mrf.mxu0
  %v1106 = vpop.f32.mrf.mxu0
  %1107 = vdwg.mxu0
  %v1109 = vsel %vm964, %v1054, 0
  %v1112 = vsel %vm1064, %v570, 0
  %1114 = vmatprep.subr.bf16.mxu0 0
  %1115 = vmatpush1.bf16.msra.mxu0 0
  %1116 = vmatprep.subr.bf16.mxu0 0
  %1117 = vmatpush1.bf16.msra.mxu0 0
  %1118 = vmatprep.subr.bf16.mxu0 0
  %1119 = vmatpush1.bf16.msra.mxu0 0
  %1120 = vmatprep.subr.bf16.mxu0 0
  %1121 = vmatpush1.bf16.msra.mxu0 0
  %1122 = vmatprep.subr.bf16.mxu0 0
  %1123 = vmatpush1.bf16.msra.mxu0 0
  %1124 = vmatprep.subr.bf16.mxu0 0
  %1125 = vmatpush1.bf16.msra.mxu0 0
  %1126 = vmatprep.subr.bf16.mxu0 0
  %1127 = vmatpush1.bf16.msra.mxu0 0
  %1128 = vmatprep.subr.bf16.mxu0 0
  %1129 = vmatpush1.bf16.msra.mxu0 %v1112
  %1130 = vmatprep.subr.bf16.mxu0 0
  %1131 = vmatpush2.bf16.msra.mxu0 0
  %1132 = vmatprep.subr.bf16.mxu0 0
  %1133 = vmatpush2.bf16.msra.mxu0 0
  %1134 = vmatprep.subr.bf16.mxu0 0
  %1135 = vmatpush2.bf16.msra.mxu0 0
  %1136 = vmatprep.subr.bf16.mxu0 0
  %1137 = vmatpush2.bf16.msra.mxu0 0
  %1138 = vmatprep.subr.bf16.mxu0 0
  %1139 = vmatpush2.bf16.msra.mxu0 0
  %1140 = vmatprep.subr.bf16.mxu0 0
  %1141 = vmatpush2.bf16.msra.mxu0 0
  %1142 = vmatprep.subr.bf16.mxu0 0
  %1143 = vmatpush2.bf16.msra.mxu0 0
  %1144 = vmatprep.subr.bf16.mxu0 0
  %1145 = vmatpush2.bf16.msra.mxu0 0
  %1146 = vmatprep.mubr.bf16.mxu0 0
  %1147 = vmatmul.mubr.bf16.gmra.mxu0 %v1109
  %v1148 = vpop.f32.mrf.mxu0
  %v1149 = vadd.f32 0.0, %v1148
  %v1150 = vpop.f32.mrf.mxu0
  %v1151 = vpop.f32.mrf.mxu0
  %v1152 = vpop.f32.mrf.mxu0
  %1153 = vdwg.mxu0
  %v1155 = vsel %vm964, %v1055, 0
  %v1158 = vsel %vm1064, %v571, 0
  %1160 = vmatprep.subr.bf16.mxu0 0
  %1161 = vmatpush1.bf16.msra.mxu0 0
  %1162 = vmatprep.subr.bf16.mxu0 0
  %1163 = vmatpush1.bf16.msra.mxu0 0
  %1164 = vmatprep.subr.bf16.mxu0 0
  %1165 = vmatpush1.bf16.msra.mxu0 0
  %1166 = vmatprep.subr.bf16.mxu0 0
  %1167 = vmatpush1.bf16.msra.mxu0 0
  %1168 = vmatprep.subr.bf16.mxu0 0
  %1169 = vmatpush1.bf16.msra.mxu0 0
  %1170 = vmatprep.subr.bf16.mxu0 0
  %1171 = vmatpush1.bf16.msra.mxu0 0
  %1172 = vmatprep.subr.bf16.mxu0 0
  %1173 = vmatpush1.bf16.msra.mxu0 0
  %1174 = vmatprep.subr.bf16.mxu0 0
  %1175 = vmatpush1.bf16.msra.mxu0 %v1158
  %1176 = vmatprep.subr.bf16.mxu0 0
  %1177 = vmatpush2.bf16.msra.mxu0 0
  %1178 = vmatprep.subr.bf16.mxu0 0
  %1179 = vmatpush2.bf16.msra.mxu0 0
  %1180 = vmatprep.subr.bf16.mxu0 0
  %1181 = vmatpush2.bf16.msra.mxu0 0
  %1182 = vmatprep.subr.bf16.mxu0 0
  %1183 = vmatpush2.bf16.msra.mxu0 0
  %1184 = vmatprep.subr.bf16.mxu0 0
  %1185 = vmatpush2.bf16.msra.mxu0 0
  %1186 = vmatprep.subr.bf16.mxu0 0
  %1187 = vmatpush2.bf16.msra.mxu0 0
  %1188 = vmatprep.subr.bf16.mxu0 0
  %1189 = vmatpush2.bf16.msra.mxu0 0
  %1190 = vmatprep.subr.bf16.mxu0 0
  %1191 = vmatpush2.bf16.msra.mxu0 0
  %1192 = vmatprep.mubr.bf16.mxu0 0
  %1193 = vmatmul.mubr.bf16.gmra.mxu0 %v1155
  %v1194 = vpop.f32.mrf.mxu0
  %v1195 = vadd.f32 0.0, %v1194
  %v1196 = vpop.f32.mrf.mxu0
  %v1197 = vpop.f32.mrf.mxu0
  %v1198 = vpop.f32.mrf.mxu0
  %1199 = vdwg.mxu0
  %v1201 = vsel %vm964, %v1056, 0
  %v1204 = vsel %vm1064, %v572, 0
  %1206 = vmatprep.subr.bf16.mxu0 0
  %1207 = vmatpush1.bf16.msra.mxu0 0
  %1208 = vmatprep.subr.bf16.mxu0 0
  %1209 = vmatpush1.bf16.msra.mxu0 0
  %1210 = vmatprep.subr.bf16.mxu0 0
  %1211 = vmatpush1.bf16.msra.mxu0 0
  %1212 = vmatprep.subr.bf16.mxu0 0
  %1213 = vmatpush1.bf16.msra.mxu0 0
  %1214 = vmatprep.subr.bf16.mxu0 0
  %1215 = vmatpush1.bf16.msra.mxu0 0
  %1216 = vmatprep.subr.bf16.mxu0 0
  %1217 = vmatpush1.bf16.msra.mxu0 0
  %1218 = vmatprep.subr.bf16.mxu0 0
  %1219 = vmatpush1.bf16.msra.mxu0 0
  %1220 = vmatprep.subr.bf16.mxu0 0
  %1221 = vmatpush1.bf16.msra.mxu0 %v1204
  %1222 = vmatprep.subr.bf16.mxu0 0
  %1223 = vmatpush2.bf16.msra.mxu0 0
  %1224 = vmatprep.subr.bf16.mxu0 0
  %1225 = vmatpush2.bf16.msra.mxu0 0
  %1226 = vmatprep.subr.bf16.mxu0 0
  %1227 = vmatpush2.bf16.msra.mxu0 0
  %1228 = vmatprep.subr.bf16.mxu0 0
  %1229 = vmatpush2.bf16.msra.mxu0 0
  %1230 = vmatprep.subr.bf16.mxu0 0
  %1231 = vmatpush2.bf16.msra.mxu0 0
  %1232 = vmatprep.subr.bf16.mxu0 0
  %1233 = vmatpush2.bf16.msra.mxu0 0
  %1234 = vmatprep.subr.bf16.mxu0 0
  %1235 = vmatpush2.bf16.msra.mxu0 0
  %1236 = vmatprep.subr.bf16.mxu0 0
  %1237 = vmatpush2.bf16.msra.mxu0 0
  %1238 = vmatprep.mubr.bf16.mxu0 0
  %1239 = vmatmul.mubr.bf16.gmra.mxu0 %v1201
  %v1240 = vpop.f32.mrf.mxu0
  %v1241 = vadd.f32 0.0, %v1240
  %v1242 = vpop.f32.mrf.mxu0
  %v1243 = vpop.f32.mrf.mxu0
  %v1244 = vpop.f32.mrf.mxu0
  %1245 = vdwg.mxu0
  %v1247 = vsel %vm964, %v1057, 0
  %v1250 = vsel %vm1064, %v573, 0
  %1252 = vmatprep.subr.bf16.mxu0 0
  %1253 = vmatpush1.bf16.msra.mxu0 0
  %1254 = vmatprep.subr.bf16.mxu0 0
  %1255 = vmatpush1.bf16.msra.mxu0 0
  %1256 = vmatprep.subr.bf16.mxu0 0
  %1257 = vmatpush1.bf16.msra.mxu0 0
  %1258 = vmatprep.subr.bf16.mxu0 0
  %1259 = vmatpush1.bf16.msra.mxu0 0
  %1260 = vmatprep.subr.bf16.mxu0 0
  %1261 = vmatpush1.bf16.msra.mxu0 0
  %1262 = vmatprep.subr.bf16.mxu0 0
  %1263 = vmatpush1.bf16.msra.mxu0 0
  %1264 = vmatprep.subr.bf16.mxu0 0
  %1265 = vmatpush1.bf16.msra.mxu0 0
  %1266 = vmatprep.subr.bf16.mxu0 0
  %1267 = vmatpush1.bf16.msra.mxu0 %v1250
  %1268 = vmatprep.subr.bf16.mxu0 0
  %1269 = vmatpush2.bf16.msra.mxu0 0
  %1270 = vmatprep.subr.bf16.mxu0 0
  %1271 = vmatpush2.bf16.msra.mxu0 0
  %1272 = vmatprep.subr.bf16.mxu0 0
  %1273 = vmatpush2.bf16.msra.mxu0 0
  %1274 = vmatprep.subr.bf16.mxu0 0
  %1275 = vmatpush2.bf16.msra.mxu0 0
  %1276 = vmatprep.subr.bf16.mxu0 0
  %1277 = vmatpush2.bf16.msra.mxu0 0
  %1278 = vmatprep.subr.bf16.mxu0 0
  %1279 = vmatpush2.bf16.msra.mxu0 0
  %1280 = vmatprep.subr.bf16.mxu0 0
  %1281 = vmatpush2.bf16.msra.mxu0 0
  %1282 = vmatprep.subr.bf16.mxu0 0
  %1283 = vmatpush2.bf16.msra.mxu0 0
  %1284 = vmatprep.mubr.bf16.mxu0 0
  %1285 = vmatmul.mubr.bf16.gmra.mxu0 %v1247
  %v1286 = vpop.f32.mrf.mxu0
  %v1287 = vadd.f32 0.0, %v1286
  %v1288 = vpop.f32.mrf.mxu0
  %v1289 = vpop.f32.mrf.mxu0
  %v1290 = vpop.f32.mrf.mxu0
  %1291 = vdwg.mxu0
  %v1293 = vsel %vm964, %v1058, 0
  %v1296 = vsel %vm1064, %v574, 0
  %1298 = vmatprep.subr.bf16.mxu0 0
  %1299 = vmatpush1.bf16.msra.mxu0 0
  %1300 = vmatprep.subr.bf16.mxu0 0
  %1301 = vmatpush1.bf16.msra.mxu0 0
  %1302 = vmatprep.subr.bf16.mxu0 0
  %1303 = vmatpush1.bf16.msra.mxu0 0
  %1304 = vmatprep.subr.bf16.mxu0 0
  %1305 = vmatpush1.bf16.msra.mxu0 0
  %1306 = vmatprep.subr.bf16.mxu0 0
  %1307 = vmatpush1.bf16.msra.mxu0 0
  %1308 = vmatprep.subr.bf16.mxu0 0
  %1309 = vmatpush1.bf16.msra.mxu0 0
  %1310 = vmatprep.subr.bf16.mxu0 0
  %1311 = vmatpush1.bf16.msra.mxu0 0
  %1312 = vmatprep.subr.bf16.mxu0 0
  %1313 = vmatpush1.bf16.msra.mxu0 %v1296
  %1314 = vmatprep.subr.bf16.mxu0 0
  %1315 = vmatpush2.bf16.msra.mxu0 0
  %1316 = vmatprep.subr.bf16.mxu0 0
  %1317 = vmatpush2.bf16.msra.mxu0 0
  %1318 = vmatprep.subr.bf16.mxu0 0
  %1319 = vmatpush2.bf16.msra.mxu0 0
  %1320 = vmatprep.subr.bf16.mxu0 0
  %1321 = vmatpush2.bf16.msra.mxu0 0
  %1322 = vmatprep.subr.bf16.mxu0 0
  %1323 = vmatpush2.bf16.msra.mxu0 0
  %1324 = vmatprep.subr.bf16.mxu0 0
  %1325 = vmatpush2.bf16.msra.mxu0 0
  %1326 = vmatprep.subr.bf16.mxu0 0
  %1327 = vmatpush2.bf16.msra.mxu0 0
  %1328 = vmatprep.subr.bf16.mxu0 0
  %1329 = vmatpush2.bf16.msra.mxu0 0
  %1330 = vmatprep.mubr.bf16.mxu0 0
  %1331 = vmatmul.mubr.bf16.gmra.mxu0 %v1293
  %v1332 = vpop.f32.mrf.mxu0
  %v1333 = vadd.f32 0.0, %v1332
  %v1334 = vpop.f32.mrf.mxu0
  %v1335 = vpop.f32.mrf.mxu0
  %v1336 = vpop.f32.mrf.mxu0
  %1337 = vdwg.mxu0
  %v1339 = vsel %vm964, %v1059, 0
  %v1342 = vsel %vm1064, %v575, 0
  %1344 = vmatprep.subr.bf16.mxu0 0
  %1345 = vmatpush1.bf16.msra.mxu0 0
  %1346 = vmatprep.subr.bf16.mxu0 0
  %1347 = vmatpush1.bf16.msra.mxu0 0
  %1348 = vmatprep.subr.bf16.mxu0 0
  %1349 = vmatpush1.bf16.msra.mxu0 0
  %1350 = vmatprep.subr.bf16.mxu0 0
  %1351 = vmatpush1.bf16.msra.mxu0 0
  %1352 = vmatprep.subr.bf16.mxu0 0
  %1353 = vmatpush1.bf16.msra.mxu0 0
  %1354 = vmatprep.subr.bf16.mxu0 0
  %1355 = vmatpush1.bf16.msra.mxu0 0
  %1356 = vmatprep.subr.bf16.mxu0 0
  %1357 = vmatpush1.bf16.msra.mxu0 0
  %1358 = vmatprep.subr.bf16.mxu0 0
  %1359 = vmatpush1.bf16.msra.mxu0 %v1342
  %1360 = vmatprep.subr.bf16.mxu0 0
  %1361 = vmatpush2.bf16.msra.mxu0 0
  %1362 = vmatprep.subr.bf16.mxu0 0
  %1363 = vmatpush2.bf16.msra.mxu0 0
  %1364 = vmatprep.subr.bf16.mxu0 0
  %1365 = vmatpush2.bf16.msra.mxu0 0
  %1366 = vmatprep.subr.bf16.mxu0 0
  %1367 = vmatpush2.bf16.msra.mxu0 0
  %1368 = vmatprep.subr.bf16.mxu0 0
  %1369 = vmatpush2.bf16.msra.mxu0 0
  %1370 = vmatprep.subr.bf16.mxu0 0
  %1371 = vmatpush2.bf16.msra.mxu0 0
  %1372 = vmatprep.subr.bf16.mxu0 0
  %1373 = vmatpush2.bf16.msra.mxu0 0
  %1374 = vmatprep.subr.bf16.mxu0 0
  %1375 = vmatpush2.bf16.msra.mxu0 0
  %1376 = vmatprep.mubr.bf16.mxu0 0
  %1377 = vmatmul.mubr.bf16.gmra.mxu0 %v1339
  %v1378 = vpop.f32.mrf.mxu0
  %v1379 = vadd.f32 0.0, %v1378
  %v1380 = vpop.f32.mrf.mxu0
  %v1381 = vpop.f32.mrf.mxu0
  %v1382 = vpop.f32.mrf.mxu0
  %1383 = vdwg.mxu0
  %v1385 = vsel %vm964, %v1060, 0
  %v1388 = vsel %vm1064, %v576, 0
  %1390 = vmatprep.subr.bf16.mxu0 0
  %1391 = vmatpush1.bf16.msra.mxu0 0
  %1392 = vmatprep.subr.bf16.mxu0 0
  %1393 = vmatpush1.bf16.msra.mxu0 0
  %1394 = vmatprep.subr.bf16.mxu0 0
  %1395 = vmatpush1.bf16.msra.mxu0 0
  %1396 = vmatprep.subr.bf16.mxu0 0
  %1397 = vmatpush1.bf16.msra.mxu0 0
  %1398 = vmatprep.subr.bf16.mxu0 0
  %1399 = vmatpush1.bf16.msra.mxu0 0
  %1400 = vmatprep.subr.bf16.mxu0 0
  %1401 = vmatpush1.bf16.msra.mxu0 0
  %1402 = vmatprep.subr.bf16.mxu0 0
  %1403 = vmatpush1.bf16.msra.mxu0 0
  %1404 = vmatprep.subr.bf16.mxu0 0
  %1405 = vmatpush1.bf16.msra.mxu0 %v1388
  %1406 = vmatprep.subr.bf16.mxu0 0
  %1407 = vmatpush2.bf16.msra.mxu0 0
  %1408 = vmatprep.subr.bf16.mxu0 0
  %1409 = vmatpush2.bf16.msra.mxu0 0
  %1410 = vmatprep.subr.bf16.mxu0 0
  %1411 = vmatpush2.bf16.msra.mxu0 0
  %1412 = vmatprep.subr.bf16.mxu0 0
  %1413 = vmatpush2.bf16.msra.mxu0 0
  %1414 = vmatprep.subr.bf16.mxu0 0
  %1415 = vmatpush2.bf16.msra.mxu0 0
  %1416 = vmatprep.subr.bf16.mxu0 0
  %1417 = vmatpush2.bf16.msra.mxu0 0
  %1418 = vmatprep.subr.bf16.mxu0 0
  %1419 = vmatpush2.bf16.msra.mxu0 0
  %1420 = vmatprep.subr.bf16.mxu0 0
  %1421 = vmatpush2.bf16.msra.mxu0 0
  %1422 = vmatprep.mubr.bf16.mxu0 0
  %1423 = vmatmul.mubr.bf16.gmra.mxu0 %v1385
  %v1424 = vpop.f32.mrf.mxu0
  %v1425 = vadd.f32 0.0, %v1424
  %v1426 = vpop.f32.mrf.mxu0
  %v1427 = vpop.f32.mrf.mxu0
  %v1428 = vpop.f32.mrf.mxu0
  %1429 = vdwg.mxu0
  %1432 = vrot.lane.b32.xlu0 %v1195, 32
  %v1433 = vpop.permute.xlu0 %1432
  %1434 = vrot.lane.b32.xlu0 %v1241, 32
  %v1435 = vpop.permute.xlu0 %1434
  %1440 = vrot.lane.b32.xlu0 %v1287, 64
  %v1441 = vpop.permute.xlu0 %1440
  %1442 = vrot.lane.b32.xlu0 %v1333, 64
  %v1443 = vpop.permute.xlu0 %1442
  %1448 = vrot.lane.b32.xlu0 %v1379, 96
  %v1449 = vpop.permute.xlu0 %1448
  %1450 = vrot.lane.b32.xlu0 %v1425, 96
  %v1451 = vpop.permute.xlu0 %1450
  %v1454 = vsel %vm577, %v1103, %v1433
  %v1455 = vsel %vm577, %v1149, %v1435
  %vm1456 = vcmask 523264
  %v1457 = vsel %vm1456, %v1454, %v1441
  %v1458 = vsel %vm1456, %v1455, %v1443
  %vm1459 = vcmask 785408
  %v1460 = vsel %vm1459, %v1457, %v1449
  %v1461 = vsel %vm1459, %v1458, %v1451
  %v1462 = vpack.c.bf16 %v1461, %v1460
  %v1463 = vunpack.c.l.bf16 %v106
  %v1464 = vlaneseq
  %v1465 = vshrl.u32 %v1464, 7
  %v1466 = vsub.s32 0, %v1465
  %v1467 = vrot.slane %v1463, %v1466
  %v1484 = vunpack.c.l.b16 %v90
  %v1485 = vunpack.c.l.b16 %v91
  %v1486 = vunpack.c.l.b16 %v92
  %v1487 = vunpack.c.l.b16 %v93
  %v1488 = vunpack.c.l.b16 %v94
  %v1489 = vunpack.c.l.b16 %v95
  %v1490 = vunpack.c.l.b16 %v96
  %v1491 = vunpack.c.l.b16 %v97
  %v1492 = vunpack.c.l.b16 %v98
  %v1493 = vunpack.c.l.b16 %v99
  %v1494 = vunpack.c.l.b16 %v100
  %v1495 = vunpack.c.l.b16 %v101
  %v1496 = vunpack.c.l.b16 %v102
  %v1497 = vunpack.c.l.b16 %v103
  %v1498 = vunpack.c.l.b16 %v104
  %v1499 = vunpack.c.l.b16 %v105
  %v1500 = vpack.c.b16 %v1485, %v1484
  %v1501 = vpack.c.b16 %v1487, %v1486
  %v1502 = vpack.c.b16 %v1489, %v1488
  %v1503 = vpack.c.b16 %v1491, %v1490
  %v1504 = vpack.c.b16 %v1493, %v1492
  %v1505 = vpack.c.b16 %v1495, %v1494
  %v1506 = vpack.c.b16 %v1497, %v1496
  %v1507 = vpack.c.b16 %v1499, %v1498
  %1516 = vmatprep.subr.bf16.mxu0 0
  %1517 = vmatpush1.bf16.msra.mxu0 %v1507
  %1518 = vmatprep.subr.bf16.mxu0 0
  %1519 = vmatpush1.bf16.msra.mxu0 %v1506
  %1520 = vmatprep.subr.bf16.mxu0 0
  %1521 = vmatpush1.bf16.msra.mxu0 %v1505
  %1522 = vmatprep.subr.bf16.mxu0 0
  %1523 = vmatpush1.bf16.msra.mxu0 %v1504
  %1524 = vmatprep.subr.bf16.mxu0 0
  %1525 = vmatpush1.bf16.msra.mxu0 %v1503
  %1526 = vmatprep.subr.bf16.mxu0 0
  %1527 = vmatpush1.bf16.msra.mxu0 %v1502
  %1528 = vmatprep.subr.bf16.mxu0 0
  %1529 = vmatpush1.bf16.msra.mxu0 %v1501
  %1530 = vmatprep.subr.bf16.mxu0 0
  %1531 = vmatpush1.bf16.msra.mxu0 %v1500
  %1532 = vmatprep.subr.bf16.mxu0 0
  %1533 = vmatpush2.bf16.msra.mxu0 0
  %1534 = vmatprep.subr.bf16.mxu0 0
  %1535 = vmatpush2.bf16.msra.mxu0 0
  %1536 = vmatprep.subr.bf16.mxu0 0
  %1537 = vmatpush2.bf16.msra.mxu0 0
  %1538 = vmatprep.subr.bf16.mxu0 0
  %1539 = vmatpush2.bf16.msra.mxu0 0
  %1540 = vmatprep.subr.bf16.mxu0 0
  %1541 = vmatpush2.bf16.msra.mxu0 0
  %1542 = vmatprep.subr.bf16.mxu0 0
  %1543 = vmatpush2.bf16.msra.mxu0 0
  %1544 = vmatprep.subr.bf16.mxu0 0
  %1545 = vmatpush2.bf16.msra.mxu0 0
  %1546 = vmatprep.subr.bf16.mxu0 0
  %1547 = vmatpush2.bf16.msra.mxu0 0
  %1548 = vmatprep.mubr.bf16.mxu0 0
  %1549 = vmatmul.mubr.bf16.gmra.mxu0 %v1462
  %v1550 = vpop.f32.mrf.mxu0
  %v1551 = vadd.f32 %v1467, %v1550
  %v1552 = vpop.f32.mrf.mxu0
  %v1553 = vpop.f32.mrf.mxu0
  %v1554 = vadd.f32 %v1467, %v1553
  %v1555 = vpop.f32.mrf.mxu0
  %1556 = vdwg.mxu0
  %v1557 = vadd.f32 %v207, %v1551
  %v1558 = vadd.f32 %v208, %v1554
  %1559 = vadd.xlane.f32.xlu0 %v1557
  %v1560 = vpop.xlane.xlu0 %1559
  %1561 = vadd.xlane.f32.xlu0 %v1558
  %v1562 = vpop.xlane.xlu0 %1561
  %v1563 = vmul.f32 %v1560, %v213
  %v1564 = vmul.f32 %v1562, %v213
  %v1565 = vsub.f32 %v1557, %v1563
  %v1566 = vsub.f32 %v1558, %v1564
  %v1567 = vmul.f32 %v1565, %v1565
  %v1568 = vmul.f32 %v1566, %v1566
  %1569 = vadd.xlane.f32.xlu0 %v1567
  %v1570 = vpop.xlane.xlu0 %1569
  %1571 = vadd.xlane.f32.xlu0 %v1568
  %v1572 = vpop.xlane.xlu0 %1571
  %v1573 = vmul.f32 %v1570, %v213
  %v1574 = vmul.f32 %v1572, %v213
  %v1575 = vadd.f32 %v1573, 1e-05
  %v1576 = vadd.f32 %v1574, 1e-05
  %v1577 = vrsqrt.pop %v1575
  %v1578 = vrsqrt.pop %v1576
  %v1579 = vmul.f32 %v1565, %v1577
  %v1580 = vmul.f32 %v1566, %v1578
  %v1581 = vunpack.c.l.bf16 %v107
  %v1582 = vlaneseq
  %v1583 = vshrl.u32 %v1582, 7
  %v1584 = vsub.s32 0, %v1583
  %v1585 = vrot.slane %v1581, %v1584
  %v1586 = vmul.f32 %v1579, %v1585
  %v1587 = vmul.f32 %v1580, %v1585
  %v1588 = vunpack.c.l.bf16 %v108
  %v1589 = vlaneseq
  %v1590 = vshrl.u32 %v1589, 7
  %v1591 = vsub.s32 0, %v1590
  %v1592 = vrot.slane %v1588, %v1591
  %v1593 = vadd.f32 %v1586, %v1592
  %v1594 = vadd.f32 %v1587, %v1592
  %v1595 = vpack.c.bf16 %v1594, %v1593
  %v1596 = vunpack.c.l.bf16 %v141
  %v1598 = vlaneseq
  %v1599 = vshrl.u32 %v1598, 7
  %v1600 = vsub.s32 0, %v1599
  %v1601 = vrot.slane %v1596, %v1600
  %v1602 = vlaneseq
  %v1603 = vshrl.u32 %v1602, 7
  %v1604 = vsub.s32 2, %v1603
  %v1605 = vrot.slane %v1596, %v1604
  %v1606 = vlaneseq
  %v1607 = vshrl.u32 %v1606, 7
  %v1608 = vsub.s32 4, %v1607
  %v1609 = vrot.slane %v1596, %v1608
  %v1610 = vlaneseq
  %v1611 = vshrl.u32 %v1610, 7
  %v1612 = vsub.s32 6, %v1611
  %v1613 = vrot.slane %v1596, %v1612
  %v1618 = vlaneseq
  %v1619 = vshrl.u32 %v1618, 7
  %v1620 = vsub.s32 0, %v1619
  %v1621 = vrot.slane %v1601, %v1620
  %v1622 = vlaneseq
  %v1623 = vshrl.u32 %v1622, 7
  %v1624 = vsub.s32 0, %v1623
  %v1625 = vrot.slane %v1605, %v1624
  %v1626 = vlaneseq
  %v1627 = vshrl.u32 %v1626, 7
  %v1628 = vsub.s32 0, %v1627
  %v1629 = vrot.slane %v1609, %v1628
  %v1630 = vlaneseq
  %v1631 = vshrl.u32 %v1630, 7
  %v1632 = vsub.s32 0, %v1631
  %v1633 = vrot.slane %v1613, %v1632
  %v1666 = vunpack.c.l.b16 %v109
  %v1667 = vunpack.c.h.b16 %v109
  %v1668 = vunpack.c.l.b16 %v110
  %v1669 = vunpack.c.h.b16 %v110
  %v1670 = vunpack.c.l.b16 %v111
  %v1671 = vunpack.c.h.b16 %v111
  %v1672 = vunpack.c.l.b16 %v112
  %v1673 = vunpack.c.h.b16 %v112
  %v1674 = vunpack.c.l.b16 %v113
  %v1675 = vunpack.c.h.b16 %v113
  %v1676 = vunpack.c.l.b16 %v114
  %v1677 = vunpack.c.h.b16 %v114
  %v1678 = vunpack.c.l.b16 %v115
  %v1679 = vunpack.c.h.b16 %v115
  %v1680 = vunpack.c.l.b16 %v116
  %v1681 = vunpack.c.h.b16 %v116
  %v1682 = vunpack.c.l.b16 %v117
  %v1683 = vunpack.c.h.b16 %v117
  %v1684 = vunpack.c.l.b16 %v118
  %v1685 = vunpack.c.h.b16 %v118
  %v1686 = vunpack.c.l.b16 %v119
  %v1687 = vunpack.c.h.b16 %v119
  %v1688 = vunpack.c.l.b16 %v120
  %v1689 = vunpack.c.h.b16 %v120
  %v1690 = vunpack.c.l.b16 %v121
  %v1691 = vunpack.c.h.b16 %v121
  %v1692 = vunpack.c.l.b16 %v122
  %v1693 = vunpack.c.h.b16 %v122
  %v1694 = vunpack.c.l.b16 %v123
  %v1695 = vunpack.c.h.b16 %v123
  %v1696 = vunpack.c.l.b16 %v124
  %v1697 = vunpack.c.h.b16 %v124
  %v1698 = vunpack.c.l.b16 %v125
  %v1699 = vunpack.c.h.b16 %v125
  %v1700 = vunpack.c.l.b16 %v126
  %v1701 = vunpack.c.h.b16 %v126
  %v1702 = vunpack.c.l.b16 %v127
  %v1703 = vunpack.c.h.b16 %v127
  %v1704 = vunpack.c.l.b16 %v128
  %v1705 = vunpack.c.h.b16 %v128
  %v1706 = vunpack.c.l.b16 %v129
  %v1707 = vunpack.c.h.b16 %v129
  %v1708 = vunpack.c.l.b16 %v130
  %v1709 = vunpack.c.h.b16 %v130
  %v1710 = vunpack.c.l.b16 %v131
  %v1711 = vunpack.c.h.b16 %v131
  %v1712 = vunpack.c.l.b16 %v132
  %v1713 = vunpack.c.h.b16 %v132
  %v1714 = vunpack.c.l.b16 %v133
  %v1715 = vunpack.c.h.b16 %v133
  %v1716 = vunpack.c.l.b16 %v134
  %v1717 = vunpack.c.h.b16 %v134
  %v1718 = vunpack.c.l.b16 %v135
  %v1719 = vunpack.c.h.b16 %v135
  %v1720 = vunpack.c.l.b16 %v136
  %v1721 = vunpack.c.h.b16 %v136
  %v1722 = vunpack.c.l.b16 %v137
  %v1723 = vunpack.c.h.b16 %v137
  %v1724 = vunpack.c.l.b16 %v138
  %v1725 = vunpack.c.h.b16 %v138
  %v1726 = vunpack.c.l.b16 %v139
  %v1727 = vunpack.c.h.b16 %v139
  %v1728 = vunpack.c.l.b16 %v140
  %v1729 = vunpack.c.h.b16 %v140
  %v1730 = vpack.c.b16 %v1670, %v1666
  %v1731 = vpack.c.b16 %v1671, %v1667
  %v1732 = vpack.c.b16 %v1672, %v1668
  %v1733 = vpack.c.b16 %v1673, %v1669
  %v1734 = vpack.c.b16 %v1678, %v1674
  %v1735 = vpack.c.b16 %v1679, %v1675
  %v1736 = vpack.c.b16 %v1680, %v1676
  %v1737 = vpack.c.b16 %v1681, %v1677
  %v1738 = vpack.c.b16 %v1686, %v1682
  %v1739 = vpack.c.b16 %v1687, %v1683
  %v1740 = vpack.c.b16 %v1688, %v1684
  %v1741 = vpack.c.b16 %v1689, %v1685
  %v1742 = vpack.c.b16 %v1694, %v1690
  %v1743 = vpack.c.b16 %v1695, %v1691
  %v1744 = vpack.c.b16 %v1696, %v1692
  %v1745 = vpack.c.b16 %v1697, %v1693
  %v1746 = vpack.c.b16 %v1702, %v1698
  %v1747 = vpack.c.b16 %v1703, %v1699
  %v1748 = vpack.c.b16 %v1704, %v1700
  %v1749 = vpack.c.b16 %v1705, %v1701
  %v1750 = vpack.c.b16 %v1710, %v1706
  %v1751 = vpack.c.b16 %v1711, %v1707
  %v1752 = vpack.c.b16 %v1712, %v1708
  %v1753 = vpack.c.b16 %v1713, %v1709
  %v1754 = vpack.c.b16 %v1718, %v1714
  %v1755 = vpack.c.b16 %v1719, %v1715
  %v1756 = vpack.c.b16 %v1720, %v1716
  %v1757 = vpack.c.b16 %v1721, %v1717
  %v1758 = vpack.c.b16 %v1726, %v1722
  %v1759 = vpack.c.b16 %v1727, %v1723
  %v1760 = vpack.c.b16 %v1728, %v1724
  %v1761 = vpack.c.b16 %v1729, %v1725
  %1794 = vmatprep.subr.bf16.mxu0 %v1759
  %1795 = vmatpush1.bf16.msra.mxu0 %v1758
  %1796 = vmatprep.subr.bf16.mxu0 %v1755
  %1797 = vmatpush1.bf16.msra.mxu0 %v1754
  %1798 = vmatprep.subr.bf16.mxu0 %v1751
  %1799 = vmatpush1.bf16.msra.mxu0 %v1750
  %1800 = vmatprep.subr.bf16.mxu0 %v1747
  %1801 = vmatpush1.bf16.msra.mxu0 %v1746
  %1802 = vmatprep.subr.bf16.mxu0 %v1743
  %1803 = vmatpush1.bf16.msra.mxu0 %v1742
  %1804 = vmatprep.subr.bf16.mxu0 %v1739
  %1805 = vmatpush1.bf16.msra.mxu0 %v1738
  %1806 = vmatprep.subr.bf16.mxu0 %v1735
  %1807 = vmatpush1.bf16.msra.mxu0 %v1734
  %1808 = vmatprep.subr.bf16.mxu0 %v1731
  %1809 = vmatpush1.bf16.msra.mxu0 %v1730
  %1810 = vmatprep.subr.bf16.mxu0 0
  %1811 = vmatpush2.bf16.msra.mxu0 0
  %1812 = vmatprep.subr.bf16.mxu0 0
  %1813 = vmatpush2.bf16.msra.mxu0 0
  %1814 = vmatprep.subr.bf16.mxu0 0
  %1815 = vmatpush2.bf16.msra.mxu0 0
  %1816 = vmatprep.subr.bf16.mxu0 0
  %1817 = vmatpush2.bf16.msra.mxu0 0
  %1818 = vmatprep.subr.bf16.mxu0 0
  %1819 = vmatpush2.bf16.msra.mxu0 0
  %1820 = vmatprep.subr.bf16.mxu0 0
  %1821 = vmatpush2.bf16.msra.mxu0 0
  %1822 = vmatprep.subr.bf16.mxu0 0
  %1823 = vmatpush2.bf16.msra.mxu0 0
  %1824 = vmatprep.subr.bf16.mxu0 0
  %1825 = vmatpush2.bf16.msra.mxu0 0
  %1826 = vmatprep.mubr.bf16.mxu0 0
  %1827 = vmatmul.mubr.bf16.gmra.mxu0 %v1595
  %v1828 = vpop.f32.mrf.mxu0
  %v1829 = vadd.f32 %v1621, %v1828
  %v1830 = vpop.f32.mrf.mxu0
  %v1831 = vadd.f32 %v1625, %v1830
  %v1832 = vpop.f32.mrf.mxu0
  %v1833 = vadd.f32 %v1621, %v1832
  %v1834 = vpop.f32.mrf.mxu0
  %v1835 = vadd.f32 %v1625, %v1834
  %1836 = vdwg.mxu0
  %1837 = vmatprep.subr.bf16.mxu0 %v1761
  %1838 = vmatpush1.bf16.msra.mxu0 %v1760
  %1839 = vmatprep.subr.bf16.mxu0 %v1757
  %1840 = vmatpush1.bf16.msra.mxu0 %v1756
  %1841 = vmatprep.subr.bf16.mxu0 %v1753
  %1842 = vmatpush1.bf16.msra.mxu0 %v1752
  %1843 = vmatprep.subr.bf16.mxu0 %v1749
  %1844 = vmatpush1.bf16.msra.mxu0 %v1748
  %1845 = vmatprep.subr.bf16.mxu0 %v1745
  %1846 = vmatpush1.bf16.msra.mxu0 %v1744
  %1847 = vmatprep.subr.bf16.mxu0 %v1741
  %1848 = vmatpush1.bf16.msra.mxu0 %v1740
  %1849 = vmatprep.subr.bf16.mxu0 %v1737
  %1850 = vmatpush1.bf16.msra.mxu0 %v1736
  %1851 = vmatprep.subr.bf16.mxu0 %v1733
  %1852 = vmatpush1.bf16.msra.mxu0 %v1732
  %1853 = vmatprep.subr.bf16.mxu0 0
  %1854 = vmatpush2.bf16.msra.mxu0 0
  %1855 = vmatprep.subr.bf16.mxu0 0
  %1856 = vmatpush2.bf16.msra.mxu0 0
  %1857 = vmatprep.subr.bf16.mxu0 0
  %1858 = vmatpush2.bf16.msra.mxu0 0
  %1859 = vmatprep.subr.bf16.mxu0 0
  %1860 = vmatpush2.bf16.msra.mxu0 0
  %1861 = vmatprep.subr.bf16.mxu0 0
  %1862 = vmatpush2.bf16.msra.mxu0 0
  %1863 = vmatprep.subr.bf16.mxu0 0
  %1864 = vmatpush2.bf16.msra.mxu0 0
  %1865 = vmatprep.subr.bf16.mxu0 0
  %1866 = vmatpush2.bf16.msra.mxu0 0
  %1867 = vmatprep.subr.bf16.mxu0 0
  %1868 = vmatpush2.bf16.msra.mxu0 0
  %1869 = vmatprep.mubr.bf16.mxu0 0
  %1870 = vmatmul.mubr.bf16.gmra.mxu0 %v1595
  %v1871 = vpop.f32.mrf.mxu0
  %v1872 = vadd.f32 %v1629, %v1871
  %v1873 = vpop.f32.mrf.mxu0
  %v1874 = vadd.f32 %v1633, %v1873
  %v1875 = vpop.f32.mrf.mxu0
  %v1876 = vadd.f32 %v1629, %v1875
  %v1877 = vpop.f32.mrf.mxu0
  %v1878 = vadd.f32 %v1633, %v1877
  %1879 = vdwg.mxu0
  %v1880 = vmul.f32 %v1829, 1.702
  %v1881 = vmul.f32 %v1831, 1.702
  %v1882 = vmul.f32 %v1872, 1.702
  %v1883 = vmul.f32 %v1874, 1.702
  %v1884 = vmul.f32 %v1833, 1.702
  %v1885 = vmul.f32 %v1835, 1.702
  %v1886 = vmul.f32 %v1876, 1.702
  %v1887 = vmul.f32 %v1878, 1.702
  %v1888 = vxor.u32 %v1880, 2147483648
  %v1889 = vxor.u32 %v1881, 2147483648
  %v1890 = vxor.u32 %v1882, 2147483648
  %v1891 = vxor.u32 %v1883, 2147483648
  %v1892 = vxor.u32 %v1884, 2147483648
  %v1893 = vxor.u32 %v1885, 2147483648
  %v1894 = vxor.u32 %v1886, 2147483648
  %v1895 = vxor.u32 %v1887, 2147483648
  %v1896 = vmul.f32 %v1888, 1.442695
  %v1897 = vpow.pop %v1896
  %v1898 = vmul.f32 %v1889, 1.442695
  %v1899 = vpow.pop %v1898
  %v1900 = vmul.f32 %v1890, 1.442695
  %v1901 = vpow.pop %v1900
  %v1902 = vmul.f32 %v1891, 1.442695
  %v1903 = vpow.pop %v1902
  %v1904 = vmul.f32 %v1892, 1.442695
  %v1905 = vpow.pop %v1904
  %v1906 = vmul.f32 %v1893, 1.442695
  %v1907 = vpow.pop %v1906
  %v1908 = vmul.f32 %v1894, 1.442695
  %v1909 = vpow.pop %v1908
  %v1910 = vmul.f32 %v1895, 1.442695
  %v1911 = vpow.pop %v1910
  %v1912 = vadd.f32 %v1897, 1.0
  %v1913 = vadd.f32 %v1899, 1.0
  %v1914 = vadd.f32 %v1901, 1.0
  %v1915 = vadd.f32 %v1903, 1.0
  %v1916 = vadd.f32 %v1905, 1.0
  %v1917 = vadd.f32 %v1907, 1.0
  %v1918 = vadd.f32 %v1909, 1.0
  %v1919 = vadd.f32 %v1911, 1.0
  %v1920 = vrcp.pop %v1912
  %v1921 = vmul.f32 1.0, %v1920
  %v1922 = vrcp.pop %v1913
  %v1923 = vmul.f32 1.0, %v1922
  %v1924 = vrcp.pop %v1914
  %v1925 = vmul.f32 1.0, %v1924
  %v1926 = vrcp.pop %v1915
  %v1927 = vmul.f32 1.0, %v1926
  %v1928 = vrcp.pop %v1916
  %v1929 = vmul.f32 1.0, %v1928
  %v1930 = vrcp.pop %v1917
  %v1931 = vmul.f32 1.0, %v1930
  %v1932 = vrcp.pop %v1918
  %v1933 = vmul.f32 1.0, %v1932
  %v1934 = vrcp.pop %v1919
  %v1935 = vmul.f32 1.0, %v1934
  %v1936 = vmul.f32 %v1829, %v1921
  %v1937 = vmul.f32 %v1831, %v1923
  %v1938 = vmul.f32 %v1872, %v1925
  %v1939 = vmul.f32 %v1874, %v1927
  %v1940 = vmul.f32 %v1833, %v1929
  %v1941 = vmul.f32 %v1835, %v1931
  %v1942 = vmul.f32 %v1876, %v1933
  %v1943 = vmul.f32 %v1878, %v1935
  %v1944 = vpack.c.bf16 %v1940, %v1936
  %v1945 = vpack.c.bf16 %v1941, %v1937
  %v1946 = vpack.c.bf16 %v1942, %v1938
  %v1947 = vpack.c.bf16 %v1943, %v1939
  %v1948 = vunpack.c.l.bf16 %v206
  %v1949 = vlaneseq
  %v1950 = vshrl.u32 %v1949, 7
  %v1951 = vsub.s32 0, %v1950
  %v1952 = vrot.slane %v1948, %v1951
  %v2017 = vunpack.c.l.b16 %v142
  %v2018 = vunpack.c.l.b16 %v143
  %v2019 = vunpack.c.l.b16 %v144
  %v2020 = vunpack.c.l.b16 %v145
  %v2021 = vunpack.c.l.b16 %v146
  %v2022 = vunpack.c.l.b16 %v147
  %v2023 = vunpack.c.l.b16 %v148
  %v2024 = vunpack.c.l.b16 %v149
  %v2025 = vunpack.c.l.b16 %v150
  %v2026 = vunpack.c.l.b16 %v151
  %v2027 = vunpack.c.l.b16 %v152
  %v2028 = vunpack.c.l.b16 %v153
  %v2029 = vunpack.c.l.b16 %v154
  %v2030 = vunpack.c.l.b16 %v155
  %v2031 = vunpack.c.l.b16 %v156
  %v2032 = vunpack.c.l.b16 %v157
  %v2033 = vunpack.c.l.b16 %v158
  %v2034 = vunpack.c.l.b16 %v159
  %v2035 = vunpack.c.l.b16 %v160
  %v2036 = vunpack.c.l.b16 %v161
  %v2037 = vunpack.c.l.b16 %v162
  %v2038 = vunpack.c.l.b16 %v163
  %v2039 = vunpack.c.l.b16 %v164
  %v2040 = vunpack.c.l.b16 %v165
  %v2041 = vunpack.c.l.b16 %v166
  %v2042 = vunpack.c.l.b16 %v167
  %v2043 = vunpack.c.l.b16 %v168
  %v2044 = vunpack.c.l.b16 %v169
  %v2045 = vunpack.c.l.b16 %v170
  %v2046 = vunpack.c.l.b16 %v171
  %v2047 = vunpack.c.l.b16 %v172
  %v2048 = vunpack.c.l.b16 %v173
  %v2049 = vunpack.c.l.b16 %v174
  %v2050 = vunpack.c.l.b16 %v175
  %v2051 = vunpack.c.l.b16 %v176
  %v2052 = vunpack.c.l.b16 %v177
  %v2053 = vunpack.c.l.b16 %v178
  %v2054 = vunpack.c.l.b16 %v179
  %v2055 = vunpack.c.l.b16 %v180
  %v2056 = vunpack.c.l.b16 %v181
  %v2057 = vunpack.c.l.b16 %v182
  %v2058 = vunpack.c.l.b16 %v183
  %v2059 = vunpack.c.l.b16 %v184
  %v2060 = vunpack.c.l.b16 %v185
  %v2061 = vunpack.c.l.b16 %v186
  %v2062 = vunpack.c.l.b16 %v187
  %v2063 = vunpack.c.l.b16 %v188
  %v2064 = vunpack.c.l.b16 %v189
  %v2065 = vunpack.c.l.b16 %v190
  %v2066 = vunpack.c.l.b16 %v191
  %v2067 = vunpack.c.l.b16 %v192
  %v2068 = vunpack.c.l.b16 %v193
  %v2069 = vunpack.c.l.b16 %v194
  %v2070 = vunpack.c.l.b16 %v195
  %v2071 = vunpack.c.l.b16 %v196
  %v2072 = vunpack.c.l.b16 %v197
  %v2073 = vunpack.c.l.b16 %v198
  %v2074 = vunpack.c.l.b16 %v199
  %v2075 = vunpack.c.l.b16 %v200
  %v2076 = vunpack.c.l.b16 %v201
  %v2077 = vunpack.c.l.b16 %v202
  %v2078 = vunpack.c.l.b16 %v203
  %v2079 = vunpack.c.l.b16 %v204
  %v2080 = vunpack.c.l.b16 %v205
  %v2081 = vpack.c.b16 %v2018, %v2017
  %v2082 = vpack.c.b16 %v2020, %v2019
  %v2083 = vpack.c.b16 %v2022, %v2021
  %v2084 = vpack.c.b16 %v2024, %v2023
  %v2085 = vpack.c.b16 %v2026, %v2025
  %v2086 = vpack.c.b16 %v2028, %v2027
  %v2087 = vpack.c.b16 %v2030, %v2029
  %v2088 = vpack.c.b16 %v2032, %v2031
  %v2089 = vpack.c.b16 %v2034, %v2033
  %v2090 = vpack.c.b16 %v2036, %v2035
  %v2091 = vpack.c.b16 %v2038, %v2037
  %v2092 = vpack.c.b16 %v2040, %v2039
  %v2093 = vpack.c.b16 %v2042, %v2041
  %v2094 = vpack.c.b16 %v2044, %v2043
  %v2095 = vpack.c.b16 %v2046, %v2045
  %v2096 = vpack.c.b16 %v2048, %v2047
  %v2097 = vpack.c.b16 %v2050, %v2049
  %v2098 = vpack.c.b16 %v2052, %v2051
  %v2099 = vpack.c.b16 %v2054, %v2053
  %v2100 = vpack.c.b16 %v2056, %v2055
  %v2101 = vpack.c.b16 %v2058, %v2057
  %v2102 = vpack.c.b16 %v2060, %v2059
  %v2103 = vpack.c.b16 %v2062, %v2061
  %v2104 = vpack.c.b16 %v2064, %v2063
  %v2105 = vpack.c.b16 %v2066, %v2065
  %v2106 = vpack.c.b16 %v2068, %v2067
  %v2107 = vpack.c.b16 %v2070, %v2069
  %v2108 = vpack.c.b16 %v2072, %v2071
  %v2109 = vpack.c.b16 %v2074, %v2073
  %v2110 = vpack.c.b16 %v2076, %v2075
  %v2111 = vpack.c.b16 %v2078, %v2077
  %v2112 = vpack.c.b16 %v2080, %v2079
  %2145 = vmatprep.subr.bf16.mxu0 0
  %2146 = vmatpush1.bf16.msra.mxu0 %v2088
  %2147 = vmatprep.subr.bf16.mxu0 0
  %2148 = vmatpush1.bf16.msra.mxu0 %v2087
  %2149 = vmatprep.subr.bf16.mxu0 0
  %2150 = vmatpush1.bf16.msra.mxu0 %v2086
  %2151 = vmatprep.subr.bf16.mxu0 0
  %2152 = vmatpush1.bf16.msra.mxu0 %v2085
  %2153 = vmatprep.subr.bf16.mxu0 0
  %2154 = vmatpush1.bf16.msra.mxu0 %v2084
  %2155 = vmatprep.subr.bf16.mxu0 0
  %2156 = vmatpush1.bf16.msra.mxu0 %v2083
  %2157 = vmatprep.subr.bf16.mxu0 0
  %2158 = vmatpush1.bf16.msra.mxu0 %v2082
  %2159 = vmatprep.subr.bf16.mxu0 0
  %2160 = vmatpush1.bf16.msra.mxu0 %v2081
  %2161 = vmatprep.subr.bf16.mxu0 0
  %2162 = vmatpush2.bf16.msra.mxu0 %v2096
  %2163 = vmatprep.subr.bf16.mxu0 0
  %2164 = vmatpush2.bf16.msra.mxu0 %v2095
  %2165 = vmatprep.subr.bf16.mxu0 0
  %2166 = vmatpush2.bf16.msra.mxu0 %v2094
  %2167 = vmatprep.subr.bf16.mxu0 0
  %2168 = vmatpush2.bf16.msra.mxu0 %v2093
  %2169 = vmatprep.subr.bf16.mxu0 0
  %2170 = vmatpush2.bf16.msra.mxu0 %v2092
  %2171 = vmatprep.subr.bf16.mxu0 0
  %2172 = vmatpush2.bf16.msra.mxu0 %v2091
  %2173 = vmatprep.subr.bf16.mxu0 0
  %2174 = vmatpush2.bf16.msra.mxu0 %v2090
  %2175 = vmatprep.subr.bf16.mxu0 0
  %2176 = vmatpush2.bf16.msra.mxu0 %v2089
  %2177 = vmatprep.mubr.bf16.mxu0 %v1945
  %2178 = vmatmul.mubr.bf16.gmra.mxu0 %v1944
  %v2179 = vpop.f32.mrf.mxu0
  %v2180 = vadd.f32 %v1952, %v2179
  %v2181 = vpop.f32.mrf.mxu0
  %v2182 = vpop.f32.mrf.mxu0
  %v2183 = vadd.f32 %v1952, %v2182
  %v2184 = vpop.f32.mrf.mxu0
  %2185 = vdwg.mxu0
  %2186 = vmatprep.subr.bf16.mxu0 0
  %2187 = vmatpush1.bf16.msra.mxu0 %v2104
  %2188 = vmatprep.subr.bf16.mxu0 0
  %2189 = vmatpush1.bf16.msra.mxu0 %v2103
  %2190 = vmatprep.subr.bf16.mxu0 0
  %2191 = vmatpush1.bf16.msra.mxu0 %v2102
  %2192 = vmatprep.subr.bf16.mxu0 0
  %2193 = vmatpush1.bf16.msra.mxu0 %v2101
  %2194 = vmatprep.subr.bf16.mxu0 0
  %2195 = vmatpush1.bf16.msra.mxu0 %v2100
  %2196 = vmatprep.subr.bf16.mxu0 0
  %2197 = vmatpush1.bf16.msra.mxu0 %v2099
  %2198 = vmatprep.subr.bf16.mxu0 0
  %2199 = vmatpush1.bf16.msra.mxu0 %v2098
  %2200 = vmatprep.subr.bf16.mxu0 0
  %2201 = vmatpush1.bf16.msra.mxu0 %v2097
  %2202 = vmatprep.subr.bf16.mxu0 0
  %2203 = vmatpush2.bf16.msra.mxu0 %v2112
  %2204 = vmatprep.subr.bf16.mxu0 0
  %2205 = vmatpush2.bf16.msra.mxu0 %v2111
  %2206 = vmatprep.subr.bf16.mxu0 0
  %2207 = vmatpush2.bf16.msra.mxu0 %v2110
  %2208 = vmatprep.subr.bf16.mxu0 0
  %2209 = vmatpush2.bf16.msra.mxu0 %v2109
  %2210 = vmatprep.subr.bf16.mxu0 0
  %2211 = vmatpush2.bf16.msra.mxu0 %v2108
  %2212 = vmatprep.subr.bf16.mxu0 0
  %2213 = vmatpush2.bf16.msra.mxu0 %v2107
  %2214 = vmatprep.subr.bf16.mxu0 0
  %2215 = vmatpush2.bf16.msra.mxu0 %v2106
  %2216 = vmatprep.subr.bf16.mxu0 0
  %2217 = vmatpush2.bf16.msra.mxu0 %v2105
  %2218 = vmatprep.mubr.bf16.mxu0 %v1947
  %2219 = vmatmul.mubr.bf16.gmra.mxu0 %v1946
  %v2220 = vpop.f32.mrf.mxu0
  %v2221 = vadd.f32 %v2180, %v2220
  %v2222 = vpop.f32.mrf.mxu0
  %v2223 = vpop.f32.mrf.mxu0
  %v2224 = vadd.f32 %v2183, %v2223
  %v2225 = vpop.f32.mrf.mxu0
  %2226 = vdwg.mxu0
  %v2227 = vadd.f32 %v1557, %v2221
  %v2228 = vadd.f32 %v1558, %v2224
  %2229 = vst [vmem:[#allocation2] sm:$0xff] %v2227
  %2230 = vst [vmem:[#allocation2 + $0x8] sm:$0xff] %v2228
  // Predicated region
  $region58: #{xl_text_encoder_forward.2} parent=0 // pred_check
    %p2231 = pneg %p45
  $region59: #{xl_text_encoder_forward.2} parent=0 // pred_check_branch
    %2233 = sbr.rel (%p2231) target = $region61
  $region60: #{xl_text_encoder_forward.2} parent=0 // pred_region
    %v2234 = vpack.c.bf16 %v2227, %v2227
    %v2235 = vpack.c.bf16 %v2228, %v2228
    %2236 = vst [vmem:[%s13] sm:$0xf] %v2234
    %2237 = vst [vmem:[%s13 + $0x4] sm:$0xf] %v2235
  $region61: #{xl_text_encoder_forward.2} parent=0 // pred_fallthru
    _
  // Predicated region
  $region62: #{xl_text_encoder_forward.2} parent=0 // pred_check
    _
  $region63: #{xl_text_encoder_forward.2} parent=0 // pred_check_branch
    %2239 = sbr.rel (0) target = $region65
  $region64: #{xl_text_encoder_forward.2} parent=0 // pred_region
    _
  $region65: #{xl_text_encoder_forward.2} parent=0 // pred_fallthru
    _
  // Predicated region
  $region66: #{xl_text_encoder_forward.2} parent=0 // pred_check
    _
  $region67: #{xl_text_encoder_forward.2} parent=0 // pred_check_branch
    %2241 = sbr.rel (0) target = $region69
  $region68: #{xl_text_encoder_forward.2} parent=0 // pred_region
    _
  $region69: #{xl_text_encoder_forward.2} parent=0 // pred_fallthru
    _

// kernel: xl_text_encoder_forward.3
$region0: #{xl_text_encoder_forward.3}
  #allocation0 [shape = 'u32[]', space=smem, size = 0x4, offset = 0x4, fixed_abs, tag = 'smem constant byte address 0x4 - core index']
  #allocation1 [shape = 'u32[144,128]{1,0:T(1,128)}', space=vmem, size = 0x12000, scoped, tag = 'internal scratch']
  #allocation2 [shape = 'f32[2,8,256]{2,1,0:T(8,128)}', space=vmem, size = 0x4000, scoped, tag = 'scratch operand']
  #allocation3 [shape = 's32[1]{0}', space=sflag, size = 0x4, scoped, tag = 'scoped memory for xl_text_encoder_forward.3']
  #allocation4 [shape = 'u8[512]{0}', space=smem, size = 0x200, scoped, tag = 'prefetched SMEM operand 0']
  %s0 = inlined_call_operand.vmem [shape: s32[2], index: 0, kind: input, shape index: {}]
  %s1 = inlined_call_operand.vmem [shape: bf16[2,8,256], index: 1, kind: input, shape index: {}]
  %s2 = inlined_call_operand.vmem [shape: bf16[2,1,256], index: 2, kind: input, shape index: {}]
  %s3 = inlined_call_operand.vmem [shape: bf16[2,1,256], index: 3, kind: input, shape index: {}]
  %s4 = inlined_call_operand.hbm [shape: bf16[2,256,768], index: 4, kind: input, shape index: {}]
  %s5 = inlined_call_operand.vmem [shape: bf16[2,1,768], index: 5, kind: input, shape index: {}]
  %s6 = inlined_call_operand.hbm [shape: bf16[2,256,256], index: 6, kind: input, shape index: {}]
  %s7 = inlined_call_operand.vmem [shape: bf16[2,1,256], index: 7, kind: input, shape index: {}]
  %s8 = inlined_call_operand.vmem [shape: bf16[2,1,256], index: 8, kind: input, shape index: {}]
  %s9 = inlined_call_operand.vmem [shape: bf16[2,1,256], index: 9, kind: input, shape index: {}]
  %s10 = inlined_call_operand.hbm [shape: bf16[2,256,1024], index: 10, kind: input, shape index: {}]
  %s11 = inlined_call_operand.vmem [shape: bf16[2,1,1024], index: 11, kind: input, shape index: {}]
  %s12 = inlined_call_operand.hbm [shape: bf16[2,1024,256], index: 12, kind: input, shape index: {}]
  %s13 = inlined_call_operand.vmem [shape: bf16[2,1,256], index: 13, kind: input, shape index: {}]
  %s14 = inlined_call_operand.vmem [shape: bf16[1,256], index: 14, kind: input, shape index: {}]
  %s15 = inlined_call_operand.vmem [shape: bf16[1,256], index: 15, kind: input, shape index: {}]
  %s16 = inlined_call_operand.vmem [shape: bf16[256,128], index: 16, kind: input, shape index: {}]
  %s17 = inlined_call_operand.vmem [shape: bf16[2,8,256], index: 17, kind: output, shape index: {0}]
  %s18 = inlined_call_operand.hbm [shape: f32[2,128], index: 18, kind: output, shape index: {1}]
  %19 = xla_tuple %s17, %s18
  %s20 = sld [smem:[#allocation0]]
  $region133: #{xl_text_encoder_forward.3} parent=0
    _
  %s22 = ssub.s32 1, %s20
  %s23 = scalar_select 0, %s22, %s20
  %s24 = sshll.u32 %s0, 4
  %s25 = int_to_ptr.vmem [resolvable:$true] %s24
  %27 = dma.vmem_to_smem %s25, 16, [#allocation4], [#allocation3]
  %28 = dma.done [#allocation3], 16
  %29 = sfence
  $region1: #{xl_text_encoder_forward.3} parent=0
    #allocation5 [shape = 'u8[786432]{0}', space=vmem, size = 0xc0000, scoped, tag = 'input window, operand 4']
    #allocation6 [shape = 's32[2]{0}', space=sflag, size = 0x8, scoped, tag = 'scoped memory for xl_text_encoder_forward.3']
    #allocation7 [shape = 's32[2]{0}', space=sflag, size = 0x8, scoped, tag = 'scoped memory for xl_text_encoder_forward.3']
    #allocation8 [shape = 'u8[262144]{0}', space=vmem, size = 0x40000, scoped, tag = 'input window, operand 6']
    #allocation9 [shape = 's32[2]{0}', space=sflag, size = 0x8, scoped, tag = 'scoped memory for xl_text_encoder_forward.3']
    #allocation10 [shape = 'u8[1048576]{0}', space=vmem, size = 0x100000, scoped, tag = 'input window, operand 10']
    #allocation11 [shape = 'u8[1048576]{0}', space=vmem, size = 0x100000, scoped, tag = 'input window, operand 12']
    #allocation12 [shape = 's32[2]{0}', space=sflag, size = 0x8, scoped, tag = 'scoped memory for xl_text_encoder_forward.3']
    #allocation13 [shape = 'u8[1024]{0}', space=vmem, size = 0x400, scoped, tag = 'output window, operand 1, single buffered']
    %30 = vsyncpa [#allocation6], 0
    %s31 = scalar_lea.sflag [#allocation6], 1
    %32 = vsyncpa %s31, 0
    %33 = vsyncpa [#allocation9], 0
    %s34 = scalar_lea.sflag [#allocation9], 1
    %35 = vsyncpa %s34, 0
    %36 = vsyncpa [#allocation12], 0
    %s37 = scalar_lea.sflag [#allocation12], 1
    %38 = vsyncpa %s37, 0
    %39 = vsyncpa [#allocation7], 0
    loop: start=0, step=1, limit=4
    $region2: #{xl_text_encoder_forward.3} parent=1 // loop_pre_header
      _
    $region3: #{xl_text_encoder_forward.3} parent=1 // loop_header
      %s41 = sphi 0, %s45
      %p42 = scmp.ge.s32.totalorder %s41, 4
      %s49 = sphi 0, %s49
      %s51 = sphi 0, %s49
      %s52 = sphi 0, %s51
      %s66 = sphi 0, %s52
      %s72 = sphi 0, %s74
      %s75 = sphi 0, %s72
      %s76 = sphi 0, %s75
      %s92 = sphi 0, %s76
      %s98 = sphi 0, %s100
      %s101 = sphi 0, %s98
      %s102 = sphi 0, %s101
      %s118 = sphi 0, %s102
      %s124 = sphi 0, %s126
      %s127 = sphi 0, %s124
      %s128 = sphi 0, %s127
      %s144 = sphi 0, %s128
      %s150 = sphi 0, %s152
      %s153 = sphi 0, %s150
      %s154 = sphi 0, %s153
      %s170 = sphi 0, %s154
      %s176 = sphi 0, %s178
      %s179 = sphi 0, %s176
      %s180 = sphi 0, %s179
      %s196 = sphi 0, %s180
      %s202 = sphi 0, %s204
      %s205 = sphi 0, %s202
      %s206 = sphi 0, %s205
      %s222 = sphi 0, %s206
      %s228 = sphi 0, %s230
      %s231 = sphi 0, %s228
      %s232 = sphi 0, %s231
      %s248 = sphi 0, %s232
      %s254 = sphi 0, %s256
      %s257 = sphi 0, %s254
      %s258 = sphi 0, %s257
      %s274 = sphi 0, %s258
      %s280 = sphi 0, %s282
      %s283 = sphi 0, %s280
      %s284 = sphi 0, %s283
      %s300 = sphi 0, %s284
      %s306 = sphi 0, %s308
      %s309 = sphi 0, %s306
      %s310 = sphi 0, %s309
      %s326 = sphi 0, %s310
      %s332 = sphi 0, %s334
      %s335 = sphi 0, %s332
      %s336 = sphi 0, %s335
      %s352 = sphi 0, %s336
      %s358 = sphi 0, %s360
      %s361 = sphi 0, %s358
      %s362 = sphi 0, %s361
      %s378 = sphi 0, %s362
      %s382 = sphi 0, %s382
      %s384 = sphi 0, %s382
      %s385 = sphi 0, %s384
      %s399 = sphi 0, %s385
      %s403 = sphi 0, %s403
      %s405 = sphi 0, %s403
      %s406 = sphi 0, %s405
      %s420 = sphi 0, %s406
      %s424 = sphi 0, %s424
      %s426 = sphi 0, %s424
      %s427 = sphi 0, %s426
      %s441 = sphi 0, %s427
      %s445 = sphi 0, %s445
      %s447 = sphi 0, %s445
      %s448 = sphi 0, %s447
      %s462 = sphi 0, %s448
      %s466 = sphi 0, %s466
      %s468 = sphi 0, %s466
      %s469 = sphi 0, %s468
      %s483 = sphi 0, %s469
    $region4: #{xl_text_encoder_forward.3} parent=1 // loop_header_branch
      %44 = sbr.rel (%p42) target = $region8
    $region5: #{xl_text_encoder_forward.3} parent=1 // loop_body
      %s46 = ssub.s32 %s41, 1
      %s47 = ssub.s32 %s41, 2
      %s48 = sadd.s32 %s41, 1
      %s50 = sadd.s32 %s49, 1
      %p53 = scmp.eq.s32.totalorder %s41, 1
      %p54 = scmp.ne.s32.totalorder %s49, %s51
      %p55 = scmp.eq.s32.totalorder %s41, 0
      %p56 = por %p54, %p55
      %p57 = scmp.ne.s32.totalorder %s49, %s51
      %p58 = scmp.eq.s32.totalorder %s46, 1
      %p59 = por %p57, %p58
      %p60 = scmp.ne.s32.totalorder %s51, %s52
      %p61 = scmp.eq.s32.totalorder %s46, 0
      %p62 = por %p60, %p61
      %p63 = scmp.ne.s32.totalorder %s51, %s52
      %p64 = scmp.eq.s32.totalorder %s47, 1
      %p65 = por %p63, %p64
      %p67 = scmp.ne.s32.totalorder %s52, %s66
      %p68 = scmp.eq.s32.totalorder %s47, 0
      %p69 = por %p67, %p68
      %s70 = ssub.s32 %s41, %s48
      %p71 = scmp.eq.s32.totalorder %s70, 0
      %s73 = sadd.s32 %s72, 1
      %s74 = scalar_select %p71, %s72, %s73
      %p77 = pneg %p71
      %p78 = scmp.eq.s32.totalorder %s41, 1
      %p79 = por %p77, %p78
      %p80 = scmp.ne.s32.totalorder %s72, %s75
      %p81 = scmp.eq.s32.totalorder %s41, 0
      %p82 = por %p80, %p81
      %p83 = scmp.ne.s32.totalorder %s72, %s75
      %p84 = scmp.eq.s32.totalorder %s46, 1
      %p85 = por %p83, %p84
      %p86 = scmp.ne.s32.totalorder %s75, %s76
      %p87 = scmp.eq.s32.totalorder %s46, 0
      %p88 = por %p86, %p87
      %p89 = scmp.ne.s32.totalorder %s75, %s76
      %p90 = scmp.eq.s32.totalorder %s47, 1
      %p91 = por %p89, %p90
      %p93 = scmp.ne.s32.totalorder %s76, %s92
      %p94 = scmp.eq.s32.totalorder %s47, 0
      %p95 = por %p93, %p94
      %s96 = ssub.s32 %s41, %s48
      %p97 = scmp.eq.s32.totalorder %s96, 0
      %s99 = sadd.s32 %s98, 1
      %s100 = scalar_select %p97, %s98, %s99
      %p103 = pneg %p97
      %p104 = scmp.eq.s32.totalorder %s41, 1
      %p105 = por %p103, %p104
      %p106 = scmp.ne.s32.totalorder %s98, %s101
      %p107 = scmp.eq.s32.totalorder %s41, 0
      %p108 = por %p106, %p107
      %p109 = scmp.ne.s32.totalorder %s98, %s101
      %p110 = scmp.eq.s32.totalorder %s46, 1
      %p111 = por %p109, %p110
      %p112 = scmp.ne.s32.totalorder %s101, %s102
      %p113 = scmp.eq.s32.totalorder %s46, 0
      %p114 = por %p112, %p113
      %p115 = scmp.ne.s32.totalorder %s101, %s102
      %p116 = scmp.eq.s32.totalorder %s47, 1
      %p117 = por %p115, %p116
      %p119 = scmp.ne.s32.totalorder %s102, %s118
      %p120 = scmp.eq.s32.totalorder %s47, 0
      %p121 = por %p119, %p120
      %s122 = ssub.s32 %s41, %s48
      %p123 = scmp.eq.s32.totalorder %s122, 0
      %s125 = sadd.s32 %s124, 1
      %s126 = scalar_select %p123, %s124, %s125
      %p129 = pneg %p123
      %p130 = scmp.eq.s32.totalorder %s41, 1
      %p131 = por %p129, %p130
      %p132 = scmp.ne.s32.totalorder %s124, %s127
      %p133 = scmp.eq.s32.totalorder %s41, 0
      %p134 = por %p132, %p133
      %p135 = scmp.ne.s32.totalorder %s124, %s127
      %p136 = scmp.eq.s32.totalorder %s46, 1
      %p137 = por %p135, %p136
      %p138 = scmp.ne.s32.totalorder %s127, %s128
      %p139 = scmp.eq.s32.totalorder %s46, 0
      %p140 = por %p138, %p139
      %p141 = scmp.ne.s32.totalorder %s127, %s128
      %p142 = scmp.eq.s32.totalorder %s47, 1
      %p143 = por %p141, %p142
      %p145 = scmp.ne.s32.totalorder %s128, %s144
      %p146 = scmp.eq.s32.totalorder %s47, 0
      %p147 = por %p145, %p146
      %s148 = ssub.s32 %s41, %s48
      %p149 = scmp.eq.s32.totalorder %s148, 0
      %s151 = sadd.s32 %s150, 1
      %s152 = scalar_select %p149, %s150, %s151
      %p155 = pneg %p149
      %p156 = scmp.eq.s32.totalorder %s41, 1
      %p157 = por %p155, %p156
      %p158 = scmp.ne.s32.totalorder %s150, %s153
      %p159 = scmp.eq.s32.totalorder %s41, 0
      %p160 = por %p158, %p159
      %p161 = scmp.ne.s32.totalorder %s150, %s153
      %p162 = scmp.eq.s32.totalorder %s46, 1
      %p163 = por %p161, %p162
      %p164 = scmp.ne.s32.totalorder %s153, %s154
      %p165 = scmp.eq.s32.totalorder %s46, 0
      %p166 = por %p164, %p165
      %p167 = scmp.ne.s32.totalorder %s153, %s154
      %p168 = scmp.eq.s32.totalorder %s47, 1
      %p169 = por %p167, %p168
      %p171 = scmp.ne.s32.totalorder %s154, %s170
      %p172 = scmp.eq.s32.totalorder %s47, 0
      %p173 = por %p171, %p172
      %s174 = ssub.s32 %s41, %s48
      %p175 = scmp.eq.s32.totalorder %s174, 0
      %s177 = sadd.s32 %s176, 1
      %s178 = scalar_select %p175, %s176, %s177
      %p181 = pneg %p175
      %p182 = scmp.eq.s32.totalorder %s41, 1
      %p183 = por %p181, %p182
      %p184 = scmp.ne.s32.totalorder %s176, %s179
      %p185 = scmp.eq.s32.totalorder %s41, 0
      %p186 = por %p184, %p185
      %p187 = scmp.ne.s32.totalorder %s176, %s179
      %p188 = scmp.eq.s32.totalorder %s46, 1
      %p189 = por %p187, %p188
      %p190 = scmp.ne.s32.totalorder %s179, %s180
      %p191 = scmp.eq.s32.totalorder %s46, 0
      %p192 = por %p190, %p191
      %p193 = scmp.ne.s32.totalorder %s179, %s180
      %p194 = scmp.eq.s32.totalorder %s47, 1
      %p195 = por %p193, %p194
      %p197 = scmp.ne.s32.totalorder %s180, %s196
      %p198 = scmp.eq.s32.totalorder %s47, 0
      %p199 = por %p197, %p198
      %s200 = ssub.s32 %s41, %s48
      %p201 = scmp.eq.s32.totalorder %s200, 0
      %s203 = sadd.s32 %s202, 1
      %s204 = scalar_select %p201, %s202, %s203
      %p207 = pneg %p201
      %p208 = scmp.eq.s32.totalorder %s41, 1
      %p209 = por %p207, %p208
      %p210 = scmp.ne.s32.totalorder %s202, %s205
      %p211 = scmp.eq.s32.totalorder %s41, 0
      %p212 = por %p210, %p211
      %p213 = scmp.ne.s32.totalorder %s202, %s205
      %p214 = scmp.eq.s32.totalorder %s46, 1
      %p215 = por %p213, %p214
      %p216 = scmp.ne.s32.totalorder %s205, %s206
      %p217 = scmp.eq.s32.totalorder %s46, 0
      %p218 = por %p216, %p217
      %p219 = scmp.ne.s32.totalorder %s205, %s206
      %p220 = scmp.eq.s32.totalorder %s47, 1
      %p221 = por %p219, %p220
      %p223 = scmp.ne.s32.totalorder %s206, %s222
      %p224 = scmp.eq.s32.totalorder %s47, 0
      %p225 = por %p223, %p224
      %s226 = ssub.s32 %s41, %s48
      %p227 = scmp.eq.s32.totalorder %s226, 0
      %s229 = sadd.s32 %s228, 1
      %s230 = scalar_select %p227, %s228, %s229
      %p233 = pneg %p227
      %p234 = scmp.eq.s32.totalorder %s41, 1
      %p235 = por %p233, %p234
      %p236 = scmp.ne.s32.totalorder %s228, %s231
      %p237 = scmp.eq.s32.totalorder %s41, 0
      %p238 = por %p236, %p237
      %p239 = scmp.ne.s32.totalorder %s228, %s231
      %p240 = scmp.eq.s32.totalorder %s46, 1
      %p241 = por %p239, %p240
      %p242 = scmp.ne.s32.totalorder %s231, %s232
      %p243 = scmp.eq.s32.totalorder %s46, 0
      %p244 = por %p242, %p243
      %p245 = scmp.ne.s32.totalorder %s231, %s232
      %p246 = scmp.eq.s32.totalorder %s47, 1
      %p247 = por %p245, %p246
      %p249 = scmp.ne.s32.totalorder %s232, %s248
      %p250 = scmp.eq.s32.totalorder %s47, 0
      %p251 = por %p249, %p250
      %s252 = ssub.s32 %s41, %s48
      %p253 = scmp.eq.s32.totalorder %s252, 0
      %s255 = sadd.s32 %s254, 1
      %s256 = scalar_select %p253, %s254, %s255
      %p259 = pneg %p253
      %p260 = scmp.eq.s32.totalorder %s41, 1
      %p261 = por %p259, %p260
      %p262 = scmp.ne.s32.totalorder %s254, %s257
      %p263 = scmp.eq.s32.totalorder %s41, 0
      %p264 = por %p262, %p263
      %p265 = scmp.ne.s32.totalorder %s254, %s257
      %p266 = scmp.eq.s32.totalorder %s46, 1
      %p267 = por %p265, %p266
      %p268 = scmp.ne.s32.totalorder %s257, %s258
      %p269 = scmp.eq.s32.totalorder %s46, 0
      %p270 = por %p268, %p269
      %p271 = scmp.ne.s32.totalorder %s257, %s258
      %p272 = scmp.eq.s32.totalorder %s47, 1
      %p273 = por %p271, %p272
      %p275 = scmp.ne.s32.totalorder %s258, %s274
      %p276 = scmp.eq.s32.totalorder %s47, 0
      %p277 = por %p275, %p276
      %s278 = ssub.s32 %s41, %s48
      %p279 = scmp.eq.s32.totalorder %s278, 0
      %s281 = sadd.s32 %s280, 1
      %s282 = scalar_select %p279, %s280, %s281
      %p285 = pneg %p279
      %p286 = scmp.eq.s32.totalorder %s41, 1
      %p287 = por %p285, %p286
      %p288 = scmp.ne.s32.totalorder %s280, %s283
      %p289 = scmp.eq.s32.totalorder %s41, 0
      %p290 = por %p288, %p289
      %p291 = scmp.ne.s32.totalorder %s280, %s283
      %p292 = scmp.eq.s32.totalorder %s46, 1
      %p293 = por %p291, %p292
      %p294 = scmp.ne.s32.totalorder %s283, %s284
      %p295 = scmp.eq.s32.totalorder %s46, 0
      %p296 = por %p294, %p295
      %p297 = scmp.ne.s32.totalorder %s283, %s284
      %p298 = scmp.eq.s32.totalorder %s47, 1
      %p299 = por %p297, %p298
      %p301 = scmp.ne.s32.totalorder %s284, %s300
      %p302 = scmp.eq.s32.totalorder %s47, 0
      %p303 = por %p301, %p302
      %s304 = ssub.s32 %s41, %s48
      %p305 = scmp.eq.s32.totalorder %s304, 0
      %s307 = sadd.s32 %s306, 1
      %s308 = scalar_select %p305, %s306, %s307
      %p311 = pneg %p305
      %p312 = scmp.eq.s32.totalorder %s41, 1
      %p313 = por %p311, %p312
      %p314 = scmp.ne.s32.totalorder %s306, %s309
      %p315 = scmp.eq.s32.totalorder %s41, 0
      %p316 = por %p314, %p315
      %p317 = scmp.ne.s32.totalorder %s306, %s309
      %p318 = scmp.eq.s32.totalorder %s46, 1
      %p319 = por %p317, %p318
      %p320 = scmp.ne.s32.totalorder %s309, %s310
      %p321 = scmp.eq.s32.totalorder %s46, 0
      %p322 = por %p320, %p321
      %p323 = scmp.ne.s32.totalorder %s309, %s310
      %p324 = scmp.eq.s32.totalorder %s47, 1
      %p325 = por %p323, %p324
      %p327 = scmp.ne.s32.totalorder %s310, %s326
      %p328 = scmp.eq.s32.totalorder %s47, 0
      %p329 = por %p327, %p328
      %s330 = ssub.s32 %s41, %s48
      %p331 = scmp.eq.s32.totalorder %s330, 0
      %s333 = sadd.s32 %s332, 1
      %s334 = scalar_select %p331, %s332, %s333
      %p337 = pneg %p331
      %p338 = scmp.eq.s32.totalorder %s41, 1
      %p339 = por %p337, %p338
      %p340 = scmp.ne.s32.totalorder %s332, %s335
      %p341 = scmp.eq.s32.totalorder %s41, 0
      %p342 = por %p340, %p341
      %p343 = scmp.ne.s32.totalorder %s332, %s335
      %p344 = scmp.eq.s32.totalorder %s46, 1
      %p345 = por %p343, %p344
      %p346 = scmp.ne.s32.totalorder %s335, %s336
      %p347 = scmp.eq.s32.totalorder %s46, 0
      %p348 = por %p346, %p347
      %p349 = scmp.ne.s32.totalorder %s335, %s336
      %p350 = scmp.eq.s32.totalorder %s47, 1
      %p351 = por %p349, %p350
      %p353 = scmp.ne.s32.totalorder %s336, %s352
      %p354 = scmp.eq.s32.totalorder %s47, 0
      %p355 = por %p353, %p354
      %s356 = ssub.s32 %s41, %s48
      %p357 = scmp.eq.s32.totalorder %s356, 0
      %s359 = sadd.s32 %s358, 1
      %s360 = scalar_select %p357, %s358, %s359
      %p363 = pneg %p357
      %p364 = scmp.eq.s32.totalorder %s41, 1
      %p365 = por %p363, %p364
      %p366 = scmp.ne.s32.totalorder %s358, %s361
      %p367 = scmp.eq.s32.totalorder %s41, 0
      %p368 = por %p366, %p367
      %p369 = scmp.ne.s32.totalorder %s358, %s361
      %p370 = scmp.eq.s32.totalorder %s46, 1
      %p371 = por %p369, %p370
      %p372 = scmp.ne.s32.totalorder %s361, %s362
      %p373 = scmp.eq.s32.totalorder %s46, 0
      %p374 = por %p372, %p373
      %p375 = scmp.ne.s32.totalorder %s361, %s362
      %p376 = scmp.eq.s32.totalorder %s47, 1
      %p377 = por %p375, %p376
      %p379 = scmp.ne.s32.totalorder %s362, %s378
      %p380 = scmp.eq.s32.totalorder %s47, 0
      %p381 = por %p379, %p380
      %s383 = sadd.s32 %s382, 1
      %p386 = scmp.eq.s32.totalorder %s41, 1
      %p387 = scmp.ne.s32.totalorder %s382, %s384
      %p388 = scmp.eq.s32.totalorder %s41, 0
      %p389 = por %p387, %p388
      %p390 = scmp.ne.s32.totalorder %s382, %s384
      %p391 = scmp.eq.s32.totalorder %s46, 1
      %p392 = por %p390, %p391
      %p393 = scmp.ne.s32.totalorder %s384, %s385
      %p394 = scmp.eq.s32.totalorder %s46, 0
      %p395 = por %p393, %p394
      %p396 = scmp.ne.s32.totalorder %s384, %s385
      %p397 = scmp.eq.s32.totalorder %s47, 1
      %p398 = por %p396, %p397
      %p400 = scmp.ne.s32.totalorder %s385, %s399
      %p401 = scmp.eq.s32.totalorder %s47, 0
      %p402 = por %p400, %p401
      %s404 = sadd.s32 %s403, 1
      %p407 = scmp.eq.s32.totalorder %s41, 1
      %p408 = scmp.ne.s32.totalorder %s403, %s405
      %p409 = scmp.eq.s32.totalorder %s41, 0
      %p410 = por %p408, %p409
      %p411 = scmp.ne.s32.totalorder %s403, %s405
      %p412 = scmp.eq.s32.totalorder %s46, 1
      %p413 = por %p411, %p412
      %p414 = scmp.ne.s32.totalorder %s405, %s406
      %p415 = scmp.eq.s32.totalorder %s46, 0
      %p416 = por %p414, %p415
      %p417 = scmp.ne.s32.totalorder %s405, %s406
      %p418 = scmp.eq.s32.totalorder %s47, 1
      %p419 = por %p417, %p418
      %p421 = scmp.ne.s32.totalorder %s406, %s420
      %p422 = scmp.eq.s32.totalorder %s47, 0
      %p423 = por %p421, %p422
      %s425 = sadd.s32 %s424, 1
      %p428 = scmp.eq.s32.totalorder %s41, 1
      %p429 = scmp.ne.s32.totalorder %s424, %s426
      %p430 = scmp.eq.s32.totalorder %s41, 0
      %p431 = por %p429, %p430
      %p432 = scmp.ne.s32.totalorder %s424, %s426
      %p433 = scmp.eq.s32.totalorder %s46, 1
      %p434 = por %p432, %p433
      %p435 = scmp.ne.s32.totalorder %s426, %s427
      %p436 = scmp.eq.s32.totalorder %s46, 0
      %p437 = por %p435, %p436
      %p438 = scmp.ne.s32.totalorder %s426, %s427
      %p439 = scmp.eq.s32.totalorder %s47, 1
      %p440 = por %p438, %p439
      %p442 = scmp.ne.s32.totalorder %s427, %s441
      %p443 = scmp.eq.s32.totalorder %s47, 0
      %p444 = por %p442, %p443
      %s446 = sadd.s32 %s445, 1
      %p449 = scmp.eq.s32.totalorder %s41, 1
      %p450 = scmp.ne.s32.totalorder %s445, %s447
      %p451 = scmp.eq.s32.totalorder %s41, 0
      %p452 = por %p450, %p451
      %p453 = scmp.ne.s32.totalorder %s445, %s447
      %p454 = scmp.eq.s32.totalorder %s46, 1
      %p455 = por %p453, %p454
      %p456 = scmp.ne.s32.totalorder %s447, %s448
      %p457 = scmp.eq.s32.totalorder %s46, 0
      %p458 = por %p456, %p457
      %p459 = scmp.ne.s32.totalorder %s447, %s448
      %p460 = scmp.eq.s32.totalorder %s47, 1
      %p461 = por %p459, %p460
      %p463 = scmp.ne.s32.totalorder %s448, %s462
      %p464 = scmp.eq.s32.totalorder %s47, 0
      %p465 = por %p463, %p464
      %s467 = sadd.s32 %s466, 1
      %p470 = scmp.eq.s32.totalorder %s41, 1
      %p471 = scmp.ne.s32.totalorder %s466, %s468
      %p472 = scmp.eq.s32.totalorder %s41, 0
      %p473 = por %p471, %p472
      %p474 = scmp.ne.s32.totalorder %s466, %s468
      %p475 = scmp.eq.s32.totalorder %s46, 1
      %p476 = por %p474, %p475
      %p477 = scmp.ne.s32.totalorder %s468, %s469
      %p478 = scmp.eq.s32.totalorder %s46, 0
      %p479 = por %p477, %p478
      %p480 = scmp.ne.s32.totalorder %s468, %s469
      %p481 = scmp.eq.s32.totalorder %s47, 1
      %p482 = por %p480, %p481
      %p484 = scmp.ne.s32.totalorder %s469, %s483
      %p485 = scmp.eq.s32.totalorder %s47, 0
      %p486 = por %p484, %p485
      %p487 = scmp.le.s32.totalorder 1, %s41
      %p488 = scmp.lt.s32.totalorder %s41, 3
      %p489 = pnand %p487, %p488
      %p490 = pneg %p489
      // Predicated region
      $region9: #{xl_text_encoder_forward.3} parent=5 // pred_check
        _
      $region10: #{xl_text_encoder_forward.3} parent=5 // pred_check_branch
        %492 = sbr.rel (%p489) target = $region12
      $region11: #{xl_text_encoder_forward.3} parent=5 // pred_region
        %s493 = ssub.s32 %s41, 1
        // Predicated region
        $region13: #{xl_text_encoder_forward.3} parent=11 // pred_check
          %p494 = pneg %p62
        $region14: #{xl_text_encoder_forward.3} parent=11 // pred_check_branch
          %496 = sbr.rel (%p494) target = $region16
        $region15: #{xl_text_encoder_forward.3} parent=11 // pred_region
          _
        $region16: #{xl_text_encoder_forward.3} parent=11 // pred_fallthru
          _
        // Predicated region
        $region17: #{xl_text_encoder_forward.3} parent=11 // pred_check
          %p497 = pneg %p395
        $region18: #{xl_text_encoder_forward.3} parent=11 // pred_check_branch
          %499 = sbr.rel (%p497) target = $region20
        $region19: #{xl_text_encoder_forward.3} parent=11 // pred_region
          _
        $region20: #{xl_text_encoder_forward.3} parent=11 // pred_fallthru
          _
        // Predicated region
        $region21: #{xl_text_encoder_forward.3} parent=11 // pred_check
          %p500 = pneg %p416
        $region22: #{xl_text_encoder_forward.3} parent=11 // pred_check_branch
          %502 = sbr.rel (%p500) target = $region24
        $region23: #{xl_text_encoder_forward.3} parent=11 // pred_region
          _
        $region24: #{xl_text_encoder_forward.3} parent=11 // pred_fallthru
          _
        // Predicated region
        $region25: #{xl_text_encoder_forward.3} parent=11 // pred_check
          %p503 = pneg %p437
        $region26: #{xl_text_encoder_forward.3} parent=11 // pred_check_branch
          %505 = sbr.rel (%p503) target = $region28
        $region27: #{xl_text_encoder_forward.3} parent=11 // pred_region
          _
        $region28: #{xl_text_encoder_forward.3} parent=11 // pred_fallthru
          _
      $region12: #{xl_text_encoder_forward.3} parent=5 // pred_fallthru
        _
      %p506 = scmp.lt.s32.totalorder %s41, 2
      // Predicated region
      $region29: #{xl_text_encoder_forward.3} parent=5 // pred_check
        %p507 = pneg %p506
      $region30: #{xl_text_encoder_forward.3} parent=5 // pred_check_branch
        %509 = sbr.rel (%p507) target = $region32
      $region31: #{xl_text_encoder_forward.3} parent=5 // pred_region
        // Predicated region
        $region33: #{xl_text_encoder_forward.3} parent=31 // pred_check
          %p510 = pneg %p82
        $region34: #{xl_text_encoder_forward.3} parent=31 // pred_check_branch
          %512 = sbr.rel (%p510) target = $region36
        $region35: #{xl_text_encoder_forward.3} parent=31 // pred_region
          %p513 = scmp.lt.s32.totalorder %s41, 1
          %s514 = scalar_select %p513, %s41, 1
          %s515 = smul.addr %s514, 2
          %s516 = scalar_lea.vmem %s2, %s515
        $region36: #{xl_text_encoder_forward.3} parent=31 // pred_fallthru
          _
        // Predicated region
        $region37: #{xl_text_encoder_forward.3} parent=31 // pred_check
          %p517 = pneg %p108
        $region38: #{xl_text_encoder_forward.3} parent=31 // pred_check_branch
          %519 = sbr.rel (%p517) target = $region40
        $region39: #{xl_text_encoder_forward.3} parent=31 // pred_region
          %p520 = scmp.lt.s32.totalorder %s41, 1
          %s521 = scalar_select %p520, %s41, 1
          %s522 = smul.addr %s521, 2
          %s523 = scalar_lea.vmem %s3, %s522
        $region40: #{xl_text_encoder_forward.3} parent=31 // pred_fallthru
          _
        // Predicated region
        $region41: #{xl_text_encoder_forward.3} parent=31 // pred_check
          %p524 = pneg %p134
        $region42: #{xl_text_encoder_forward.3} parent=31 // pred_check_branch
          %526 = sbr.rel (%p524) target = $region44
        $region43: #{xl_text_encoder_forward.3} parent=31 // pred_region
          %s527 = sand.u32 %s124, 1
          %s528 = scalar_lea.sflag [#allocation6], %s527
          %s529 = sand.u32 %s124, 1
          %s530 = smul.addr %s529, 768
          %s531 = scalar_lea.vmem [#allocation5], %s530
          %s533 = ssub.s32 12288, 12288
          %534 = vsyncadd %s528, %s533
          %s535 = smul.addr %s41, 192
          %s536 = smul.addr %s535, 64
          %s537 = scalar_lea.hbm %s4, %s536
          %s538 = sshll.u32 %s531, 4
          %s539 = int_to_ptr.vmem [resolvable:$true] %s538
          %544 = dma.hbm_to_vmem [thread:$0]  %s537, 12288, %s539, %s528, 384, 384, 24
        $region44: #{xl_text_encoder_forward.3} parent=31 // pred_fallthru
          _
        // Predicated region
        $region45: #{xl_text_encoder_forward.3} parent=31 // pred_check
          %p545 = pneg %p160
        $region46: #{xl_text_encoder_forward.3} parent=31 // pred_check_branch
          %547 = sbr.rel (%p545) target = $region48
        $region47: #{xl_text_encoder_forward.3} parent=31 // pred_region
          %p548 = scmp.lt.s32.totalorder %s41, 1
          %s549 = scalar_select %p548, %s41, 1
          %s550 = smul.addr %s549, 6
          %s551 = scalar_lea.vmem %s5, %s550
        $region48: #{xl_text_encoder_forward.3} parent=31 // pred_fallthru
          _
        // Predicated region
        $region49: #{xl_text_encoder_forward.3} parent=31 // pred_check
          %p552 = pneg %p186
        $region50: #{xl_text_encoder_forward.3} parent=31 // pred_check_branch
          %554 = sbr.rel (%p552) target = $region52
        $region51: #{xl_text_encoder_forward.3} parent=31 // pred_region
          %s555 = sand.u32 %s41, 1
          %s556 = scalar_lea.sflag [#allocation9], %s555
          %s557 = sand.u32 %s176, 1
          %s558 = smul.addr %s557, 256
          %s559 = scalar_lea.vmem [#allocation8], %s558
          %s561 = ssub.s32 4096, 4096
          %562 = vsyncadd %s556, %s561
          %s563 = smul.addr %s41, 64
          %s564 = smul.addr %s563, 64
          %s565 = scalar_lea.hbm %s6, %s564
          %s566 = sshll.u32 %s559, 4
          %s567 = int_to_ptr.vmem [resolvable:$true] %s566
          %572 = dma.hbm_to_vmem [thread:$0]  %s565, 4096, %s567, %s556, 128, 128, 8
        $region52: #{xl_text_encoder_forward.3} parent=31 // pred_fallthru
          _
        // Predicated region
        $region53: #{xl_text_encoder_forward.3} parent=31 // pred_check
          %p573 = pneg %p212
        $region54: #{xl_text_encoder_forward.3} parent=31 // pred_check_branch
          %575 = sbr.rel (%p573) target = $region56
        $region55: #{xl_text_encoder_forward.3} parent=31 // pred_region
          %p576 = scmp.lt.s32.totalorder %s41, 1
          %s577 = scalar_select %p576, %s41, 1
          %s578 = smul.addr %s577, 2
          %s579 = scalar_lea.vmem %s7, %s578
        $region56: #{xl_text_encoder_forward.3} parent=31 // pred_fallthru
          _
        // Predicated region
        $region57: #{xl_text_encoder_forward.3} parent=31 // pred_check
          %p580 = pneg %p238
        $region58: #{xl_text_encoder_forward.3} parent=31 // pred_check_branch
          %582 = sbr.rel (%p580) target = $region60
        $region59: #{xl_text_encoder_forward.3} parent=31 // pred_region
          %p583 = scmp.lt.s32.totalorder %s41, 1
          %s584 = scalar_select %p583, %s41, 1
          %s585 = smul.addr %s584, 2
          %s586 = scalar_lea.vmem %s8, %s585
        $region60: #{xl_text_encoder_forward.3} parent=31 // pred_fallthru
          _
        // Predicated region
        $region61: #{xl_text_encoder_forward.3} parent=31 // pred_check
          %p587 = pneg %p264
        $region62: #{xl_text_encoder_forward.3} parent=31 // pred_check_branch
          %589 = sbr.rel (%p587) target = $region64
        $region63: #{xl_text_encoder_forward.3} parent=31 // pred_region
          %p590 = scmp.lt.s32.totalorder %s41, 1
          %s591 = scalar_select %p590, %s41, 1
          %s592 = smul.addr %s591, 2
          %s593 = scalar_lea.vmem %s9, %s592
        $region64: #{xl_text_encoder_forward.3} parent=31 // pred_fallthru
          _
        // Predicated region
        $region65: #{xl_text_encoder_forward.3} parent=31 // pred_check
          %p594 = pneg %p290
        $region66: #{xl_text_encoder_forward.3} parent=31 // pred_check_branch
          %596 = sbr.rel (%p594) target = $region68
        $region67: #{xl_text_encoder_forward.3} parent=31 // pred_region
          %s597 = sand.u32 %s41, 1
          %s598 = scalar_lea.sflag [#allocation9], %s597
          %s599 = sand.u32 %s280, 1
          %s600 = smul.addr %s599, 1024
          %s601 = scalar_lea.vmem [#allocation10], %s600
          %s603 = ssub.s32 16384, 16384
          %604 = vsyncadd %s598, %s603
          %s605 = smul.addr %s41, 256
          %s606 = smul.addr %s605, 64
          %s607 = scalar_lea.hbm %s10, %s606
          %s608 = sshll.u32 %s601, 4
          %s609 = int_to_ptr.vmem [resolvable:$true] %s608
          %614 = dma.hbm_to_vmem [thread:$0]  %s607, 16384, %s609, %s598, 512, 512, 32
        $region68: #{xl_text_encoder_forward.3} parent=31 // pred_fallthru
          _
        // Predicated region
        $region69: #{xl_text_encoder_forward.3} parent=31 // pred_check
          %p615 = pneg %p316
        $region70: #{xl_text_encoder_forward.3} parent=31 // pred_check_branch
          %617 = sbr.rel (%p615) target = $region72
        $region71: #{xl_text_encoder_forward.3} parent=31 // pred_region
          %p618 = scmp.lt.s32.totalorder %s41, 1
          %s619 = scalar_select %p618, %s41, 1
          %s620 = smul.addr %s619, 8
          %s621 = scalar_lea.vmem %s11, %s620
        $region72: #{xl_text_encoder_forward.3} parent=31 // pred_fallthru
          _
        // Predicated region
        $region73: #{xl_text_encoder_forward.3} parent=31 // pred_check
          %p622 = pneg %p342
        $region74: #{xl_text_encoder_forward.3} parent=31 // pred_check_branch
          %624 = sbr.rel (%p622) target = $region76
        $region75: #{xl_text_encoder_forward.3} parent=31 // pred_region
          %s625 = sand.u32 %s332, 1
          %s626 = scalar_lea.sflag [#allocation12], %s625
          %s627 = sand.u32 %s332, 1
          %s628 = smul.addr %s627, 1024
          %s629 = scalar_lea.vmem [#allocation11], %s628
          %s631 = ssub.s32 16384, 16384
          %632 = vsyncadd %s626, %s631
          %s633 = smul.addr %s41, 256
          %s634 = smul.addr %s633, 64
          %s635 = scalar_lea.hbm %s12, %s634
          %s636 = sshll.u32 %s629, 4
          %s637 = int_to_ptr.vmem [resolvable:$true] %s636
          %642 = dma.hbm_to_vmem [thread:$0]  %s635, 16384, %s637, %s626, 128, 128, 8
        $region76: #{xl_text_encoder_forward.3} parent=31 // pred_fallthru
          _
        // Predicated region
        $region77: #{xl_text_encoder_forward.3} parent=31 // pred_check
          %p643 = pneg %p368
        $region78: #{xl_text_encoder_forward.3} parent=31 // pred_check_branch
          %645 = sbr.rel (%p643) target = $region80
        $region79: #{xl_text_encoder_forward.3} parent=31 // pred_region
          %p646 = scmp.lt.s32.totalorder %s41, 1
          %s647 = scalar_select %p646, %s41, 1
          %s648 = smul.addr %s647, 2
          %s649 = scalar_lea.vmem %s13, %s648
        $region80: #{xl_text_encoder_forward.3} parent=31 // pred_fallthru
          _
      $region32: #{xl_text_encoder_forward.3} parent=5 // pred_fallthru
        _
      %p650 = scmp.le.s32.totalorder 1, %s41
      %p651 = scmp.lt.s32.totalorder %s41, 3
      %p652 = pnand %p650, %p651
      %p653 = pneg %p652
      // Predicated region
      $region81: #{xl_text_encoder_forward.3} parent=5 // pred_check
        _
      $region82: #{xl_text_encoder_forward.3} parent=5 // pred_check_branch
        %655 = sbr.rel (%p652) target = $region84
      $region83: #{xl_text_encoder_forward.3} parent=5 // pred_region
        %s656 = ssub.s32 %s41, 1
        %s657 = sand.u32 %s127, 1
        %s658 = scalar_lea.sflag [#allocation6], %s657
        %s659 = sand.u32 %s127, 1
        %s660 = smul.addr %s659, 768
        %s661 = scalar_lea.vmem [#allocation5], %s660
        // Predicated region
        $region85: #{xl_text_encoder_forward.3} parent=83 // pred_check
          %p662 = pneg %p140
        $region86: #{xl_text_encoder_forward.3} parent=83 // pred_check_branch
          %664 = sbr.rel (%p662) target = $region88
        $region87: #{xl_text_encoder_forward.3} parent=83 // pred_region
          %665 = dma.done %s658, 12288
        $region88: #{xl_text_encoder_forward.3} parent=83 // pred_fallthru
          _
        %s666 = sand.u32 %s46, 1
        %s667 = scalar_lea.sflag [#allocation9], %s666
        %s668 = sand.u32 %s179, 1
        %s669 = smul.addr %s668, 256
        %s670 = scalar_lea.vmem [#allocation8], %s669
        // Predicated region
        $region89: #{xl_text_encoder_forward.3} parent=83 // pred_check
          %p671 = pneg %p192
        $region90: #{xl_text_encoder_forward.3} parent=83 // pred_check_branch
          %673 = sbr.rel (%p671) target = $region92
        $region91: #{xl_text_encoder_forward.3} parent=83 // pred_region
          %674 = dma.done %s667, 4096
        $region92: #{xl_text_encoder_forward.3} parent=83 // pred_fallthru
          _
        %s675 = sand.u32 %s46, 1
        %s676 = scalar_lea.sflag [#allocation9], %s675
        %s677 = sand.u32 %s283, 1
        %s678 = smul.addr %s677, 1024
        %s679 = scalar_lea.vmem [#allocation10], %s678
        // Predicated region
        $region93: #{xl_text_encoder_forward.3} parent=83 // pred_check
          %p680 = pneg %p296
        $region94: #{xl_text_encoder_forward.3} parent=83 // pred_check_branch
          %682 = sbr.rel (%p680) target = $region96
        $region95: #{xl_text_encoder_forward.3} parent=83 // pred_region
          %683 = dma.done %s676, 16384
        $region96: #{xl_text_encoder_forward.3} parent=83 // pred_fallthru
          _
        %s684 = sand.u32 %s335, 1
        %s685 = scalar_lea.sflag [#allocation12], %s684
        %s686 = sand.u32 %s335, 1
        %s687 = smul.addr %s686, 1024
        %s688 = scalar_lea.vmem [#allocation11], %s687
        // Predicated region
        $region97: #{xl_text_encoder_forward.3} parent=83 // pred_check
          %p689 = pneg %p348
        $region98: #{xl_text_encoder_forward.3} parent=83 // pred_check_branch
          %691 = sbr.rel (%p689) target = $region100
        $region99: #{xl_text_encoder_forward.3} parent=83 // pred_region
          %692 = dma.done %s685, 16384
        $region100: #{xl_text_encoder_forward.3} parent=83 // pred_fallthru
          _
        %p693 = pneg %p62
        %p694 = pneg %p59
        %p695 = scmp.lt.s32.totalorder %s46, 1
        %s696 = scalar_select %p695, %s46, 1
        %s697 = smul.addr %s696, 2
        %s698 = scalar_lea.vmem %s2, %s697
        %p699 = pneg %p88
        %p700 = pneg %p85
        %p701 = scmp.lt.s32.totalorder %s46, 1
        %s702 = scalar_select %p701, %s46, 1
        %s703 = smul.addr %s702, 2
        %s704 = scalar_lea.vmem %s3, %s703
        %p705 = pneg %p114
        %p706 = pneg %p111
        %s707 = sand.u32 %s127, 1
        %s708 = scalar_lea.sflag [#allocation6], %s707
        %s709 = sand.u32 %s127, 1
        %s710 = smul.addr %s709, 768
        %s711 = scalar_lea.vmem [#allocation5], %s710
        %p712 = pneg %p140
        %p713 = pneg %p137
        %p714 = scmp.lt.s32.totalorder %s46, 1
        %s715 = scalar_select %p714, %s46, 1
        %s716 = smul.addr %s715, 6
        %s717 = scalar_lea.vmem %s5, %s716
        %p718 = pneg %p166
        %p719 = pneg %p163
        %s720 = sand.u32 %s46, 1
        %s721 = scalar_lea.sflag [#allocation9], %s720
        %s722 = sand.u32 %s179, 1
        %s723 = smul.addr %s722, 256
        %s724 = scalar_lea.vmem [#allocation8], %s723
        %p725 = pneg %p192
        %p726 = pneg %p189
        %p727 = scmp.lt.s32.totalorder %s46, 1
        %s728 = scalar_select %p727, %s46, 1
        %s729 = smul.addr %s728, 2
        %s730 = scalar_lea.vmem %s7, %s729
        %p731 = pneg %p218
        %p732 = pneg %p215
        %p733 = scmp.lt.s32.totalorder %s46, 1
        %s734 = scalar_select %p733, %s46, 1
        %s735 = smul.addr %s734, 2
        %s736 = scalar_lea.vmem %s8, %s735
        %p737 = pneg %p244
        %p738 = pneg %p241
        %p739 = scmp.lt.s32.totalorder %s46, 1
        %s740 = scalar_select %p739, %s46, 1
        %s741 = smul.addr %s740, 2
        %s742 = scalar_lea.vmem %s9, %s741
        %p743 = pneg %p270
        %p744 = pneg %p267
        %s745 = sand.u32 %s46, 1
        %s746 = scalar_lea.sflag [#allocation9], %s745
        %s747 = sand.u32 %s283, 1
        %s748 = smul.addr %s747, 1024
        %s749 = scalar_lea.vmem [#allocation10], %s748
        %p750 = pneg %p296
        %p751 = pneg %p293
        %p752 = scmp.lt.s32.totalorder %s46, 1
        %s753 = scalar_select %p752, %s46, 1
        %s754 = smul.addr %s753, 8
        %s755 = scalar_lea.vmem %s11, %s754
        %p756 = pneg %p322
        %p757 = pneg %p319
        %s758 = sand.u32 %s335, 1
        %s759 = scalar_lea.sflag [#allocation12], %s758
        %s760 = sand.u32 %s335, 1
        %s761 = smul.addr %s760, 1024
        %s762 = scalar_lea.vmem [#allocation11], %s761
        %p763 = pneg %p348
        %p764 = pneg %p345
        %p765 = scmp.lt.s32.totalorder %s46, 1
        %s766 = scalar_select %p765, %s46, 1
        %s767 = smul.addr %s766, 2
        %s768 = scalar_lea.vmem %s13, %s767
        %p769 = pneg %p374
        %p770 = pneg %p371
        %p771 = pneg %p395
        %p772 = pneg %p392
        %p773 = pneg %p416
        %p774 = pneg %p413
        %p775 = pneg %p437
        %p776 = pneg %p434
        %p777 = pneg %p458
        %p778 = pneg %p455
        %p779 = pneg %p479
        %p780 = pneg %p476
        %p781 = scmp.lt.s32.totalorder %s46, 1
        %s782 = scalar_select %p781, %s46, 1
        %s783 = smul.addr %s782, 2
        %s784 = scalar_lea.vmem %s2, %s783
        %p785 = scmp.lt.s32.totalorder %s46, 1
        %s786 = scalar_select %p785, %s46, 1
        %s787 = smul.addr %s786, 2
        %s788 = scalar_lea.vmem %s3, %s787
        %p789 = scmp.lt.s32.totalorder %s46, 1
        %s790 = scalar_select %p789, %s46, 1
        %s791 = smul.addr %s790, 6
        %s792 = scalar_lea.vmem %s5, %s791
        %p793 = scmp.lt.s32.totalorder %s46, 1
        %s794 = scalar_select %p793, %s46, 1
        %s795 = smul.addr %s794, 2
        %s796 = scalar_lea.vmem %s7, %s795
        %p797 = scmp.lt.s32.totalorder %s46, 1
        %s798 = scalar_select %p797, %s46, 1
        %s799 = smul.addr %s798, 2
        %s800 = scalar_lea.vmem %s8, %s799
        %p801 = scmp.lt.s32.totalorder %s46, 1
        %s802 = scalar_select %p801, %s46, 1
        %s803 = smul.addr %s802, 2
        %s804 = scalar_lea.vmem %s9, %s803
        %p805 = scmp.lt.s32.totalorder %s46, 1
        %s806 = scalar_select %p805, %s46, 1
        %s807 = smul.addr %s806, 8
        %s808 = scalar_lea.vmem %s11, %s807
        %p809 = scmp.lt.s32.totalorder %s46, 1
        %s810 = scalar_select %p809, %s46, 1
        %s811 = smul.addr %s810, 2
        %s812 = scalar_lea.vmem %s13, %s811
        %p814 = scmp.eq.s32.totalorder %s46, 0
        // Predicated region
        $region101: #{xl_text_encoder_forward.3} parent=83 // pred_check
          %p815 = pneg %p814
        $region102: #{xl_text_encoder_forward.3} parent=83 // pred_check_branch
          %817 = sbr.rel (%p815) target = $region104
        $region103: #{xl_text_encoder_forward.3} parent=83 // pred_region
          %v818 = vld [vmem:[%s1] sm:$0xff]
          %v819 = vld [vmem:[%s1 + $0x8] sm:$0xff]
          %v820 = vunpack.c.l.bf16 %v818
          %v821 = vunpack.c.h.bf16 %v818
          %v822 = vunpack.c.l.bf16 %v819
          %v823 = vunpack.c.h.bf16 %v819
          %824 = vst [vmem:[#allocation2] sm:$0xff] %v820
          %825 = vst [vmem:[#allocation2 + $0x8] sm:$0xff] %v821
          %826 = vst [vmem:[#allocation2 + $0x10] sm:$0xff] %v822
          %827 = vst [vmem:[#allocation2 + $0x18] sm:$0xff] %v823
        $region104: #{xl_text_encoder_forward.3} parent=83 // pred_fallthru
          _
        %v828 = vld [vmem:[%s784] sm:$0x3]
        %v829 = vld [vmem:[%s788] sm:$0x3]
        %v830 = vld [vmem:[%s661] sm:$0xff]
        %v831 = vld [vmem:[%s661 + $0x8] sm:$0xff]
        %v832 = vld [vmem:[%s661 + $0x10] sm:$0xff]
        %v833 = vld [vmem:[%s661 + $0x18] sm:$0xff]
        %v834 = vld [vmem:[%s661 + $0x20] sm:$0xff]
        %v835 = vld [vmem:[%s661 + $0x28] sm:$0xff]
        %v836 = vld [vmem:[%s661 + $0x30] sm:$0xff]
        %v837 = vld [vmem:[%s661 + $0x38] sm:$0xff]
        %v838 = vld [vmem:[%s661 + $0x40] sm:$0xff]
        %v839 = vld [vmem:[%s661 + $0x48] sm:$0xff]
        %v840 = vld [vmem:[%s661 + $0x50] sm:$0xff]
        %v841 = vld [vmem:[%s661 + $0x58] sm:$0xff]
        %v842 = vld [vmem:[%s661 + $0x60] sm:$0xff]
        %v843 = vld [vmem:[%s661 + $0x68] sm:$0xff]
        %v844 = vld [vmem:[%s661 + $0x70] sm:$0xff]
        %v845 = vld [vmem:[%s661 + $0x78] sm:$0xff]
        %v846 = vld [vmem:[%s661 + $0x80] sm:$0xff]
        %v847 = vld [vmem:[%s661 + $0x88] sm:$0xff]
        %v848 = vld [vmem:[%s661 + $0x90] sm:$0xff]
        %v849 = vld [vmem:[%s661 + $0x98] sm:$0xff]
        %v850 = vld [vmem:[%s661 + $0xa0] sm:$0xff]
        %v851 = vld [vmem:[%s661 + $0xa8] sm:$0xff]
        %v852 = vld [vmem:[%s661 + $0xb0] sm:$0xff]
        %v853 = vld [vmem:[%s661 + $0xb8] sm:$0xff]
        %v854 = vld [vmem:[%s661 + $0xc0] sm:$0xff]
        %v855 = vld [vmem:[%s661 + $0xc8] sm:$0xff]
        %v856 = vld [vmem:[%s661 + $0xd0] sm:$0xff]
        %v857 = vld [vmem:[%s661 + $0xd8] sm:$0xff]
        %v858 = vld [vmem:[%s661 + $0xe0] sm:$0xff]
        %v859 = vld [vmem:[%s661 + $0xe8] sm:$0xff]
        %v860 = vld [vmem:[%s661 + $0xf0] sm:$0xff]
        %v861 = vld [vmem:[%s661 + $0xf8] sm:$0xff]
        %v862 = vld [vmem:[%s661 + $0x100] sm:$0xff]
        %v863 = vld [vmem:[%s661 + $0x108] sm:$0xff]
        %v864 = vld [vmem:[%s661 + $0x110] sm:$0xff]
        %v865 = vld [vmem:[%s661 + $0x118] sm:$0xff]
        %v866 = vld [vmem:[%s661 + $0x120] sm:$0xff]
        %v867 = vld [vmem:[%s661 + $0x128] sm:$0xff]
        %v868 = vld [vmem:[%s661 + $0x130] sm:$0xff]
        %v869 = vld [vmem:[%s661 + $0x138] sm:$0xff]
        %v870 = vld [vmem:[%s661 + $0x140] sm:$0xff]
        %v871 = vld [vmem:[%s661 + $0x148] sm:$0xff]
        %v872 = vld [vmem:[%s661 + $0x150] sm:$0xff]
        %v873 = vld [vmem:[%s661 + $0x158] sm:$0xff]
        %v874 = vld [vmem:[%s661 + $0x160] sm:$0xff]
        %v875 = vld [vmem:[%s661 + $0x168] sm:$0xff]
        %v876 = vld [vmem:[%s661 + $0x170] sm:$0xff]
        %v877 = vld [vmem:[%s661 + $0x178] sm:$0xff]
        %v878 = vld [vmem:[%s661 + $0x180] sm:$0xff]
        %v879 = vld [vmem:[%s661 + $0x188] sm:$0xff]
        %v880 = vld [vmem:[%s661 + $0x190] sm:$0xff]
        %v881 = vld [vmem:[%s661 + $0x198] sm:$0xff]
        %v882 = vld [vmem:[%s661 + $0x1a0] sm:$0xff]
        %v883 = vld [vmem:[%s661 + $0x1a8] sm:$0xff]
        %v884 = vld [vmem:[%s661 + $0x1b0] sm:$0xff]
        %v885 = vld [vmem:[%s661 + $0x1b8] sm:$0xff]
        %v886 = vld [vmem:[%s661 + $0x1c0] sm:$0xff]
        %v887 = vld [vmem:[%s661 + $0x1c8] sm:$0xff]
        %v888 = vld [vmem:[%s661 + $0x1d0] sm:$0xff]
        %v889 = vld [vmem:[%s661 + $0x1d8] sm:$0xff]
        %v890 = vld [vmem:[%s661 + $0x1e0] sm:$0xff]
        %v891 = vld [vmem:[%s661 + $0x1e8] sm:$0xff]
        %v892 = vld [vmem:[%s661 + $0x1f0] sm:$0xff]
        %v893 = vld [vmem:[%s661 + $0x1f8] sm:$0xff]
        %v894 = vld [vmem:[%s661 + $0x200] sm:$0xff]
        %v895 = vld [vmem:[%s661 + $0x208] sm:$0xff]
        %v896 = vld [vmem:[%s661 + $0x210] sm:$0xff]
        %v897 = vld [vmem:[%s661 + $0x218] sm:$0xff]
        %v898 = vld [vmem:[%s661 + $0x220] sm:$0xff]
        %v899 = vld [vmem:[%s661 + $0x228] sm:$0xff]
        %v900 = vld [vmem:[%s661 + $0x230] sm:$0xff]
        %v901 = vld [vmem:[%s661 + $0x238] sm:$0xff]
        %v902 = vld [vmem:[%s661 + $0x240] sm:$0xff]
        %v903 = vld [vmem:[%s661 + $0x248] sm:$0xff]
        %v904 = vld [vmem:[%s661 + $0x250] sm:$0xff]
        %v905 = vld [vmem:[%s661 + $0x258] sm:$0xff]
        %v906 = vld [vmem:[%s661 + $0x260] sm:$0xff]
        %v907 = vld [vmem:[%s661 + $0x268] sm:$0xff]
        %v908 = vld [vmem:[%s661 + $0x270] sm:$0xff]
        %v909 = vld [vmem:[%s661 + $0x278] sm:$0xff]
        %v910 = vld [vmem:[%s661 + $0x280] sm:$0xff]
        %v911 = vld [vmem:[%s661 + $0x288] sm:$0xff]
        %v912 = vld [vmem:[%s661 + $0x290] sm:$0xff]
        %v913 = vld [vmem:[%s661 + $0x298] sm:$0xff]
        %v914 = vld [vmem:[%s661 + $0x2a0] sm:$0xff]
        %v915 = vld [vmem:[%s661 + $0x2a8] sm:$0xff]
        %v916 = vld [vmem:[%s661 + $0x2b0] sm:$0xff]
        %v917 = vld [vmem:[%s661 + $0x2b8] sm:$0xff]
        %v918 = vld [vmem:[%s661 + $0x2c0] sm:$0xff]
        %v919 = vld [vmem:[%s661 + $0x2c8] sm:$0xff]
        %v920 = vld [vmem:[%s661 + $0x2d0] sm:$0xff]
        %v921 = vld [vmem:[%s661 + $0x2d8] sm:$0xff]
        %v922 = vld [vmem:[%s661 + $0x2e0] sm:$0xff]
        %v923 = vld [vmem:[%s661 + $0x2e8] sm:$0xff]
        %v924 = vld [vmem:[%s661 + $0x2f0] sm:$0xff]
        %v925 = vld [vmem:[%s661 + $0x2f8] sm:$0xff]
        %v926 = vld [vmem:[%s792] sm:$0x3f]
        %v927 = vld [vmem:[%s670] sm:$0xff]
        %v928 = vld [vmem:[%s670 + $0x8] sm:$0xff]
        %v929 = vld [vmem:[%s670 + $0x10] sm:$0xff]
        %v930 = vld [vmem:[%s670 + $0x18] sm:$0xff]
        %v931 = vld [vmem:[%s670 + $0x20] sm:$0xff]
        %v932 = vld [vmem:[%s670 + $0x28] sm:$0xff]
        %v933 = vld [vmem:[%s670 + $0x30] sm:$0xff]
        %v934 = vld [vmem:[%s670 + $0x38] sm:$0xff]
        %v935 = vld [vmem:[%s670 + $0x40] sm:$0xff]
        %v936 = vld [vmem:[%s670 + $0x48] sm:$0xff]
        %v937 = vld [vmem:[%s670 + $0x50] sm:$0xff]
        %v938 = vld [vmem:[%s670 + $0x58] sm:$0xff]
        %v939 = vld [vmem:[%s670 + $0x60] sm:$0xff]
        %v940 = vld [vmem:[%s670 + $0x68] sm:$0xff]
        %v941 = vld [vmem:[%s670 + $0x70] sm:$0xff]
        %v942 = vld [vmem:[%s670 + $0x78] sm:$0xff]
        %v943 = vld [vmem:[%s670 + $0x80] sm:$0xff]
        %v944 = vld [vmem:[%s670 + $0x88] sm:$0xff]
        %v945 = vld [vmem:[%s670 + $0x90] sm:$0xff]
        %v946 = vld [vmem:[%s670 + $0x98] sm:$0xff]
        %v947 = vld [vmem:[%s670 + $0xa0] sm:$0xff]
        %v948 = vld [vmem:[%s670 + $0xa8] sm:$0xff]
        %v949 = vld [vmem:[%s670 + $0xb0] sm:$0xff]
        %v950 = vld [vmem:[%s670 + $0xb8] sm:$0xff]
        %v951 = vld [vmem:[%s670 + $0xc0] sm:$0xff]
        %v952 = vld [vmem:[%s670 + $0xc8] sm:$0xff]
        %v953 = vld [vmem:[%s670 + $0xd0] sm:$0xff]
        %v954 = vld [vmem:[%s670 + $0xd8] sm:$0xff]
        %v955 = vld [vmem:[%s670 + $0xe0] sm:$0xff]
        %v956 = vld [vmem:[%s670 + $0xe8] sm:$0xff]
        %v957 = vld [vmem:[%s670 + $0xf0] sm:$0xff]
        %v958 = vld [vmem:[%s670 + $0xf8] sm:$0xff]
        %v959 = vld [vmem:[%s796] sm:$0x3]
        %v960 = vld [vmem:[%s800] sm:$0x3]
        %v961 = vld [vmem:[%s804] sm:$0x3]
        %v962 = vld [vmem:[%s679] sm:$0xff]
        %v963 = vld [vmem:[%s679 + $0x8] sm:$0xff]
        %v964 = vld [vmem:[%s679 + $0x10] sm:$0xff]
        %v965 = vld [vmem:[%s679 + $0x18] sm:$0xff]
        %v966 = vld [vmem:[%s679 + $0x20] sm:$0xff]
        %v967 = vld [vmem:[%s679 + $0x28] sm:$0xff]
        %v968 = vld [vmem:[%s679 + $0x30] sm:$0xff]
        %v969 = vld [vmem:[%s679 + $0x38] sm:$0xff]
        %v970 = vld [vmem:[%s679 + $0x40] sm:$0xff]
        %v971 = vld [vmem:[%s679 + $0x48] sm:$0xff]
        %v972 = vld [vmem:[%s679 + $0x50] sm:$0xff]
        %v973 = vld [vmem:[%s679 + $0x58] sm:$0xff]
        %v974 = vld [vmem:[%s679 + $0x60] sm:$0xff]
        %v975 = vld [vmem:[%s679 + $0x68] sm:$0xff]
        %v976 = vld [vmem:[%s679 + $0x70] sm:$0xff]
        %v977 = vld [vmem:[%s679 + $0x78] sm:$0xff]
        %v978 = vld [vmem:[%s679 + $0x80] sm:$0xff]
        %v979 = vld [vmem:[%s679 + $0x88] sm:$0xff]
        %v980 = vld [vmem:[%s679 + $0x90] sm:$0xff]
        %v981 = vld [vmem:[%s679 + $0x98] sm:$0xff]
        %v982 = vld [vmem:[%s679 + $0xa0] sm:$0xff]
        %v983 = vld [vmem:[%s679 + $0xa8] sm:$0xff]
        %v984 = vld [vmem:[%s679 + $0xb0] sm:$0xff]
        %v985 = vld [vmem:[%s679 + $0xb8] sm:$0xff]
        %v986 = vld [vmem:[%s679 + $0xc0] sm:$0xff]
        %v987 = vld [vmem:[%s679 + $0xc8] sm:$0xff]
        %v988 = vld [vmem:[%s679 + $0xd0] sm:$0xff]
        %v989 = vld [vmem:[%s679 + $0xd8] sm:$0xff]
        %v990 = vld [vmem:[%s679 + $0xe0] sm:$0xff]
        %v991 = vld [vmem:[%s679 + $0xe8] sm:$0xff]
        %v992 = vld [vmem:[%s679 + $0xf0] sm:$0xff]
        %v993 = vld [vmem:[%s679 + $0xf8] sm:$0xff]
        %v994 = vld [vmem:[%s679 + $0x100] sm:$0xff]
        %v995 = vld [vmem:[%s679 + $0x108] sm:$0xff]
        %v996 = vld [vmem:[%s679 + $0x110] sm:$0xff]
        %v997 = vld [vmem:[%s679 + $0x118] sm:$0xff]
        %v998 = vld [vmem:[%s679 + $0x120] sm:$0xff]
        %v999 = vld [vmem:[%s679 + $0x128] sm:$0xff]
        %v1000 = vld [vmem:[%s679 + $0x130] sm:$0xff]
        %v1001 = vld [vmem:[%s679 + $0x138] sm:$0xff]
        %v1002 = vld [vmem:[%s679 + $0x140] sm:$0xff]
        %v1003 = vld [vmem:[%s679 + $0x148] sm:$0xff]
        %v1004 = vld [vmem:[%s679 + $0x150] sm:$0xff]
        %v1005 = vld [vmem:[%s679 + $0x158] sm:$0xff]
        %v1006 = vld [vmem:[%s679 + $0x160] sm:$0xff]
        %v1007 = vld [vmem:[%s679 + $0x168] sm:$0xff]
        %v1008 = vld [vmem:[%s679 + $0x170] sm:$0xff]
        %v1009 = vld [vmem:[%s679 + $0x178] sm:$0xff]
        %v1010 = vld [vmem:[%s679 + $0x180] sm:$0xff]
        %v1011 = vld [vmem:[%s679 + $0x188] sm:$0xff]
        %v1012 = vld [vmem:[%s679 + $0x190] sm:$0xff]
        %v1013 = vld [vmem:[%s679 + $0x198] sm:$0xff]
        %v1014 = vld [vmem:[%s679 + $0x1a0] sm:$0xff]
        %v1015 = vld [vmem:[%s679 + $0x1a8] sm:$0xff]
        %v1016 = vld [vmem:[%s679 + $0x1b0] sm:$0xff]
        %v1017 = vld [vmem:[%s679 + $0x1b8] sm:$0xff]
        %v1018 = vld [vmem:[%s679 + $0x1c0] sm:$0xff]
        %v1019 = vld [vmem:[%s679 + $0x1c8] sm:$0xff]
        %v1020 = vld [vmem:[%s679 + $0x1d0] sm:$0xff]
        %v1021 = vld [vmem:[%s679 + $0x1d8] sm:$0xff]
        %v1022 = vld [vmem:[%s679 + $0x1e0] sm:$0xff]
        %v1023 = vld [vmem:[%s679 + $0x1e8] sm:$0xff]
        %v1024 = vld [vmem:[%s679 + $0x1f0] sm:$0xff]
        %v1025 = vld [vmem:[%s679 + $0x1f8] sm:$0xff]
        %v1026 = vld [vmem:[%s679 + $0x200] sm:$0xff]
        %v1027 = vld [vmem:[%s679 + $0x208] sm:$0xff]
        %v1028 = vld [vmem:[%s679 + $0x210] sm:$0xff]
        %v1029 = vld [vmem:[%s679 + $0x218] sm:$0xff]
        %v1030 = vld [vmem:[%s679 + $0x220] sm:$0xff]
        %v1031 = vld [vmem:[%s679 + $0x228] sm:$0xff]
        %v1032 = vld [vmem:[%s679 + $0x230] sm:$0xff]
        %v1033 = vld [vmem:[%s679 + $0x238] sm:$0xff]
        %v1034 = vld [vmem:[%s679 + $0x240] sm:$0xff]
        %v1035 = vld [vmem:[%s679 + $0x248] sm:$0xff]
        %v1036 = vld [vmem:[%s679 + $0x250] sm:$0xff]
        %v1037 = vld [vmem:[%s679 + $0x258] sm:$0xff]
        %v1038 = vld [vmem:[%s679 + $0x260] sm:$0xff]
        %v1039 = vld [vmem:[%s679 + $0x268] sm:$0xff]
        %v1040 = vld [vmem:[%s679 + $0x270] sm:$0xff]
        %v1041 = vld [vmem:[%s679 + $0x278] sm:$0xff]
        %v1042 = vld [vmem:[%s679 + $0x280] sm:$0xff]
        %v1043 = vld [vmem:[%s679 + $0x288] sm:$0xff]
        %v1044 = vld [vmem:[%s679 + $0x290] sm:$0xff]
        %v1045 = vld [vmem:[%s679 + $0x298] sm:$0xff]
        %v1046 = vld [vmem:[%s679 + $0x2a0] sm:$0xff]
        %v1047 = vld [vmem:[%s679 + $0x2a8] sm:$0xff]
        %v1048 = vld [vmem:[%s679 + $0x2b0] sm:$0xff]
        %v1049 = vld [vmem:[%s679 + $0x2b8] sm:$0xff]
        %v1050 = vld [vmem:[%s679 + $0x2c0] sm:$0xff]
        %v1051 = vld [vmem:[%s679 + $0x2c8] sm:$0xff]
        %v1052 = vld [vmem:[%s679 + $0x2d0] sm:$0xff]
        %v1053 = vld [vmem:[%s679 + $0x2d8] sm:$0xff]
        %v1054 = vld [vmem:[%s679 + $0x2e0] sm:$0xff]
        %v1055 = vld [vmem:[%s679 + $0x2e8] sm:$0xff]
        %v1056 = vld [vmem:[%s679 + $0x2f0] sm:$0xff]
        %v1057 = vld [vmem:[%s679 + $0x2f8] sm:$0xff]
        %v1058 = vld [vmem:[%s679 + $0x300] sm:$0xff]
        %v1059 = vld [vmem:[%s679 + $0x308] sm:$0xff]
        %v1060 = vld [vmem:[%s679 + $0x310] sm:$0xff]
        %v1061 = vld [vmem:[%s679 + $0x318] sm:$0xff]
        %v1062 = vld [vmem:[%s679 + $0x320] sm:$0xff]
        %v1063 = vld [vmem:[%s679 + $0x328] sm:$0xff]
        %v1064 = vld [vmem:[%s679 + $0x330] sm:$0xff]
        %v1065 = vld [vmem:[%s679 + $0x338] sm:$0xff]
        %v1066 = vld [vmem:[%s679 + $0x340] sm:$0xff]
        %v1067 = vld [vmem:[%s679 + $0x348] sm:$0xff]
        %v1068 = vld [vmem:[%s679 + $0x350] sm:$0xff]
        %v1069 = vld [vmem:[%s679 + $0x358] sm:$0xff]
        %v1070 = vld [vmem:[%s679 + $0x360] sm:$0xff]
        %v1071 = vld [vmem:[%s679 + $0x368] sm:$0xff]
        %v1072 = vld [vmem:[%s679 + $0x370] sm:$0xff]
        %v1073 = vld [vmem:[%s679 + $0x378] sm:$0xff]
        %v1074 = vld [vmem:[%s679 + $0x380] sm:$0xff]
        %v1075 = vld [vmem:[%s679 + $0x388] sm:$0xff]
        %v1076 = vld [vmem:[%s679 + $0x390] sm:$0xff]
        %v1077 = vld [vmem:[%s679 + $0x398] sm:$0xff]
        %v1078 = vld [vmem:[%s679 + $0x3a0] sm:$0xff]
        %v1079 = vld [vmem:[%s679 + $0x3a8] sm:$0xff]
        %v1080 = vld [vmem:[%s679 + $0x3b0] sm:$0xff]
        %v1081 = vld [vmem:[%s679 + $0x3b8] sm:$0xff]
        %v1082 = vld [vmem:[%s679 + $0x3c0] sm:$0xff]
        %v1083 = vld [vmem:[%s679 + $0x3c8] sm:$0xff]
        %v1084 = vld [vmem:[%s679 + $0x3d0] sm:$0xff]
        %v1085 = vld [vmem:[%s679 + $0x3d8] sm:$0xff]
        %v1086 = vld [vmem:[%s679 + $0x3e0] sm:$0xff]
        %v1087 = vld [vmem:[%s679 + $0x3e8] sm:$0xff]
        %v1088 = vld [vmem:[%s679 + $0x3f0] sm:$0xff]
        %v1089 = vld [vmem:[%s679 + $0x3f8] sm:$0xff]
        %v1090 = vld [vmem:[%s808] sm:$0xff]
        %v1091 = vld [vmem:[%s688] sm:$0xff]
        %v1092 = vld [vmem:[%s688 + $0x8] sm:$0xff]
        %v1093 = vld [vmem:[%s688 + $0x10] sm:$0xff]
        %v1094 = vld [vmem:[%s688 + $0x18] sm:$0xff]
        %v1095 = vld [vmem:[%s688 + $0x20] sm:$0xff]
        %v1096 = vld [vmem:[%s688 + $0x28] sm:$0xff]
        %v1097 = vld [vmem:[%s688 + $0x30] sm:$0xff]
        %v1098 = vld [vmem:[%s688 + $0x38] sm:$0xff]
        %v1099 = vld [vmem:[%s688 + $0x40] sm:$0xff]
        %v1100 = vld [vmem:[%s688 + $0x48] sm:$0xff]
        %v1101 = vld [vmem:[%s688 + $0x50] sm:$0xff]
        %v1102 = vld [vmem:[%s688 + $0x58] sm:$0xff]
        %v1103 = vld [vmem:[%s688 + $0x60] sm:$0xff]
        %v1104 = vld [vmem:[%s688 + $0x68] sm:$0xff]
        %v1105 = vld [vmem:[%s688 + $0x70] sm:$0xff]
        %v1106 = vld [vmem:[%s688 + $0x78] sm:$0xff]
        %v1107 = vld [vmem:[%s688 + $0x80] sm:$0xff]
        %v1108 = vld [vmem:[%s688 + $0x88] sm:$0xff]
        %v1109 = vld [vmem:[%s688 + $0x90] sm:$0xff]
        %v1110 = vld [vmem:[%s688 + $0x98] sm:$0xff]
        %v1111 = vld [vmem:[%s688 + $0xa0] sm:$0xff]
        %v1112 = vld [vmem:[%s688 + $0xa8] sm:$0xff]
        %v1113 = vld [vmem:[%s688 + $0xb0] sm:$0xff]
        %v1114 = vld [vmem:[%s688 + $0xb8] sm:$0xff]
        %v1115 = vld [vmem:[%s688 + $0xc0] sm:$0xff]
        %v1116 = vld [vmem:[%s688 + $0xc8] sm:$0xff]
        %v1117 = vld [vmem:[%s688 + $0xd0] sm:$0xff]
        %v1118 = vld [vmem:[%s688 + $0xd8] sm:$0xff]
        %v1119 = vld [vmem:[%s688 + $0xe0] sm:$0xff]
        %v1120 = vld [vmem:[%s688 + $0xe8] sm:$0xff]
        %v1121 = vld [vmem:[%s688 + $0xf0] sm:$0xff]
        %v1122 = vld [vmem:[%s688 + $0xf8] sm:$0xff]
        %v1123 = vld [vmem:[%s688 + $0x100] sm:$0xff]
        %v1124 = vld [vmem:[%s688 + $0x108] sm:$0xff]
        %v1125 = vld [vmem:[%s688 + $0x110] sm:$0xff]
        %v1126 = vld [vmem:[%s688 + $0x118] sm:$0xff]
        %v1127 = vld [vmem:[%s688 + $0x120] sm:$0xff]
        %v1128 = vld [vmem:[%s688 + $0x128] sm:$0xff]
        %v1129 = vld [vmem:[%s688 + $0x130] sm:$0xff]
        %v1130 = vld [vmem:[%s688 + $0x138] sm:$0xff]
        %v1131 = vld [vmem:[%s688 + $0x140] sm:$0xff]
        %v1132 = vld [vmem:[%s688 + $0x148] sm:$0xff]
        %v1133 = vld [vmem:[%s688 + $0x150] sm:$0xff]
        %v1134 = vld [vmem:[%s688 + $0x158] sm:$0xff]
        %v1135 = vld [vmem:[%s688 + $0x160] sm:$0xff]
        %v1136 = vld [vmem:[%s688 + $0x168] sm:$0xff]
        %v1137 = vld [vmem:[%s688 + $0x170] sm:$0xff]
        %v1138 = vld [vmem:[%s688 + $0x178] sm:$0xff]
        %v1139 = vld [vmem:[%s688 + $0x180] sm:$0xff]
        %v1140 = vld [vmem:[%s688 + $0x188] sm:$0xff]
        %v1141 = vld [vmem:[%s688 + $0x190] sm:$0xff]
        %v1142 = vld [vmem:[%s688 + $0x198] sm:$0xff]
        %v1143 = vld [vmem:[%s688 + $0x1a0] sm:$0xff]
        %v1144 = vld [vmem:[%s688 + $0x1a8] sm:$0xff]
        %v1145 = vld [vmem:[%s688 + $0x1b0] sm:$0xff]
        %v1146 = vld [vmem:[%s688 + $0x1b8] sm:$0xff]
        %v1147 = vld [vmem:[%s688 + $0x1c0] sm:$0xff]
        %v1148 = vld [vmem:[%s688 + $0x1c8] sm:$0xff]
        %v1149 = vld [vmem:[%s688 + $0x1d0] sm:$0xff]
        %v1150 = vld [vmem:[%s688 + $0x1d8] sm:$0xff]
        %v1151 = vld [vmem:[%s688 + $0x1e0] sm:$0xff]
        %v1152 = vld [vmem:[%s688 + $0x1e8] sm:$0xff]
        %v1153 = vld [vmem:[%s688 + $0x1f0] sm:$0xff]
        %v1154 = vld [vmem:[%s688 + $0x1f8] sm:$0xff]
        %v1155 = vld [vmem:[%s688 + $0x200] sm:$0xff]
        %v1156 = vld [vmem:[%s688 + $0x208] sm:$0xff]
        %v1157 = vld [vmem:[%s688 + $0x210] sm:$0xff]
        %v1158 = vld [vmem:[%s688 + $0x218] sm:$0xff]
        %v1159 = vld [vmem:[%s688 + $0x220] sm:$0xff]
        %v1160 = vld [vmem:[%s688 + $0x228] sm:$0xff]
        %v1161 = vld [vmem:[%s688 + $0x230] sm:$0xff]
        %v1162 = vld [vmem:[%s688 + $0x238] sm:$0xff]
        %v1163 = vld [vmem:[%s688 + $0x240] sm:$0xff]
        %v1164 = vld [vmem:[%s688 + $0x248] sm:$0xff]
        %v1165 = vld [vmem:[%s688 + $0x250] sm:$0xff]
        %v1166 = vld [vmem:[%s688 + $0x258] sm:$0xff]
        %v1167 = vld [vmem:[%s688 + $0x260] sm:$0xff]
        %v1168 = vld [vmem:[%s688 + $0x268] sm:$0xff]
        %v1169 = vld [vmem:[%s688 + $0x270] sm:$0xff]
        %v1170 = vld [vmem:[%s688 + $0x278] sm:$0xff]
        %v1171 = vld [vmem:[%s688 + $0x280] sm:$0xff]
        %v1172 = vld [vmem:[%s688 + $0x288] sm:$0xff]
        %v1173 = vld [vmem:[%s688 + $0x290] sm:$0xff]
        %v1174 = vld [vmem:[%s688 + $0x298] sm:$0xff]
        %v1175 = vld [vmem:[%s688 + $0x2a0] sm:$0xff]
        %v1176 = vld [vmem:[%s688 + $0x2a8] sm:$0xff]
        %v1177 = vld [vmem:[%s688 + $0x2b0] sm:$0xff]
        %v1178 = vld [vmem:[%s688 + $0x2b8] sm:$0xff]
        %v1179 = vld [vmem:[%s688 + $0x2c0] sm:$0xff]
        %v1180 = vld [vmem:[%s688 + $0x2c8] sm:$0xff]
        %v1181 = vld [vmem:[%s688 + $0x2d0] sm:$0xff]
        %v1182 = vld [vmem:[%s688 + $0x2d8] sm:$0xff]
        %v1183 = vld [vmem:[%s688 + $0x2e0] sm:$0xff]
        %v1184 = vld [vmem:[%s688 + $0x2e8] sm:$0xff]
        %v1185 = vld [vmem:[%s688 + $0x2f0] sm:$0xff]
        %v1186 = vld [vmem:[%s688 + $0x2f8] sm:$0xff]
        %v1187 = vld [vmem:[%s688 + $0x300] sm:$0xff]
        %v1188 = vld [vmem:[%s688 + $0x308] sm:$0xff]
        %v1189 = vld [vmem:[%s688 + $0x310] sm:$0xff]
        %v1190 = vld [vmem:[%s688 + $0x318] sm:$0xff]
        %v1191 = vld [vmem:[%s688 + $0x320] sm:$0xff]
        %v1192 = vld [vmem:[%s688 + $0x328] sm:$0xff]
        %v1193 = vld [vmem:[%s688 + $0x330] sm:$0xff]
        %v1194 = vld [vmem:[%s688 + $0x338] sm:$0xff]
        %v1195 = vld [vmem:[%s688 + $0x340] sm:$0xff]
        %v1196 = vld [vmem:[%s688 + $0x348] sm:$0xff]
        %v1197 = vld [vmem:[%s688 + $0x350] sm:$0xff]
        %v1198 = vld [vmem:[%s688 + $0x358] sm:$0xff]
        %v1199 = vld [vmem:[%s688 + $0x360] sm:$0xff]
        %v1200 = vld [vmem:[%s688 + $0x368] sm:$0xff]
        %v1201 = vld [vmem:[%s688 + $0x370] sm:$0xff]
        %v1202 = vld [vmem:[%s688 + $0x378] sm:$0xff]
        %v1203 = vld [vmem:[%s688 + $0x380] sm:$0xff]
        %v1204 = vld [vmem:[%s688 + $0x388] sm:$0xff]
        %v1205 = vld [vmem:[%s688 + $0x390] sm:$0xff]
        %v1206 = vld [vmem:[%s688 + $0x398] sm:$0xff]
        %v1207 = vld [vmem:[%s688 + $0x3a0] sm:$0xff]
        %v1208 = vld [vmem:[%s688 + $0x3a8] sm:$0xff]
        %v1209 = vld [vmem:[%s688 + $0x3b0] sm:$0xff]
        %v1210 = vld [vmem:[%s688 + $0x3b8] sm:$0xff]
        %v1211 = vld [vmem:[%s688 + $0x3c0] sm:$0xff]
        %v1212 = vld [vmem:[%s688 + $0x3c8] sm:$0xff]
        %v1213 = vld [vmem:[%s688 + $0x3d0] sm:$0xff]
        %v1214 = vld [vmem:[%s688 + $0x3d8] sm:$0xff]
        %v1215 = vld [vmem:[%s688 + $0x3e0] sm:$0xff]
        %v1216 = vld [vmem:[%s688 + $0x3e8] sm:$0xff]
        %v1217 = vld [vmem:[%s688 + $0x3f0] sm:$0xff]
        %v1218 = vld [vmem:[%s688 + $0x3f8] sm:$0xff]
        %v1219 = vld [vmem:[%s812] sm:$0x3]
        %v1220 = vld [vmem:[#allocation2] sm:$0xff]
        %v1221 = vld [vmem:[#allocation2 + $0x8] sm:$0xff]
        %v1222 = vld [vmem:[#allocation2 + $0x10] sm:$0xff]
        %v1223 = vld [vmem:[#allocation2 + $0x18] sm:$0xff]
        %v1224 = vadd.f32 %v1220, %v1221
        %1225 = vadd.xlane.f32.xlu0 %v1224
        %v1226 = vpop.xlane.xlu0 %1225
        %v1227 = vadd.f32 %v1222, %v1223
        %1228 = vadd.xlane.f32.xlu0 %v1227
        %v1229 = vpop.xlane.xlu0 %1228
        %v1230 = vrcp.pop 256.0
        %v1231 = vmul.f32 %v1226, %v1230
        %v1232 = vmul.f32 %v1229, %v1230
        %v1233 = vsub.f32 %v1220, %v1231
        %v1234 = vsub.f32 %v1221, %v1231
        %v1235 = vsub.f32 %v1222, %v1232
        %v1236 = vsub.f32 %v1223, %v1232
        %v1237 = vmul.f32 %v1233, %v1233
        %v1238 = vmul.f32 %v1234, %v1234
        %v1239 = vmul.f32 %v1235, %v1235
        %v1240 = vmul.f32 %v1236, %v1236
        %v1241 = vadd.f32 %v1237, %v1238
        %1242 = vadd.xlane.f32.xlu0 %v1241
        %v1243 = vpop.xlane.xlu0 %1242
        %v1244 = vadd.f32 %v1239, %v1240
        %1245 = vadd.xlane.f32.xlu0 %v1244
        %v1246 = vpop.xlane.xlu0 %1245
        %v1247 = vmul.f32 %v1243, %v1230
        %v1248 = vmul.f32 %v1246, %v1230
        %v1249 = vadd.f32 %v1247, 1e-05
        %v1250 = vadd.f32 %v1248, 1e-05
        %v1251 = vrsqrt.pop %v1249
        %v1252 = vrsqrt.pop %v1250
        %v1253 = vmul.f32 %v1233, %v1251
        %v1254 = vmul.f32 %v1234, %v1251
        %v1255 = vmul.f32 %v1235, %v1252
        %v1256 = vmul.f32 %v1236, %v1252
        %v1257 = vunpack.c.l.bf16 %v828
        %v1259 = vlaneseq
        %v1260 = vshrl.u32 %v1259, 7
        %v1261 = vsub.s32 0, %v1260
        %v1262 = vrot.slane %v1257, %v1261
        %v1263 = vlaneseq
        %v1264 = vshrl.u32 %v1263, 7
        %v1265 = vsub.s32 2, %v1264
        %v1266 = vrot.slane %v1257, %v1265
        %v1269 = vlaneseq
        %v1270 = vshrl.u32 %v1269, 7
        %v1271 = vsub.s32 0, %v1270
        %v1272 = vrot.slane %v1262, %v1271
        %v1273 = vlaneseq
        %v1274 = vshrl.u32 %v1273, 7
        %v1275 = vsub.s32 0, %v1274
        %v1276 = vrot.slane %v1266, %v1275
        %v1277 = vmul.f32 %v1253, %v1272
        %v1278 = vmul.f32 %v1254, %v1276
        %v1279 = vmul.f32 %v1255, %v1272
        %v1280 = vmul.f32 %v1256, %v1276
        %v1281 = vunpack.c.l.bf16 %v829
        %v1283 = vlaneseq
        %v1284 = vshrl.u32 %v1283, 7
        %v1285 = vsub.s32 0, %v1284
        %v1286 = vrot.slane %v1281, %v1285
        %v1287 = vlaneseq
        %v1288 = vshrl.u32 %v1287, 7
        %v1289 = vsub.s32 2, %v1288
        %v1290 = vrot.slane %v1281, %v1289
        %v1293 = vlaneseq
        %v1294 = vshrl.u32 %v1293, 7
        %v1295 = vsub.s32 0, %v1294
        %v1296 = vrot.slane %v1286, %v1295
        %v1297 = vlaneseq
        %v1298 = vshrl.u32 %v1297, 7
        %v1299 = vsub.s32 0, %v1298
        %v1300 = vrot.slane %v1290, %v1299
        %v1301 = vadd.f32 %v1277, %v1296
        %v1302 = vadd.f32 %v1278, %v1300
        %v1303 = vadd.f32 %v1279, %v1296
        %v1304 = vadd.f32 %v1280, %v1300
        %v1305 = vpack.c.bf16 %v1303, %v1301
        %v1306 = vpack.c.bf16 %v1304, %v1302
        %v1307 = vunpack.c.l.bf16 %v926
        %v1308 = vunpack.c.h.bf16 %v926
        %v1311 = vlaneseq
        %v1312 = vshrl.u32 %v1311, 7
        %v1313 = vsub.s32 0, %v1312
        %v1314 = vrot.slane %v1307, %v1313
        %v1315 = vlaneseq
        %v1316 = vshrl.u32 %v1315, 7
        %v1317 = vsub.s32 2, %v1316
        %v1318 = vrot.slane %v1307, %v1317
        %v1319 = vlaneseq
        %v1320 = vshrl.u32 %v1319, 7
        %v1321 = vsub.s32 4, %v1320
        %v1322 = vrot.slane %v1307, %v1321
        %v1323 = vlaneseq
        %v1324 = vshrl.u32 %v1323, 7
        %v1325 = vsub.s32 6, %v1324
        %v1326 = vrot.slane %v1307, %v1325
        %v1327 = vlaneseq
        %v1328 = vshrl.u32 %v1327, 7
        %v1329 = vsub.s32 0, %v1328
        %v1330 = vrot.slane %v1308, %v1329
        %v1331 = vlaneseq
        %v1332 = vshrl.u32 %v1331, 7
        %v1333 = vsub.s32 2, %v1332
        %v1334 = vrot.slane %v1308, %v1333
        %v1341 = vlaneseq
        %v1342 = vshrl.u32 %v1341, 7
        %v1343 = vsub.s32 0, %v1342
        %v1344 = vrot.slane %v1314, %v1343
        %v1345 = vlaneseq
        %v1346 = vshrl.u32 %v1345, 7
        %v1347 = vsub.s32 0, %v1346
        %v1348 = vrot.slane %v1318, %v1347
        %v1349 = vlaneseq
        %v1350 = vshrl.u32 %v1349, 7
        %v1351 = vsub.s32 0, %v1350
        %v1352 = vrot.slane %v1322, %v1351
        %v1353 = vlaneseq
        %v1354 = vshrl.u32 %v1353, 7
        %v1355 = vsub.s32 0, %v1354
        %v1356 = vrot.slane %v1326, %v1355
        %v1357 = vlaneseq
        %v1358 = vshrl.u32 %v1357, 7
        %v1359 = vsub.s32 0, %v1358
        %v1360 = vrot.slane %v1330, %v1359
        %v1361 = vlaneseq
        %v1362 = vshrl.u32 %v1361, 7
        %v1363 = vsub.s32 0, %v1362
        %v1364 = vrot.slane %v1334, %v1363
        %v1461 = vunpack.c.l.b16 %v830
        %v1462 = vunpack.c.h.b16 %v830
        %v1463 = vunpack.c.l.b16 %v831
        %v1464 = vunpack.c.h.b16 %v831
        %v1465 = vunpack.c.l.b16 %v832
        %v1466 = vunpack.c.h.b16 %v832
        %v1467 = vunpack.c.l.b16 %v833
        %v1468 = vunpack.c.h.b16 %v833
        %v1469 = vunpack.c.l.b16 %v834
        %v1470 = vunpack.c.h.b16 %v834
        %v1471 = vunpack.c.l.b16 %v835
        %v1472 = vunpack.c.h.b16 %v835
        %v1473 = vunpack.c.l.b16 %v836
        %v1474 = vunpack.c.h.b16 %v836
        %v1475 = vunpack.c.l.b16 %v837
        %v1476 = vunpack.c.h.b16 %v837
        %v1477 = vunpack.c.l.b16 %v838
        %v1478 = vunpack.c.h.b16 %v838
        %v1479 = vunpack.c.l.b16 %v839
        %v1480 = vunpack.c.h.b16 %v839
        %v1481 = vunpack.c.l.b16 %v840
        %v1482 = vunpack.c.h.b16 %v840
        %v1483 = vunpack.c.l.b16 %v841
        %v1484 = vunpack.c.h.b16 %v841
        %v1485 = vunpack.c.l.b16 %v842
        %v1486 = vunpack.c.h.b16 %v842
        %v1487 = vunpack.c.l.b16 %v843
        %v1488 = vunpack.c.h.b16 %v843
        %v1489 = vunpack.c.l.b16 %v844
        %v1490 = vunpack.c.h.b16 %v844
        %v1491 = vunpack.c.l.b16 %v845
        %v1492 = vunpack.c.h.b16 %v845
        %v1493 = vunpack.c.l.b16 %v846
        %v1494 = vunpack.c.h.b16 %v846
        %v1495 = vunpack.c.l.b16 %v847
        %v1496 = vunpack.c.h.b16 %v847
        %v1497 = vunpack.c.l.b16 %v848
        %v1498 = vunpack.c.h.b16 %v848
        %v1499 = vunpack.c.l.b16 %v849
        %v1500 = vunpack.c.h.b16 %v849
        %v1501 = vunpack.c.l.b16 %v850
        %v1502 = vunpack.c.h.b16 %v850
        %v1503 = vunpack.c.l.b16 %v851
        %v1504 = vunpack.c.h.b16 %v851
        %v1505 = vunpack.c.l.b16 %v852
        %v1506 = vunpack.c.h.b16 %v852
        %v1507 = vunpack.c.l.b16 %v853
        %v1508 = vunpack.c.h.b16 %v853
        %v1509 = vunpack.c.l.b16 %v854
        %v1510 = vunpack.c.h.b16 %v854
        %v1511 = vunpack.c.l.b16 %v855
        %v1512 = vunpack.c.h.b16 %v855
        %v1513 = vunpack.c.l.b16 %v856
        %v1514 = vunpack.c.h.b16 %v856
        %v1515 = vunpack.c.l.b16 %v857
        %v1516 = vunpack.c.h.b16 %v857
        %v1517 = vunpack.c.l.b16 %v858
        %v1518 = vunpack.c.h.b16 %v858
        %v1519 = vunpack.c.l.b16 %v859
        %v1520 = vunpack.c.h.b16 %v859
        %v1521 = vunpack.c.l.b16 %v860
        %v1522 = vunpack.c.h.b16 %v860
        %v1523 = vunpack.c.l.b16 %v861
        %v1524 = vunpack.c.h.b16 %v861
        %v1525 = vunpack.c.l.b16 %v862
        %v1526 = vunpack.c.h.b16 %v862
        %v1527 = vunpack.c.l.b16 %v863
        %v1528 = vunpack.c.h.b16 %v863
        %v1529 = vunpack.c.l.b16 %v864
        %v1530 = vunpack.c.h.b16 %v864
        %v1531 = vunpack.c.l.b16 %v865
        %v1532 = vunpack.c.h.b16 %v865
        %v1533 = vunpack.c.l.b16 %v866
        %v1534 = vunpack.c.h.b16 %v866
        %v1535 = vunpack.c.l.b16 %v867
        %v1536 = vunpack.c.h.b16 %v867
        %v1537 = vunpack.c.l.b16 %v868
        %v1538 = vunpack.c.h.b16 %v868
        %v1539 = vunpack.c.l.b16 %v869
        %v1540 = vunpack.c.h.b16 %v869
        %v1541 = vunpack.c.l.b16 %v870
        %v1542 = vunpack.c.h.b16 %v870
        %v1543 = vunpack.c.l.b16 %v871
        %v1544 = vunpack.c.h.b16 %v871
        %v1545 = vunpack.c.l.b16 %v872
        %v1546 = vunpack.c.h.b16 %v872
        %v1547 = vunpack.c.l.b16 %v873
        %v1548 = vunpack.c.h.b16 %v873
        %v1549 = vunpack.c.l.b16 %v874
        %v1550 = vunpack.c.h.b16 %v874
        %v1551 = vunpack.c.l.b16 %v875
        %v1552 = vunpack.c.h.b16 %v875
        %v1553 = vunpack.c.l.b16 %v876
        %v1554 = vunpack.c.h.b16 %v876
        %v1555 = vunpack.c.l.b16 %v877
        %v1556 = vunpack.c.h.b16 %v877
        %v1557 = vunpack.c.l.b16 %v878
        %v1558 = vunpack.c.h.b16 %v878
        %v1559 = vunpack.c.l.b16 %v879
        %v1560 = vunpack.c.h.b16 %v879
        %v1561 = vunpack.c.l.b16 %v880
        %v1562 = vunpack.c.h.b16 %v880
        %v1563 = vunpack.c.l.b16 %v881
        %v1564 = vunpack.c.h.b16 %v881
        %v1565 = vunpack.c.l.b16 %v882
        %v1566 = vunpack.c.h.b16 %v882
        %v1567 = vunpack.c.l.b16 %v883
        %v1568 = vunpack.c.h.b16 %v883
        %v1569 = vunpack.c.l.b16 %v884
        %v1570 = vunpack.c.h.b16 %v884
        %v1571 = vunpack.c.l.b16 %v885
        %v1572 = vunpack.c.h.b16 %v885
        %v1573 = vunpack.c.l.b16 %v886
        %v1574 = vunpack.c.h.b16 %v886
        %v1575 = vunpack.c.l.b16 %v887
        %v1576 = vunpack.c.h.b16 %v887
        %v1577 = vunpack.c.l.b16 %v888
        %v1578 = vunpack.c.h.b16 %v888
        %v1579 = vunpack.c.l.b16 %v889
        %v1580 = vunpack.c.h.b16 %v889
        %v1581 = vunpack.c.l.b16 %v890
        %v1582 = vunpack.c.h.b16 %v890
        %v1583 = vunpack.c.l.b16 %v891
        %v1584 = vunpack.c.h.b16 %v891
        %v1585 = vunpack.c.l.b16 %v892
        %v1586 = vunpack.c.h.b16 %v892
        %v1587 = vunpack.c.l.b16 %v893
        %v1588 = vunpack.c.h.b16 %v893
        %v1589 = vunpack.c.l.b16 %v894
        %v1590 = vunpack.c.h.b16 %v894
        %v1591 = vunpack.c.l.b16 %v895
        %v1592 = vunpack.c.h.b16 %v895
        %v1593 = vunpack.c.l.b16 %v896
        %v1594 = vunpack.c.h.b16 %v896
        %v1595 = vunpack.c.l.b16 %v897
        %v1596 = vunpack.c.h.b16 %v897
        %v1597 = vunpack.c.l.b16 %v898
        %v1598 = vunpack.c.h.b16 %v898
        %v1599 = vunpack.c.l.b16 %v899
        %v1600 = vunpack.c.h.b16 %v899
        %v1601 = vunpack.c.l.b16 %v900
        %v1602 = vunpack.c.h.b16 %v900
        %v1603 = vunpack.c.l.b16 %v901
        %v1604 = vunpack.c.h.b16 %v901
        %v1605 = vunpack.c.l.b16 %v902
        %v1606 = vunpack.c.h.b16 %v902
        %v1607 = vunpack.c.l.b16 %v903
        %v1608 = vunpack.c.h.b16 %v903
        %v1609 = vunpack.c.l.b16 %v904
        %v1610 = vunpack.c.h.b16 %v904
        %v1611 = vunpack.c.l.b16 %v905
        %v1612 = vunpack.c.h.b16 %v905
        %v1613 = vunpack.c.l.b16 %v906
        %v1614 = vunpack.c.h.b16 %v906
        %v1615 = vunpack.c.l.b16 %v907
        %v1616 = vunpack.c.h.b16 %v907
        %v1617 = vunpack.c.l.b16 %v908
        %v1618 = vunpack.c.h.b16 %v908
        %v1619 = vunpack.c.l.b16 %v909
        %v1620 = vunpack.c.h.b16 %v909
        %v1621 = vunpack.c.l.b16 %v910
        %v1622 = vunpack.c.h.b16 %v910
        %v1623 = vunpack.c.l.b16 %v911
        %v1624 = vunpack.c.h.b16 %v911
        %v1625 = vunpack.c.l.b16 %v912
        %v1626 = vunpack.c.h.b16 %v912
        %v1627 = vunpack.c.l.b16 %v913
        %v1628 = vunpack.c.h.b16 %v913
        %v1629 = vunpack.c.l.b16 %v914
        %v1630 = vunpack.c.h.b16 %v914
        %v1631 = vunpack.c.l.b16 %v915
        %v1632 = vunpack.c.h.b16 %v915
        %v1633 = vunpack.c.l.b16 %v916
        %v1634 = vunpack.c.h.b16 %v916
        %v1635 = vunpack.c.l.b16 %v917
        %v1636 = vunpack.c.h.b16 %v917
        %v1637 = vunpack.c.l.b16 %v918
        %v1638 = vunpack.c.h.b16 %v918
        %v1639 = vunpack.c.l.b16 %v919
        %v1640 = vunpack.c.h.b16 %v919
        %v1641 = vunpack.c.l.b16 %v920
        %v1642 = vunpack.c.h.b16 %v920
        %v1643 = vunpack.c.l.b16 %v921
        %v1644 = vunpack.c.h.b16 %v921
        %v1645 = vunpack.c.l.b16 %v922
        %v1646 = vunpack.c.h.b16 %v922
        %v1647 = vunpack.c.l.b16 %v923
        %v1648 = vunpack.c.h.b16 %v923
        %v1649 = vunpack.c.l.b16 %v924
        %v1650 = vunpack.c.h.b16 %v924
        %v1651 = vunpack.c.l.b16 %v925
        %v1652 = vunpack.c.h.b16 %v925
        %v1653 = vpack.c.b16 %v1467, %v1461
        %v1654 = vpack.c.b16 %v1468, %v1462
        %v1655 = vpack.c.b16 %v1469, %v1463
        %v1656 = vpack.c.b16 %v1470, %v1464
        %v1657 = vpack.c.b16 %v1471, %v1465
        %v1658 = vpack.c.b16 %v1472, %v1466
        %v1659 = vpack.c.b16 %v1479, %v1473
        %v1660 = vpack.c.b16 %v1480, %v1474
        %v1661 = vpack.c.b16 %v1481, %v1475
        %v1662 = vpack.c.b16 %v1482, %v1476
        %v1663 = vpack.c.b16 %v1483, %v1477
        %v1664 = vpack.c.b16 %v1484, %v1478
        %v1665 = vpack.c.b16 %v1491, %v1485
        %v1666 = vpack.c.b16 %v1492, %v1486
        %v1667 = vpack.c.b16 %v1493, %v1487
        %v1668 = vpack.c.b16 %v1494, %v1488
        %v1669 = vpack.c.b16 %v1495, %v1489
        %v1670 = vpack.c.b16 %v1496, %v1490
        %v1671 = vpack.c.b16 %v1503, %v1497
        %v1672 = vpack.c.b16 %v1504, %v1498
        %v1673 = vpack.c.b16 %v1505, %v1499
        %v1674 = vpack.c.b16 %v1506, %v1500
        %v1675 = vpack.c.b16 %v1507, %v1501
        %v1676 = vpack.c.b16 %v1508, %v1502
        %v1677 = vpack.c.b16 %v1515, %v1509
        %v1678 = vpack.c.b16 %v1516, %v1510
        %v1679 = vpack.c.b16 %v1517, %v1511
        %v1680 = vpack.c.b16 %v1518, %v1512
        %v1681 = vpack.c.b16 %v1519, %v1513
        %v1682 = vpack.c.b16 %v1520, %v1514
        %v1683 = vpack.c.b16 %v1527, %v1521
        %v1684 = vpack.c.b16 %v1528, %v1522
        %v1685 = vpack.c.b16 %v1529, %v1523
        %v1686 = vpack.c.b16 %v1530, %v1524
        %v1687 = vpack.c.b16 %v1531, %v1525
        %v1688 = vpack.c.b16 %v1532, %v1526
        %v1689 = vpack.c.b16 %v1539, %v1533
        %v1690 = vpack.c.b16 %v1540, %v1534
        %v1691 = vpack.c.b16 %v1541, %v1535
        %v1692 = vpack.c.b16 %v1542, %v1536
        %v1693 = vpack.c.b16 %v1543, %v1537
        %v1694 = vpack.c.b16 %v1544, %v1538
        %v1695 = vpack.c.b16 %v1551, %v1545
        %v1696 = vpack.c.b16 %v1552, %v1546
        %v1697 = vpack.c.b16 %v1553, %v1547
        %v1698 = vpack.c.b16 %v1554, %v1548
        %v1699 = vpack.c.b16 %v1555, %v1549
        %v1700 = vpack.c.b16 %v1556, %v1550
        %v1701 = vpack.c.b16 %v1563, %v1557
        %v1702 = vpack.c.b16 %v1564, %v1558
        %v1703 = vpack.c.b16 %v1565, %v1559
        %v1704 = vpack.c.b16 %v1566, %v1560
        %v1705 = vpack.c.b16 %v1567, %v1561
        %v1706 = vpack.c.b16 %v1568, %v1562
        %v1707 = vpack.c.b16 %v1575, %v1569
        %v1708 = vpack.c.b16 %v1576, %v1570
        %v1709 = vpack.c.b16 %v1577, %v1571
        %v1710 = vpack.c.b16 %v1578, %v1572
        %v1711 = vpack.c.b16 %v1579, %v1573
        %v1712 = vpack.c.b16 %v1580, %v1574
        %v1713 = vpack.c.b16 %v1587, %v1581
        %v1714 = vpack.c.b16 %v1588, %v1582
        %v1715 = vpack.c.b16 %v1589, %v1583
        %v1716 = vpack.c.b16 %v1590, %v1584
        %v1717 = vpack.c.b16 %v1591, %v1585
        %v1718 = vpack.c.b16 %v1592, %v1586
        %v1719 = vpack.c.b16 %v1599, %v1593
        %v1720 = vpack.c.b16 %v1600, %v1594
        %v1721 = vpack.c.b16 %v1601, %v1595
        %v1722 = vpack.c.b16 %v1602, %v1596
        %v1723 = vpack.c.b16 %v1603, %v1597
        %v1724 = vpack.c.b16 %v1604, %v1598
        %v1725 = vpack.c.b16 %v1611, %v1605
        %v1726 = vpack.c.b16 %v1612, %v1606
        %v1727 = vpack.c.b16 %v1613, %v1607
        %v1728 = vpack.c.b16 %v1614, %v1608
        %v1729 = vpack.c.b16 %v1615, %v1609
        %v1730 = vpack.c.b16 %v1616, %v1610
        %v1731 = vpack.c.b16 %v1623, %v1617
        %v1732 = vpack.c.b16 %v1624, %v1618
        %v1733 = vpack.c.b16 %v1625, %v1619
        %v1734 = vpack.c.b16 %v1626, %v1620
        %v1735 = vpack.c.b16 %v1627, %v1621
        %v1736 = vpack.c.b16 %v1628, %v1622
        %v1737 = vpack.c.b16 %v1635, %v1629
        %v1738 = vpack.c.b16 %v1636, %v1630
        %v1739 = vpack.c.b16 %v1637, %v1631
        %v1740 = vpack.c.b16 %v1638, %v1632
        %v1741 = vpack.c.b16 %v1639, %v1633
        %v1742 = vpack.c.b16 %v1640, %v1634
        %v1743 = vpack.c.b16 %v1647, %v1641
        %v1744 = vpack.c.b16 %v1648, %v1642
        %v1745 = vpack.c.b16 %v1649, %v1643
        %v1746 = vpack.c.b16 %v1650, %v1644
        %v1747 = vpack.c.b16 %v1651, %v1645
        %v1748 = vpack.c.b16 %v1652, %v1646
        %1845 = vmatprep.subr.bf16.mxu0 %v1696
        %1846 = vmatpush1.bf16.msra.mxu0 %v1695
        %1847 = vmatprep.subr.bf16.mxu0 %v1690
        %1848 = vmatpush1.bf16.msra.mxu0 %v1689
        %1849 = vmatprep.subr.bf16.mxu0 %v1684
        %1850 = vmatpush1.bf16.msra.mxu0 %v1683
        %1851 = vmatprep.subr.bf16.mxu0 %v1678
        %1852 = vmatpush1.bf16.msra.mxu0 %v1677
        %1853 = vmatprep.subr.bf16.mxu0 %v1672
        %1854 = vmatpush1.bf16.msra.mxu0 %v1671
        %1855 = vmatprep.subr.bf16.mxu0 %v1666
        %1856 = vmatpush1.bf16.msra.mxu0 %v1665
        %1857 = vmatprep.subr.bf16.mxu0 %v1660
        %1858 = vmatpush1.bf16.msra.mxu0 %v1659
        %1859 = vmatprep.subr.bf16.mxu0 %v1654
        %1860 = vmatpush1.bf16.msra.mxu0 %v1653
        %1861 = vmatprep.subr.bf16.mxu0 %v1744
        %1862 = vmatpush2.bf16.msra.mxu0 %v1743
        %1863 = vmatprep.subr.bf16.mxu0 %v1738
        %1864 = vmatpush2.bf16.msra.mxu0 %v1737
        %1865 = vmatprep.subr.bf16.mxu0 %v1732
        %1866 = vmatpush2.bf16.msra.mxu0 %v1731
        %1867 = vmatprep.subr.bf16.mxu0 %v1726
        %1868 = vmatpush2.bf16.msra.mxu0 %v1725
        %1869 = vmatprep.subr.bf16.mxu0 %v1720
        %1870 = vmatpush2.bf16.msra.mxu0 %v1719
        %1871 = vmatprep.subr.bf16.mxu0 %v1714
        %1872 = vmatpush2.bf16.msra.mxu0 %v1713
        %1873 = vmatprep.subr.bf16.mxu0 %v1708
        %1874 = vmatpush2.bf16.msra.mxu0 %v1707
        %1875 = vmatprep.subr.bf16.mxu0 %v1702
        %1876 = vmatpush2.bf16.msra.mxu0 %v1701
        %1877 = vmatprep.mubr.bf16.mxu0 %v1306
        %1878 = vmatmul.mubr.bf16.gmra.mxu0 %v1305
        %v1879 = vpop.f32.mrf.mxu0
        %v1880 = vadd.f32 %v1344, %v1879
        %v1881 = vpop.f32.mrf.mxu0
        %v1882 = vadd.f32 %v1348, %v1881
        %v1883 = vpop.f32.mrf.mxu0
        %v1884 = vadd.f32 %v1344, %v1883
        %v1885 = vpop.f32.mrf.mxu0
        %v1886 = vadd.f32 %v1348, %v1885
        %1887 = vdwg.mxu0
        %1888 = vmatprep.subr.bf16.mxu0 %v1698
        %1889 = vmatpush1.bf16.msra.mxu0 %v1697
        %1890 = vmatprep.subr.bf16.mxu0 %v1692
        %1891 = vmatpush1.bf16.msra.mxu0 %v1691
        %1892 = vmatprep.subr.bf16.mxu0 %v1686
        %1893 = vmatpush1.bf16.msra.mxu0 %v1685
        %1894 = vmatprep.subr.bf16.mxu0 %v1680
        %1895 = vmatpush1.bf16.msra.mxu0 %v1679
        %1896 = vmatprep.subr.bf16.mxu0 %v1674
        %1897 = vmatpush1.bf16.msra.mxu0 %v1673
        %1898 = vmatprep.subr.bf16.mxu0 %v1668
        %1899 = vmatpush1.bf16.msra.mxu0 %v1667
        %1900 = vmatprep.subr.bf16.mxu0 %v1662
        %1901 = vmatpush1.bf16.msra.mxu0 %v1661
        %1902 = vmatprep.subr.bf16.mxu0 %v1656
        %1903 = vmatpush1.bf16.msra.mxu0 %v1655
        %1904 = vmatprep.subr.bf16.mxu0 %v1746
        %1905 = vmatpush2.bf16.msra.mxu0 %v1745
        %1906 = vmatprep.subr.bf16.mxu0 %v1740
        %1907 = vmatpush2.bf16.msra.mxu0 %v1739
        %1908 = vmatprep.subr.bf16.mxu0 %v1734
        %1909 = vmatpush2.bf16.msra.mxu0 %v1733
        %1910 = vmatprep.subr.bf16.mxu0 %v1728
        %1911 = vmatpush2.bf16.msra.mxu0 %v1727
        %1912 = vmatprep.subr.bf16.mxu0 %v1722
        %1913 = vmatpush2.bf16.msra.mxu0 %v1721
        %1914 = vmatprep.subr.bf16.mxu0 %v1716
        %1915 = vmatpush2.bf16.msra.mxu0 %v1715
        %1916 = vmatprep.subr.bf16.mxu0 %v1710
        %1917 = vmatpush2.bf16.msra.mxu0 %v1709
        %1918 = vmatprep.subr.bf16.mxu0 %v1704
        %1919 = vmatpush2.bf16.msra.mxu0 %v1703
        %1920 = vmatprep.mubr.bf16.mxu0 %v1306
        %1921 = vmatmul.mubr.bf16.gmra.mxu0 %v1305
        %v1922 = vpop.f32.mrf.mxu0
        %v1923 = vadd.f32 %v1352, %v1922
        %v1924 = vpop.f32.mrf.mxu0
        %v1925 = vadd.f32 %v1356, %v1924
        %v1926 = vpop.f32.mrf.mxu0
        %v1927 = vadd.f32 %v1352, %v1926
        %v1928 = vpop.f32.mrf.mxu0
        %v1929 = vadd.f32 %v1356, %v1928
        %1930 = vdwg.mxu0
        %1931 = vmatprep.subr.bf16.mxu0 %v1700
        %1932 = vmatpush1.bf16.msra.mxu0 %v1699
        %1933 = vmatprep.subr.bf16.mxu0 %v1694
        %1934 = vmatpush1.bf16.msra.mxu0 %v1693
        %1935 = vmatprep.subr.bf16.mxu0 %v1688
        %1936 = vmatpush1.bf16.msra.mxu0 %v1687
        %1937 = vmatprep.subr.bf16.mxu0 %v1682
        %1938 = vmatpush1.bf16.msra.mxu0 %v1681
        %1939 = vmatprep.subr.bf16.mxu0 %v1676
        %1940 = vmatpush1.bf16.msra.mxu0 %v1675
        %1941 = vmatprep.subr.bf16.mxu0 %v1670
        %1942 = vmatpush1.bf16.msra.mxu0 %v1669
        %1943 = vmatprep.subr.bf16.mxu0 %v1664
        %1944 = vmatpush1.bf16.msra.mxu0 %v1663
        %1945 = vmatprep.subr.bf16.mxu0 %v1658
        %1946 = vmatpush1.bf16.msra.mxu0 %v1657
        %1947 = vmatprep.subr.bf16.mxu0 %v1748
        %1948 = vmatpush2.bf16.msra.mxu0 %v1747
        %1949 = vmatprep.subr.bf16.mxu0 %v1742
        %1950 = vmatpush2.bf16.msra.mxu0 %v1741
        %1951 = vmatprep.subr.bf16.mxu0 %v1736
        %1952 = vmatpush2.bf16.msra.mxu0 %v1735
        %1953 = vmatprep.subr.bf16.mxu0 %v1730
        %1954 = vmatpush2.bf16.msra.mxu0 %v1729
        %1955 = vmatprep.subr.bf16.mxu0 %v1724
        %1956 = vmatpush2.bf16.msra.mxu0 %v1723
        %1957 = vmatprep.subr.bf16.mxu0 %v1718
        %1958 = vmatpush2.bf16.msra.mxu0 %v1717
        %1959 = vmatprep.subr.bf16.mxu0 %v1712
        %1960 = vmatpush2.bf16.msra.mxu0 %v1711
        %1961 = vmatprep.subr.bf16.mxu0 %v1706
        %1962 = vmatpush2.bf16.msra.mxu0 %v1705
        %1963 = vmatprep.mubr.bf16.mxu0 %v1306
        %1964 = vmatmul.mubr.bf16.gmra.mxu0 %v1305
        %v1965 = vpop.f32.mrf.mxu0
        %v1966 = vadd.f32 %v1360, %v1965
        %v1967 = vpop.f32.mrf.mxu0
        %v1968 = vadd.f32 %v1364, %v1967
        %v1969 = vpop.f32.mrf.mxu0
        %v1970 = vadd.f32 %v1360, %v1969
        %v1971 = vpop.f32.mrf.mxu0
        %v1972 = vadd.f32 %v1364, %v1971
        %1973 = vdwg.mxu0
        %v1974 = vlaneseq
        %v1975 = vshrl.u32 %v1974, 7
        %v1976 = vlaneseq
        %v1977 = vand.u32 %v1976, 127
        %vm1978 = vcmp.le.s32.totalorder %v1977, %v1975
        %1981 = vrot.lane.b32.xlu0 %v1880, 96
        %v1982 = vpop.permute.xlu0 %1981
        %1983 = vrot.lane.b32.xlu0 %v1884, 96
        %v1984 = vpop.permute.xlu0 %1983
        %1987 = vrot.lane.b32.xlu0 %v1880, 64
        %v1988 = vpop.permute.xlu0 %1987
        %1989 = vrot.lane.b32.xlu0 %v1884, 64
        %v1990 = vpop.permute.xlu0 %1989
        %1993 = vrot.lane.b32.xlu0 %v1880, 32
        %v1994 = vpop.permute.xlu0 %1993
        %1995 = vrot.lane.b32.xlu0 %v1884, 32
        %v1996 = vpop.permute.xlu0 %1995
        %2001 = vrot.lane.b32.xlu0 %v1882, 96
        %v2002 = vpop.permute.xlu0 %2001
        %2003 = vrot.lane.b32.xlu0 %v1886, 96
        %v2004 = vpop.permute.xlu0 %2003
        %2007 = vrot.lane.b32.xlu0 %v1882, 64
        %v2008 = vpop.permute.xlu0 %2007
        %2009 = vrot.lane.b32.xlu0 %v1886, 64
        %v2010 = vpop.permute.xlu0 %2009
        %2013 = vrot.lane.b32.xlu0 %v1882, 32
        %v2014 = vpop.permute.xlu0 %2013
        %2015 = vrot.lane.b32.xlu0 %v1886, 32
        %v2016 = vpop.permute.xlu0 %2015
        %v2019 = vpack.c.bf16 %v1880, %v1880
        %v2020 = vpack.c.bf16 %v1884, %v1884
        %v2021 = vpack.c.bf16 %v1982, %v1982
        %v2022 = vpack.c.bf16 %v1984, %v1984
        %v2023 = vpack.c.bf16 %v1988, %v1988
        %v2024 = vpack.c.bf16 %v1990, %v1990
        %v2025 = vpack.c.bf16 %v1994, %v1994
        %v2026 = vpack.c.bf16 %v1996, %v1996
        %v2027 = vpack.c.bf16 %v1882, %v1882
        %v2028 = vpack.c.bf16 %v1886, %v1886
        %v2029 = vpack.c.bf16 %v2002, %v2002
        %v2030 = vpack.c.bf16 %v2004, %v2004
        %v2031 = vpack.c.bf16 %v2008, %v2008
        %v2032 = vpack.c.bf16 %v2010, %v2010
        %v2033 = vpack.c.bf16 %v2014, %v2014
        %v2034 = vpack.c.bf16 %v2016, %v2016
        %2037 = vrot.lane.b32.xlu0 %v1923, 96
        %v2038 = vpop.permute.xlu0 %2037
        %2039 = vrot.lane.b32.xlu0 %v1927, 96
        %v2040 = vpop.permute.xlu0 %2039
        %2043 = vrot.lane.b32.xlu0 %v1923, 64
        %v2044 = vpop.permute.xlu0 %2043
        %2045 = vrot.lane.b32.xlu0 %v1927, 64
        %v2046 = vpop.permute.xlu0 %2045
        %2049 = vrot.lane.b32.xlu0 %v1923, 32
        %v2050 = vpop.permute.xlu0 %2049
        %2051 = vrot.lane.b32.xlu0 %v1927, 32
        %v2052 = vpop.permute.xlu0 %2051
        %2057 = vrot.lane.b32.xlu0 %v1925, 96
        %v2058 = vpop.permute.xlu0 %2057
        %2059 = vrot.lane.b32.xlu0 %v1929, 96
        %v2060 = vpop.permute.xlu0 %2059
        %2063 = vrot.lane.b32.xlu0 %v1925, 64
        %v2064 = vpop.permute.xlu0 %2063
        %2065 = vrot.lane.b32.xlu0 %v1929, 64
        %v2066 = vpop.permute.xlu0 %2065
        %2069 = vrot.lane.b32.xlu0 %v1925, 32
        %v2070 = vpop.permute.xlu0 %2069
        %2071 = vrot.lane.b32.xlu0 %v1929, 32
        %v2072 = vpop.permute.xlu0 %2071
        %v2075 = vpack.c.bf16 %v1923, %v1923
        %v2076 = vpack.c.bf16 %v1927, %v1927
        %v2077 = vpack.c.bf16 %v2038, %v2038
        %v2078 = vpack.c.bf16 %v2040, %v2040
        %v2079 = vpack.c.bf16 %v2044, %v2044
        %v2080 = vpack.c.bf16 %v2046, %v2046
        %v2081 = vpack.c.bf16 %v2050, %v2050
        %v2082 = vpack.c.bf16 %v2052, %v2052
        %v2083 = vpack.c.bf16 %v1925, %v1925
        %v2084 = vpack.c.bf16 %v1929, %v1929
        %v2085 = vpack.c.bf16 %v2058, %v2058
        %v2086 = vpack.c.bf16 %v2060, %v2060
        %v2087 = vpack.c.bf16 %v2064, %v2064
        %v2088 = vpack.c.bf16 %v2066, %v2066
        %v2089 = vpack.c.bf16 %v2070, %v2070
        %v2090 = vpack.c.bf16 %v2072, %v2072
        %2093 = vrot.lane.b32.xlu0 %v1966, 96
        %v2094 = vpop.permute.xlu0 %2093
        %2095 = vrot.lane.b32.xlu0 %v1970, 96
        %v2096 = vpop.permute.xlu0 %2095
        %2099 = vrot.lane.b32.xlu0 %v1966, 64
        %v2100 = vpop.permute.xlu0 %2099
        %2101 = vrot.lane.b32.xlu0 %v1970, 64
        %v2102 = vpop.permute.xlu0 %2101
        %2105 = vrot.lane.b32.xlu0 %v1966, 32
        %v2106 = vpop.permute.xlu0 %2105
        %2107 = vrot.lane.b32.xlu0 %v1970, 32
        %v2108 = vpop.permute.xlu0 %2107
        %2113 = vrot.lane.b32.xlu0 %v1968, 96
        %v2114 = vpop.permute.xlu0 %2113
        %2115 = vrot.lane.b32.xlu0 %v1972, 96
        %v2116 = vpop.permute.xlu0 %2115
        %2119 = vrot.lane.b32.xlu0 %v1968, 64
        %v2120 = vpop.permute.xlu0 %2119
        %2121 = vrot.lane.b32.xlu0 %v1972, 64
        %v2122 = vpop.permute.xlu0 %2121
        %2125 = vrot.lane.b32.xlu0 %v1968, 32
        %v2126 = vpop.permute.xlu0 %2125
        %2127 = vrot.lane.b32.xlu0 %v1972, 32
        %v2128 = vpop.permute.xlu0 %2127
        %v2131 = vpack.c.bf16 %v1966, %v1966
        %v2132 = vpack.c.bf16 %v1970, %v1970
        %v2133 = vpack.c.bf16 %v2094, %v2094
        %v2134 = vpack.c.bf16 %v2096, %v2096
        %v2135 = vpack.c.bf16 %v2100, %v2100
        %v2136 = vpack.c.bf16 %v2102, %v2102
        %v2137 = vpack.c.bf16 %v2106, %v2106
        %v2138 = vpack.c.bf16 %v2108, %v2108
        %v2139 = vpack.c.bf16 %v1968, %v1968
        %v2140 = vpack.c.bf16 %v1972, %v1972
        %v2141 = vpack.c.bf16 %v2114, %v2114
        %v2142 = vpack.c.bf16 %v2116, %v2116
        %v2143 = vpack.c.bf16 %v2120, %v2120
        %v2144 = vpack.c.bf16 %v2122, %v2122
        %v2145 = vpack.c.bf16 %v2126, %v2126
        %v2146 = vpack.c.bf16 %v2128, %v2128
        %vm2147 = vcmask 261120
        %v2149 = vsel %vm2147, %v2019, 0
        %v2152 = vsel %vm2147, %v2075, 0
        %2154 = vmatprep.subr.bf16.mxu0 0
        %2155 = vmatpush1.bf16.xpose.msra.mxu0 0
        %2156 = vmatprep.subr.bf16.mxu0 0
        %2157 = vmatpush1.bf16.xpose.msra.mxu0 0
        %2158 = vmatprep.subr.bf16.mxu0 0
        %2159 = vmatpush1.bf16.xpose.msra.mxu0 0
        %2160 = vmatprep.subr.bf16.mxu0 0
        %2161 = vmatpush1.bf16.xpose.msra.mxu0 0
        %2162 = vmatprep.subr.bf16.mxu0 0
        %2163 = vmatpush1.bf16.xpose.msra.mxu0 0
        %2164 = vmatprep.subr.bf16.mxu0 0
        %2165 = vmatpush1.bf16.xpose.msra.mxu0 0
        %2166 = vmatprep.subr.bf16.mxu0 0
        %2167 = vmatpush1.bf16.xpose.msra.mxu0 0
        %2168 = vmatprep.subr.bf16.mxu0 0
        %2169 = vmatpush1.bf16.xpose.msra.mxu0 %v2152
        %2170 = vmatprep.subr.bf16.mxu0 0
        %2171 = vmatpush2.bf16.xpose.msra.mxu0 0
        %2172 = vmatprep.subr.bf16.mxu0 0
        %2173 = vmatpush2.bf16.xpose.msra.mxu0 0
        %2174 = vmatprep.subr.bf16.mxu0 0
        %2175 = vmatpush2.bf16.xpose.msra.mxu0 0
        %2176 = vmatprep.subr.bf16.mxu0 0
        %2177 = vmatpush2.bf16.xpose.msra.mxu0 0
        %2178 = vmatprep.subr.bf16.mxu0 0
        %2179 = vmatpush2.bf16.xpose.msra.mxu0 0
        %2180 = vmatprep.subr.bf16.mxu0 0
        %2181 = vmatpush2.bf16.xpose.msra.mxu0 0
        %2182 = vmatprep.subr.bf16.mxu0 0
        %2183 = vmatpush2.bf16.xpose.msra.mxu0 0
        %2184 = vmatprep.subr.bf16.mxu0 0
        %2185 = vmatpush2.bf16.xpose.msra.mxu0 0
        %2186 = vmatprep.mubr.bf16.mxu0 0
        %2187 = vmatmul.mubr.bf16.gmra.mxu0 %v2149
        %v2188 = vpop.f32.mrf.mxu0
        %v2189 = vadd.f32 0.0, %v2188
        %v2190 = vpop.f32.mrf.mxu0
        %v2191 = vpop.f32.mrf.mxu0
        %v2192 = vpop.f32.mrf.mxu0
        %2193 = vdwg.mxu0
        %v2195 = vsel %vm2147, %v2020, 0
        %v2198 = vsel %vm2147, %v2076, 0
        %2200 = vmatprep.subr.bf16.mxu0 0
        %2201 = vmatpush1.bf16.xpose.msra.mxu0 0
        %2202 = vmatprep.subr.bf16.mxu0 0
        %2203 = vmatpush1.bf16.xpose.msra.mxu0 0
        %2204 = vmatprep.subr.bf16.mxu0 0
        %2205 = vmatpush1.bf16.xpose.msra.mxu0 0
        %2206 = vmatprep.subr.bf16.mxu0 0
        %2207 = vmatpush1.bf16.xpose.msra.mxu0 0
        %2208 = vmatprep.subr.bf16.mxu0 0
        %2209 = vmatpush1.bf16.xpose.msra.mxu0 0
        %2210 = vmatprep.subr.bf16.mxu0 0
        %2211 = vmatpush1.bf16.xpose.msra.mxu0 0
        %2212 = vmatprep.subr.bf16.mxu0 0
        %2213 = vmatpush1.bf16.xpose.msra.mxu0 0
        %2214 = vmatprep.subr.bf16.mxu0 0
        %2215 = vmatpush1.bf16.xpose.msra.mxu0 %v2198
        %2216 = vmatprep.subr.bf16.mxu0 0
        %2217 = vmatpush2.bf16.xpose.msra.mxu0 0
        %2218 = vmatprep.subr.bf16.mxu0 0
        %2219 = vmatpush2.bf16.xpose.msra.mxu0 0
        %2220 = vmatprep.subr.bf16.mxu0 0
        %2221 = vmatpush2.bf16.xpose.msra.mxu0 0
        %2222 = vmatprep.subr.bf16.mxu0 0
        %2223 = vmatpush2.bf16.xpose.msra.mxu0 0
        %2224 = vmatprep.subr.bf16.mxu0 0
        %2225 = vmatpush2.bf16.xpose.msra.mxu0 0
        %2226 = vmatprep.subr.bf16.mxu0 0
        %2227 = vmatpush2.bf16.xpose.msra.mxu0 0
        %2228 = vmatprep.subr.bf16.mxu0 0
        %2229 = vmatpush2.bf16.xpose.msra.mxu0 0
        %2230 = vmatprep.subr.bf16.mxu0 0
        %2231 = vmatpush2.bf16.xpose.msra.mxu0 0
        %2232 = vmatprep.mubr.bf16.mxu0 0
        %2233 = vmatmul.mubr.bf16.gmra.mxu0 %v2195
        %v2234 = vpop.f32.mrf.mxu0
        %v2235 = vadd.f32 0.0, %v2234
        %v2236 = vpop.f32.mrf.mxu0
        %v2237 = vpop.f32.mrf.mxu0
        %v2238 = vpop.f32.mrf.mxu0
        %2239 = vdwg.mxu0
        %v2241 = vsel %vm2147, %v2021, 0
        %v2244 = vsel %vm2147, %v2077, 0
        %2246 = vmatprep.subr.bf16.mxu0 0
        %2247 = vmatpush1.bf16.xpose.msra.mxu0 0
        %2248 = vmatprep.subr.bf16.mxu0 0
        %2249 = vmatpush1.bf16.xpose.msra.mxu0 0
        %2250 = vmatprep.subr.bf16.mxu0 0
        %2251 = vmatpush1.bf16.xpose.msra.mxu0 0
        %2252 = vmatprep.subr.bf16.mxu0 0
        %2253 = vmatpush1.bf16.xpose.msra.mxu0 0
        %2254 = vmatprep.subr.bf16.mxu0 0
        %2255 = vmatpush1.bf16.xpose.msra.mxu0 0
        %2256 = vmatprep.subr.bf16.mxu0 0
        %2257 = vmatpush1.bf16.xpose.msra.mxu0 0
        %2258 = vmatprep.subr.bf16.mxu0 0
        %2259 = vmatpush1.bf16.xpose.msra.mxu0 0
        %2260 = vmatprep.subr.bf16.mxu0 0
        %2261 = vmatpush1.bf16.xpose.msra.mxu0 %v2244
        %2262 = vmatprep.subr.bf16.mxu0 0
        %2263 = vmatpush2.bf16.xpose.msra.mxu0 0
        %2264 = vmatprep.subr.bf16.mxu0 0
        %2265 = vmatpush2.bf16.xpose.msra.mxu0 0
        %2266 = vmatprep.subr.bf16.mxu0 0
        %2267 = vmatpush2.bf16.xpose.msra.mxu0 0
        %2268 = vmatprep.subr.bf16.mxu0 0
        %2269 = vmatpush2.bf16.xpose.msra.mxu0 0
        %2270 = vmatprep.subr.bf16.mxu0 0
        %2271 = vmatpush2.bf16.xpose.msra.mxu0 0
        %2272 = vmatprep.subr.bf16.mxu0 0
        %2273 = vmatpush2.bf16.xpose.msra.mxu0 0
        %2274 = vmatprep.subr.bf16.mxu0 0
        %2275 = vmatpush2.bf16.xpose.msra.mxu0 0
        %2276 = vmatprep.subr.bf16.mxu0 0
        %2277 = vmatpush2.bf16.xpose.msra.mxu0 0
        %2278 = vmatprep.mubr.bf16.mxu0 0
        %2279 = vmatmul.mubr.bf16.gmra.mxu0 %v2241
        %v2280 = vpop.f32.mrf.mxu0
        %v2281 = vadd.f32 0.0, %v2280
        %v2282 = vpop.f32.mrf.mxu0
        %v2283 = vpop.f32.mrf.mxu0
        %v2284 = vpop.f32.mrf.mxu0
        %2285 = vdwg.mxu0
        %v2287 = vsel %vm2147, %v2022, 0
        %v2290 = vsel %vm2147, %v2078, 0
        %2292 = vmatprep.subr.bf16.mxu0 0
        %2293 = vmatpush1.bf16.xpose.msra.mxu0 0
        %2294 = vmatprep.subr.bf16.mxu0 0
        %2295 = vmatpush1.bf16.xpose.msra.mxu0 0
        %2296 = vmatprep.subr.bf16.mxu0 0
        %2297 = vmatpush1.bf16.xpose.msra.mxu0 0
        %2298 = vmatprep.subr.bf16.mxu0 0
        %2299 = vmatpush1.bf16.xpose.msra.mxu0 0
        %2300 = vmatprep.subr.bf16.mxu0 0
        %2301 = vmatpush1.bf16.xpose.msra.mxu0 0
        %2302 = vmatprep.subr.bf16.mxu0 0
        %2303 = vmatpush1.bf16.xpose.msra.mxu0 0
        %2304 = vmatprep.subr.bf16.mxu0 0
        %2305 = vmatpush1.bf16.xpose.msra.mxu0 0
        %2306 = vmatprep.subr.bf16.mxu0 0
        %2307 = vmatpush1.bf16.xpose.msra.mxu0 %v2290
        %2308 = vmatprep.subr.bf16.mxu0 0
        %2309 = vmatpush2.bf16.xpose.msra.mxu0 0
        %2310 = vmatprep.subr.bf16.mxu0 0
        %2311 = vmatpush2.bf16.xpose.msra.mxu0 0
        %2312 = vmatprep.subr.bf16.mxu0 0
        %2313 = vmatpush2.bf16.xpose.msra.mxu0 0
        %2314 = vmatprep.subr.bf16.mxu0 0
        %2315 = vmatpush2.bf16.xpose.msra.mxu0 0
        %2316 = vmatprep.subr.bf16.mxu0 0
        %2317 = vmatpush2.bf16.xpose.msra.mxu0 0
        %2318 = vmatprep.subr.bf16.mxu0 0
        %2319 = vmatpush2.bf16.xpose.msra.mxu0 0
        %2320 = vmatprep.subr.bf16.mxu0 0
        %2321 = vmatpush2.bf16.xpose.msra.mxu0 0
        %2322 = vmatprep.subr.bf16.mxu0 0
        %2323 = vmatpush2.bf16.xpose.msra.mxu0 0
        %2324 = vmatprep.mubr.bf16.mxu0 0
        %2325 = vmatmul.mubr.bf16.gmra.mxu0 %v2287
        %v2326 = vpop.f32.mrf.mxu0
        %v2327 = vadd.f32 0.0, %v2326
        %v2328 = vpop.f32.mrf.mxu0
        %v2329 = vpop.f32.mrf.mxu0
        %v2330 = vpop.f32.mrf.mxu0
        %2331 = vdwg.mxu0
        %v2333 = vsel %vm2147, %v2023, 0
        %v2336 = vsel %vm2147, %v2079, 0
        %2338 = vmatprep.subr.bf16.mxu0 0
        %2339 = vmatpush1.bf16.xpose.msra.mxu0 0
        %2340 = vmatprep.subr.bf16.mxu0 0
        %2341 = vmatpush1.bf16.xpose.msra.mxu0 0
        %2342 = vmatprep.subr.bf16.mxu0 0
        %2343 = vmatpush1.bf16.xpose.msra.mxu0 0
        %2344 = vmatprep.subr.bf16.mxu0 0
        %2345 = vmatpush1.bf16.xpose.msra.mxu0 0
        %2346 = vmatprep.subr.bf16.mxu0 0
        %2347 = vmatpush1.bf16.xpose.msra.mxu0 0
        %2348 = vmatprep.subr.bf16.mxu0 0
        %2349 = vmatpush1.bf16.xpose.msra.mxu0 0
        %2350 = vmatprep.subr.bf16.mxu0 0
        %2351 = vmatpush1.bf16.xpose.msra.mxu0 0
        %2352 = vmatprep.subr.bf16.mxu0 0
        %2353 = vmatpush1.bf16.xpose.msra.mxu0 %v2336
        %2354 = vmatprep.subr.bf16.mxu0 0
        %2355 = vmatpush2.bf16.xpose.msra.mxu0 0
        %2356 = vmatprep.subr.bf16.mxu0 0
        %2357 = vmatpush2.bf16.xpose.msra.mxu0 0
        %2358 = vmatprep.subr.bf16.mxu0 0
        %2359 = vmatpush2.bf16.xpose.msra.mxu0 0
        %2360 = vmatprep.subr.bf16.mxu0 0
        %2361 = vmatpush2.bf16.xpose.msra.mxu0 0
        %2362 = vmatprep.subr.bf16.mxu0 0
        %2363 = vmatpush2.bf16.xpose.msra.mxu0 0
        %2364 = vmatprep.subr.bf16.mxu0 0
        %2365 = vmatpush2.bf16.xpose.msra.mxu0 0
        %2366 = vmatprep.subr.bf16.mxu0 0
        %2367 = vmatpush2.bf16.xpose.msra.mxu0 0
        %2368 = vmatprep.subr.bf16.mxu0 0
        %2369 = vmatpush2.bf16.xpose.msra.mxu0 0
        %2370 = vmatprep.mubr.bf16.mxu0 0
        %2371 = vmatmul.mubr.bf16.gmra.mxu0 %v2333
        %v2372 = vpop.f32.mrf.mxu0
        %v2373 = vadd.f32 0.0, %v2372
        %v2374 = vpop.f32.mrf.mxu0
        %v2375 = vpop.f32.mrf.mxu0
        %v2376 = vpop.f32.mrf.mxu0
        %2377 = vdwg.mxu0
        %v2379 = vsel %vm2147, %v2024, 0
        %v2382 = vsel %vm2147, %v2080, 0
        %2384 = vmatprep.subr.bf16.mxu0 0
        %2385 = vmatpush1.bf16.xpose.msra.mxu0 0
        %2386 = vmatprep.subr.bf16.mxu0 0
        %2387 = vmatpush1.bf16.xpose.msra.mxu0 0
        %2388 = vmatprep.subr.bf16.mxu0 0
        %2389 = vmatpush1.bf16.xpose.msra.mxu0 0
        %2390 = vmatprep.subr.bf16.mxu0 0
        %2391 = vmatpush1.bf16.xpose.msra.mxu0 0
        %2392 = vmatprep.subr.bf16.mxu0 0
        %2393 = vmatpush1.bf16.xpose.msra.mxu0 0
        %2394 = vmatprep.subr.bf16.mxu0 0
        %2395 = vmatpush1.bf16.xpose.msra.mxu0 0
        %2396 = vmatprep.subr.bf16.mxu0 0
        %2397 = vmatpush1.bf16.xpose.msra.mxu0 0
        %2398 = vmatprep.subr.bf16.mxu0 0
        %2399 = vmatpush1.bf16.xpose.msra.mxu0 %v2382
        %2400 = vmatprep.subr.bf16.mxu0 0
        %2401 = vmatpush2.bf16.xpose.msra.mxu0 0
        %2402 = vmatprep.subr.bf16.mxu0 0
        %2403 = vmatpush2.bf16.xpose.msra.mxu0 0
        %2404 = vmatprep.subr.bf16.mxu0 0
        %2405 = vmatpush2.bf16.xpose.msra.mxu0 0
        %2406 = vmatprep.subr.bf16.mxu0 0
        %2407 = vmatpush2.bf16.xpose.msra.mxu0 0
        %2408 = vmatprep.subr.bf16.mxu0 0
        %2409 = vmatpush2.bf16.xpose.msra.mxu0 0
        %2410 = vmatprep.subr.bf16.mxu0 0
        %2411 = vmatpush2.bf16.xpose.msra.mxu0 0
        %2412 = vmatprep.subr.bf16.mxu0 0
        %2413 = vmatpush2.bf16.xpose.msra.mxu0 0
        %2414 = vmatprep.subr.bf16.mxu0 0
        %2415 = vmatpush2.bf16.xpose.msra.mxu0 0
        %2416 = vmatprep.mubr.bf16.mxu0 0
        %2417 = vmatmul.mubr.bf16.gmra.mxu0 %v2379
        %v2418 = vpop.f32.mrf.mxu0
        %v2419 = vadd.f32 0.0, %v2418
        %v2420 = vpop.f32.mrf.mxu0
        %v2421 = vpop.f32.mrf.mxu0
        %v2422 = vpop.f32.mrf.mxu0
        %2423 = vdwg.mxu0
        %v2425 = vsel %vm2147, %v2025, 0
        %v2428 = vsel %vm2147, %v2081, 0
        %2430 = vmatprep.subr.bf16.mxu0 0
        %2431 = vmatpush1.bf16.xpose.msra.mxu0 0
        %2432 = vmatprep.subr.bf16.mxu0 0
        %2433 = vmatpush1.bf16.xpose.msra.mxu0 0
        %2434 = vmatprep.subr.bf16.mxu0 0
        %2435 = vmatpush1.bf16.xpose.msra.mxu0 0
        %2436 = vmatprep.subr.bf16.mxu0 0
        %2437 = vmatpush1.bf16.xpose.msra.mxu0 0
        %2438 = vmatprep.subr.bf16.mxu0 0
        %2439 = vmatpush1.bf16.xpose.msra.mxu0 0
        %2440 = vmatprep.subr.bf16.mxu0 0
        %2441 = vmatpush1.bf16.xpose.msra.mxu0 0
        %2442 = vmatprep.subr.bf16.mxu0 0
        %2443 = vmatpush1.bf16.xpose.msra.mxu0 0
        %2444 = vmatprep.subr.bf16.mxu0 0
        %2445 = vmatpush1.bf16.xpose.msra.mxu0 %v2428
        %2446 = vmatprep.subr.bf16.mxu0 0
        %2447 = vmatpush2.bf16.xpose.msra.mxu0 0
        %2448 = vmatprep.subr.bf16.mxu0 0
        %2449 = vmatpush2.bf16.xpose.msra.mxu0 0
        %2450 = vmatprep.subr.bf16.mxu0 0
        %2451 = vmatpush2.bf16.xpose.msra.mxu0 0
        %2452 = vmatprep.subr.bf16.mxu0 0
        %2453 = vmatpush2.bf16.xpose.msra.mxu0 0
        %2454 = vmatprep.subr.bf16.mxu0 0
        %2455 = vmatpush2.bf16.xpose.msra.mxu0 0
        %2456 = vmatprep.subr.bf16.mxu0 0
        %2457 = vmatpush2.bf16.xpose.msra.mxu0 0
        %2458 = vmatprep.subr.bf16.mxu0 0
        %2459 = vmatpush2.bf16.xpose.msra.mxu0 0
        %2460 = vmatprep.subr.bf16.mxu0 0
        %2461 = vmatpush2.bf16.xpose.msra.mxu0 0
        %2462 = vmatprep.mubr.bf16.mxu0 0
        %2463 = vmatmul.mubr.bf16.gmra.mxu0 %v2425
        %v2464 = vpop.f32.mrf.mxu0
        %v2465 = vadd.f32 0.0, %v2464
        %v2466 = vpop.f32.mrf.mxu0
        %v2467 = vpop.f32.mrf.mxu0
        %v2468 = vpop.f32.mrf.mxu0
        %2469 = vdwg.mxu0
        %v2471 = vsel %vm2147, %v2026, 0
        %v2474 = vsel %vm2147, %v2082, 0
        %2476 = vmatprep.subr.bf16.mxu0 0
        %2477 = vmatpush1.bf16.xpose.msra.mxu0 0
        %2478 = vmatprep.subr.bf16.mxu0 0
        %2479 = vmatpush1.bf16.xpose.msra.mxu0 0
        %2480 = vmatprep.subr.bf16.mxu0 0
        %2481 = vmatpush1.bf16.xpose.msra.mxu0 0
        %2482 = vmatprep.subr.bf16.mxu0 0
        %2483 = vmatpush1.bf16.xpose.msra.mxu0 0
        %2484 = vmatprep.subr.bf16.mxu0 0
        %2485 = vmatpush1.bf16.xpose.msra.mxu0 0
        %2486 = vmatprep.subr.bf16.mxu0 0
        %2487 = vmatpush1.bf16.xpose.msra.mxu0 0
        %2488 = vmatprep.subr.bf16.mxu0 0
        %2489 = vmatpush1.bf16.xpose.msra.mxu0 0
        %2490 = vmatprep.subr.bf16.mxu0 0
        %2491 = vmatpush1.bf16.xpose.msra.mxu0 %v2474
        %2492 = vmatprep.subr.bf16.mxu0 0
        %2493 = vmatpush2.bf16.xpose.msra.mxu0 0
        %2494 = vmatprep.subr.bf16.mxu0 0
        %2495 = vmatpush2.bf16.xpose.msra.mxu0 0
        %2496 = vmatprep.subr.bf16.mxu0 0
        %2497 = vmatpush2.bf16.xpose.msra.mxu0 0
        %2498 = vmatprep.subr.bf16.mxu0 0
        %2499 = vmatpush2.bf16.xpose.msra.mxu0 0
        %2500 = vmatprep.subr.bf16.mxu0 0
        %2501 = vmatpush2.bf16.xpose.msra.mxu0 0
        %2502 = vmatprep.subr.bf16.mxu0 0
        %2503 = vmatpush2.bf16.xpose.msra.mxu0 0
        %2504 = vmatprep.subr.bf16.mxu0 0
        %2505 = vmatpush2.bf16.xpose.msra.mxu0 0
        %2506 = vmatprep.subr.bf16.mxu0 0
        %2507 = vmatpush2.bf16.xpose.msra.mxu0 0
        %2508 = vmatprep.mubr.bf16.mxu0 0
        %2509 = vmatmul.mubr.bf16.gmra.mxu0 %v2471
        %v2510 = vpop.f32.mrf.mxu0
        %v2511 = vadd.f32 0.0, %v2510
        %v2512 = vpop.f32.mrf.mxu0
        %v2513 = vpop.f32.mrf.mxu0
        %v2514 = vpop.f32.mrf.mxu0
        %2515 = vdwg.mxu0
        %v2517 = vsel %vm2147, %v2027, 0
        %v2520 = vsel %vm2147, %v2083, 0
        %2522 = vmatprep.subr.bf16.mxu0 0
        %2523 = vmatpush1.bf16.xpose.msra.mxu0 0
        %2524 = vmatprep.subr.bf16.mxu0 0
        %2525 = vmatpush1.bf16.xpose.msra.mxu0 0
        %2526 = vmatprep.subr.bf16.mxu0 0
        %2527 = vmatpush1.bf16.xpose.msra.mxu0 0
        %2528 = vmatprep.subr.bf16.mxu0 0
        %2529 = vmatpush1.bf16.xpose.msra.mxu0 0
        %2530 = vmatprep.subr.bf16.mxu0 0
        %2531 = vmatpush1.bf16.xpose.msra.mxu0 0
        %2532 = vmatprep.subr.bf16.mxu0 0
        %2533 = vmatpush1.bf16.xpose.msra.mxu0 0
        %2534 = vmatprep.subr.bf16.mxu0 0
        %2535 = vmatpush1.bf16.xpose.msra.mxu0 0
        %2536 = vmatprep.subr.bf16.mxu0 0
        %2537 = vmatpush1.bf16.xpose.msra.mxu0 %v2520
        %2538 = vmatprep.subr.bf16.mxu0 0
        %2539 = vmatpush2.bf16.xpose.msra.mxu0 0
        %2540 = vmatprep.subr.bf16.mxu0 0
        %2541 = vmatpush2.bf16.xpose.msra.mxu0 0
        %2542 = vmatprep.subr.bf16.mxu0 0
        %2543 = vmatpush2.bf16.xpose.msra.mxu0 0
        %2544 = vmatprep.subr.bf16.mxu0 0
        %2545 = vmatpush2.bf16.xpose.msra.mxu0 0
        %2546 = vmatprep.subr.bf16.mxu0 0
        %2547 = vmatpush2.bf16.xpose.msra.mxu0 0
        %2548 = vmatprep.subr.bf16.mxu0 0
        %2549 = vmatpush2.bf16.xpose.msra.mxu0 0
        %2550 = vmatprep.subr.bf16.mxu0 0
        %2551 = vmatpush2.bf16.xpose.msra.mxu0 0
        %2552 = vmatprep.subr.bf16.mxu0 0
        %2553 = vmatpush2.bf16.xpose.msra.mxu0 0
        %2554 = vmatprep.mubr.bf16.mxu0 0
        %2555 = vmatmul.mubr.bf16.gmra.mxu0 %v2517
        %v2556 = vpop.f32.mrf.mxu0
        %v2557 = vadd.f32 0.0, %v2556
        %v2558 = vpop.f32.mrf.mxu0
        %v2559 = vpop.f32.mrf.mxu0
        %v2560 = vpop.f32.mrf.mxu0
        %2561 = vdwg.mxu0
        %v2563 = vsel %vm2147, %v2028, 0
        %v2566 = vsel %vm2147, %v2084, 0
        %2568 = vmatprep.subr.bf16.mxu0 0
        %2569 = vmatpush1.bf16.xpose.msra.mxu0 0
        %2570 = vmatprep.subr.bf16.mxu0 0
        %2571 = vmatpush1.bf16.xpose.msra.mxu0 0
        %2572 = vmatprep.subr.bf16.mxu0 0
        %2573 = vmatpush1.bf16.xpose.msra.mxu0 0
        %2574 = vmatprep.subr.bf16.mxu0 0
        %2575 = vmatpush1.bf16.xpose.msra.mxu0 0
        %2576 = vmatprep.subr.bf16.mxu0 0
        %2577 = vmatpush1.bf16.xpose.msra.mxu0 0
        %2578 = vmatprep.subr.bf16.mxu0 0
        %2579 = vmatpush1.bf16.xpose.msra.mxu0 0
        %2580 = vmatprep.subr.bf16.mxu0 0
        %2581 = vmatpush1.bf16.xpose.msra.mxu0 0
        %2582 = vmatprep.subr.bf16.mxu0 0
        %2583 = vmatpush1.bf16.xpose.msra.mxu0 %v2566
        %2584 = vmatprep.subr.bf16.mxu0 0
        %2585 = vmatpush2.bf16.xpose.msra.mxu0 0
        %2586 = vmatprep.subr.bf16.mxu0 0
        %2587 = vmatpush2.bf16.xpose.msra.mxu0 0
        %2588 = vmatprep.subr.bf16.mxu0 0
        %2589 = vmatpush2.bf16.xpose.msra.mxu0 0
        %2590 = vmatprep.subr.bf16.mxu0 0
        %2591 = vmatpush2.bf16.xpose.msra.mxu0 0
        %2592 = vmatprep.subr.bf16.mxu0 0
        %2593 = vmatpush2.bf16.xpose.msra.mxu0 0
        %2594 = vmatprep.subr.bf16.mxu0 0
        %2595 = vmatpush2.bf16.xpose.msra.mxu0 0
        %2596 = vmatprep.subr.bf16.mxu0 0
        %2597 = vmatpush2.bf16.xpose.msra.mxu0 0
        %2598 = vmatprep.subr.bf16.mxu0 0
        %2599 = vmatpush2.bf16.xpose.msra.mxu0 0
        %2600 = vmatprep.mubr.bf16.mxu0 0
        %2601 = vmatmul.mubr.bf16.gmra.mxu0 %v2563
        %v2602 = vpop.f32.mrf.mxu0
        %v2603 = vadd.f32 0.0, %v2602
        %v2604 = vpop.f32.mrf.mxu0
        %v2605 = vpop.f32.mrf.mxu0
        %v2606 = vpop.f32.mrf.mxu0
        %2607 = vdwg.mxu0
        %v2609 = vsel %vm2147, %v2029, 0
        %v2612 = vsel %vm2147, %v2085, 0
        %2614 = vmatprep.subr.bf16.mxu0 0
        %2615 = vmatpush1.bf16.xpose.msra.mxu0 0
        %2616 = vmatprep.subr.bf16.mxu0 0
        %2617 = vmatpush1.bf16.xpose.msra.mxu0 0
        %2618 = vmatprep.subr.bf16.mxu0 0
        %2619 = vmatpush1.bf16.xpose.msra.mxu0 0
        %2620 = vmatprep.subr.bf16.mxu0 0
        %2621 = vmatpush1.bf16.xpose.msra.mxu0 0
        %2622 = vmatprep.subr.bf16.mxu0 0
        %2623 = vmatpush1.bf16.xpose.msra.mxu0 0
        %2624 = vmatprep.subr.bf16.mxu0 0
        %2625 = vmatpush1.bf16.xpose.msra.mxu0 0
        %2626 = vmatprep.subr.bf16.mxu0 0
        %2627 = vmatpush1.bf16.xpose.msra.mxu0 0
        %2628 = vmatprep.subr.bf16.mxu0 0
        %2629 = vmatpush1.bf16.xpose.msra.mxu0 %v2612
        %2630 = vmatprep.subr.bf16.mxu0 0
        %2631 = vmatpush2.bf16.xpose.msra.mxu0 0
        %2632 = vmatprep.subr.bf16.mxu0 0
        %2633 = vmatpush2.bf16.xpose.msra.mxu0 0
        %2634 = vmatprep.subr.bf16.mxu0 0
        %2635 = vmatpush2.bf16.xpose.msra.mxu0 0
        %2636 = vmatprep.subr.bf16.mxu0 0
        %2637 = vmatpush2.bf16.xpose.msra.mxu0 0
        %2638 = vmatprep.subr.bf16.mxu0 0
        %2639 = vmatpush2.bf16.xpose.msra.mxu0 0
        %2640 = vmatprep.subr.bf16.mxu0 0
        %2641 = vmatpush2.bf16.xpose.msra.mxu0 0
        %2642 = vmatprep.subr.bf16.mxu0 0
        %2643 = vmatpush2.bf16.xpose.msra.mxu0 0
        %2644 = vmatprep.subr.bf16.mxu0 0
        %2645 = vmatpush2.bf16.xpose.msra.mxu0 0
        %2646 = vmatprep.mubr.bf16.mxu0 0
        %2647 = vmatmul.mubr.bf16.gmra.mxu0 %v2609
        %v2648 = vpop.f32.mrf.mxu0
        %v2649 = vadd.f32 0.0, %v2648
        %v2650 = vpop.f32.mrf.mxu0
        %v2651 = vpop.f32.mrf.mxu0
        %v2652 = vpop.f32.mrf.mxu0
        %2653 = vdwg.mxu0
        %v2655 = vsel %vm2147, %v2030, 0
        %v2658 = vsel %vm2147, %v2086, 0
        %2660 = vmatprep.subr.bf16.mxu0 0
        %2661 = vmatpush1.bf16.xpose.msra.mxu0 0
        %2662 = vmatprep.subr.bf16.mxu0 0
        %2663 = vmatpush1.bf16.xpose.msra.mxu0 0
        %2664 = vmatprep.subr.bf16.mxu0 0
        %2665 = vmatpush1.bf16.xpose.msra.mxu0 0
        %2666 = vmatprep.subr.bf16.mxu0 0
        %2667 = vmatpush1.bf16.xpose.msra.mxu0 0
        %2668 = vmatprep.subr.bf16.mxu0 0
        %2669 = vmatpush1.bf16.xpose.msra.mxu0 0
        %2670 = vmatprep.subr.bf16.mxu0 0
        %2671 = vmatpush1.bf16.xpose.msra.mxu0 0
        %2672 = vmatprep.subr.bf16.mxu0 0
        %2673 = vmatpush1.bf16.xpose.msra.mxu0 0
        %2674 = vmatprep.subr.bf16.mxu0 0
        %2675 = vmatpush1.bf16.xpose.msra.mxu0 %v2658
        %2676 = vmatprep.subr.bf16.mxu0 0
        %2677 = vmatpush2.bf16.xpose.msra.mxu0 0
        %2678 = vmatprep.subr.bf16.mxu0 0
        %2679 = vmatpush2.bf16.xpose.msra.mxu0 0
        %2680 = vmatprep.subr.bf16.mxu0 0
        %2681 = vmatpush2.bf16.xpose.msra.mxu0 0
        %2682 = vmatprep.subr.bf16.mxu0 0
        %2683 = vmatpush2.bf16.xpose.msra.mxu0 0
        %2684 = vmatprep.subr.bf16.mxu0 0
        %2685 = vmatpush2.bf16.xpose.msra.mxu0 0
        %2686 = vmatprep.subr.bf16.mxu0 0
        %2687 = vmatpush2.bf16.xpose.msra.mxu0 0
        %2688 = vmatprep.subr.bf16.mxu0 0
        %2689 = vmatpush2.bf16.xpose.msra.mxu0 0
        %2690 = vmatprep.subr.bf16.mxu0 0
        %2691 = vmatpush2.bf16.xpose.msra.mxu0 0
        %2692 = vmatprep.mubr.bf16.mxu0 0
        %2693 = vmatmul.mubr.bf16.gmra.mxu0 %v2655
        %v2694 = vpop.f32.mrf.mxu0
        %v2695 = vadd.f32 0.0, %v2694
        %v2696 = vpop.f32.mrf.mxu0
        %v2697 = vpop.f32.mrf.mxu0
        %v2698 = vpop.f32.mrf.mxu0
        %2699 = vdwg.mxu0
        %v2701 = vsel %vm2147, %v2031, 0
        %v2704 = vsel %vm2147, %v2087, 0
        %2706 = vmatprep.subr.bf16.mxu0 0
        %2707 = vmatpush1.bf16.xpose.msra.mxu0 0
        %2708 = vmatprep.subr.bf16.mxu0 0
        %2709 = vmatpush1.bf16.xpose.msra.mxu0 0
        %2710 = vmatprep.subr.bf16.mxu0 0
        %2711 = vmatpush1.bf16.xpose.msra.mxu0 0
        %2712 = vmatprep.subr.bf16.mxu0 0
        %2713 = vmatpush1.bf16.xpose.msra.mxu0 0
        %2714 = vmatprep.subr.bf16.mxu0 0
        %2715 = vmatpush1.bf16.xpose.msra.mxu0 0
        %2716 = vmatprep.subr.bf16.mxu0 0
        %2717 = vmatpush1.bf16.xpose.msra.mxu0 0
        %2718 = vmatprep.subr.bf16.mxu0 0
        %2719 = vmatpush1.bf16.xpose.msra.mxu0 0
        %2720 = vmatprep.subr.bf16.mxu0 0
        %2721 = vmatpush1.bf16.xpose.msra.mxu0 %v2704
        %2722 = vmatprep.subr.bf16.mxu0 0
        %2723 = vmatpush2.bf16.xpose.msra.mxu0 0
        %2724 = vmatprep.subr.bf16.mxu0 0
        %2725 = vmatpush2.bf16.xpose.msra.mxu0 0
        %2726 = vmatprep.subr.bf16.mxu0 0
        %2727 = vmatpush2.bf16.xpose.msra.mxu0 0
        %2728 = vmatprep.subr.bf16.mxu0 0
        %2729 = vmatpush2.bf16.xpose.msra.mxu0 0
        %2730 = vmatprep.subr.bf16.mxu0 0
        %2731 = vmatpush2.bf16.xpose.msra.mxu0 0
        %2732 = vmatprep.subr.bf16.mxu0 0
        %2733 = vmatpush2.bf16.xpose.msra.mxu0 0
        %2734 = vmatprep.subr.bf16.mxu0 0
        %2735 = vmatpush2.bf16.xpose.msra.mxu0 0
        %2736 = vmatprep.subr.bf16.mxu0 0
        %2737 = vmatpush2.bf16.xpose.msra.mxu0 0
        %2738 = vmatprep.mubr.bf16.mxu0 0
        %2739 = vmatmul.mubr.bf16.gmra.mxu0 %v2701
        %v2740 = vpop.f32.mrf.mxu0
        %v2741 = vadd.f32 0.0, %v2740
        %v2742 = vpop.f32.mrf.mxu0
        %v2743 = vpop.f32.mrf.mxu0
        %v2744 = vpop.f32.mrf.mxu0
        %2745 = vdwg.mxu0
        %v2747 = vsel %vm2147, %v2032, 0
        %v2750 = vsel %vm2147, %v2088, 0
        %2752 = vmatprep.subr.bf16.mxu0 0
        %2753 = vmatpush1.bf16.xpose.msra.mxu0 0
        %2754 = vmatprep.subr.bf16.mxu0 0
        %2755 = vmatpush1.bf16.xpose.msra.mxu0 0
        %2756 = vmatprep.subr.bf16.mxu0 0
        %2757 = vmatpush1.bf16.xpose.msra.mxu0 0
        %2758 = vmatprep.subr.bf16.mxu0 0
        %2759 = vmatpush1.bf16.xpose.msra.mxu0 0
        %2760 = vmatprep.subr.bf16.mxu0 0
        %2761 = vmatpush1.bf16.xpose.msra.mxu0 0
        %2762 = vmatprep.subr.bf16.mxu0 0
        %2763 = vmatpush1.bf16.xpose.msra.mxu0 0
        %2764 = vmatprep.subr.bf16.mxu0 0
        %2765 = vmatpush1.bf16.xpose.msra.mxu0 0
        %2766 = vmatprep.subr.bf16.mxu0 0
        %2767 = vmatpush1.bf16.xpose.msra.mxu0 %v2750
        %2768 = vmatprep.subr.bf16.mxu0 0
        %2769 = vmatpush2.bf16.xpose.msra.mxu0 0
        %2770 = vmatprep.subr.bf16.mxu0 0
        %2771 = vmatpush2.bf16.xpose.msra.mxu0 0
        %2772 = vmatprep.subr.bf16.mxu0 0
        %2773 = vmatpush2.bf16.xpose.msra.mxu0 0
        %2774 = vmatprep.subr.bf16.mxu0 0
        %2775 = vmatpush2.bf16.xpose.msra.mxu0 0
        %2776 = vmatprep.subr.bf16.mxu0 0
        %2777 = vmatpush2.bf16.xpose.msra.mxu0 0
        %2778 = vmatprep.subr.bf16.mxu0 0
        %2779 = vmatpush2.bf16.xpose.msra.mxu0 0
        %2780 = vmatprep.subr.bf16.mxu0 0
        %2781 = vmatpush2.bf16.xpose.msra.mxu0 0
        %2782 = vmatprep.subr.bf16.mxu0 0
        %2783 = vmatpush2.bf16.xpose.msra.mxu0 0
        %2784 = vmatprep.mubr.bf16.mxu0 0
        %2785 = vmatmul.mubr.bf16.gmra.mxu0 %v2747
        %v2786 = vpop.f32.mrf.mxu0
        %v2787 = vadd.f32 0.0, %v2786
        %v2788 = vpop.f32.mrf.mxu0
        %v2789 = vpop.f32.mrf.mxu0
        %v2790 = vpop.f32.mrf.mxu0
        %2791 = vdwg.mxu0
        %v2793 = vsel %vm2147, %v2033, 0
        %v2796 = vsel %vm2147, %v2089, 0
        %2798 = vmatprep.subr.bf16.mxu0 0
        %2799 = vmatpush1.bf16.xpose.msra.mxu0 0
        %2800 = vmatprep.subr.bf16.mxu0 0
        %2801 = vmatpush1.bf16.xpose.msra.mxu0 0
        %2802 = vmatprep.subr.bf16.mxu0 0
        %2803 = vmatpush1.bf16.xpose.msra.mxu0 0
        %2804 = vmatprep.subr.bf16.mxu0 0
        %2805 = vmatpush1.bf16.xpose.msra.mxu0 0
        %2806 = vmatprep.subr.bf16.mxu0 0
        %2807 = vmatpush1.bf16.xpose.msra.mxu0 0
        %2808 = vmatprep.subr.bf16.mxu0 0
        %2809 = vmatpush1.bf16.xpose.msra.mxu0 0
        %2810 = vmatprep.subr.bf16.mxu0 0
        %2811 = vmatpush1.bf16.xpose.msra.mxu0 0
        %2812 = vmatprep.subr.bf16.mxu0 0
        %2813 = vmatpush1.bf16.xpose.msra.mxu0 %v2796
        %2814 = vmatprep.subr.bf16.mxu0 0
        %2815 = vmatpush2.bf16.xpose.msra.mxu0 0
        %2816 = vmatprep.subr.bf16.mxu0 0
        %2817 = vmatpush2.bf16.xpose.msra.mxu0 0
        %2818 = vmatprep.subr.bf16.mxu0 0
        %2819 = vmatpush2.bf16.xpose.msra.mxu0 0
        %2820 = vmatprep.subr.bf16.mxu0 0
        %2821 = vmatpush2.bf16.xpose.msra.mxu0 0
        %2822 = vmatprep.subr.bf16.mxu0 0
        %2823 = vmatpush2.bf16.xpose.msra.mxu0 0
        %2824 = vmatprep.subr.bf16.mxu0 0
        %2825 = vmatpush2.bf16.xpose.msra.mxu0 0
        %2826 = vmatprep.subr.bf16.mxu0 0
        %2827 = vmatpush2.bf16.xpose.msra.mxu0 0
        %2828 = vmatprep.subr.bf16.mxu0 0
        %2829 = vmatpush2.bf16.xpose.msra.mxu0 0
        %2830 = vmatprep.mubr.bf16.mxu0 0
        %2831 = vmatmul.mubr.bf16.gmra.mxu0 %v2793
        %v2832 = vpop.f32.mrf.mxu0
        %v2833 = vadd.f32 0.0, %v2832
        %v2834 = vpop.f32.mrf.mxu0
        %v2835 = vpop.f32.mrf.mxu0
        %v2836 = vpop.f32.mrf.mxu0
        %2837 = vdwg.mxu0
        %v2839 = vsel %vm2147, %v2034, 0
        %v2842 = vsel %vm2147, %v2090, 0
        %2844 = vmatprep.subr.bf16.mxu0 0
        %2845 = vmatpush1.bf16.xpose.msra.mxu0 0
        %2846 = vmatprep.subr.bf16.mxu0 0
        %2847 = vmatpush1.bf16.xpose.msra.mxu0 0
        %2848 = vmatprep.subr.bf16.mxu0 0
        %2849 = vmatpush1.bf16.xpose.msra.mxu0 0
        %2850 = vmatprep.subr.bf16.mxu0 0
        %2851 = vmatpush1.bf16.xpose.msra.mxu0 0
        %2852 = vmatprep.subr.bf16.mxu0 0
        %2853 = vmatpush1.bf16.xpose.msra.mxu0 0
        %2854 = vmatprep.subr.bf16.mxu0 0
        %2855 = vmatpush1.bf16.xpose.msra.mxu0 0
        %2856 = vmatprep.subr.bf16.mxu0 0
        %2857 = vmatpush1.bf16.xpose.msra.mxu0 0
        %2858 = vmatprep.subr.bf16.mxu0 0
        %2859 = vmatpush1.bf16.xpose.msra.mxu0 %v2842
        %2860 = vmatprep.subr.bf16.mxu0 0
        %2861 = vmatpush2.bf16.xpose.msra.mxu0 0
        %2862 = vmatprep.subr.bf16.mxu0 0
        %2863 = vmatpush2.bf16.xpose.msra.mxu0 0
        %2864 = vmatprep.subr.bf16.mxu0 0
        %2865 = vmatpush2.bf16.xpose.msra.mxu0 0
        %2866 = vmatprep.subr.bf16.mxu0 0
        %2867 = vmatpush2.bf16.xpose.msra.mxu0 0
        %2868 = vmatprep.subr.bf16.mxu0 0
        %2869 = vmatpush2.bf16.xpose.msra.mxu0 0
        %2870 = vmatprep.subr.bf16.mxu0 0
        %2871 = vmatpush2.bf16.xpose.msra.mxu0 0
        %2872 = vmatprep.subr.bf16.mxu0 0
        %2873 = vmatpush2.bf16.xpose.msra.mxu0 0
        %2874 = vmatprep.subr.bf16.mxu0 0
        %2875 = vmatpush2.bf16.xpose.msra.mxu0 0
        %2876 = vmatprep.mubr.bf16.mxu0 0
        %2877 = vmatmul.mubr.bf16.gmra.mxu0 %v2839
        %v2878 = vpop.f32.mrf.mxu0
        %v2879 = vadd.f32 0.0, %v2878
        %v2880 = vpop.f32.mrf.mxu0
        %v2881 = vpop.f32.mrf.mxu0
        %v2882 = vpop.f32.mrf.mxu0
        %2883 = vdwg.mxu0
        %v2884 = vmul.f32 %v2189, 0.17677669
        %v2885 = vmul.f32 %v2235, 0.17677669
        %v2886 = vmul.f32 %v2281, 0.17677669
        %v2887 = vmul.f32 %v2327, 0.17677669
        %v2888 = vmul.f32 %v2373, 0.17677669
        %v2889 = vmul.f32 %v2419, 0.17677669
        %v2890 = vmul.f32 %v2465, 0.17677669
        %v2891 = vmul.f32 %v2511, 0.17677669
        %v2892 = vmul.f32 %v2557, 0.17677669
        %v2893 = vmul.f32 %v2603, 0.17677669
        %v2894 = vmul.f32 %v2649, 0.17677669
        %v2895 = vmul.f32 %v2695, 0.17677669
        %v2896 = vmul.f32 %v2741, 0.17677669
        %v2897 = vmul.f32 %v2787, 0.17677669
        %v2898 = vmul.f32 %v2833, 0.17677669
        %v2899 = vmul.f32 %v2879, 0.17677669
        %v2900 = vsel %vm1978, 1, 0
        %vm2901 = vcmp.eq.s32.totalorder %v2900, 1
        %v2902 = vsel %vm2901, %v2884, -1e+30
        %v2903 = vsel %vm2901, %v2885, -1e+30
        %v2904 = vsel %vm2901, %v2886, -1e+30
        %v2905 = vsel %vm2901, %v2887, -1e+30
        %v2906 = vsel %vm2901, %v2888, -1e+30
        %v2907 = vsel %vm2901, %v2889, -1e+30
        %v2908 = vsel %vm2901, %v2890, -1e+30
        %v2909 = vsel %vm2901, %v2891, -1e+30
        %v2910 = vsel %vm2901, %v2892, -1e+30
        %v2911 = vsel %vm2901, %v2893, -1e+30
        %v2912 = vsel %vm2901, %v2894, -1e+30
        %v2913 = vsel %vm2901, %v2895, -1e+30
        %v2914 = vsel %vm2901, %v2896, -1e+30
        %v2915 = vsel %vm2901, %v2897, -1e+30
        %v2916 = vsel %vm2901, %v2898, -1e+30
        %v2917 = vsel %vm2901, %v2899, -1e+30
        %vm2918 = vcmask 64512
        %v2919 = vsel %vm2918, %v2902, -inf
        %2920 = vmax.xlane.f32.xlu0 %v2919
        %v2921 = vpop.xlane.xlu0 %2920
        %v2922 = vsel %vm2918, %v2903, -inf
        %2923 = vmax.xlane.f32.xlu0 %v2922
        %v2924 = vpop.xlane.xlu0 %2923
        %v2925 = vsel %vm2918, %v2904, -inf
        %2926 = vmax.xlane.f32.xlu0 %v2925
        %v2927 = vpop.xlane.xlu0 %2926
        %v2928 = vsel %vm2918, %v2905, -inf
        %2929 = vmax.xlane.f32.xlu0 %v2928
        %v2930 = vpop.xlane.xlu0 %2929
        %v2931 = vsel %vm2918, %v2906, -inf
        %2932 = vmax.xlane.f32.xlu0 %v2931
        %v2933 = vpop.xlane.xlu0 %2932
        %v2934 = vsel %vm2918, %v2907, -inf
        %2935 = vmax.xlane.f32.xlu0 %v2934
        %v2936 = vpop.xlane.xlu0 %2935
        %v2937 = vsel %vm2918, %v2908, -inf
        %2938 = vmax.xlane.f32.xlu0 %v2937
        %v2939 = vpop.xlane.xlu0 %2938
        %v2940 = vsel %vm2918, %v2909, -inf
        %2941 = vmax.xlane.f32.xlu0 %v2940
        %v2942 = vpop.xlane.xlu0 %2941
        %v2943 = vsel %vm2918, %v2910, -inf
        %2944 = vmax.xlane.f32.xlu0 %v2943
        %v2945 = vpop.xlane.xlu0 %2944
        %v2946 = vsel %vm2918, %v2911, -inf
        %2947 = vmax.xlane.f32.xlu0 %v2946
        %v2948 = vpop.xlane.xlu0 %2947
        %v2949 = vsel %vm2918, %v2912, -inf
        %2950 = vmax.xlane.f32.xlu0 %v2949
        %v2951 = vpop.xlane.xlu0 %2950
        %v2952 = vsel %vm2918, %v2913, -inf
        %2953 = vmax.xlane.f32.xlu0 %v2952
        %v2954 = vpop.xlane.xlu0 %2953
        %v2955 = vsel %vm2918, %v2914, -inf
        %2956 = vmax.xlane.f32.xlu0 %v2955
        %v2957 = vpop.xlane.xlu0 %2956
        %v2958 = vsel %vm2918, %v2915, -inf
        %2959 = vmax.xlane.f32.xlu0 %v2958
        %v2960 = vpop.xlane.xlu0 %2959
        %v2961 = vsel %vm2918, %v2916, -inf
        %2962 = vmax.xlane.f32.xlu0 %v2961
        %v2963 = vpop.xlane.xlu0 %2962
        %v2964 = vsel %vm2918, %v2917, -inf
        %2965 = vmax.xlane.f32.xlu0 %v2964
        %v2966 = vpop.xlane.xlu0 %2965
        %v2967 = vsub.f32 %v2902, %v2921
        %v2968 = vsub.f32 %v2903, %v2924
        %v2969 = vsub.f32 %v2904, %v2927
        %v2970 = vsub.f32 %v2905, %v2930
        %v2971 = vsub.f32 %v2906, %v2933
        %v2972 = vsub.f32 %v2907, %v2936
        %v2973 = vsub.f32 %v2908, %v2939
        %v2974 = vsub.f32 %v2909, %v2942
        %v2975 = vsub.f32 %v2910, %v2945
        %v2976 = vsub.f32 %v2911, %v2948
        %v2977 = vsub.f32 %v2912, %v2951
        %v2978 = vsub.f32 %v2913, %v2954
        %v2979 = vsub.f32 %v2914, %v2957
        %v2980 = vsub.f32 %v2915, %v2960
        %v2981 = vsub.f32 %v2916, %v2963
        %v2982 = vsub.f32 %v2917, %v2966
        %v2983 = vmul.f32 %v2967, 1.442695
        %v2984 = vpow.pop %v2983
        %v2985 = vmul.f32 %v2968, 1.442695
        %v2986 = vpow.pop %v2985
        %v2987 = vmul.f32 %v2969, 1.442695
        %v2988 = vpow.pop %v2987
        %v2989 = vmul.f32 %v2970, 1.442695
        %v2990 = vpow.pop %v2989
        %v2991 = vmul.f32 %v2971, 1.442695
        %v2992 = vpow.pop %v2991
        %v2993 = vmul.f32 %v2972, 1.442695
        %v2994 = vpow.pop %v2993
        %v2995 = vmul.f32 %v2973, 1.442695
        %v2996 = vpow.pop %v2995
        %v2997 = vmul.f32 %v2974, 1.442695
        %v2998 = vpow.pop %v2997
        %v2999 = vmul.f32 %v2975, 1.442695
        %v3000 = vpow.pop %v2999
        %v3001 = vmul.f32 %v2976, 1.442695
        %v3002 = vpow.pop %v3001
        %v3003 = vmul.f32 %v2977, 1.442695
        %v3004 = vpow.pop %v3003
        %v3005 = vmul.f32 %v2978, 1.442695
        %v3006 = vpow.pop %v3005
        %v3007 = vmul.f32 %v2979, 1.442695
        %v3008 = vpow.pop %v3007
        %v3009 = vmul.f32 %v2980, 1.442695
        %v3010 = vpow.pop %v3009
        %v3011 = vmul.f32 %v2981, 1.442695
        %v3012 = vpow.pop %v3011
        %v3013 = vmul.f32 %v2982, 1.442695
        %v3014 = vpow.pop %v3013
        %v3015 = vsel %vm2918, %v2984, 0.0
        %3016 = vadd.xlane.f32.xlu0 %v3015
        %v3017 = vpop.xlane.xlu0 %3016
        %v3018 = vsel %vm2918, %v2986, 0.0
        %3019 = vadd.xlane.f32.xlu0 %v3018
        %v3020 = vpop.xlane.xlu0 %3019
        %v3021 = vsel %vm2918, %v2988, 0.0
        %3022 = vadd.xlane.f32.xlu0 %v3021
        %v3023 = vpop.xlane.xlu0 %3022
        %v3024 = vsel %vm2918, %v2990, 0.0
        %3025 = vadd.xlane.f32.xlu0 %v3024
        %v3026 = vpop.xlane.xlu0 %3025
        %v3027 = vsel %vm2918, %v2992, 0.0
        %3028 = vadd.xlane.f32.xlu0 %v3027
        %v3029 = vpop.xlane.xlu0 %3028
        %v3030 = vsel %vm2918, %v2994, 0.0
        %3031 = vadd.xlane.f32.xlu0 %v3030
        %v3032 = vpop.xlane.xlu0 %3031
        %v3033 = vsel %vm2918, %v2996, 0.0
        %3034 = vadd.xlane.f32.xlu0 %v3033
        %v3035 = vpop.xlane.xlu0 %3034
        %v3036 = vsel %vm2918, %v2998, 0.0
        %3037 = vadd.xlane.f32.xlu0 %v3036
        %v3038 = vpop.xlane.xlu0 %3037
        %v3039 = vsel %vm2918, %v3000, 0.0
        %3040 = vadd.xlane.f32.xlu0 %v3039
        %v3041 = vpop.xlane.xlu0 %3040
        %v3042 = vsel %vm2918, %v3002, 0.0
        %3043 = vadd.xlane.f32.xlu0 %v3042
        %v3044 = vpop.xlane.xlu0 %3043
        %v3045 = vsel %vm2918, %v3004, 0.0
        %3046 = vadd.xlane.f32.xlu0 %v3045
        %v3047 = vpop.xlane.xlu0 %3046
        %v3048 = vsel %vm2918, %v3006, 0.0
        %3049 = vadd.xlane.f32.xlu0 %v3048
        %v3050 = vpop.xlane.xlu0 %3049
        %v3051 = vsel %vm2918, %v3008, 0.0
        %3052 = vadd.xlane.f32.xlu0 %v3051
        %v3053 = vpop.xlane.xlu0 %3052
        %v3054 = vsel %vm2918, %v3010, 0.0
        %3055 = vadd.xlane.f32.xlu0 %v3054
        %v3056 = vpop.xlane.xlu0 %3055
        %v3057 = vsel %vm2918, %v3012, 0.0
        %3058 = vadd.xlane.f32.xlu0 %v3057
        %v3059 = vpop.xlane.xlu0 %3058
        %v3060 = vsel %vm2918, %v3014, 0.0
        %3061 = vadd.xlane.f32.xlu0 %v3060
        %v3062 = vpop.xlane.xlu0 %3061
        %v3063 = vrcp.pop %v3017
        %v3064 = vrcp.pop %v3020
        %v3065 = vrcp.pop %v3023
        %v3066 = vrcp.pop %v3026
        %v3067 = vrcp.pop %v3029
        %v3068 = vrcp.pop %v3032
        %v3069 = vrcp.pop %v3035
        %v3070 = vrcp.pop %v3038
        %v3071 = vrcp.pop %v3041
        %v3072 = vrcp.pop %v3044
        %v3073 = vrcp.pop %v3047
        %v3074 = vrcp.pop %v3050
        %v3075 = vrcp.pop %v3053
        %v3076 = vrcp.pop %v3056
        %v3077 = vrcp.pop %v3059
        %v3078 = vrcp.pop %v3062
        %v3079 = vmul.f32 %v2984, %v3063
        %v3080 = vmul.f32 %v2986, %v3064
        %v3081 = vmul.f32 %v2988, %v3065
        %v3082 = vmul.f32 %v2990, %v3066
        %v3083 = vmul.f32 %v2992, %v3067
        %v3084 = vmul.f32 %v2994, %v3068
        %v3085 = vmul.f32 %v2996, %v3069
        %v3086 = vmul.f32 %v2998, %v3070
        %v3087 = vmul.f32 %v3000, %v3071
        %v3088 = vmul.f32 %v3002, %v3072
        %v3089 = vmul.f32 %v3004, %v3073
        %v3090 = vmul.f32 %v3006, %v3074
        %v3091 = vmul.f32 %v3008, %v3075
        %v3092 = vmul.f32 %v3010, %v3076
        %v3093 = vmul.f32 %v3012, %v3077
        %v3094 = vmul.f32 %v3014, %v3078
        %v3095 = vpack.c.bf16 %v3079, %v3079
        %v3096 = vpack.c.bf16 %v3080, %v3080
        %v3097 = vpack.c.bf16 %v3081, %v3081
        %v3098 = vpack.c.bf16 %v3082, %v3082
        %v3099 = vpack.c.bf16 %v3083, %v3083
        %v3100 = vpack.c.bf16 %v3084, %v3084
        %v3101 = vpack.c.bf16 %v3085, %v3085
        %v3102 = vpack.c.bf16 %v3086, %v3086
        %v3103 = vpack.c.bf16 %v3087, %v3087
        %v3104 = vpack.c.bf16 %v3088, %v3088
        %v3105 = vpack.c.bf16 %v3089, %v3089
        %v3106 = vpack.c.bf16 %v3090, %v3090
        %v3107 = vpack.c.bf16 %v3091, %v3091
        %v3108 = vpack.c.bf16 %v3092, %v3092
        %v3109 = vpack.c.bf16 %v3093, %v3093
        %v3110 = vpack.c.bf16 %v3094, %v3094
        %v3112 = vsel %vm2918, %v3095, 0
        %vm3114 = vcmask 1043456
        %v3116 = vsel %vm3114, %v2131, 0
        %3118 = vmatprep.subr.bf16.mxu0 0
        %3119 = vmatpush1.bf16.msra.mxu0 0
        %3120 = vmatprep.subr.bf16.mxu0 0
        %3121 = vmatpush1.bf16.msra.mxu0 0
        %3122 = vmatprep.subr.bf16.mxu0 0
        %3123 = vmatpush1.bf16.msra.mxu0 0
        %3124 = vmatprep.subr.bf16.mxu0 0
        %3125 = vmatpush1.bf16.msra.mxu0 0
        %3126 = vmatprep.subr.bf16.mxu0 0
        %3127 = vmatpush1.bf16.msra.mxu0 0
        %3128 = vmatprep.subr.bf16.mxu0 0
        %3129 = vmatpush1.bf16.msra.mxu0 0
        %3130 = vmatprep.subr.bf16.mxu0 0
        %3131 = vmatpush1.bf16.msra.mxu0 0
        %3132 = vmatprep.subr.bf16.mxu0 0
        %3133 = vmatpush1.bf16.msra.mxu0 %v3116
        %3134 = vmatprep.subr.bf16.mxu0 0
        %3135 = vmatpush2.bf16.msra.mxu0 0
        %3136 = vmatprep.subr.bf16.mxu0 0
        %3137 = vmatpush2.bf16.msra.mxu0 0
        %3138 = vmatprep.subr.bf16.mxu0 0
        %3139 = vmatpush2.bf16.msra.mxu0 0
        %3140 = vmatprep.subr.bf16.mxu0 0
        %3141 = vmatpush2.bf16.msra.mxu0 0
        %3142 = vmatprep.subr.bf16.mxu0 0
        %3143 = vmatpush2.bf16.msra.mxu0 0
        %3144 = vmatprep.subr.bf16.mxu0 0
        %3145 = vmatpush2.bf16.msra.mxu0 0
        %3146 = vmatprep.subr.bf16.mxu0 0
        %3147 = vmatpush2.bf16.msra.mxu0 0
        %3148 = vmatprep.subr.bf16.mxu0 0
        %3149 = vmatpush2.bf16.msra.mxu0 0
        %3150 = vmatprep.mubr.bf16.mxu0 0
        %3151 = vmatmul.mubr.bf16.gmra.mxu0 %v3112
        %v3152 = vpop.f32.mrf.mxu0
        %v3153 = vadd.f32 0.0, %v3152
        %v3154 = vpop.f32.mrf.mxu0
        %v3155 = vpop.f32.mrf.mxu0
        %v3156 = vpop.f32.mrf.mxu0
        %3157 = vdwg.mxu0
        %v3159 = vsel %vm2918, %v3096, 0
        %v3162 = vsel %vm3114, %v2132, 0
        %3164 = vmatprep.subr.bf16.mxu0 0
        %3165 = vmatpush1.bf16.msra.mxu0 0
        %3166 = vmatprep.subr.bf16.mxu0 0
        %3167 = vmatpush1.bf16.msra.mxu0 0
        %3168 = vmatprep.subr.bf16.mxu0 0
        %3169 = vmatpush1.bf16.msra.mxu0 0
        %3170 = vmatprep.subr.bf16.mxu0 0
        %3171 = vmatpush1.bf16.msra.mxu0 0
        %3172 = vmatprep.subr.bf16.mxu0 0
        %3173 = vmatpush1.bf16.msra.mxu0 0
        %3174 = vmatprep.subr.bf16.mxu0 0
        %3175 = vmatpush1.bf16.msra.mxu0 0
        %3176 = vmatprep.subr.bf16.mxu0 0
        %3177 = vmatpush1.bf16.msra.mxu0 0
        %3178 = vmatprep.subr.bf16.mxu0 0
        %3179 = vmatpush1.bf16.msra.mxu0 %v3162
        %3180 = vmatprep.subr.bf16.mxu0 0
        %3181 = vmatpush2.bf16.msra.mxu0 0
        %3182 = vmatprep.subr.bf16.mxu0 0
        %3183 = vmatpush2.bf16.msra.mxu0 0
        %3184 = vmatprep.subr.bf16.mxu0 0
        %3185 = vmatpush2.bf16.msra.mxu0 0
        %3186 = vmatprep.subr.bf16.mxu0 0
        %3187 = vmatpush2.bf16.msra.mxu0 0
        %3188 = vmatprep.subr.bf16.mxu0 0
        %3189 = vmatpush2.bf16.msra.mxu0 0
        %3190 = vmatprep.subr.bf16.mxu0 0
        %3191 = vmatpush2.bf16.msra.mxu0 0
        %3192 = vmatprep.subr.bf16.mxu0 0
        %3193 = vmatpush2.bf16.msra.mxu0 0
        %3194 = vmatprep.subr.bf16.mxu0 0
        %3195 = vmatpush2.bf16.msra.mxu0 0
        %3196 = vmatprep.mubr.bf16.mxu0 0
        %3197 = vmatmul.mubr.bf16.gmra.mxu0 %v3159
        %v3198 = vpop.f32.mrf.mxu0
        %v3199 = vadd.f32 0.0, %v3198
        %v3200 = vpop.f32.mrf.mxu0
        %v3201 = vpop.f32.mrf.mxu0
        %v3202 = vpop.f32.mrf.mxu0
        %3203 = vdwg.mxu0
        %v3205 = vsel %vm2918, %v3097, 0
        %v3208 = vsel %vm3114, %v2133, 0
        %3210 = vmatprep.subr.bf16.mxu0 0
        %3211 = vmatpush1.bf16.msra.mxu0 0
        %3212 = vmatprep.subr.bf16.mxu0 0
        %3213 = vmatpush1.bf16.msra.mxu0 0
        %3214 = vmatprep.subr.bf16.mxu0 0
        %3215 = vmatpush1.bf16.msra.mxu0 0
        %3216 = vmatprep.subr.bf16.mxu0 0
        %3217 = vmatpush1.bf16.msra.mxu0 0
        %3218 = vmatprep.subr.bf16.mxu0 0
        %3219 = vmatpush1.bf16.msra.mxu0 0
        %3220 = vmatprep.subr.bf16.mxu0 0
        %3221 = vmatpush1.bf16.msra.mxu0 0
        %3222 = vmatprep.subr.bf16.mxu0 0
        %3223 = vmatpush1.bf16.msra.mxu0 0
        %3224 = vmatprep.subr.bf16.mxu0 0
        %3225 = vmatpush1.bf16.msra.mxu0 %v3208
        %3226 = vmatprep.subr.bf16.mxu0 0
        %3227 = vmatpush2.bf16.msra.mxu0 0
        %3228 = vmatprep.subr.bf16.mxu0 0
        %3229 = vmatpush2.bf16.msra.mxu0 0
        %3230 = vmatprep.subr.bf16.mxu0 0
        %3231 = vmatpush2.bf16.msra.mxu0 0
        %3232 = vmatprep.subr.bf16.mxu0 0
        %3233 = vmatpush2.bf16.msra.mxu0 0
        %3234 = vmatprep.subr.bf16.mxu0 0
        %3235 = vmatpush2.bf16.msra.mxu0 0
        %3236 = vmatprep.subr.bf16.mxu0 0
        %3237 = vmatpush2.bf16.msra.mxu0 0
        %3238 = vmatprep.subr.bf16.mxu0 0
        %3239 = vmatpush2.bf16.msra.mxu0 0
        %3240 = vmatprep.subr.bf16.mxu0 0
        %3241 = vmatpush2.bf16.msra.mxu0 0
        %3242 = vmatprep.mubr.bf16.mxu0 0
        %3243 = vmatmul.mubr.bf16.gmra.mxu0 %v3205
        %v3244 = vpop.f32.mrf.mxu0
        %v3245 = vadd.f32 0.0, %v3244
        %v3246 = vpop.f32.mrf.mxu0
        %v3247 = vpop.f32.mrf.mxu0
        %v3248 = vpop.f32.mrf.mxu0
        %3249 = vdwg.mxu0
        %v3251 = vsel %vm2918, %v3098, 0
        %v3254 = vsel %vm3114, %v2134, 0
        %3256 = vmatprep.subr.bf16.mxu0 0
        %3257 = vmatpush1.bf16.msra.mxu0 0
        %3258 = vmatprep.subr.bf16.mxu0 0
        %3259 = vmatpush1.bf16.msra.mxu0 0
        %3260 = vmatprep.subr.bf16.mxu0 0
        %3261 = vmatpush1.bf16.msra.mxu0 0
        %3262 = vmatprep.subr.bf16.mxu0 0
        %3263 = vmatpush1.bf16.msra.mxu0 0
        %3264 = vmatprep.subr.bf16.mxu0 0
        %3265 = vmatpush1.bf16.msra.mxu0 0
        %3266 = vmatprep.subr.bf16.mxu0 0
        %3267 = vmatpush1.bf16.msra.mxu0 0
        %3268 = vmatprep.subr.bf16.mxu0 0
        %3269 = vmatpush1.bf16.msra.mxu0 0
        %3270 = vmatprep.subr.bf16.mxu0 0
        %3271 = vmatpush1.bf16.msra.mxu0 %v3254
        %3272 = vmatprep.subr.bf16.mxu0 0
        %3273 = vmatpush2.bf16.msra.mxu0 0
        %3274 = vmatprep.subr.bf16.mxu0 0
        %3275 = vmatpush2.bf16.msra.mxu0 0
        %3276 = vmatprep.subr.bf16.mxu0 0
        %3277 = vmatpush2.bf16.msra.mxu0 0
        %3278 = vmatprep.subr.bf16.mxu0 0
        %3279 = vmatpush2.bf16.msra.mxu0 0
        %3280 = vmatprep.subr.bf16.mxu0 0
        %3281 = vmatpush2.bf16.msra.mxu0 0
        %3282 = vmatprep.subr.bf16.mxu0 0
        %3283 = vmatpush2.bf16.msra.mxu0 0
        %3284 = vmatprep.subr.bf16.mxu0 0
        %3285 = vmatpush2.bf16.msra.mxu0 0
        %3286 = vmatprep.subr.bf16.mxu0 0
        %3287 = vmatpush2.bf16.msra.mxu0 0
        %3288 = vmatprep.mubr.bf16.mxu0 0
        %3289 = vmatmul.mubr.bf16.gmra.mxu0 %v3251
        %v3290 = vpop.f32.mrf.mxu0
        %v3291 = vadd.f32 0.0, %v3290
        %v3292 = vpop.f32.mrf.mxu0
        %v3293 = vpop.f32.mrf.mxu0
        %v3294 = vpop.f32.mrf.mxu0
        %3295 = vdwg.mxu0
        %v3297 = vsel %vm2918, %v3099, 0
        %v3300 = vsel %vm3114, %v2135, 0
        %3302 = vmatprep.subr.bf16.mxu0 0
        %3303 = vmatpush1.bf16.msra.mxu0 0
        %3304 = vmatprep.subr.bf16.mxu0 0
        %3305 = vmatpush1.bf16.msra.mxu0 0
        %3306 = vmatprep.subr.bf16.mxu0 0
        %3307 = vmatpush1.bf16.msra.mxu0 0
        %3308 = vmatprep.subr.bf16.mxu0 0
        %3309 = vmatpush1.bf16.msra.mxu0 0
        %3310 = vmatprep.subr.bf16.mxu0 0
        %3311 = vmatpush1.bf16.msra.mxu0 0
        %3312 = vmatprep.subr.bf16.mxu0 0
        %3313 = vmatpush1.bf16.msra.mxu0 0
        %3314 = vmatprep.subr.bf16.mxu0 0
        %3315 = vmatpush1.bf16.msra.mxu0 0
        %3316 = vmatprep.subr.bf16.mxu0 0
        %3317 = vmatpush1.bf16.msra.mxu0 %v3300
        %3318 = vmatprep.subr.bf16.mxu0 0
        %3319 = vmatpush2.bf16.msra.mxu0 0
        %3320 = vmatprep.subr.bf16.mxu0 0
        %3321 = vmatpush2.bf16.msra.mxu0 0
        %3322 = vmatprep.subr.bf16.mxu0 0
        %3323 = vmatpush2.bf16.msra.mxu0 0
        %3324 = vmatprep.subr.bf16.mxu0 0
        %3325 = vmatpush2.bf16.msra.mxu0 0
        %3326 = vmatprep.subr.bf16.mxu0 0
        %3327 = vmatpush2.bf16.msra.mxu0 0
        %3328 = vmatprep.subr.bf16.mxu0 0
        %3329 = vmatpush2.bf16.msra.mxu0 0
        %3330 = vmatprep.subr.bf16.mxu0 0
        %3331 = vmatpush2.bf16.msra.mxu0 0
        %3332 = vmatprep.subr.bf16.mxu0 0
        %3333 = vmatpush2.bf16.msra.mxu0 0
        %3334 = vmatprep.mubr.bf16.mxu0 0
        %3335 = vmatmul.mubr.bf16.gmra.mxu0 %v3297
        %v3336 = vpop.f32.mrf.mxu0
        %v3337 = vadd.f32 0.0, %v3336
        %v3338 = vpop.f32.mrf.mxu0
        %v3339 = vpop.f32.mrf.mxu0
        %v3340 = vpop.f32.mrf.mxu0
        %3341 = vdwg.mxu0
        %v3343 = vsel %vm2918, %v3100, 0
        %v3346 = vsel %vm3114, %v2136, 0
        %3348 = vmatprep.subr.bf16.mxu0 0
        %3349 = vmatpush1.bf16.msra.mxu0 0
        %3350 = vmatprep.subr.bf16.mxu0 0
        %3351 = vmatpush1.bf16.msra.mxu0 0
        %3352 = vmatprep.subr.bf16.mxu0 0
        %3353 = vmatpush1.bf16.msra.mxu0 0
        %3354 = vmatprep.subr.bf16.mxu0 0
        %3355 = vmatpush1.bf16.msra.mxu0 0
        %3356 = vmatprep.subr.bf16.mxu0 0
        %3357 = vmatpush1.bf16.msra.mxu0 0
        %3358 = vmatprep.subr.bf16.mxu0 0
        %3359 = vmatpush1.bf16.msra.mxu0 0
        %3360 = vmatprep.subr.bf16.mxu0 0
        %3361 = vmatpush1.bf16.msra.mxu0 0
        %3362 = vmatprep.subr.bf16.mxu0 0
        %3363 = vmatpush1.bf16.msra.mxu0 %v3346
        %3364 = vmatprep.subr.bf16.mxu0 0
        %3365 = vmatpush2.bf16.msra.mxu0 0
        %3366 = vmatprep.subr.bf16.mxu0 0
        %3367 = vmatpush2.bf16.msra.mxu0 0
        %3368 = vmatprep.subr.bf16.mxu0 0
        %3369 = vmatpush2.bf16.msra.mxu0 0
        %3370 = vmatprep.subr.bf16.mxu0 0
        %3371 = vmatpush2.bf16.msra.mxu0 0
        %3372 = vmatprep.subr.bf16.mxu0 0
        %3373 = vmatpush2.bf16.msra.mxu0 0
        %3374 = vmatprep.subr.bf16.mxu0 0
        %3375 = vmatpush2.bf16.msra.mxu0 0
        %3376 = vmatprep.subr.bf16.mxu0 0
        %3377 = vmatpush2.bf16.msra.mxu0 0
        %3378 = vmatprep.subr.bf16.mxu0 0
        %3379 = vmatpush2.bf16.msra.mxu0 0
        %3380 = vmatprep.mubr.bf16.mxu0 0
        %3381 = vmatmul.mubr.bf16.gmra.mxu0 %v3343
        %v3382 = vpop.f32.mrf.mxu0
        %v3383 = vadd.f32 0.0, %v3382
        %v3384 = vpop.f32.mrf.mxu0
        %v3385 = vpop.f32.mrf.mxu0
        %v3386 = vpop.f32.mrf.mxu0
        %3387 = vdwg.mxu0
        %v3389 = vsel %vm2918, %v3101, 0
        %v3392 = vsel %vm3114, %v2137, 0
        %3394 = vmatprep.subr.bf16.mxu0 0
        %3395 = vmatpush1.bf16.msra.mxu0 0
        %3396 = vmatprep.subr.bf16.mxu0 0
        %3397 = vmatpush1.bf16.msra.mxu0 0
        %3398 = vmatprep.subr.bf16.mxu0 0
        %3399 = vmatpush1.bf16.msra.mxu0 0
        %3400 = vmatprep.subr.bf16.mxu0 0
        %3401 = vmatpush1.bf16.msra.mxu0 0
        %3402 = vmatprep.subr.bf16.mxu0 0
        %3403 = vmatpush1.bf16.msra.mxu0 0
        %3404 = vmatprep.subr.bf16.mxu0 0
        %3405 = vmatpush1.bf16.msra.mxu0 0
        %3406 = vmatprep.subr.bf16.mxu0 0
        %3407 = vmatpush1.bf16.msra.mxu0 0
        %3408 = vmatprep.subr.bf16.mxu0 0
        %3409 = vmatpush1.bf16.msra.mxu0 %v3392
        %3410 = vmatprep.subr.bf16.mxu0 0
        %3411 = vmatpush2.bf16.msra.mxu0 0
        %3412 = vmatprep.subr.bf16.mxu0 0
        %3413 = vmatpush2.bf16.msra.mxu0 0
        %3414 = vmatprep.subr.bf16.mxu0 0
        %3415 = vmatpush2.bf16.msra.mxu0 0
        %3416 = vmatprep.subr.bf16.mxu0 0
        %3417 = vmatpush2.bf16.msra.mxu0 0
        %3418 = vmatprep.subr.bf16.mxu0 0
        %3419 = vmatpush2.bf16.msra.mxu0 0
        %3420 = vmatprep.subr.bf16.mxu0 0
        %3421 = vmatpush2.bf16.msra.mxu0 0
        %3422 = vmatprep.subr.bf16.mxu0 0
        %3423 = vmatpush2.bf16.msra.mxu0 0
        %3424 = vmatprep.subr.bf16.mxu0 0
        %3425 = vmatpush2.bf16.msra.mxu0 0
        %3426 = vmatprep.mubr.bf16.mxu0 0
        %3427 = vmatmul.mubr.bf16.gmra.mxu0 %v3389
        %v3428 = vpop.f32.mrf.mxu0
        %v3429 = vadd.f32 0.0, %v3428
        %v3430 = vpop.f32.mrf.mxu0
        %v3431 = vpop.f32.mrf.mxu0
        %v3432 = vpop.f32.mrf.mxu0
        %3433 = vdwg.mxu0
        %v3435 = vsel %vm2918, %v3102, 0
        %v3438 = vsel %vm3114, %v2138, 0
        %3440 = vmatprep.subr.bf16.mxu0 0
        %3441 = vmatpush1.bf16.msra.mxu0 0
        %3442 = vmatprep.subr.bf16.mxu0 0
        %3443 = vmatpush1.bf16.msra.mxu0 0
        %3444 = vmatprep.subr.bf16.mxu0 0
        %3445 = vmatpush1.bf16.msra.mxu0 0
        %3446 = vmatprep.subr.bf16.mxu0 0
        %3447 = vmatpush1.bf16.msra.mxu0 0
        %3448 = vmatprep.subr.bf16.mxu0 0
        %3449 = vmatpush1.bf16.msra.mxu0 0
        %3450 = vmatprep.subr.bf16.mxu0 0
        %3451 = vmatpush1.bf16.msra.mxu0 0
        %3452 = vmatprep.subr.bf16.mxu0 0
        %3453 = vmatpush1.bf16.msra.mxu0 0
        %3454 = vmatprep.subr.bf16.mxu0 0
        %3455 = vmatpush1.bf16.msra.mxu0 %v3438
        %3456 = vmatprep.subr.bf16.mxu0 0
        %3457 = vmatpush2.bf16.msra.mxu0 0
        %3458 = vmatprep.subr.bf16.mxu0 0
        %3459 = vmatpush2.bf16.msra.mxu0 0
        %3460 = vmatprep.subr.bf16.mxu0 0
        %3461 = vmatpush2.bf16.msra.mxu0 0
        %3462 = vmatprep.subr.bf16.mxu0 0
        %3463 = vmatpush2.bf16.msra.mxu0 0
        %3464 = vmatprep.subr.bf16.mxu0 0
        %3465 = vmatpush2.bf16.msra.mxu0 0
        %3466 = vmatprep.subr.bf16.mxu0 0
        %3467 = vmatpush2.bf16.msra.mxu0 0
        %3468 = vmatprep.subr.bf16.mxu0 0
        %3469 = vmatpush2.bf16.msra.mxu0 0
        %3470 = vmatprep.subr.bf16.mxu0 0
        %3471 = vmatpush2.bf16.msra.mxu0 0
        %3472 = vmatprep.mubr.bf16.mxu0 0
        %3473 = vmatmul.mubr.bf16.gmra.mxu0 %v3435
        %v3474 = vpop.f32.mrf.mxu0
        %v3475 = vadd.f32 0.0, %v3474
        %v3476 = vpop.f32.mrf.mxu0
        %v3477 = vpop.f32.mrf.mxu0
        %v3478 = vpop.f32.mrf.mxu0
        %3479 = vdwg.mxu0
        %v3481 = vsel %vm2918, %v3103, 0
        %v3484 = vsel %vm3114, %v2139, 0
        %3486 = vmatprep.subr.bf16.mxu0 0
        %3487 = vmatpush1.bf16.msra.mxu0 0
        %3488 = vmatprep.subr.bf16.mxu0 0
        %3489 = vmatpush1.bf16.msra.mxu0 0
        %3490 = vmatprep.subr.bf16.mxu0 0
        %3491 = vmatpush1.bf16.msra.mxu0 0
        %3492 = vmatprep.subr.bf16.mxu0 0
        %3493 = vmatpush1.bf16.msra.mxu0 0
        %3494 = vmatprep.subr.bf16.mxu0 0
        %3495 = vmatpush1.bf16.msra.mxu0 0
        %3496 = vmatprep.subr.bf16.mxu0 0
        %3497 = vmatpush1.bf16.msra.mxu0 0
        %3498 = vmatprep.subr.bf16.mxu0 0
        %3499 = vmatpush1.bf16.msra.mxu0 0
        %3500 = vmatprep.subr.bf16.mxu0 0
        %3501 = vmatpush1.bf16.msra.mxu0 %v3484
        %3502 = vmatprep.subr.bf16.mxu0 0
        %3503 = vmatpush2.bf16.msra.mxu0 0
        %3504 = vmatprep.subr.bf16.mxu0 0
        %3505 = vmatpush2.bf16.msra.mxu0 0
        %3506 = vmatprep.subr.bf16.mxu0 0
        %3507 = vmatpush2.bf16.msra.mxu0 0
        %3508 = vmatprep.subr.bf16.mxu0 0
        %3509 = vmatpush2.bf16.msra.mxu0 0
        %3510 = vmatprep.subr.bf16.mxu0 0
        %3511 = vmatpush2.bf16.msra.mxu0 0
        %3512 = vmatprep.subr.bf16.mxu0 0
        %3513 = vmatpush2.bf16.msra.mxu0 0
        %3514 = vmatprep.subr.bf16.mxu0 0
        %3515 = vmatpush2.bf16.msra.mxu0 0
        %3516 = vmatprep.subr.bf16.mxu0 0
        %3517 = vmatpush2.bf16.msra.mxu0 0
        %3518 = vmatprep.mubr.bf16.mxu0 0
        %3519 = vmatmul.mubr.bf16.gmra.mxu0 %v3481
        %v3520 = vpop.f32.mrf.mxu0
        %v3521 = vadd.f32 0.0, %v3520
        %v3522 = vpop.f32.mrf.mxu0
        %v3523 = vpop.f32.mrf.mxu0
        %v3524 = vpop.f32.mrf.mxu0
        %3525 = vdwg.mxu0
        %v3527 = vsel %vm2918, %v3104, 0
        %v3530 = vsel %vm3114, %v2140, 0
        %3532 = vmatprep.subr.bf16.mxu0 0
        %3533 = vmatpush1.bf16.msra.mxu0 0
        %3534 = vmatprep.subr.bf16.mxu0 0
        %3535 = vmatpush1.bf16.msra.mxu0 0
        %3536 = vmatprep.subr.bf16.mxu0 0
        %3537 = vmatpush1.bf16.msra.mxu0 0
        %3538 = vmatprep.subr.bf16.mxu0 0
        %3539 = vmatpush1.bf16.msra.mxu0 0
        %3540 = vmatprep.subr.bf16.mxu0 0
        %3541 = vmatpush1.bf16.msra.mxu0 0
        %3542 = vmatprep.subr.bf16.mxu0 0
        %3543 = vmatpush1.bf16.msra.mxu0 0
        %3544 = vmatprep.subr.bf16.mxu0 0
        %3545 = vmatpush1.bf16.msra.mxu0 0
        %3546 = vmatprep.subr.bf16.mxu0 0
        %3547 = vmatpush1.bf16.msra.mxu0 %v3530
        %3548 = vmatprep.subr.bf16.mxu0 0
        %3549 = vmatpush2.bf16.msra.mxu0 0
        %3550 = vmatprep.subr.bf16.mxu0 0
        %3551 = vmatpush2.bf16.msra.mxu0 0
        %3552 = vmatprep.subr.bf16.mxu0 0
        %3553 = vmatpush2.bf16.msra.mxu0 0
        %3554 = vmatprep.subr.bf16.mxu0 0
        %3555 = vmatpush2.bf16.msra.mxu0 0
        %3556 = vmatprep.subr.bf16.mxu0 0
        %3557 = vmatpush2.bf16.msra.mxu0 0
        %3558 = vmatprep.subr.bf16.mxu0 0
        %3559 = vmatpush2.bf16.msra.mxu0 0
        %3560 = vmatprep.subr.bf16.mxu0 0
        %3561 = vmatpush2.bf16.msra.mxu0 0
        %3562 = vmatprep.subr.bf16.mxu0 0
        %3563 = vmatpush2.bf16.msra.mxu0 0
        %3564 = vmatprep.mubr.bf16.mxu0 0
        %3565 = vmatmul.mubr.bf16.gmra.mxu0 %v3527
        %v3566 = vpop.f32.mrf.mxu0
        %v3567 = vadd.f32 0.0, %v3566
        %v3568 = vpop.f32.mrf.mxu0
        %v3569 = vpop.f32.mrf.mxu0
        %v3570 = vpop.f32.mrf.mxu0
        %3571 = vdwg.mxu0
        %v3573 = vsel %vm2918, %v3105, 0
        %v3576 = vsel %vm3114, %v2141, 0
        %3578 = vmatprep.subr.bf16.mxu0 0
        %3579 = vmatpush1.bf16.msra.mxu0 0
        %3580 = vmatprep.subr.bf16.mxu0 0
        %3581 = vmatpush1.bf16.msra.mxu0 0
        %3582 = vmatprep.subr.bf16.mxu0 0
        %3583 = vmatpush1.bf16.msra.mxu0 0
        %3584 = vmatprep.subr.bf16.mxu0 0
        %3585 = vmatpush1.bf16.msra.mxu0 0
        %3586 = vmatprep.subr.bf16.mxu0 0
        %3587 = vmatpush1.bf16.msra.mxu0 0
        %3588 = vmatprep.subr.bf16.mxu0 0
        %3589 = vmatpush1.bf16.msra.mxu0 0
        %3590 = vmatprep.subr.bf16.mxu0 0
        %3591 = vmatpush1.bf16.msra.mxu0 0
        %3592 = vmatprep.subr.bf16.mxu0 0
        %3593 = vmatpush1.bf16.msra.mxu0 %v3576
        %3594 = vmatprep.subr.bf16.mxu0 0
        %3595 = vmatpush2.bf16.msra.mxu0 0
        %3596 = vmatprep.subr.bf16.mxu0 0
        %3597 = vmatpush2.bf16.msra.mxu0 0
        %3598 = vmatprep.subr.bf16.mxu0 0
        %3599 = vmatpush2.bf16.msra.mxu0 0
        %3600 = vmatprep.subr.bf16.mxu0 0
        %3601 = vmatpush2.bf16.msra.mxu0 0
        %3602 = vmatprep.subr.bf16.mxu0 0
        %3603 = vmatpush2.bf16.msra.mxu0 0
        %3604 = vmatprep.subr.bf16.mxu0 0
        %3605 = vmatpush2.bf16.msra.mxu0 0
        %3606 = vmatprep.subr.bf16.mxu0 0
        %3607 = vmatpush2.bf16.msra.mxu0 0
        %3608 = vmatprep.subr.bf16.mxu0 0
        %3609 = vmatpush2.bf16.msra.mxu0 0
        %3610 = vmatprep.mubr.bf16.mxu0 0
        %3611 = vmatmul.mubr.bf16.gmra.mxu0 %v3573
        %v3612 = vpop.f32.mrf.mxu0
        %v3613 = vadd.f32 0.0, %v3612
        %v3614 = vpop.f32.mrf.mxu0
        %v3615 = vpop.f32.mrf.mxu0
        %v3616 = vpop.f32.mrf.mxu0
        %3617 = vdwg.mxu0
        %v3619 = vsel %vm2918, %v3106, 0
        %v3622 = vsel %vm3114, %v2142, 0
        %3624 = vmatprep.subr.bf16.mxu0 0
        %3625 = vmatpush1.bf16.msra.mxu0 0
        %3626 = vmatprep.subr.bf16.mxu0 0
        %3627 = vmatpush1.bf16.msra.mxu0 0
        %3628 = vmatprep.subr.bf16.mxu0 0
        %3629 = vmatpush1.bf16.msra.mxu0 0
        %3630 = vmatprep.subr.bf16.mxu0 0
        %3631 = vmatpush1.bf16.msra.mxu0 0
        %3632 = vmatprep.subr.bf16.mxu0 0
        %3633 = vmatpush1.bf16.msra.mxu0 0
        %3634 = vmatprep.subr.bf16.mxu0 0
        %3635 = vmatpush1.bf16.msra.mxu0 0
        %3636 = vmatprep.subr.bf16.mxu0 0
        %3637 = vmatpush1.bf16.msra.mxu0 0
        %3638 = vmatprep.subr.bf16.mxu0 0
        %3639 = vmatpush1.bf16.msra.mxu0 %v3622
        %3640 = vmatprep.subr.bf16.mxu0 0
        %3641 = vmatpush2.bf16.msra.mxu0 0
        %3642 = vmatprep.subr.bf16.mxu0 0
        %3643 = vmatpush2.bf16.msra.mxu0 0
        %3644 = vmatprep.subr.bf16.mxu0 0
        %3645 = vmatpush2.bf16.msra.mxu0 0
        %3646 = vmatprep.subr.bf16.mxu0 0
        %3647 = vmatpush2.bf16.msra.mxu0 0
        %3648 = vmatprep.subr.bf16.mxu0 0
        %3649 = vmatpush2.bf16.msra.mxu0 0
        %3650 = vmatprep.subr.bf16.mxu0 0
        %3651 = vmatpush2.bf16.msra.mxu0 0
        %3652 = vmatprep.subr.bf16.mxu0 0
        %3653 = vmatpush2.bf16.msra.mxu0 0
        %3654 = vmatprep.subr.bf16.mxu0 0
        %3655 = vmatpush2.bf16.msra.mxu0 0
        %3656 = vmatprep.mubr.bf16.mxu0 0
        %3657 = vmatmul.mubr.bf16.gmra.mxu0 %v3619
        %v3658 = vpop.f32.mrf.mxu0
        %v3659 = vadd.f32 0.0, %v3658
        %v3660 = vpop.f32.mrf.mxu0
        %v3661 = vpop.f32.mrf.mxu0
        %v3662 = vpop.f32.mrf.mxu0
        %3663 = vdwg.mxu0
        %v3665 = vsel %vm2918, %v3107, 0
        %v3668 = vsel %vm3114, %v2143, 0
        %3670 = vmatprep.subr.bf16.mxu0 0
        %3671 = vmatpush1.bf16.msra.mxu0 0
        %3672 = vmatprep.subr.bf16.mxu0 0
        %3673 = vmatpush1.bf16.msra.mxu0 0
        %3674 = vmatprep.subr.bf16.mxu0 0
        %3675 = vmatpush1.bf16.msra.mxu0 0
        %3676 = vmatprep.subr.bf16.mxu0 0
        %3677 = vmatpush1.bf16.msra.mxu0 0
        %3678 = vmatprep.subr.bf16.mxu0 0
        %3679 = vmatpush1.bf16.msra.mxu0 0
        %3680 = vmatprep.subr.bf16.mxu0 0
        %3681 = vmatpush1.bf16.msra.mxu0 0
        %3682 = vmatprep.subr.bf16.mxu0 0
        %3683 = vmatpush1.bf16.msra.mxu0 0
        %3684 = vmatprep.subr.bf16.mxu0 0
        %3685 = vmatpush1.bf16.msra.mxu0 %v3668
        %3686 = vmatprep.subr.bf16.mxu0 0
        %3687 = vmatpush2.bf16.msra.mxu0 0
        %3688 = vmatprep.subr.bf16.mxu0 0
        %3689 = vmatpush2.bf16.msra.mxu0 0
        %3690 = vmatprep.subr.bf16.mxu0 0
        %3691 = vmatpush2.bf16.msra.mxu0 0
        %3692 = vmatprep.subr.bf16.mxu0 0
        %3693 = vmatpush2.bf16.msra.mxu0 0
        %3694 = vmatprep.subr.bf16.mxu0 0
        %3695 = vmatpush2.bf16.msra.mxu0 0
        %3696 = vmatprep.subr.bf16.mxu0 0
        %3697 = vmatpush2.bf16.msra.mxu0 0
        %3698 = vmatprep.subr.bf16.mxu0 0
        %3699 = vmatpush2.bf16.msra.mxu0 0
        %3700 = vmatprep.subr.bf16.mxu0 0
        %3701 = vmatpush2.bf16.msra.mxu0 0
        %3702 = vmatprep.mubr.bf16.mxu0 0
        %3703 = vmatmul.mubr.bf16.gmra.mxu0 %v3665
        %v3704 = vpop.f32.mrf.mxu0
        %v3705 = vadd.f32 0.0, %v3704
        %v3706 = vpop.f32.mrf.mxu0
        %v3707 = vpop.f32.mrf.mxu0
        %v3708 = vpop.f32.mrf.mxu0
        %3709 = vdwg.mxu0
        %v3711 = vsel %vm2918, %v3108, 0
        %v3714 = vsel %vm3114, %v2144, 0
        %3716 = vmatprep.subr.bf16.mxu0 0
        %3717 = vmatpush1.bf16.msra.mxu0 0
        %3718 = vmatprep.subr.bf16.mxu0 0
        %3719 = vmatpush1.bf16.msra.mxu0 0
        %3720 = vmatprep.subr.bf16.mxu0 0
        %3721 = vmatpush1.bf16.msra.mxu0 0
        %3722 = vmatprep.subr.bf16.mxu0 0
        %3723 = vmatpush1.bf16.msra.mxu0 0
        %3724 = vmatprep.subr.bf16.mxu0 0
        %3725 = vmatpush1.bf16.msra.mxu0 0
        %3726 = vmatprep.subr.bf16.mxu0 0
        %3727 = vmatpush1.bf16.msra.mxu0 0
        %3728 = vmatprep.subr.bf16.mxu0 0
        %3729 = vmatpush1.bf16.msra.mxu0 0
        %3730 = vmatprep.subr.bf16.mxu0 0
        %3731 = vmatpush1.bf16.msra.mxu0 %v3714
        %3732 = vmatprep.subr.bf16.mxu0 0
        %3733 = vmatpush2.bf16.msra.mxu0 0
        %3734 = vmatprep.subr.bf16.mxu0 0
        %3735 = vmatpush2.bf16.msra.mxu0 0
        %3736 = vmatprep.subr.bf16.mxu0 0
        %3737 = vmatpush2.bf16.msra.mxu0 0
        %3738 = vmatprep.subr.bf16.mxu0 0
        %3739 = vmatpush2.bf16.msra.mxu0 0
        %3740 = vmatprep.subr.bf16.mxu0 0
        %3741 = vmatpush2.bf16.msra.mxu0 0
        %3742 = vmatprep.subr.bf16.mxu0 0
        %3743 = vmatpush2.bf16.msra.mxu0 0
        %3744 = vmatprep.subr.bf16.mxu0 0
        %3745 = vmatpush2.bf16.msra.mxu0 0
        %3746 = vmatprep.subr.bf16.mxu0 0
        %3747 = vmatpush2.bf16.msra.mxu0 0
        %3748 = vmatprep.mubr.bf16.mxu0 0
        %3749 = vmatmul.mubr.bf16.gmra.mxu0 %v3711
        %v3750 = vpop.f32.mrf.mxu0
        %v3751 = vadd.f32 0.0, %v3750
        %v3752 = vpop.f32.mrf.mxu0
        %v3753 = vpop.f32.mrf.mxu0
        %v3754 = vpop.f32.mrf.mxu0
        %3755 = vdwg.mxu0
        %v3757 = vsel %vm2918, %v3109, 0
        %v3760 = vsel %vm3114, %v2145, 0
        %3762 = vmatprep.subr.bf16.mxu0 0
        %3763 = vmatpush1.bf16.msra.mxu0 0
        %3764 = vmatprep.subr.bf16.mxu0 0
        %3765 = vmatpush1.bf16.msra.mxu0 0
        %3766 = vmatprep.subr.bf16.mxu0 0
        %3767 = vmatpush1.bf16.msra.mxu0 0
        %3768 = vmatprep.subr.bf16.mxu0 0
        %3769 = vmatpush1.bf16.msra.mxu0 0
        %3770 = vmatprep.subr.bf16.mxu0 0
        %3771 = vmatpush1.bf16.msra.mxu0 0
        %3772 = vmatprep.subr.bf16.mxu0 0
        %3773 = vmatpush1.bf16.msra.mxu0 0
        %3774 = vmatprep.subr.bf16.mxu0 0
        %3775 = vmatpush1.bf16.msra.mxu0 0
        %3776 = vmatprep.subr.bf16.mxu0 0
        %3777 = vmatpush1.bf16.msra.mxu0 %v3760
        %3778 = vmatprep.subr.bf16.mxu0 0
        %3779 = vmatpush2.bf16.msra.mxu0 0
        %3780 = vmatprep.subr.bf16.mxu0 0
        %3781 = vmatpush2.bf16.msra.mxu0 0
        %3782 = vmatprep.subr.bf16.mxu0 0
        %3783 = vmatpush2.bf16.msra.mxu0 0
        %3784 = vmatprep.subr.bf16.mxu0 0
        %3785 = vmatpush2.bf16.msra.mxu0 0
        %3786 = vmatprep.subr.bf16.mxu0 0
        %3787 = vmatpush2.bf16.msra.mxu0 0
        %3788 = vmatprep.subr.bf16.mxu0 0
        %3789 = vmatpush2.bf16.msra.mxu0 0
        %3790 = vmatprep.subr.bf16.mxu0 0
        %3791 = vmatpush2.bf16.msra.mxu0 0
        %3792 = vmatprep.subr.bf16.mxu0 0
        %3793 = vmatpush2.bf16.msra.mxu0 0
        %3794 = vmatprep.mubr.bf16.mxu0 0
        %3795 = vmatmul.mubr.bf16.gmra.mxu0 %v3757
        %v3796 = vpop.f32.mrf.mxu0
        %v3797 = vadd.f32 0.0, %v3796
        %v3798 = vpop.f32.mrf.mxu0
        %v3799 = vpop.f32.mrf.mxu0
        %v3800 = vpop.f32.mrf.mxu0
        %3801 = vdwg.mxu0
        %v3803 = vsel %vm2918, %v3110, 0
        %v3806 = vsel %vm3114, %v2146, 0
        %3808 = vmatprep.subr.bf16.mxu0 0
        %3809 = vmatpush1.bf16.msra.mxu0 0
        %3810 = vmatprep.subr.bf16.mxu0 0
        %3811 = vmatpush1.bf16.msra.mxu0 0
        %3812 = vmatprep.subr.bf16.mxu0 0
        %3813 = vmatpush1.bf16.msra.mxu0 0
        %3814 = vmatprep.subr.bf16.mxu0 0
        %3815 = vmatpush1.bf16.msra.mxu0 0
        %3816 = vmatprep.subr.bf16.mxu0 0
        %3817 = vmatpush1.bf16.msra.mxu0 0
        %3818 = vmatprep.subr.bf16.mxu0 0
        %3819 = vmatpush1.bf16.msra.mxu0 0
        %3820 = vmatprep.subr.bf16.mxu0 0
        %3821 = vmatpush1.bf16.msra.mxu0 0
        %3822 = vmatprep.subr.bf16.mxu0 0
        %3823 = vmatpush1.bf16.msra.mxu0 %v3806
        %3824 = vmatprep.subr.bf16.mxu0 0
        %3825 = vmatpush2.bf16.msra.mxu0 0
        %3826 = vmatprep.subr.bf16.mxu0 0
        %3827 = vmatpush2.bf16.msra.mxu0 0
        %3828 = vmatprep.subr.bf16.mxu0 0
        %3829 = vmatpush2.bf16.msra.mxu0 0
        %3830 = vmatprep.subr.bf16.mxu0 0
        %3831 = vmatpush2.bf16.msra.mxu0 0
        %3832 = vmatprep.subr.bf16.mxu0 0
        %3833 = vmatpush2.bf16.msra.mxu0 0
        %3834 = vmatprep.subr.bf16.mxu0 0
        %3835 = vmatpush2.bf16.msra.mxu0 0
        %3836 = vmatprep.subr.bf16.mxu0 0
        %3837 = vmatpush2.bf16.msra.mxu0 0
        %3838 = vmatprep.subr.bf16.mxu0 0
        %3839 = vmatpush2.bf16.msra.mxu0 0
        %3840 = vmatprep.mubr.bf16.mxu0 0
        %3841 = vmatmul.mubr.bf16.gmra.mxu0 %v3803
        %v3842 = vpop.f32.mrf.mxu0
        %v3843 = vadd.f32 0.0, %v3842
        %v3844 = vpop.f32.mrf.mxu0
        %v3845 = vpop.f32.mrf.mxu0
        %v3846 = vpop.f32.mrf.mxu0
        %3847 = vdwg.mxu0
        %3850 = vrot.lane.b32.xlu0 %v3245, 32
        %v3851 = vpop.permute.xlu0 %3850
        %3852 = vrot.lane.b32.xlu0 %v3291, 32
        %v3853 = vpop.permute.xlu0 %3852
        %3858 = vrot.lane.b32.xlu0 %v3337, 64
        %v3859 = vpop.permute.xlu0 %3858
        %3860 = vrot.lane.b32.xlu0 %v3383, 64
        %v3861 = vpop.permute.xlu0 %3860
        %3866 = vrot.lane.b32.xlu0 %v3429, 96
        %v3867 = vpop.permute.xlu0 %3866
        %3868 = vrot.lane.b32.xlu0 %v3475, 96
        %v3869 = vpop.permute.xlu0 %3868
        %3874 = vrot.lane.b32.xlu0 %v3613, 32
        %v3875 = vpop.permute.xlu0 %3874
        %3876 = vrot.lane.b32.xlu0 %v3659, 32
        %v3877 = vpop.permute.xlu0 %3876
        %3882 = vrot.lane.b32.xlu0 %v3705, 64
        %v3883 = vpop.permute.xlu0 %3882
        %3884 = vrot.lane.b32.xlu0 %v3751, 64
        %v3885 = vpop.permute.xlu0 %3884
        %3890 = vrot.lane.b32.xlu0 %v3797, 96
        %v3891 = vpop.permute.xlu0 %3890
        %3892 = vrot.lane.b32.xlu0 %v3843, 96
        %v3893 = vpop.permute.xlu0 %3892
        %v3896 = vsel %vm2147, %v3153, %v3851
        %v3897 = vsel %vm2147, %v3199, %v3853
        %vm3898 = vcmask 523264
        %v3899 = vsel %vm3898, %v3896, %v3859
        %v3900 = vsel %vm3898, %v3897, %v3861
        %vm3901 = vcmask 785408
        %v3902 = vsel %vm3901, %v3899, %v3867
        %v3903 = vsel %vm3901, %v3900, %v3869
        %v3904 = vsel %vm2147, %v3521, %v3875
        %v3905 = vsel %vm2147, %v3567, %v3877
        %v3906 = vsel %vm3898, %v3904, %v3883
        %v3907 = vsel %vm3898, %v3905, %v3885
        %v3908 = vsel %vm3901, %v3906, %v3891
        %v3909 = vsel %vm3901, %v3907, %v3893
        %v3910 = vpack.c.bf16 %v3903, %v3902
        %v3911 = vpack.c.bf16 %v3909, %v3908
        %v3912 = vunpack.c.l.bf16 %v959
        %v3914 = vlaneseq
        %v3915 = vshrl.u32 %v3914, 7
        %v3916 = vsub.s32 0, %v3915
        %v3917 = vrot.slane %v3912, %v3916
        %v3918 = vlaneseq
        %v3919 = vshrl.u32 %v3918, 7
        %v3920 = vsub.s32 2, %v3919
        %v3921 = vrot.slane %v3912, %v3920
        %v3924 = vlaneseq
        %v3925 = vshrl.u32 %v3924, 7
        %v3926 = vsub.s32 0, %v3925
        %v3927 = vrot.slane %v3917, %v3926
        %v3928 = vlaneseq
        %v3929 = vshrl.u32 %v3928, 7
        %v3930 = vsub.s32 0, %v3929
        %v3931 = vrot.slane %v3921, %v3930
        %v3964 = vunpack.c.l.b16 %v927
        %v3965 = vunpack.c.h.b16 %v927
        %v3966 = vunpack.c.l.b16 %v928
        %v3967 = vunpack.c.h.b16 %v928
        %v3968 = vunpack.c.l.b16 %v929
        %v3969 = vunpack.c.h.b16 %v929
        %v3970 = vunpack.c.l.b16 %v930
        %v3971 = vunpack.c.h.b16 %v930
        %v3972 = vunpack.c.l.b16 %v931
        %v3973 = vunpack.c.h.b16 %v931
        %v3974 = vunpack.c.l.b16 %v932
        %v3975 = vunpack.c.h.b16 %v932
        %v3976 = vunpack.c.l.b16 %v933
        %v3977 = vunpack.c.h.b16 %v933
        %v3978 = vunpack.c.l.b16 %v934
        %v3979 = vunpack.c.h.b16 %v934
        %v3980 = vunpack.c.l.b16 %v935
        %v3981 = vunpack.c.h.b16 %v935
        %v3982 = vunpack.c.l.b16 %v936
        %v3983 = vunpack.c.h.b16 %v936
        %v3984 = vunpack.c.l.b16 %v937
        %v3985 = vunpack.c.h.b16 %v937
        %v3986 = vunpack.c.l.b16 %v938
        %v3987 = vunpack.c.h.b16 %v938
        %v3988 = vunpack.c.l.b16 %v939
        %v3989 = vunpack.c.h.b16 %v939
        %v3990 = vunpack.c.l.b16 %v940
        %v3991 = vunpack.c.h.b16 %v940
        %v3992 = vunpack.c.l.b16 %v941
        %v3993 = vunpack.c.h.b16 %v941
        %v3994 = vunpack.c.l.b16 %v942
        %v3995 = vunpack.c.h.b16 %v942
        %v3996 = vunpack.c.l.b16 %v943
        %v3997 = vunpack.c.h.b16 %v943
        %v3998 = vunpack.c.l.b16 %v944
        %v3999 = vunpack.c.h.b16 %v944
        %v4000 = vunpack.c.l.b16 %v945
        %v4001 = vunpack.c.h.b16 %v945
        %v4002 = vunpack.c.l.b16 %v946
        %v4003 = vunpack.c.h.b16 %v946
        %v4004 = vunpack.c.l.b16 %v947
        %v4005 = vunpack.c.h.b16 %v947
        %v4006 = vunpack.c.l.b16 %v948
        %v4007 = vunpack.c.h.b16 %v948
        %v4008 = vunpack.c.l.b16 %v949
        %v4009 = vunpack.c.h.b16 %v949
        %v4010 = vunpack.c.l.b16 %v950
        %v4011 = vunpack.c.h.b16 %v950
        %v4012 = vunpack.c.l.b16 %v951
        %v4013 = vunpack.c.h.b16 %v951
        %v4014 = vunpack.c.l.b16 %v952
        %v4015 = vunpack.c.h.b16 %v952
        %v4016 = vunpack.c.l.b16 %v953
        %v4017 = vunpack.c.h.b16 %v953
        %v4018 = vunpack.c.l.b16 %v954
        %v4019 = vunpack.c.h.b16 %v954
        %v4020 = vunpack.c.l.b16 %v955
        %v4021 = vunpack.c.h.b16 %v955
        %v4022 = vunpack.c.l.b16 %v956
        %v4023 = vunpack.c.h.b16 %v956
        %v4024 = vunpack.c.l.b16 %v957
        %v4025 = vunpack.c.h.b16 %v957
        %v4026 = vunpack.c.l.b16 %v958
        %v4027 = vunpack.c.h.b16 %v958
        %v4028 = vpack.c.b16 %v3966, %v3964
        %v4029 = vpack.c.b16 %v3967, %v3965
        %v4030 = vpack.c.b16 %v3970, %v3968
        %v4031 = vpack.c.b16 %v3971, %v3969
        %v4032 = vpack.c.b16 %v3974, %v3972
        %v4033 = vpack.c.b16 %v3975, %v3973
        %v4034 = vpack.c.b16 %v3978, %v3976
        %v4035 = vpack.c.b16 %v3979, %v3977
        %v4036 = vpack.c.b16 %v3982, %v3980
        %v4037 = vpack.c.b16 %v3983, %v3981
        %v4038 = vpack.c.b16 %v3986, %v3984
        %v4039 = vpack.c.b16 %v3987, %v3985
        %v4040 = vpack.c.b16 %v3990, %v3988
        %v4041 = vpack.c.b16 %v3991, %v3989
        %v4042 = vpack.c.b16 %v3994, %v3992
        %v4043 = vpack.c.b16 %v3995, %v3993
        %v4044 = vpack.c.b16 %v3998, %v3996
        %v4045 = vpack.c.b16 %v3999, %v3997
        %v4046 = vpack.c.b16 %v4002, %v4000
        %v4047 = vpack.c.b16 %v4003, %v4001
        %v4048 = vpack.c.b16 %v4006, %v4004
        %v4049 = vpack.c.b16 %v4007, %v4005
        %v4050 = vpack.c.b16 %v4010, %v4008
        %v4051 = vpack.c.b16 %v4011, %v4009
        %v4052 = vpack.c.b16 %v4014, %v4012
        %v4053 = vpack.c.b16 %v4015, %v4013
        %v4054 = vpack.c.b16 %v4018, %v4016
        %v4055 = vpack.c.b16 %v4019, %v4017
        %v4056 = vpack.c.b16 %v4022, %v4020
        %v4057 = vpack.c.b16 %v4023, %v4021
        %v4058 = vpack.c.b16 %v4026, %v4024
        %v4059 = vpack.c.b16 %v4027, %v4025
        %4092 = vmatprep.subr.bf16.mxu0 %v4043
        %4093 = vmatpush1.bf16.msra.mxu0 %v4042
        %4094 = vmatprep.subr.bf16.mxu0 %v4041
        %4095 = vmatpush1.bf16.msra.mxu0 %v4040
        %4096 = vmatprep.subr.bf16.mxu0 %v4039
        %4097 = vmatpush1.bf16.msra.mxu0 %v4038
        %4098 = vmatprep.subr.bf16.mxu0 %v4037
        %4099 = vmatpush1.bf16.msra.mxu0 %v4036
        %4100 = vmatprep.subr.bf16.mxu0 %v4035
        %4101 = vmatpush1.bf16.msra.mxu0 %v4034
        %4102 = vmatprep.subr.bf16.mxu0 %v4033
        %4103 = vmatpush1.bf16.msra.mxu0 %v4032
        %4104 = vmatprep.subr.bf16.mxu0 %v4031
        %4105 = vmatpush1.bf16.msra.mxu0 %v4030
        %4106 = vmatprep.subr.bf16.mxu0 %v4029
        %4107 = vmatpush1.bf16.msra.mxu0 %v4028
        %4108 = vmatprep.subr.bf16.mxu0 %v4059
        %4109 = vmatpush2.bf16.msra.mxu0 %v4058
        %4110 = vmatprep.subr.bf16.mxu0 %v4057
        %4111 = vmatpush2.bf16.msra.mxu0 %v4056
        %4112 = vmatprep.subr.bf16.mxu0 %v4055
        %4113 = vmatpush2.bf16.msra.mxu0 %v4054
        %4114 = vmatprep.subr.bf16.mxu0 %v4053
        %4115 = vmatpush2.bf16.msra.mxu0 %v4052
        %4116 = vmatprep.subr.bf16.mxu0 %v4051
        %4117 = vmatpush2.bf16.msra.mxu0 %v4050
        %4118 = vmatprep.subr.bf16.mxu0 %v4049
        %4119 = vmatpush2.bf16.msra.mxu0 %v4048
        %4120 = vmatprep.subr.bf16.mxu0 %v4047
        %4121 = vmatpush2.bf16.msra.mxu0 %v4046
        %4122 = vmatprep.subr.bf16.mxu0 %v4045
        %4123 = vmatpush2.bf16.msra.mxu0 %v4044
        %4124 = vmatprep.mubr.bf16.mxu0 %v3911
        %4125 = vmatmul.mubr.bf16.gmra.mxu0 %v3910
        %v4126 = vpop.f32.mrf.mxu0
        %v4127 = vadd.f32 %v3927, %v4126
        %v4128 = vpop.f32.mrf.mxu0
        %v4129 = vadd.f32 %v3931, %v4128
        %v4130 = vpop.f32.mrf.mxu0
        %v4131 = vadd.f32 %v3927, %v4130
        %v4132 = vpop.f32.mrf.mxu0
        %v4133 = vadd.f32 %v3931, %v4132
        %4134 = vdwg.mxu0
        %v4135 = vadd.f32 %v1220, %v4127
        %v4136 = vadd.f32 %v1221, %v4129
        %v4137 = vadd.f32 %v1222, %v4131
        %v4138 = vadd.f32 %v1223, %v4133
        %v4139 = vadd.f32 %v4135, %v4136
        %4140 = vadd.xlane.f32.xlu0 %v4139
        %v4141 = vpop.xlane.xlu0 %4140
        %v4142 = vadd.f32 %v4137, %v4138
        %4143 = vadd.xlane.f32.xlu0 %v4142
        %v4144 = vpop.xlane.xlu0 %4143
        %v4145 = vmul.f32 %v4141, %v1230
        %v4146 = vmul.f32 %v4144, %v1230
        %v4147 = vsub.f32 %v4135, %v4145
        %v4148 = vsub.f32 %v4136, %v4145
        %v4149 = vsub.f32 %v4137, %v4146
        %v4150 = vsub.f32 %v4138, %v4146
        %v4151 = vmul.f32 %v4147, %v4147
        %v4152 = vmul.f32 %v4148, %v4148
        %v4153 = vmul.f32 %v4149, %v4149
        %v4154 = vmul.f32 %v4150, %v4150
        %v4155 = vadd.f32 %v4151, %v4152
        %4156 = vadd.xlane.f32.xlu0 %v4155
        %v4157 = vpop.xlane.xlu0 %4156
        %v4158 = vadd.f32 %v4153, %v4154
        %4159 = vadd.xlane.f32.xlu0 %v4158
        %v4160 = vpop.xlane.xlu0 %4159
        %v4161 = vmul.f32 %v4157, %v1230
        %v4162 = vmul.f32 %v4160, %v1230
        %v4163 = vadd.f32 %v4161, 1e-05
        %v4164 = vadd.f32 %v4162, 1e-05
        %v4165 = vrsqrt.pop %v4163
        %v4166 = vrsqrt.pop %v4164
        %v4167 = vmul.f32 %v4147, %v4165
        %v4168 = vmul.f32 %v4148, %v4165
        %v4169 = vmul.f32 %v4149, %v4166
        %v4170 = vmul.f32 %v4150, %v4166
        %v4171 = vunpack.c.l.bf16 %v960
        %v4173 = vlaneseq
        %v4174 = vshrl.u32 %v4173, 7
        %v4175 = vsub.s32 0, %v4174
        %v4176 = vrot.slane %v4171, %v4175
        %v4177 = vlaneseq
        %v4178 = vshrl.u32 %v4177, 7
        %v4179 = vsub.s32 2, %v4178
        %v4180 = vrot.slane %v4171, %v4179
        %v4183 = vlaneseq
        %v4184 = vshrl.u32 %v4183, 7
        %v4185 = vsub.s32 0, %v4184
        %v4186 = vrot.slane %v4176, %v4185
        %v4187 = vlaneseq
        %v4188 = vshrl.u32 %v4187, 7
        %v4189 = vsub.s32 0, %v4188
        %v4190 = vrot.slane %v4180, %v4189
        %v4191 = vmul.f32 %v4167, %v4186
        %v4192 = vmul.f32 %v4168, %v4190
        %v4193 = vmul.f32 %v4169, %v4186
        %v4194 = vmul.f32 %v4170, %v4190
        %v4195 = vunpack.c.l.bf16 %v961
        %v4197 = vlaneseq
        %v4198 = vshrl.u32 %v4197, 7
        %v4199 = vsub.s32 0, %v4198
        %v4200 = vrot.slane %v4195, %v4199
        %v4201 = vlaneseq
        %v4202 = vshrl.u32 %v4201, 7
        %v4203 = vsub.s32 2, %v4202
        %v4204 = vrot.slane %v4195, %v4203
        %v4207 = vlaneseq
        %v4208 = vshrl.u32 %v4207, 7
        %v4209 = vsub.s32 0, %v4208
        %v4210 = vrot.slane %v4200, %v4209
        %v4211 = vlaneseq
        %v4212 = vshrl.u32 %v4211, 7
        %v4213 = vsub.s32 0, %v4212
        %v4214 = vrot.slane %v4204, %v4213
        %v4215 = vadd.f32 %v4191, %v4210
        %v4216 = vadd.f32 %v4192, %v4214
        %v4217 = vadd.f32 %v4193, %v4210
        %v4218 = vadd.f32 %v4194, %v4214
        %v4219 = vpack.c.bf16 %v4217, %v4215
        %v4220 = vpack.c.bf16 %v4218, %v4216
        %v4221 = vunpack.c.l.bf16 %v1090
        %v4222 = vunpack.c.h.bf16 %v1090
        %v4225 = vlaneseq
        %v4226 = vshrl.u32 %v4225, 7
        %v4227 = vsub.s32 0, %v4226
        %v4228 = vrot.slane %v4221, %v4227
        %v4229 = vlaneseq
        %v4230 = vshrl.u32 %v4229, 7
        %v4231 = vsub.s32 2, %v4230
        %v4232 = vrot.slane %v4221, %v4231
        %v4233 = vlaneseq
        %v4234 = vshrl.u32 %v4233, 7
        %v4235 = vsub.s32 4, %v4234
        %v4236 = vrot.slane %v4221, %v4235
        %v4237 = vlaneseq
        %v4238 = vshrl.u32 %v4237, 7
        %v4239 = vsub.s32 6, %v4238
        %v4240 = vrot.slane %v4221, %v4239
        %v4241 = vlaneseq
        %v4242 = vshrl.u32 %v4241, 7
        %v4243 = vsub.s32 0, %v4242
        %v4244 = vrot.slane %v4222, %v4243
        %v4245 = vlaneseq
        %v4246 = vshrl.u32 %v4245, 7
        %v4247 = vsub.s32 2, %v4246
        %v4248 = vrot.slane %v4222, %v4247
        %v4249 = vlaneseq
        %v4250 = vshrl.u32 %v4249, 7
        %v4251 = vsub.s32 4, %v4250
        %v4252 = vrot.slane %v4222, %v4251
        %v4253 = vlaneseq
        %v4254 = vshrl.u32 %v4253, 7
        %v4255 = vsub.s32 6, %v4254
        %v4256 = vrot.slane %v4222, %v4255
        %v4265 = vlaneseq
        %v4266 = vshrl.u32 %v4265, 7
        %v4267 = vsub.s32 0, %v4266
        %v4268 = vrot.slane %v4228, %v4267
        %v4269 = vlaneseq
        %v4270 = vshrl.u32 %v4269, 7
        %v4271 = vsub.s32 0, %v4270
        %v4272 = vrot.slane %v4232, %v4271
        %v4273 = vlaneseq
        %v4274 = vshrl.u32 %v4273, 7
        %v4275 = vsub.s32 0, %v4274
        %v4276 = vrot.slane %v4236, %v4275
        %v4277 = vlaneseq
        %v4278 = vshrl.u32 %v4277, 7
        %v4279 = vsub.s32 0, %v4278
        %v4280 = vrot.slane %v4240, %v4279
        %v4281 = vlaneseq
        %v4282 = vshrl.u32 %v4281, 7
        %v4283 = vsub.s32 0, %v4282
        %v4284 = vrot.slane %v4244, %v4283
        %v4285 = vlaneseq
        %v4286 = vshrl.u32 %v4285, 7
        %v4287 = vsub.s32 0, %v4286
        %v4288 = vrot.slane %v4248, %v4287
        %v4289 = vlaneseq
        %v4290 = vshrl.u32 %v4289, 7
        %v4291 = vsub.s32 0, %v4290
        %v4292 = vrot.slane %v4252, %v4291
        %v4293 = vlaneseq
        %v4294 = vshrl.u32 %v4293, 7
        %v4295 = vsub.s32 0, %v4294
        %v4296 = vrot.slane %v4256, %v4295
        %v4425 = vunpack.c.l.b16 %v962
        %v4426 = vunpack.c.h.b16 %v962
        %v4427 = vunpack.c.l.b16 %v963
        %v4428 = vunpack.c.h.b16 %v963
        %v4429 = vunpack.c.l.b16 %v964
        %v4430 = vunpack.c.h.b16 %v964
        %v4431 = vunpack.c.l.b16 %v965
        %v4432 = vunpack.c.h.b16 %v965
        %v4433 = vunpack.c.l.b16 %v966
        %v4434 = vunpack.c.h.b16 %v966
        %v4435 = vunpack.c.l.b16 %v967
        %v4436 = vunpack.c.h.b16 %v967
        %v4437 = vunpack.c.l.b16 %v968
        %v4438 = vunpack.c.h.b16 %v968
        %v4439 = vunpack.c.l.b16 %v969
        %v4440 = vunpack.c.h.b16 %v969
        %v4441 = vunpack.c.l.b16 %v970
        %v4442 = vunpack.c.h.b16 %v970
        %v4443 = vunpack.c.l.b16 %v971
        %v4444 = vunpack.c.h.b16 %v971
        %v4445 = vunpack.c.l.b16 %v972
        %v4446 = vunpack.c.h.b16 %v972
        %v4447 = vunpack.c.l.b16 %v973
        %v4448 = vunpack.c.h.b16 %v973
        %v4449 = vunpack.c.l.b16 %v974
        %v4450 = vunpack.c.h.b16 %v974
        %v4451 = vunpack.c.l.b16 %v975
        %v4452 = vunpack.c.h.b16 %v975
        %v4453 = vunpack.c.l.b16 %v976
        %v4454 = vunpack.c.h.b16 %v976
        %v4455 = vunpack.c.l.b16 %v977
        %v4456 = vunpack.c.h.b16 %v977
        %v4457 = vunpack.c.l.b16 %v978
        %v4458 = vunpack.c.h.b16 %v978
        %v4459 = vunpack.c.l.b16 %v979
        %v4460 = vunpack.c.h.b16 %v979
        %v4461 = vunpack.c.l.b16 %v980
        %v4462 = vunpack.c.h.b16 %v980
        %v4463 = vunpack.c.l.b16 %v981
        %v4464 = vunpack.c.h.b16 %v981
        %v4465 = vunpack.c.l.b16 %v982
        %v4466 = vunpack.c.h.b16 %v982
        %v4467 = vunpack.c.l.b16 %v983
        %v4468 = vunpack.c.h.b16 %v983
        %v4469 = vunpack.c.l.b16 %v984
        %v4470 = vunpack.c.h.b16 %v984
        %v4471 = vunpack.c.l.b16 %v985
        %v4472 = vunpack.c.h.b16 %v985
        %v4473 = vunpack.c.l.b16 %v986
        %v4474 = vunpack.c.h.b16 %v986
        %v4475 = vunpack.c.l.b16 %v987
        %v4476 = vunpack.c.h.b16 %v987
        %v4477 = vunpack.c.l.b16 %v988
        %v4478 = vunpack.c.h.b16 %v988
        %v4479 = vunpack.c.l.b16 %v989
        %v4480 = vunpack.c.h.b16 %v989
        %v4481 = vunpack.c.l.b16 %v990
        %v4482 = vunpack.c.h.b16 %v990
        %v4483 = vunpack.c.l.b16 %v991
        %v4484 = vunpack.c.h.b16 %v991
        %v4485 = vunpack.c.l.b16 %v992
        %v4486 = vunpack.c.h.b16 %v992
        %v4487 = vunpack.c.l.b16 %v993
        %v4488 = vunpack.c.h.b16 %v993
        %v4489 = vunpack.c.l.b16 %v994
        %v4490 = vunpack.c.h.b16 %v994
        %v4491 = vunpack.c.l.b16 %v995
        %v4492 = vunpack.c.h.b16 %v995
        %v4493 = vunpack.c.l.b16 %v996
        %v4494 = vunpack.c.h.b16 %v996
        %v4495 = vunpack.c.l.b16 %v997
        %v4496 = vunpack.c.h.b16 %v997
        %v4497 = vunpack.c.l.b16 %v998
        %v4498 = vunpack.c.h.b16 %v998
        %v4499 = vunpack.c.l.b16 %v999
        %v4500 = vunpack.c.h.b16 %v999
        %v4501 = vunpack.c.l.b16 %v1000
        %v4502 = vunpack.c.h.b16 %v1000
        %v4503 = vunpack.c.l.b16 %v1001
        %v4504 = vunpack.c.h.b16 %v1001
        %v4505 = vunpack.c.l.b16 %v1002
        %v4506 = vunpack.c.h.b16 %v1002
        %v4507 = vunpack.c.l.b16 %v1003
        %v4508 = vunpack.c.h.b16 %v1003
        %v4509 = vunpack.c.l.b16 %v1004
        %v4510 = vunpack.c.h.b16 %v1004
        %v4511 = vunpack.c.l.b16 %v1005
        %v4512 = vunpack.c.h.b16 %v1005
        %v4513 = vunpack.c.l.b16 %v1006
        %v4514 = vunpack.c.h.b16 %v1006
        %v4515 = vunpack.c.l.b16 %v1007
        %v4516 = vunpack.c.h.b16 %v1007
        %v4517 = vunpack.c.l.b16 %v1008
        %v4518 = vunpack.c.h.b16 %v1008
        %v4519 = vunpack.c.l.b16 %v1009
        %v4520 = vunpack.c.h.b16 %v1009
        %v4521 = vunpack.c.l.b16 %v1010
        %v4522 = vunpack.c.h.b16 %v1010
        %v4523 = vunpack.c.l.b16 %v1011
        %v4524 = vunpack.c.h.b16 %v1011
        %v4525 = vunpack.c.l.b16 %v1012
        %v4526 = vunpack.c.h.b16 %v1012
        %v4527 = vunpack.c.l.b16 %v1013
        %v4528 = vunpack.c.h.b16 %v1013
        %v4529 = vunpack.c.l.b16 %v1014
        %v4530 = vunpack.c.h.b16 %v1014
        %v4531 = vunpack.c.l.b16 %v1015
        %v4532 = vunpack.c.h.b16 %v1015
        %v4533 = vunpack.c.l.b16 %v1016
        %v4534 = vunpack.c.h.b16 %v1016
        %v4535 = vunpack.c.l.b16 %v1017
        %v4536 = vunpack.c.h.b16 %v1017
        %v4537 = vunpack.c.l.b16 %v1018
        %v4538 = vunpack.c.h.b16 %v1018
        %v4539 = vunpack.c.l.b16 %v1019
        %v4540 = vunpack.c.h.b16 %v1019
        %v4541 = vunpack.c.l.b16 %v1020
        %v4542 = vunpack.c.h.b16 %v1020
        %v4543 = vunpack.c.l.b16 %v1021
        %v4544 = vunpack.c.h.b16 %v1021
        %v4545 = vunpack.c.l.b16 %v1022
        %v4546 = vunpack.c.h.b16 %v1022
        %v4547 = vunpack.c.l.b16 %v1023
        %v4548 = vunpack.c.h.b16 %v1023
        %v4549 = vunpack.c.l.b16 %v1024
        %v4550 = vunpack.c.h.b16 %v1024
        %v4551 = vunpack.c.l.b16 %v1025
        %v4552 = vunpack.c.h.b16 %v1025
        %v4553 = vunpack.c.l.b16 %v1026
        %v4554 = vunpack.c.h.b16 %v1026
        %v4555 = vunpack.c.l.b16 %v1027
        %v4556 = vunpack.c.h.b16 %v1027
        %v4557 = vunpack.c.l.b16 %v1028
        %v4558 = vunpack.c.h.b16 %v1028
        %v4559 = vunpack.c.l.b16 %v1029
        %v4560 = vunpack.c.h.b16 %v1029
        %v4561 = vunpack.c.l.b16 %v1030
        %v4562 = vunpack.c.h.b16 %v1030
        %v4563 = vunpack.c.l.b16 %v1031
        %v4564 = vunpack.c.h.b16 %v1031
        %v4565 = vunpack.c.l.b16 %v1032
        %v4566 = vunpack.c.h.b16 %v1032
        %v4567 = vunpack.c.l.b16 %v1033
        %v4568 = vunpack.c.h.b16 %v1033
        %v4569 = vunpack.c.l.b16 %v1034
        %v4570 = vunpack.c.h.b16 %v1034
        %v4571 = vunpack.c.l.b16 %v1035
        %v4572 = vunpack.c.h.b16 %v1035
        %v4573 = vunpack.c.l.b16 %v1036
        %v4574 = vunpack.c.h.b16 %v1036
        %v4575 = vunpack.c.l.b16 %v1037
        %v4576 = vunpack.c.h.b16 %v1037
        %v4577 = vunpack.c.l.b16 %v1038
        %v4578 = vunpack.c.h.b16 %v1038
        %v4579 = vunpack.c.l.b16 %v1039
        %v4580 = vunpack.c.h.b16 %v1039
        %v4581 = vunpack.c.l.b16 %v1040
        %v4582 = vunpack.c.h.b16 %v1040
        %v4583 = vunpack.c.l.b16 %v1041
        %v4584 = vunpack.c.h.b16 %v1041
        %v4585 = vunpack.c.l.b16 %v1042
        %v4586 = vunpack.c.h.b16 %v1042
        %v4587 = vunpack.c.l.b16 %v1043
        %v4588 = vunpack.c.h.b16 %v1043
        %v4589 = vunpack.c.l.b16 %v1044
        %v4590 = vunpack.c.h.b16 %v1044
        %v4591 = vunpack.c.l.b16 %v1045
        %v4592 = vunpack.c.h.b16 %v1045
        %v4593 = vunpack.c.l.b16 %v1046
        %v4594 = vunpack.c.h.b16 %v1046
        %v4595 = vunpack.c.l.b16 %v1047
        %v4596 = vunpack.c.h.b16 %v1047
        %v4597 = vunpack.c.l.b16 %v1048
        %v4598 = vunpack.c.h.b16 %v1048
        %v4599 = vunpack.c.l.b16 %v1049
        %v4600 = vunpack.c.h.b16 %v1049
        %v4601 = vunpack.c.l.b16 %v1050
        %v4602 = vunpack.c.h.b16 %v1050
        %v4603 = vunpack.c.l.b16 %v1051
        %v4604 = vunpack.c.h.b16 %v1051
        %v4605 = vunpack.c.l.b16 %v1052
        %v4606 = vunpack.c.h.b16 %v1052
        %v4607 = vunpack.c.l.b16 %v1053
        %v4608 = vunpack.c.h.b16 %v1053
        %v4609 = vunpack.c.l.b16 %v1054
        %v4610 = vunpack.c.h.b16 %v1054
        %v4611 = vunpack.c.l.b16 %v1055
        %v4612 = vunpack.c.h.b16 %v1055
        %v4613 = vunpack.c.l.b16 %v1056
        %v4614 = vunpack.c.h.b16 %v1056
        %v4615 = vunpack.c.l.b16 %v1057
        %v4616 = vunpack.c.h.b16 %v1057
        %v4617 = vunpack.c.l.b16 %v1058
        %v4618 = vunpack.c.h.b16 %v1058
        %v4619 = vunpack.c.l.b16 %v1059
        %v4620 = vunpack.c.h.b16 %v1059
        %v4621 = vunpack.c.l.b16 %v1060
        %v4622 = vunpack.c.h.b16 %v1060
        %v4623 = vunpack.c.l.b16 %v1061
        %v4624 = vunpack.c.h.b16 %v1061
        %v4625 = vunpack.c.l.b16 %v1062
        %v4626 = vunpack.c.h.b16 %v1062
        %v4627 = vunpack.c.l.b16 %v1063
        %v4628 = vunpack.c.h.b16 %v1063
        %v4629 = vunpack.c.l.b16 %v1064
        %v4630 = vunpack.c.h.b16 %v1064
        %v4631 = vunpack.c.l.b16 %v1065
        %v4632 = vunpack.c.h.b16 %v1065
        %v4633 = vunpack.c.l.b16 %v1066
        %v4634 = vunpack.c.h.b16 %v1066
        %v4635 = vunpack.c.l.b16 %v1067
        %v4636 = vunpack.c.h.b16 %v1067
        %v4637 = vunpack.c.l.b16 %v1068
        %v4638 = vunpack.c.h.b16 %v1068
        %v4639 = vunpack.c.l.b16 %v1069
        %v4640 = vunpack.c.h.b16 %v1069
        %v4641 = vunpack.c.l.b16 %v1070
        %v4642 = vunpack.c.h.b16 %v1070
        %v4643 = vunpack.c.l.b16 %v1071
        %v4644 = vunpack.c.h.b16 %v1071
        %v4645 = vunpack.c.l.b16 %v1072
        %v4646 = vunpack.c.h.b16 %v1072
        %v4647 = vunpack.c.l.b16 %v1073
        %v4648 = vunpack.c.h.b16 %v1073
        %v4649 = vunpack.c.l.b16 %v1074
        %v4650 = vunpack.c.h.b16 %v1074
        %v4651 = vunpack.c.l.b16 %v1075
        %v4652 = vunpack.c.h.b16 %v1075
        %v4653 = vunpack.c.l.b16 %v1076
        %v4654 = vunpack.c.h.b16 %v1076
        %v4655 = vunpack.c.l.b16 %v1077
        %v4656 = vunpack.c.h.b16 %v1077
        %v4657 = vunpack.c.l.b16 %v1078
        %v4658 = vunpack.c.h.b16 %v1078
        %v4659 = vunpack.c.l.b16 %v1079
        %v4660 = vunpack.c.h.b16 %v1079
        %v4661 = vunpack.c.l.b16 %v1080
        %v4662 = vunpack.c.h.b16 %v1080
        %v4663 = vunpack.c.l.b16 %v1081
        %v4664 = vunpack.c.h.b16 %v1081
        %v4665 = vunpack.c.l.b16 %v1082
        %v4666 = vunpack.c.h.b16 %v1082
        %v4667 = vunpack.c.l.b16 %v1083
        %v4668 = vunpack.c.h.b16 %v1083
        %v4669 = vunpack.c.l.b16 %v1084
        %v4670 = vunpack.c.h.b16 %v1084
        %v4671 = vunpack.c.l.b16 %v1085
        %v4672 = vunpack.c.h.b16 %v1085
        %v4673 = vunpack.c.l.b16 %v1086
        %v4674 = vunpack.c.h.b16 %v1086
        %v4675 = vunpack.c.l.b16 %v1087
        %v4676 = vunpack.c.h.b16 %v1087
        %v4677 = vunpack.c.l.b16 %v1088
        %v4678 = vunpack.c.h.b16 %v1088
        %v4679 = vunpack.c.l.b16 %v1089
        %v4680 = vunpack.c.h.b16 %v1089
        %v4681 = vpack.c.b16 %v4433, %v4425
        %v4682 = vpack.c.b16 %v4434, %v4426
        %v4683 = vpack.c.b16 %v4435, %v4427
        %v4684 = vpack.c.b16 %v4436, %v4428
        %v4685 = vpack.c.b16 %v4437, %v4429
        %v4686 = vpack.c.b16 %v4438, %v4430
        %v4687 = vpack.c.b16 %v4439, %v4431
        %v4688 = vpack.c.b16 %v4440, %v4432
        %v4689 = vpack.c.b16 %v4449, %v4441
        %v4690 = vpack.c.b16 %v4450, %v4442
        %v4691 = vpack.c.b16 %v4451, %v4443
        %v4692 = vpack.c.b16 %v4452, %v4444
        %v4693 = vpack.c.b16 %v4453, %v4445
        %v4694 = vpack.c.b16 %v4454, %v4446
        %v4695 = vpack.c.b16 %v4455, %v4447
        %v4696 = vpack.c.b16 %v4456, %v4448
        %v4697 = vpack.c.b16 %v4465, %v4457
        %v4698 = vpack.c.b16 %v4466, %v4458
        %v4699 = vpack.c.b16 %v4467, %v4459
        %v4700 = vpack.c.b16 %v4468, %v4460
        %v4701 = vpack.c.b16 %v4469, %v4461
        %v4702 = vpack.c.b16 %v4470, %v4462
        %v4703 = vpack.c.b16 %v4471, %v4463
        %v4704 = vpack.c.b16 %v4472, %v4464
        %v4705 = vpack.c.b16 %v4481, %v4473
        %v4706 = vpack.c.b16 %v4482, %v4474
        %v4707 = vpack.c.b16 %v4483, %v4475
        %v4708 = vpack.c.b16 %v4484, %v4476
        %v4709 = vpack.c.b16 %v4485, %v4477
        %v4710 = vpack.c.b16 %v4486, %v4478
        %v4711 = vpack.c.b16 %v4487, %v4479
        %v4712 = vpack.c.b16 %v4488, %v4480
        %v4713 = vpack.c.b16 %v4497, %v4489
        %v4714 = vpack.c.b16 %v4498, %v4490
        %v4715 = vpack.c.b16 %v4499, %v4491
        %v4716 = vpack.c.b16 %v4500, %v4492
        %v4717 = vpack.c.b16 %v4501, %v4493
        %v4718 = vpack.c.b16 %v4502, %v4494
        %v4719 = vpack.c.b16 %v4503, %v4495
        %v4720 = vpack.c.b16 %v4504, %v4496
        %v4721 = vpack.c.b16 %v4513, %v4505
        %v4722 = vpack.c.b16 %v4514, %v4506
        %v4723 = vpack.c.b16 %v4515, %v4507
        %v4724 = vpack.c.b16 %v4516, %v4508
        %v4725 = vpack.c.b16 %v4517, %v4509
        %v4726 = vpack.c.b16 %v4518, %v4510
        %v4727 = vpack.c.b16 %v4519, %v4511
        %v4728 = vpack.c.b16 %v4520, %v4512
        %v4729 = vpack.c.b16 %v4529, %v4521
        %v4730 = vpack.c.b16 %v4530, %v4522
        %v4731 = vpack.c.b16 %v4531, %v4523
        %v4732 = vpack.c.b16 %v4532, %v4524
        %v4733 = vpack.c.b16 %v4533, %v4525
        %v4734 = vpack.c.b16 %v4534, %v4526
        %v4735 = vpack.c.b16 %v4535, %v4527
        %v4736 = vpack.c.b16 %v4536, %v4528
        %v4737 = vpack.c.b16 %v4545, %v4537
        %v4738 = vpack.c.b16 %v4546, %v4538
        %v4739 = vpack.c.b16 %v4547, %v4539
        %v4740 = vpack.c.b16 %v4548, %v4540
        %v4741 = vpack.c.b16 %v4549, %v4541
        %v4742 = vpack.c.b16 %v4550, %v4542
        %v4743 = vpack.c.b16 %v4551, %v4543
        %v4744 = vpack.c.b16 %v4552, %v4544
        %v4745 = vpack.c.b16 %v4561, %v4553
        %v4746 = vpack.c.b16 %v4562, %v4554
        %v4747 = vpack.c.b16 %v4563, %v4555
        %v4748 = vpack.c.b16 %v4564, %v4556
        %v4749 = vpack.c.b16 %v4565, %v4557
        %v4750 = vpack.c.b16 %v4566, %v4558
        %v4751 = vpack.c.b16 %v4567, %v4559
        %v4752 = vpack.c.b16 %v4568, %v4560
        %v4753 = vpack.c.b16 %v4577, %v4569
        %v4754 = vpack.c.b16 %v4578, %v4570
        %v4755 = vpack.c.b16 %v4579, %v4571
        %v4756 = vpack.c.b16 %v4580, %v4572
        %v4757 = vpack.c.b16 %v4581, %v4573
        %v4758 = vpack.c.b16 %v4582, %v4574
        %v4759 = vpack.c.b16 %v4583, %v4575
        %v4760 = vpack.c.b16 %v4584, %v4576
        %v4761 = vpack.c.b16 %v4593, %v4585
        %v4762 = vpack.c.b16 %v4594, %v4586
        %v4763 = vpack.c.b16 %v4595, %v4587
        %v4764 = vpack.c.b16 %v4596, %v4588
        %v4765 = vpack.c.b16 %v4597, %v4589
        %v4766 = vpack.c.b16 %v4598, %v4590
        %v4767 = vpack.c.b16 %v4599, %v4591
        %v4768 = vpack.c.b16 %v4600, %v4592
        %v4769 = vpack.c.b16 %v4609, %v4601
        %v4770 = vpack.c.b16 %v4610, %v4602
        %v4771 = vpack.c.b16 %v4611, %v4603
        %v4772 = vpack.c.b16 %v4612, %v4604
        %v4773 = vpack.c.b16 %v4613, %v4605
        %v4774 = vpack.c.b16 %v4614, %v4606
        %v4775 = vpack.c.b16 %v4615, %v4607
        %v4776 = vpack.c.b16 %v4616, %v4608
        %v4777 = vpack.c.b16 %v4625, %v4617
        %v4778 = vpack.c.b16 %v4626, %v4618
        %v4779 = vpack.c.b16 %v4627, %v4619
        %v4780 = vpack.c.b16 %v4628, %v4620
        %v4781 = vpack.c.b16 %v4629, %v4621
        %v4782 = vpack.c.b16 %v4630, %v4622
        %v4783 = vpack.c.b16 %v4631, %v4623
        %v4784 = vpack.c.b16 %v4632, %v4624
        %v4785 = vpack.c.b16 %v4641, %v4633
        %v4786 = vpack.c.b16 %v4642, %v4634
        %v4787 = vpack.c.b16 %v4643, %v4635
        %v4788 = vpack.c.b16 %v4644, %v4636
        %v4789 = vpack.c.b16 %v4645, %v4637
        %v4790 = vpack.c.b16 %v4646, %v4638
        %v4791 = vpack.c.b16 %v4647, %v4639
        %v4792 = vpack.c.b16 %v4648, %v4640
        %v4793 = vpack.c.b16 %v4657, %v4649
        %v4794 = vpack.c.b16 %v4658, %v4650
        %v4795 = vpack.c.b16 %v4659, %v4651
        %v4796 = vpack.c.b16 %v4660, %v4652
        %v4797 = vpack.c.b16 %v4661, %v4653
        %v4798 = vpack.c.b16 %v4662, %v4654
        %v4799 = vpack.c.b16 %v4663, %v4655
        %v4800 = vpack.c.b16 %v4664, %v4656
        %v4801 = vpack.c.b16 %v4673, %v4665
        %v4802 = vpack.c.b16 %v4674, %v4666
        %v4803 = vpack.c.b16 %v4675, %v4667
        %v4804 = vpack.c.b16 %v4676, %v4668
        %v4805 = vpack.c.b16 %v4677, %v4669
        %v4806 = vpack.c.b16 %v4678, %v4670
        %v4807 = vpack.c.b16 %v4679, %v4671
        %v4808 = vpack.c.b16 %v4680, %v4672
        %4937 = vmatprep.subr.bf16.mxu0 %v4738
        %4938 = vmatpush1.bf16.msra.mxu0 %v4737
        %4939 = vmatprep.subr.bf16.mxu0 %v4730
        %4940 = vmatpush1.bf16.msra.mxu0 %v4729
        %4941 = vmatprep.subr.bf16.mxu0 %v4722
        %4942 = vmatpush1.bf16.msra.mxu0 %v4721
        %4943 = vmatprep.subr.bf16.mxu0 %v4714
        %4944 = vmatpush1.bf16.msra.mxu0 %v4713
        %4945 = vmatprep.subr.bf16.mxu0 %v4706
        %4946 = vmatpush1.bf16.msra.mxu0 %v4705
        %4947 = vmatprep.subr.bf16.mxu0 %v4698
        %4948 = vmatpush1.bf16.msra.mxu0 %v4697
        %4949 = vmatprep.subr.bf16.mxu0 %v4690
        %4950 = vmatpush1.bf16.msra.mxu0 %v4689
        %4951 = vmatprep.subr.bf16.mxu0 %v4682
        %4952 = vmatpush1.bf16.msra.mxu0 %v4681
        %4953 = vmatprep.subr.bf16.mxu0 %v4802
        %4954 = vmatpush2.bf16.msra.mxu0 %v4801
        %4955 = vmatprep.subr.bf16.mxu0 %v4794
        %4956 = vmatpush2.bf16.msra.mxu0 %v4793
        %4957 = vmatprep.subr.bf16.mxu0 %v4786
        %4958 = vmatpush2.bf16.msra.mxu0 %v4785
        %4959 = vmatprep.subr.bf16.mxu0 %v4778
        %4960 = vmatpush2.bf16.msra.mxu0 %v4777
        %4961 = vmatprep.subr.bf16.mxu0 %v4770
        %4962 = vmatpush2.bf16.msra.mxu0 %v4769
        %4963 = vmatprep.subr.bf16.mxu0 %v4762
        %4964 = vmatpush2.bf16.msra.mxu0 %v4761
        %4965 = vmatprep.subr.bf16.mxu0 %v4754
        %4966 = vmatpush2.bf16.msra.mxu0 %v4753
        %4967 = vmatprep.subr.bf16.mxu0 %v4746
        %4968 = vmatpush2.bf16.msra.mxu0 %v4745
        %4969 = vmatprep.mubr.bf16.mxu0 %v4220
        %4970 = vmatmul.mubr.bf16.gmra.mxu0 %v4219
        %v4971 = vpop.f32.mrf.mxu0
        %v4972 = vadd.f32 %v4268, %v4971
        %v4973 = vpop.f32.mrf.mxu0
        %v4974 = vadd.f32 %v4272, %v4973
        %v4975 = vpop.f32.mrf.mxu0
        %v4976 = vadd.f32 %v4268, %v4975
        %v4977 = vpop.f32.mrf.mxu0
        %v4978 = vadd.f32 %v4272, %v4977
        %4979 = vdwg.mxu0
        %4980 = vmatprep.subr.bf16.mxu0 %v4740
        %4981 = vmatpush1.bf16.msra.mxu0 %v4739
        %4982 = vmatprep.subr.bf16.mxu0 %v4732
        %4983 = vmatpush1.bf16.msra.mxu0 %v4731
        %4984 = vmatprep.subr.bf16.mxu0 %v4724
        %4985 = vmatpush1.bf16.msra.mxu0 %v4723
        %4986 = vmatprep.subr.bf16.mxu0 %v4716
        %4987 = vmatpush1.bf16.msra.mxu0 %v4715
        %4988 = vmatprep.subr.bf16.mxu0 %v4708
        %4989 = vmatpush1.bf16.msra.mxu0 %v4707
        %4990 = vmatprep.subr.bf16.mxu0 %v4700
        %4991 = vmatpush1.bf16.msra.mxu0 %v4699
        %4992 = vmatprep.subr.bf16.mxu0 %v4692
        %4993 = vmatpush1.bf16.msra.mxu0 %v4691
        %4994 = vmatprep.subr.bf16.mxu0 %v4684
        %4995 = vmatpush1.bf16.msra.mxu0 %v4683
        %4996 = vmatprep.subr.bf16.mxu0 %v4804
        %4997 = vmatpush2.bf16.msra.mxu0 %v4803
        %4998 = vmatprep.subr.bf16.mxu0 %v4796
        %4999 = vmatpush2.bf16.msra.mxu0 %v4795
        %5000 = vmatprep.subr.bf16.mxu0 %v4788
        %5001 = vmatpush2.bf16.msra.mxu0 %v4787
        %5002 = vmatprep.subr.bf16.mxu0 %v4780
        %5003 = vmatpush2.bf16.msra.mxu0 %v4779
        %5004 = vmatprep.subr.bf16.mxu0 %v4772
        %5005 = vmatpush2.bf16.msra.mxu0 %v4771
        %5006 = vmatprep.subr.bf16.mxu0 %v4764
        %5007 = vmatpush2.bf16.msra.mxu0 %v4763
        %5008 = vmatprep.subr.bf16.mxu0 %v4756
        %5009 = vmatpush2.bf16.msra.mxu0 %v4755
        %5010 = vmatprep.subr.bf16.mxu0 %v4748
        %5011 = vmatpush2.bf16.msra.mxu0 %v4747
        %5012 = vmatprep.mubr.bf16.mxu0 %v4220
        %5013 = vmatmul.mubr.bf16.gmra.mxu0 %v4219
        %v5014 = vpop.f32.mrf.mxu0
        %v5015 = vadd.f32 %v4276, %v5014
        %v5016 = vpop.f32.mrf.mxu0
        %v5017 = vadd.f32 %v4280, %v5016
        %v5018 = vpop.f32.mrf.mxu0
        %v5019 = vadd.f32 %v4276, %v5018
        %v5020 = vpop.f32.mrf.mxu0
        %v5021 = vadd.f32 %v4280, %v5020
        %5022 = vdwg.mxu0
        %5023 = vmatprep.subr.bf16.mxu0 %v4742
        %5024 = vmatpush1.bf16.msra.mxu0 %v4741
        %5025 = vmatprep.subr.bf16.mxu0 %v4734
        %5026 = vmatpush1.bf16.msra.mxu0 %v4733
        %5027 = vmatprep.subr.bf16.mxu0 %v4726
        %5028 = vmatpush1.bf16.msra.mxu0 %v4725
        %5029 = vmatprep.subr.bf16.mxu0 %v4718
        %5030 = vmatpush1.bf16.msra.mxu0 %v4717
        %5031 = vmatprep.subr.bf16.mxu0 %v4710
        %5032 = vmatpush1.bf16.msra.mxu0 %v4709
        %5033 = vmatprep.subr.bf16.mxu0 %v4702
        %5034 = vmatpush1.bf16.msra.mxu0 %v4701
        %5035 = vmatprep.subr.bf16.mxu0 %v4694
        %5036 = vmatpush1.bf16.msra.mxu0 %v4693
        %5037 = vmatprep.subr.bf16.mxu0 %v4686
        %5038 = vmatpush1.bf16.msra.mxu0 %v4685
        %5039 = vmatprep.subr.bf16.mxu0 %v4806
        %5040 = vmatpush2.bf16.msra.mxu0 %v4805
        %5041 = vmatprep.subr.bf16.mxu0 %v4798
        %5042 = vmatpush2.bf16.msra.mxu0 %v4797
        %5043 = vmatprep.subr.bf16.mxu0 %v4790
        %5044 = vmatpush2.bf16.msra.mxu0 %v4789
        %5045 = vmatprep.subr.bf16.mxu0 %v4782
        %5046 = vmatpush2.bf16.msra.mxu0 %v4781
        %5047 = vmatprep.subr.bf16.mxu0 %v4774
        %5048 = vmatpush2.bf16.msra.mxu0 %v4773
        %5049 = vmatprep.subr.bf16.mxu0 %v4766
        %5050 = vmatpush2.bf16.msra.mxu0 %v4765
        %5051 = vmatprep.subr.bf16.mxu0 %v4758
        %5052 = vmatpush2.bf16.msra.mxu0 %v4757
        %5053 = vmatprep.subr.bf16.mxu0 %v4750
        %5054 = vmatpush2.bf16.msra.mxu0 %v4749
        %5055 = vmatprep.mubr.bf16.mxu0 %v4220
        %5056 = vmatmul.mubr.bf16.gmra.mxu0 %v4219
        %v5057 = vpop.f32.mrf.mxu0
        %v5058 = vadd.f32 %v4284, %v5057
        %v5059 = vpop.f32.mrf.mxu0
        %v5060 = vadd.f32 %v4288, %v5059
        %v5061 = vpop.f32.mrf.mxu0
        %v5062 = vadd.f32 %v4284, %v5061
        %v5063 = vpop.f32.mrf.mxu0
        %v5064 = vadd.f32 %v4288, %v5063
        %5065 = vdwg.mxu0
        %5066 = vmatprep.subr.bf16.mxu0 %v4744
        %5067 = vmatpush1.bf16.msra.mxu0 %v4743
        %5068 = vmatprep.subr.bf16.mxu0 %v4736
        %5069 = vmatpush1.bf16.msra.mxu0 %v4735
        %5070 = vmatprep.subr.bf16.mxu0 %v4728
        %5071 = vmatpush1.bf16.msra.mxu0 %v4727
        %5072 = vmatprep.subr.bf16.mxu0 %v4720
        %5073 = vmatpush1.bf16.msra.mxu0 %v4719
        %5074 = vmatprep.subr.bf16.mxu0 %v4712
        %5075 = vmatpush1.bf16.msra.mxu0 %v4711
        %5076 = vmatprep.subr.bf16.mxu0 %v4704
        %5077 = vmatpush1.bf16.msra.mxu0 %v4703
        %5078 = vmatprep.subr.bf16.mxu0 %v4696
        %5079 = vmatpush1.bf16.msra.mxu0 %v4695
        %5080 = vmatprep.subr.bf16.mxu0 %v4688
        %5081 = vmatpush1.bf16.msra.mxu0 %v4687
        %5082 = vmatprep.subr.bf16.mxu0 %v4808
        %5083 = vmatpush2.bf16.msra.mxu0 %v4807
        %5084 = vmatprep.subr.bf16.mxu0 %v4800
        %5085 = vmatpush2.bf16.msra.mxu0 %v4799
        %5086 = vmatprep.subr.bf16.mxu0 %v4792
        %5087 = vmatpush2.bf16.msra.mxu0 %v4791
        %5088 = vmatprep.subr.bf16.mxu0 %v4784
        %5089 = vmatpush2.bf16.msra.mxu0 %v4783
        %5090 = vmatprep.subr.bf16.mxu0 %v4776
        %5091 = vmatpush2.bf16.msra.mxu0 %v4775
        %5092 = vmatprep.subr.bf16.mxu0 %v4768
        %5093 = vmatpush2.bf16.msra.mxu0 %v4767
        %5094 = vmatprep.subr.bf16.mxu0 %v4760
        %5095 = vmatpush2.bf16.msra.mxu0 %v4759
        %5096 = vmatprep.subr.bf16.mxu0 %v4752
        %5097 = vmatpush2.bf16.msra.mxu0 %v4751
        %5098 = vmatprep.mubr.bf16.mxu0 %v4220
        %5099 = vmatmul.mubr.bf16.gmra.mxu0 %v4219
        %v5100 = vpop.f32.mrf.mxu0
        %v5101 = vadd.f32 %v4292, %v5100
        %v5102 = vpop.f32.mrf.mxu0
        %v5103 = vadd.f32 %v4296, %v5102
        %v5104 = vpop.f32.mrf.mxu0
        %v5105 = vadd.f32 %v4292, %v5104
        %v5106 = vpop.f32.mrf.mxu0
        %v5107 = vadd.f32 %v4296, %v5106
        %5108 = vdwg.mxu0
        %v5109 = vmul.f32 %v4972, 1.702
        %v5110 = vmul.f32 %v4974, 1.702
        %v5111 = vmul.f32 %v5015, 1.702
        %v5112 = vmul.f32 %v5017, 1.702
        %v5113 = vmul.f32 %v5058, 1.702
        %v5114 = vmul.f32 %v5060, 1.702
        %v5115 = vmul.f32 %v5101, 1.702
        %v5116 = vmul.f32 %v5103, 1.702
        %v5117 = vmul.f32 %v4976, 1.702
        %v5118 = vmul.f32 %v4978, 1.702
        %v5119 = vmul.f32 %v5019, 1.702
        %v5120 = vmul.f32 %v5021, 1.702
        %v5121 = vmul.f32 %v5062, 1.702
        %v5122 = vmul.f32 %v5064, 1.702
        %v5123 = vmul.f32 %v5105, 1.702
        %v5124 = vmul.f32 %v5107, 1.702
        %v5125 = vxor.u32 %v5109, 2147483648
        %v5126 = vxor.u32 %v5110, 2147483648
        %v5127 = vxor.u32 %v5111, 2147483648
        %v5128 = vxor.u32 %v5112, 2147483648
        %v5129 = vxor.u32 %v5113, 2147483648
        %v5130 = vxor.u32 %v5114, 2147483648
        %v5131 = vxor.u32 %v5115, 2147483648
        %v5132 = vxor.u32 %v5116, 2147483648
        %v5133 = vxor.u32 %v5117, 2147483648
        %v5134 = vxor.u32 %v5118, 2147483648
        %v5135 = vxor.u32 %v5119, 2147483648
        %v5136 = vxor.u32 %v5120, 2147483648
        %v5137 = vxor.u32 %v5121, 2147483648
        %v5138 = vxor.u32 %v5122, 2147483648
        %v5139 = vxor.u32 %v5123, 2147483648
        %v5140 = vxor.u32 %v5124, 2147483648
        %v5141 = vmul.f32 %v5125, 1.442695
        %v5142 = vpow.pop %v5141
        %v5143 = vmul.f32 %v5126, 1.442695
        %v5144 = vpow.pop %v5143
        %v5145 = vmul.f32 %v5127, 1.442695
        %v5146 = vpow.pop %v5145
        %v5147 = vmul.f32 %v5128, 1.442695
        %v5148 = vpow.pop %v5147
        %v5149 = vmul.f32 %v5129, 1.442695
        %v5150 = vpow.pop %v5149
        %v5151 = vmul.f32 %v5130, 1.442695
        %v5152 = vpow.pop %v5151
        %v5153 = vmul.f32 %v5131, 1.442695
        %v5154 = vpow.pop %v5153
        %v5155 = vmul.f32 %v5132, 1.442695
        %v5156 = vpow.pop %v5155
        %v5157 = vmul.f32 %v5133, 1.442695
        %v5158 = vpow.pop %v5157
        %v5159 = vmul.f32 %v5134, 1.442695
        %v5160 = vpow.pop %v5159
        %v5161 = vmul.f32 %v5135, 1.442695
        %v5162 = vpow.pop %v5161
        %v5163 = vmul.f32 %v5136, 1.442695
        %v5164 = vpow.pop %v5163
        %v5165 = vmul.f32 %v5137, 1.442695
        %v5166 = vpow.pop %v5165
        %v5167 = vmul.f32 %v5138, 1.442695
        %v5168 = vpow.pop %v5167
        %v5169 = vmul.f32 %v5139, 1.442695
        %v5170 = vpow.pop %v5169
        %v5171 = vmul.f32 %v5140, 1.442695
        %v5172 = vpow.pop %v5171
        %v5173 = vadd.f32 %v5142, 1.0
        %v5174 = vadd.f32 %v5144, 1.0
        %v5175 = vadd.f32 %v5146, 1.0
        %v5176 = vadd.f32 %v5148, 1.0
        %v5177 = vadd.f32 %v5150, 1.0
        %v5178 = vadd.f32 %v5152, 1.0
        %v5179 = vadd.f32 %v5154, 1.0
        %v5180 = vadd.f32 %v5156, 1.0
        %v5181 = vadd.f32 %v5158, 1.0
        %v5182 = vadd.f32 %v5160, 1.0
        %v5183 = vadd.f32 %v5162, 1.0
        %v5184 = vadd.f32 %v5164, 1.0
        %v5185 = vadd.f32 %v5166, 1.0
        %v5186 = vadd.f32 %v5168, 1.0
        %v5187 = vadd.f32 %v5170, 1.0
        %v5188 = vadd.f32 %v5172, 1.0
        %v5189 = vrcp.pop %v5173
        %v5190 = vmul.f32 1.0, %v5189
        %v5191 = vrcp.pop %v5174
        %v5192 = vmul.f32 1.0, %v5191
        %v5193 = vrcp.pop %v5175
        %v5194 = vmul.f32 1.0, %v5193
        %v5195 = vrcp.pop %v5176
        %v5196 = vmul.f32 1.0, %v5195
        %v5197 = vrcp.pop %v5177
        %v5198 = vmul.f32 1.0, %v5197
        %v5199 = vrcp.pop %v5178
        %v5200 = vmul.f32 1.0, %v5199
        %v5201 = vrcp.pop %v5179
        %v5202 = vmul.f32 1.0, %v5201
        %v5203 = vrcp.pop %v5180
        %v5204 = vmul.f32 1.0, %v5203
        %v5205 = vrcp.pop %v5181
        %v5206 = vmul.f32 1.0, %v5205
        %v5207 = vrcp.pop %v5182
        %v5208 = vmul.f32 1.0, %v5207
        %v5209 = vrcp.pop %v5183
        %v5210 = vmul.f32 1.0, %v5209
        %v5211 = vrcp.pop %v5184
        %v5212 = vmul.f32 1.0, %v5211
        %v5213 = vrcp.pop %v5185
        %v5214 = vmul.f32 1.0, %v5213
        %v5215 = vrcp.pop %v5186
        %v5216 = vmul.f32 1.0, %v5215
        %v5217 = vrcp.pop %v5187
        %v5218 = vmul.f32 1.0, %v5217
        %v5219 = vrcp.pop %v5188
        %v5220 = vmul.f32 1.0, %v5219
        %v5221 = vmul.f32 %v4972, %v5190
        %v5222 = vmul.f32 %v4974, %v5192
        %v5223 = vmul.f32 %v5015, %v5194
        %v5224 = vmul.f32 %v5017, %v5196
        %v5225 = vmul.f32 %v5058, %v5198
        %v5226 = vmul.f32 %v5060, %v5200
        %v5227 = vmul.f32 %v5101, %v5202
        %v5228 = vmul.f32 %v5103, %v5204
        %v5229 = vmul.f32 %v4976, %v5206
        %v5230 = vmul.f32 %v4978, %v5208
        %v5231 = vmul.f32 %v5019, %v5210
        %v5232 = vmul.f32 %v5021, %v5212
        %v5233 = vmul.f32 %v5062, %v5214
        %v5234 = vmul.f32 %v5064, %v5216
        %v5235 = vmul.f32 %v5105, %v5218
        %v5236 = vmul.f32 %v5107, %v5220
        %v5237 = vpack.c.bf16 %v5229, %v5221
        %v5238 = vpack.c.bf16 %v5230, %v5222
        %v5239 = vpack.c.bf16 %v5231, %v5223
        %v5240 = vpack.c.bf16 %v5232, %v5224
        %v5241 = vpack.c.bf16 %v5233, %v5225
        %v5242 = vpack.c.bf16 %v5234, %v5226
        %v5243 = vpack.c.bf16 %v5235, %v5227
        %v5244 = vpack.c.bf16 %v5236, %v5228
        %v5245 = vunpack.c.l.bf16 %v1219
        %v5247 = vlaneseq
        %v5248 = vshrl.u32 %v5247, 7
        %v5249 = vsub.s32 0, %v5248
        %v5250 = vrot.slane %v5245, %v5249
        %v5251 = vlaneseq
        %v5252 = vshrl.u32 %v5251, 7
        %v5253 = vsub.s32 2, %v5252
        %v5254 = vrot.slane %v5245, %v5253
        %v5257 = vlaneseq
        %v5258 = vshrl.u32 %v5257, 7
        %v5259 = vsub.s32 0, %v5258
        %v5260 = vrot.slane %v5250, %v5259
        %v5261 = vlaneseq
        %v5262 = vshrl.u32 %v5261, 7
        %v5263 = vsub.s32 0, %v5262
        %v5264 = vrot.slane %v5254, %v5263
        %v5393 = vunpack.c.l.b16 %v1091
        %v5394 = vunpack.c.h.b16 %v1091
        %v5395 = vunpack.c.l.b16 %v1092
        %v5396 = vunpack.c.h.b16 %v1092
        %v5397 = vunpack.c.l.b16 %v1093
        %v5398 = vunpack.c.h.b16 %v1093
        %v5399 = vunpack.c.l.b16 %v1094
        %v5400 = vunpack.c.h.b16 %v1094
        %v5401 = vunpack.c.l.b16 %v1095
        %v5402 = vunpack.c.h.b16 %v1095
        %v5403 = vunpack.c.l.b16 %v1096
        %v5404 = vunpack.c.h.b16 %v1096
        %v5405 = vunpack.c.l.b16 %v1097
        %v5406 = vunpack.c.h.b16 %v1097
        %v5407 = vunpack.c.l.b16 %v1098
        %v5408 = vunpack.c.h.b16 %v1098
        %v5409 = vunpack.c.l.b16 %v1099
        %v5410 = vunpack.c.h.b16 %v1099
        %v5411 = vunpack.c.l.b16 %v1100
        %v5412 = vunpack.c.h.b16 %v1100
        %v5413 = vunpack.c.l.b16 %v1101
        %v5414 = vunpack.c.h.b16 %v1101
        %v5415 = vunpack.c.l.b16 %v1102
        %v5416 = vunpack.c.h.b16 %v1102
        %v5417 = vunpack.c.l.b16 %v1103
        %v5418 = vunpack.c.h.b16 %v1103
        %v5419 = vunpack.c.l.b16 %v1104
        %v5420 = vunpack.c.h.b16 %v1104
        %v5421 = vunpack.c.l.b16 %v1105
        %v5422 = vunpack.c.h.b16 %v1105
        %v5423 = vunpack.c.l.b16 %v1106
        %v5424 = vunpack.c.h.b16 %v1106
        %v5425 = vunpack.c.l.b16 %v1107
        %v5426 = vunpack.c.h.b16 %v1107
        %v5427 = vunpack.c.l.b16 %v1108
        %v5428 = vunpack.c.h.b16 %v1108
        %v5429 = vunpack.c.l.b16 %v1109
        %v5430 = vunpack.c.h.b16 %v1109
        %v5431 = vunpack.c.l.b16 %v1110
        %v5432 = vunpack.c.h.b16 %v1110
        %v5433 = vunpack.c.l.b16 %v1111
        %v5434 = vunpack.c.h.b16 %v1111
        %v5435 = vunpack.c.l.b16 %v1112
        %v5436 = vunpack.c.h.b16 %v1112
        %v5437 = vunpack.c.l.b16 %v1113
        %v5438 = vunpack.c.h.b16 %v1113
        %v5439 = vunpack.c.l.b16 %v1114
        %v5440 = vunpack.c.h.b16 %v1114
        %v5441 = vunpack.c.l.b16 %v1115
        %v5442 = vunpack.c.h.b16 %v1115
        %v5443 = vunpack.c.l.b16 %v1116
        %v5444 = vunpack.c.h.b16 %v1116
        %v5445 = vunpack.c.l.b16 %v1117
        %v5446 = vunpack.c.h.b16 %v1117
        %v5447 = vunpack.c.l.b16 %v1118
        %v5448 = vunpack.c.h.b16 %v1118
        %v5449 = vunpack.c.l.b16 %v1119
        %v5450 = vunpack.c.h.b16 %v1119
        %v5451 = vunpack.c.l.b16 %v1120
        %v5452 = vunpack.c.h.b16 %v1120
        %v5453 = vunpack.c.l.b16 %v1121
        %v5454 = vunpack.c.h.b16 %v1121
        %v5455 = vunpack.c.l.b16 %v1122
        %v5456 = vunpack.c.h.b16 %v1122
        %v5457 = vunpack.c.l.b16 %v1123
        %v5458 = vunpack.c.h.b16 %v1123
        %v5459 = vunpack.c.l.b16 %v1124
        %v5460 = vunpack.c.h.b16 %v1124
        %v5461 = vunpack.c.l.b16 %v1125
        %v5462 = vunpack.c.h.b16 %v1125
        %v5463 = vunpack.c.l.b16 %v1126
        %v5464 = vunpack.c.h.b16 %v1126
        %v5465 = vunpack.c.l.b16 %v1127
        %v5466 = vunpack.c.h.b16 %v1127
        %v5467 = vunpack.c.l.b16 %v1128
        %v5468 = vunpack.c.h.b16 %v1128
        %v5469 = vunpack.c.l.b16 %v1129
        %v5470 = vunpack.c.h.b16 %v1129
        %v5471 = vunpack.c.l.b16 %v1130
        %v5472 = vunpack.c.h.b16 %v1130
        %v5473 = vunpack.c.l.b16 %v1131
        %v5474 = vunpack.c.h.b16 %v1131
        %v5475 = vunpack.c.l.b16 %v1132
        %v5476 = vunpack.c.h.b16 %v1132
        %v5477 = vunpack.c.l.b16 %v1133
        %v5478 = vunpack.c.h.b16 %v1133
        %v5479 = vunpack.c.l.b16 %v1134
        %v5480 = vunpack.c.h.b16 %v1134
        %v5481 = vunpack.c.l.b16 %v1135
        %v5482 = vunpack.c.h.b16 %v1135
        %v5483 = vunpack.c.l.b16 %v1136
        %v5484 = vunpack.c.h.b16 %v1136
        %v5485 = vunpack.c.l.b16 %v1137
        %v5486 = vunpack.c.h.b16 %v1137
        %v5487 = vunpack.c.l.b16 %v1138
        %v5488 = vunpack.c.h.b16 %v1138
        %v5489 = vunpack.c.l.b16 %v1139
        %v5490 = vunpack.c.h.b16 %v1139
        %v5491 = vunpack.c.l.b16 %v1140
        %v5492 = vunpack.c.h.b16 %v1140
        %v5493 = vunpack.c.l.b16 %v1141
        %v5494 = vunpack.c.h.b16 %v1141
        %v5495 = vunpack.c.l.b16 %v1142
        %v5496 = vunpack.c.h.b16 %v1142
        %v5497 = vunpack.c.l.b16 %v1143
        %v5498 = vunpack.c.h.b16 %v1143
        %v5499 = vunpack.c.l.b16 %v1144
        %v5500 = vunpack.c.h.b16 %v1144
        %v5501 = vunpack.c.l.b16 %v1145
        %v5502 = vunpack.c.h.b16 %v1145
        %v5503 = vunpack.c.l.b16 %v1146
        %v5504 = vunpack.c.h.b16 %v1146
        %v5505 = vunpack.c.l.b16 %v1147
        %v5506 = vunpack.c.h.b16 %v1147
        %v5507 = vunpack.c.l.b16 %v1148
        %v5508 = vunpack.c.h.b16 %v1148
        %v5509 = vunpack.c.l.b16 %v1149
        %v5510 = vunpack.c.h.b16 %v1149
        %v5511 = vunpack.c.l.b16 %v1150
        %v5512 = vunpack.c.h.b16 %v1150
        %v5513 = vunpack.c.l.b16 %v1151
        %v5514 = vunpack.c.h.b16 %v1151
        %v5515 = vunpack.c.l.b16 %v1152
        %v5516 = vunpack.c.h.b16 %v1152
        %v5517 = vunpack.c.l.b16 %v1153
        %v5518 = vunpack.c.h.b16 %v1153
        %v5519 = vunpack.c.l.b16 %v1154
        %v5520 = vunpack.c.h.b16 %v1154
        %v5521 = vunpack.c.l.b16 %v1155
        %v5522 = vunpack.c.h.b16 %v1155
        %v5523 = vunpack.c.l.b16 %v1156
        %v5524 = vunpack.c.h.b16 %v1156
        %v5525 = vunpack.c.l.b16 %v1157
        %v5526 = vunpack.c.h.b16 %v1157
        %v5527 = vunpack.c.l.b16 %v1158
        %v5528 = vunpack.c.h.b16 %v1158
        %v5529 = vunpack.c.l.b16 %v1159
        %v5530 = vunpack.c.h.b16 %v1159
        %v5531 = vunpack.c.l.b16 %v1160
        %v5532 = vunpack.c.h.b16 %v1160
        %v5533 = vunpack.c.l.b16 %v1161
        %v5534 = vunpack.c.h.b16 %v1161
        %v5535 = vunpack.c.l.b16 %v1162
        %v5536 = vunpack.c.h.b16 %v1162
        %v5537 = vunpack.c.l.b16 %v1163
        %v5538 = vunpack.c.h.b16 %v1163
        %v5539 = vunpack.c.l.b16 %v1164
        %v5540 = vunpack.c.h.b16 %v1164
        %v5541 = vunpack.c.l.b16 %v1165
        %v5542 = vunpack.c.h.b16 %v1165
        %v5543 = vunpack.c.l.b16 %v1166
        %v5544 = vunpack.c.h.b16 %v1166
        %v5545 = vunpack.c.l.b16 %v1167
        %v5546 = vunpack.c.h.b16 %v1167
        %v5547 = vunpack.c.l.b16 %v1168
        %v5548 = vunpack.c.h.b16 %v1168
        %v5549 = vunpack.c.l.b16 %v1169
        %v5550 = vunpack.c.h.b16 %v1169
        %v5551 = vunpack.c.l.b16 %v1170
        %v5552 = vunpack.c.h.b16 %v1170
        %v5553 = vunpack.c.l.b16 %v1171
        %v5554 = vunpack.c.h.b16 %v1171
        %v5555 = vunpack.c.l.b16 %v1172
        %v5556 = vunpack.c.h.b16 %v1172
        %v5557 = vunpack.c.l.b16 %v1173
        %v5558 = vunpack.c.h.b16 %v1173
        %v5559 = vunpack.c.l.b16 %v1174
        %v5560 = vunpack.c.h.b16 %v1174
        %v5561 = vunpack.c.l.b16 %v1175
        %v5562 = vunpack.c.h.b16 %v1175
        %v5563 = vunpack.c.l.b16 %v1176
        %v5564 = vunpack.c.h.b16 %v1176
        %v5565 = vunpack.c.l.b16 %v1177
        %v5566 = vunpack.c.h.b16 %v1177
        %v5567 = vunpack.c.l.b16 %v1178
        %v5568 = vunpack.c.h.b16 %v1178
        %v5569 = vunpack.c.l.b16 %v1179
        %v5570 = vunpack.c.h.b16 %v1179
        %v5571 = vunpack.c.l.b16 %v1180
        %v5572 = vunpack.c.h.b16 %v1180
        %v5573 = vunpack.c.l.b16 %v1181
        %v5574 = vunpack.c.h.b16 %v1181
        %v5575 = vunpack.c.l.b16 %v1182
        %v5576 = vunpack.c.h.b16 %v1182
        %v5577 = vunpack.c.l.b16 %v1183
        %v5578 = vunpack.c.h.b16 %v1183
        %v5579 = vunpack.c.l.b16 %v1184
        %v5580 = vunpack.c.h.b16 %v1184
        %v5581 = vunpack.c.l.b16 %v1185
        %v5582 = vunpack.c.h.b16 %v1185
        %v5583 = vunpack.c.l.b16 %v1186
        %v5584 = vunpack.c.h.b16 %v1186
        %v5585 = vunpack.c.l.b16 %v1187
        %v5586 = vunpack.c.h.b16 %v1187
        %v5587 = vunpack.c.l.b16 %v1188
        %v5588 = vunpack.c.h.b16 %v1188
        %v5589 = vunpack.c.l.b16 %v1189
        %v5590 = vunpack.c.h.b16 %v1189
        %v5591 = vunpack.c.l.b16 %v1190
        %v5592 = vunpack.c.h.b16 %v1190
        %v5593 = vunpack.c.l.b16 %v1191
        %v5594 = vunpack.c.h.b16 %v1191
        %v5595 = vunpack.c.l.b16 %v1192
        %v5596 = vunpack.c.h.b16 %v1192
        %v5597 = vunpack.c.l.b16 %v1193
        %v5598 = vunpack.c.h.b16 %v1193
        %v5599 = vunpack.c.l.b16 %v1194
        %v5600 = vunpack.c.h.b16 %v1194
        %v5601 = vunpack.c.l.b16 %v1195
        %v5602 = vunpack.c.h.b16 %v1195
        %v5603 = vunpack.c.l.b16 %v1196
        %v5604 = vunpack.c.h.b16 %v1196
        %v5605 = vunpack.c.l.b16 %v1197
        %v5606 = vunpack.c.h.b16 %v1197
        %v5607 = vunpack.c.l.b16 %v1198
        %v5608 = vunpack.c.h.b16 %v1198
        %v5609 = vunpack.c.l.b16 %v1199
        %v5610 = vunpack.c.h.b16 %v1199
        %v5611 = vunpack.c.l.b16 %v1200
        %v5612 = vunpack.c.h.b16 %v1200
        %v5613 = vunpack.c.l.b16 %v1201
        %v5614 = vunpack.c.h.b16 %v1201
        %v5615 = vunpack.c.l.b16 %v1202
        %v5616 = vunpack.c.h.b16 %v1202
        %v5617 = vunpack.c.l.b16 %v1203
        %v5618 = vunpack.c.h.b16 %v1203
        %v5619 = vunpack.c.l.b16 %v1204
        %v5620 = vunpack.c.h.b16 %v1204
        %v5621 = vunpack.c.l.b16 %v1205
        %v5622 = vunpack.c.h.b16 %v1205
        %v5623 = vunpack.c.l.b16 %v1206
        %v5624 = vunpack.c.h.b16 %v1206
        %v5625 = vunpack.c.l.b16 %v1207
        %v5626 = vunpack.c.h.b16 %v1207
        %v5627 = vunpack.c.l.b16 %v1208
        %v5628 = vunpack.c.h.b16 %v1208
        %v5629 = vunpack.c.l.b16 %v1209
        %v5630 = vunpack.c.h.b16 %v1209
        %v5631 = vunpack.c.l.b16 %v1210
        %v5632 = vunpack.c.h.b16 %v1210
        %v5633 = vunpack.c.l.b16 %v1211
        %v5634 = vunpack.c.h.b16 %v1211
        %v5635 = vunpack.c.l.b16 %v1212
        %v5636 = vunpack.c.h.b16 %v1212
        %v5637 = vunpack.c.l.b16 %v1213
        %v5638 = vunpack.c.h.b16 %v1213
        %v5639 = vunpack.c.l.b16 %v1214
        %v5640 = vunpack.c.h.b16 %v1214
        %v5641 = vunpack.c.l.b16 %v1215
        %v5642 = vunpack.c.h.b16 %v1215
        %v5643 = vunpack.c.l.b16 %v1216
        %v5644 = vunpack.c.h.b16 %v1216
        %v5645 = vunpack.c.l.b16 %v1217
        %v5646 = vunpack.c.h.b16 %v1217
        %v5647 = vunpack.c.l.b16 %v1218
        %v5648 = vunpack.c.h.b16 %v1218
        %v5649 = vpack.c.b16 %v5395, %v5393
        %v5650 = vpack.c.b16 %v5396, %v5394
        %v5651 = vpack.c.b16 %v5399, %v5397
        %v5652 = vpack.c.b16 %v5400, %v5398
        %v5653 = vpack.c.b16 %v5403, %v5401
        %v5654 = vpack.c.b16 %v5404, %v5402
        %v5655 = vpack.c.b16 %v5407, %v5405
        %v5656 = vpack.c.b16 %v5408, %v5406
        %v5657 = vpack.c.b16 %v5411, %v5409
        %v5658 = vpack.c.b16 %v5412, %v5410
        %v5659 = vpack.c.b16 %v5415, %v5413
        %v5660 = vpack.c.b16 %v5416, %v5414
        %v5661 = vpack.c.b16 %v5419, %v5417
        %v5662 = vpack.c.b16 %v5420, %v5418
        %v5663 = vpack.c.b16 %v5423, %v5421
        %v5664 = vpack.c.b16 %v5424, %v5422
        %v5665 = vpack.c.b16 %v5427, %v5425
        %v5666 = vpack.c.b16 %v5428, %v5426
        %v5667 = vpack.c.b16 %v5431, %v5429
        %v5668 = vpack.c.b16 %v5432, %v5430
        %v5669 = vpack.c.b16 %v5435, %v5433
        %v5670 = vpack.c.b16 %v5436, %v5434
        %v5671 = vpack.c.b16 %v5439, %v5437
        %v5672 = vpack.c.b16 %v5440, %v5438
        %v5673 = vpack.c.b16 %v5443, %v5441
        %v5674 = vpack.c.b16 %v5444, %v5442
        %v5675 = vpack.c.b16 %v5447, %v5445
        %v5676 = vpack.c.b16 %v5448, %v5446
        %v5677 = vpack.c.b16 %v5451, %v5449
        %v5678 = vpack.c.b16 %v5452, %v5450
        %v5679 = vpack.c.b16 %v5455, %v5453
        %v5680 = vpack.c.b16 %v5456, %v5454
        %v5681 = vpack.c.b16 %v5459, %v5457
        %v5682 = vpack.c.b16 %v5460, %v5458
        %v5683 = vpack.c.b16 %v5463, %v5461
        %v5684 = vpack.c.b16 %v5464, %v5462
        %v5685 = vpack.c.b16 %v5467, %v5465
        %v5686 = vpack.c.b16 %v5468, %v5466
        %v5687 = vpack.c.b16 %v5471, %v5469
        %v5688 = vpack.c.b16 %v5472, %v5470
        %v5689 = vpack.c.b16 %v5475, %v5473
        %v5690 = vpack.c.b16 %v5476, %v5474
        %v5691 = vpack.c.b16 %v5479, %v5477
        %v5692 = vpack.c.b16 %v5480, %v5478
        %v5693 = vpack.c.b16 %v5483, %v5481
        %v5694 = vpack.c.b16 %v5484, %v5482
        %v5695 = vpack.c.b16 %v5487, %v5485
        %v5696 = vpack.c.b16 %v5488, %v5486
        %v5697 = vpack.c.b16 %v5491, %v5489
        %v5698 = vpack.c.b16 %v5492, %v5490
        %v5699 = vpack.c.b16 %v5495, %v5493
        %v5700 = vpack.c.b16 %v5496, %v5494
        %v5701 = vpack.c.b16 %v5499, %v5497
        %v5702 = vpack.c.b16 %v5500, %v5498
        %v5703 = vpack.c.b16 %v5503, %v5501
        %v5704 = vpack.c.b16 %v5504, %v5502
        %v5705 = vpack.c.b16 %v5507, %v5505
        %v5706 = vpack.c.b16 %v5508, %v5506
        %v5707 = vpack.c.b16 %v5511, %v5509
        %v5708 = vpack.c.b16 %v5512, %v5510
        %v5709 = vpack.c.b16 %v5515, %v5513
        %v5710 = vpack.c.b16 %v5516, %v5514
        %v5711 = vpack.c.b16 %v5519, %v5517
        %v5712 = vpack.c.b16 %v5520, %v5518
        %v5713 = vpack.c.b16 %v5523, %v5521
        %v5714 = vpack.c.b16 %v5524, %v5522
        %v5715 = vpack.c.b16 %v5527, %v5525
        %v5716 = vpack.c.b16 %v5528, %v5526
        %v5717 = vpack.c.b16 %v5531, %v5529
        %v5718 = vpack.c.b16 %v5532, %v5530
        %v5719 = vpack.c.b16 %v5535, %v5533
        %v5720 = vpack.c.b16 %v5536, %v5534
        %v5721 = vpack.c.b16 %v5539, %v5537
        %v5722 = vpack.c.b16 %v5540, %v5538
        %v5723 = vpack.c.b16 %v5543, %v5541
        %v5724 = vpack.c.b16 %v5544, %v5542
        %v5725 = vpack.c.b16 %v5547, %v5545
        %v5726 = vpack.c.b16 %v5548, %v5546
        %v5727 = vpack.c.b16 %v5551, %v5549
        %v5728 = vpack.c.b16 %v5552, %v5550
        %v5729 = vpack.c.b16 %v5555, %v5553
        %v5730 = vpack.c.b16 %v5556, %v5554
        %v5731 = vpack.c.b16 %v5559, %v5557
        %v5732 = vpack.c.b16 %v5560, %v5558
        %v5733 = vpack.c.b16 %v5563, %v5561
        %v5734 = vpack.c.b16 %v5564, %v5562
        %v5735 = vpack.c.b16 %v5567, %v5565
        %v5736 = vpack.c.b16 %v5568, %v5566
        %v5737 = vpack.c.b16 %v5571, %v5569
        %v5738 = vpack.c.b16 %v5572, %v5570
        %v5739 = vpack.c.b16 %v5575, %v5573
        %v5740 = vpack.c.b16 %v5576, %v5574
        %v5741 = vpack.c.b16 %v5579, %v5577
        %v5742 = vpack.c.b16 %v5580, %v5578
        %v5743 = vpack.c.b16 %v5583, %v5581
        %v5744 = vpack.c.b16 %v5584, %v5582
        %v5745 = vpack.c.b16 %v5587, %v5585
        %v5746 = vpack.c.b16 %v5588, %v5586
        %v5747 = vpack.c.b16 %v5591, %v5589
        %v5748 = vpack.c.b16 %v5592, %v5590
        %v5749 = vpack.c.b16 %v5595, %v5593
        %v5750 = vpack.c.b16 %v5596, %v5594
        %v5751 = vpack.c.b16 %v5599, %v5597
        %v5752 = vpack.c.b16 %v5600, %v5598
        %v5753 = vpack.c.b16 %v5603, %v5601
        %v5754 = vpack.c.b16 %v5604, %v5602
        %v5755 = vpack.c.b16 %v5607, %v5605
        %v5756 = vpack.c.b16 %v5608, %v5606
        %v5757 = vpack.c.b16 %v5611, %v5609
        %v5758 = vpack.c.b16 %v5612, %v5610
        %v5759 = vpack.c.b16 %v5615, %v5613
        %v5760 = vpack.c.b16 %v5616, %v5614
        %v5761 = vpack.c.b16 %v5619, %v5617
        %v5762 = vpack.c.b16 %v5620, %v5618
        %v5763 = vpack.c.b16 %v5623, %v5621
        %v5764 = vpack.c.b16 %v5624, %v5622
        %v5765 = vpack.c.b16 %v5627, %v5625
        %v5766 = vpack.c.b16 %v5628, %v5626
        %v5767 = vpack.c.b16 %v5631, %v5629
        %v5768 = vpack.c.b16 %v5632, %v5630
        %v5769 = vpack.c.b16 %v5635, %v5633
        %v5770 = vpack.c.b16 %v5636, %v5634
        %v5771 = vpack.c.b16 %v5639, %v5637
        %v5772 = vpack.c.b16 %v5640, %v5638
        %v5773 = vpack.c.b16 %v5643, %v5641
        %v5774 = vpack.c.b16 %v5644, %v5642
        %v5775 = vpack.c.b16 %v5647, %v5645
        %v5776 = vpack.c.b16 %v5648, %v5646
        %5905 = vmatprep.subr.bf16.mxu0 %v5664
        %5906 = vmatpush1.bf16.msra.mxu0 %v5663
        %5907 = vmatprep.subr.bf16.mxu0 %v5662
        %5908 = vmatpush1.bf16.msra.mxu0 %v5661
        %5909 = vmatprep.subr.bf16.mxu0 %v5660
        %5910 = vmatpush1.bf16.msra.mxu0 %v5659
        %5911 = vmatprep.subr.bf16.mxu0 %v5658
        %5912 = vmatpush1.bf16.msra.mxu0 %v5657
        %5913 = vmatprep.subr.bf16.mxu0 %v5656
        %5914 = vmatpush1.bf16.msra.mxu0 %v5655
        %5915 = vmatprep.subr.bf16.mxu0 %v5654
        %5916 = vmatpush1.bf16.msra.mxu0 %v5653
        %5917 = vmatprep.subr.bf16.mxu0 %v5652
        %5918 = vmatpush1.bf16.msra.mxu0 %v5651
        %5919 = vmatprep.subr.bf16.mxu0 %v5650
        %5920 = vmatpush1.bf16.msra.mxu0 %v5649
        %5921 = vmatprep.subr.bf16.mxu0 %v5680
        %5922 = vmatpush2.bf16.msra.mxu0 %v5679
        %5923 = vmatprep.subr.bf16.mxu0 %v5678
        %5924 = vmatpush2.bf16.msra.mxu0 %v5677
        %5925 = vmatprep.subr.bf16.mxu0 %v5676
        %5926 = vmatpush2.bf16.msra.mxu0 %v5675
        %5927 = vmatprep.subr.bf16.mxu0 %v5674
        %5928 = vmatpush2.bf16.msra.mxu0 %v5673
        %5929 = vmatprep.subr.bf16.mxu0 %v5672
        %5930 = vmatpush2.bf16.msra.mxu0 %v5671
        %5931 = vmatprep.subr.bf16.mxu0 %v5670
        %5932 = vmatpush2.bf16.msra.mxu0 %v5669
        %5933 = vmatprep.subr.bf16.mxu0 %v5668
        %5934 = vmatpush2.bf16.msra.mxu0 %v5667
        %5935 = vmatprep.subr.bf16.mxu0 %v5666
        %5936 = vmatpush2.bf16.msra.mxu0 %v5665
        %5937 = vmatprep.mubr.bf16.mxu0 %v5238
        %5938 = vmatmul.mubr.bf16.gmra.mxu0 %v5237
        %v5939 = vpop.f32.mrf.mxu0
        %v5940 = vadd.f32 %v5260, %v5939
        %v5941 = vpop.f32.mrf.mxu0
        %v5942 = vadd.f32 %v5264, %v5941
        %v5943 = vpop.f32.mrf.mxu0
        %v5944 = vadd.f32 %v5260, %v5943
        %v5945 = vpop.f32.mrf.mxu0
        %v5946 = vadd.f32 %v5264, %v5945
        %5947 = vdwg.mxu0
        %5948 = vmatprep.subr.bf16.mxu0 %v5696
        %5949 = vmatpush1.bf16.msra.mxu0 %v5695
        %5950 = vmatprep.subr.bf16.mxu0 %v5694
        %5951 = vmatpush1.bf16.msra.mxu0 %v5693
        %5952 = vmatprep.subr.bf16.mxu0 %v5692
        %5953 = vmatpush1.bf16.msra.mxu0 %v5691
        %5954 = vmatprep.subr.bf16.mxu0 %v5690
        %5955 = vmatpush1.bf16.msra.mxu0 %v5689
        %5956 = vmatprep.subr.bf16.mxu0 %v5688
        %5957 = vmatpush1.bf16.msra.mxu0 %v5687
        %5958 = vmatprep.subr.bf16.mxu0 %v5686
        %5959 = vmatpush1.bf16.msra.mxu0 %v5685
        %5960 = vmatprep.subr.bf16.mxu0 %v5684
        %5961 = vmatpush1.bf16.msra.mxu0 %v5683
        %5962 = vmatprep.subr.bf16.mxu0 %v5682
        %5963 = vmatpush1.bf16.msra.mxu0 %v5681
        %5964 = vmatprep.subr.bf16.mxu0 %v5712
        %5965 = vmatpush2.bf16.msra.mxu0 %v5711
        %5966 = vmatprep.subr.bf16.mxu0 %v5710
        %5967 = vmatpush2.bf16.msra.mxu0 %v5709
        %5968 = vmatprep.subr.bf16.mxu0 %v5708
        %5969 = vmatpush2.bf16.msra.mxu0 %v5707
        %5970 = vmatprep.subr.bf16.mxu0 %v5706
        %5971 = vmatpush2.bf16.msra.mxu0 %v5705
        %5972 = vmatprep.subr.bf16.mxu0 %v5704
        %5973 = vmatpush2.bf16.msra.mxu0 %v5703
        %5974 = vmatprep.subr.bf16.mxu0 %v5702
        %5975 = vmatpush2.bf16.msra.mxu0 %v5701
        %5976 = vmatprep.subr.bf16.mxu0 %v5700
        %5977 = vmatpush2.bf16.msra.mxu0 %v5699
        %5978 = vmatprep.subr.bf16.mxu0 %v5698
        %5979 = vmatpush2.bf16.msra.mxu0 %v5697
        %5980 = vmatprep.mubr.bf16.mxu0 %v5240
        %5981 = vmatmul.mubr.bf16.gmra.mxu0 %v5239
        %v5982 = vpop.f32.mrf.mxu0
        %v5983 = vadd.f32 %v5940, %v5982
        %v5984 = vpop.f32.mrf.mxu0
        %v5985 = vadd.f32 %v5942, %v5984
        %v5986 = vpop.f32.mrf.mxu0
        %v5987 = vadd.f32 %v5944, %v5986
        %v5988 = vpop.f32.mrf.mxu0
        %v5989 = vadd.f32 %v5946, %v5988
        %5990 = vdwg.mxu0
        %5991 = vmatprep.subr.bf16.mxu0 %v5728
        %5992 = vmatpush1.bf16.msra.mxu0 %v5727
        %5993 = vmatprep.subr.bf16.mxu0 %v5726
        %5994 = vmatpush1.bf16.msra.mxu0 %v5725
        %5995 = vmatprep.subr.bf16.mxu0 %v5724
        %5996 = vmatpush1.bf16.msra.mxu0 %v5723
        %5997 = vmatprep.subr.bf16.mxu0 %v5722
        %5998 = vmatpush1.bf16.msra.mxu0 %v5721
        %5999 = vmatprep.subr.bf16.mxu0 %v5720
        %6000 = vmatpush1.bf16.msra.mxu0 %v5719
        %6001 = vmatprep.subr.bf16.mxu0 %v5718
        %6002 = vmatpush1.bf16.msra.mxu0 %v5717
        %6003 = vmatprep.subr.bf16.mxu0 %v5716
        %6004 = vmatpush1.bf16.msra.mxu0 %v5715
        %6005 = vmatprep.subr.bf16.mxu0 %v5714
        %6006 = vmatpush1.bf16.msra.mxu0 %v5713
        %6007 = vmatprep.subr.bf16.mxu0 %v5744
        %6008 = vmatpush2.bf16.msra.mxu0 %v5743
        %6009 = vmatprep.subr.bf16.mxu0 %v5742
        %6010 = vmatpush2.bf16.msra.mxu0 %v5741
        %6011 = vmatprep.subr.bf16.mxu0 %v5740
        %6012 = vmatpush2.bf16.msra.mxu0 %v5739
        %6013 = vmatprep.subr.bf16.mxu0 %v5738
        %6014 = vmatpush2.bf16.msra.mxu0 %v5737
        %6015 = vmatprep.subr.bf16.mxu0 %v5736
        %6016 = vmatpush2.bf16.msra.mxu0 %v5735
        %6017 = vmatprep.subr.bf16.mxu0 %v5734
        %6018 = vmatpush2.bf16.msra.mxu0 %v5733
        %6019 = vmatprep.subr.bf16.mxu0 %v5732
        %6020 = vmatpush2.bf16.msra.mxu0 %v5731
        %6021 = vmatprep.subr.bf16.mxu0 %v5730
        %6022 = vmatpush2.bf16.msra.mxu0 %v5729
        %6023 = vmatprep.mubr.bf16.mxu0 %v5242
        %6024 = vmatmul.mubr.bf16.gmra.mxu0 %v5241
        %v6025 = vpop.f32.mrf.mxu0
        %v6026 = vadd.f32 %v5983, %v6025
        %v6027 = vpop.f32.mrf.mxu0
        %v6028 = vadd.f32 %v5985, %v6027
        %v6029 = vpop.f32.mrf.mxu0
        %v6030 = vadd.f32 %v5987, %v6029
        %v6031 = vpop.f32.mrf.mxu0
        %v6032 = vadd.f32 %v5989, %v6031
        %6033 = vdwg.mxu0
        %6034 = vmatprep.subr.bf16.mxu0 %v5760
        %6035 = vmatpush1.bf16.msra.mxu0 %v5759
        %6036 = vmatprep.subr.bf16.mxu0 %v5758
        %6037 = vmatpush1.bf16.msra.mxu0 %v5757
        %6038 = vmatprep.subr.bf16.mxu0 %v5756
        %6039 = vmatpush1.bf16.msra.mxu0 %v5755
        %6040 = vmatprep.subr.bf16.mxu0 %v5754
        %6041 = vmatpush1.bf16.msra.mxu0 %v5753
        %6042 = vmatprep.subr.bf16.mxu0 %v5752
        %6043 = vmatpush1.bf16.msra.mxu0 %v5751
        %6044 = vmatprep.subr.bf16.mxu0 %v5750
        %6045 = vmatpush1.bf16.msra.mxu0 %v5749
        %6046 = vmatprep.subr.bf16.mxu0 %v5748
        %6047 = vmatpush1.bf16.msra.mxu0 %v5747
        %6048 = vmatprep.subr.bf16.mxu0 %v5746
        %6049 = vmatpush1.bf16.msra.mxu0 %v5745
        %6050 = vmatprep.subr.bf16.mxu0 %v5776
        %6051 = vmatpush2.bf16.msra.mxu0 %v5775
        %6052 = vmatprep.subr.bf16.mxu0 %v5774
        %6053 = vmatpush2.bf16.msra.mxu0 %v5773
        %6054 = vmatprep.subr.bf16.mxu0 %v5772
        %6055 = vmatpush2.bf16.msra.mxu0 %v5771
        %6056 = vmatprep.subr.bf16.mxu0 %v5770
        %6057 = vmatpush2.bf16.msra.mxu0 %v5769
        %6058 = vmatprep.subr.bf16.mxu0 %v5768
        %6059 = vmatpush2.bf16.msra.mxu0 %v5767
        %6060 = vmatprep.subr.bf16.mxu0 %v5766
        %6061 = vmatpush2.bf16.msra.mxu0 %v5765
        %6062 = vmatprep.subr.bf16.mxu0 %v5764
        %6063 = vmatpush2.bf16.msra.mxu0 %v5763
        %6064 = vmatprep.subr.bf16.mxu0 %v5762
        %6065 = vmatpush2.bf16.msra.mxu0 %v5761
        %6066 = vmatprep.mubr.bf16.mxu0 %v5244
        %6067 = vmatmul.mubr.bf16.gmra.mxu0 %v5243
        %v6068 = vpop.f32.mrf.mxu0
        %v6069 = vadd.f32 %v6026, %v6068
        %v6070 = vpop.f32.mrf.mxu0
        %v6071 = vadd.f32 %v6028, %v6070
        %v6072 = vpop.f32.mrf.mxu0
        %v6073 = vadd.f32 %v6030, %v6072
        %v6074 = vpop.f32.mrf.mxu0
        %v6075 = vadd.f32 %v6032, %v6074
        %6076 = vdwg.mxu0
        %v6077 = vadd.f32 %v4135, %v6069
        %v6078 = vadd.f32 %v4136, %v6071
        %v6079 = vadd.f32 %v4137, %v6073
        %v6080 = vadd.f32 %v4138, %v6075
        %6081 = vst [vmem:[#allocation2] sm:$0xff] %v6077
        %6082 = vst [vmem:[#allocation2 + $0x8] sm:$0xff] %v6078
        %6083 = vst [vmem:[#allocation2 + $0x10] sm:$0xff] %v6079
        %6084 = vst [vmem:[#allocation2 + $0x18] sm:$0xff] %v6080
        // Predicated region
        $region105: #{xl_text_encoder_forward.3} parent=83 // pred_check
          %p6085 = pneg %p814
        $region106: #{xl_text_encoder_forward.3} parent=83 // pred_check_branch
          %6087 = sbr.rel (%p6085) target = $region108
        $region107: #{xl_text_encoder_forward.3} parent=83 // pred_region
          %v6088 = vpack.c.bf16 %v6077, %v6077
          %v6089 = vpack.c.bf16 %v6078, %v6078
          %v6090 = vpack.c.bf16 %v6079, %v6079
          %v6091 = vpack.c.bf16 %v6080, %v6080
          %v6096 = vunpack.c.l.b16 %v6088
          %v6097 = vunpack.c.l.b16 %v6089
          %v6098 = vunpack.c.l.b16 %v6090
          %v6099 = vunpack.c.l.b16 %v6091
          %v6100 = vpack.c.b16 %v6097, %v6096
          %v6101 = vpack.c.b16 %v6099, %v6098
          %6104 = vst [vmem:[%s17] sm:$0xff] %v6100
          %6105 = vst [vmem:[%s17 + $0x8] sm:$0xff] %v6101
        $region108: #{xl_text_encoder_forward.3} parent=83 // pred_fallthru
          _
        %p6106 = scmp.eq.s32.totalorder %s46, 1
        // Predicated region
        $region109: #{xl_text_encoder_forward.3} parent=83 // pred_check
          %p6107 = pneg %p6106
        $region110: #{xl_text_encoder_forward.3} parent=83 // pred_check_branch
          %6109 = sbr.rel (%p6107) target = $region112
        $region111: #{xl_text_encoder_forward.3} parent=83 // pred_region
          %s6110 = sld [smem:[#allocation4]]
          %v6111 = vstv %s6110
          %vm6112 = vcmp.eq.s32.totalorder %v1975, %v6111
          %v6113 = vsel %vm6112, 1, 0
          %v6114 = vcvt.s32.f32 %v6113
          %v6115 = vmul.f32 %v6077, %v6114
          %v6116 = vmul.f32 %v6078, %v6114
          %v6117 = vrot.slane %v6115, 4
          %v6118 = vadd.f32 %v6115, %v6117
          %v6119 = vrot.slane %v6118, 2
          %v6120 = vadd.f32 %v6118, %v6119
          %v6121 = vrot.slane %v6120, 1
          %v6122 = vadd.f32 %v6120, %v6121
          %v6123 = vrot.slane %v6116, 4
          %v6124 = vadd.f32 %v6116, %v6123
          %v6125 = vrot.slane %v6124, 2
          %v6126 = vadd.f32 %v6124, %v6125
          %v6127 = vrot.slane %v6126, 1
          %v6128 = vadd.f32 %v6126, %v6127
          %s6129 = sld [smem:[#allocation4 + $0x1]]
          %v6130 = vstv %s6129
          %vm6131 = vcmp.eq.s32.totalorder %v1975, %v6130
          %v6132 = vsel %vm6131, 1, 0
          %v6133 = vcvt.s32.f32 %v6132
          %v6134 = vmul.f32 %v6079, %v6133
          %v6135 = vmul.f32 %v6080, %v6133
          %v6136 = vrot.slane %v6134, 4
          %v6137 = vadd.f32 %v6134, %v6136
          %v6138 = vrot.slane %v6137, 2
          %v6139 = vadd.f32 %v6137, %v6138
          %v6140 = vrot.slane %v6139, 1
          %v6141 = vadd.f32 %v6139, %v6140
          %v6142 = vrot.slane %v6135, 4
          %v6143 = vadd.f32 %v6135, %v6142
          %v6144 = vrot.slane %v6143, 2
          %v6145 = vadd.f32 %v6143, %v6144
          %v6146 = vrot.slane %v6145, 1
          %v6147 = vadd.f32 %v6145, %v6146
          %vm6148 = vcmask 1040384
          %v6149 = vsel %vm6148, %v6122, %v6141
          %v6150 = vsel %vm6148, %v6128, %v6147
          %v6151 = vld [vmem:[%s14] sm:$0x3]
          %v6152 = vld [vmem:[%s15] sm:$0x3]
          %vm6153 = vcmask 1041408
          %v6154 = vsel %vm6153, %v6149, 0.0
          %v6155 = vsel %vm6153, %v6150, 0.0
          %v6156 = vadd.f32 %v6154, %v6155
          %6157 = vadd.xlane.f32.xlu0 %v6156
          %v6158 = vpop.xlane.xlu0 %6157
          %v6159 = vmul.f32 %v6158, %v1230
          %v6160 = vsub.f32 %v6149, %v6159
          %v6161 = vsub.f32 %v6150, %v6159
          %v6162 = vmul.f32 %v6160, %v6160
          %v6163 = vmul.f32 %v6161, %v6161
          %v6164 = vsel %vm6153, %v6162, 0.0
          %v6165 = vsel %vm6153, %v6163, 0.0
          %v6166 = vadd.f32 %v6164, %v6165
          %6167 = vadd.xlane.f32.xlu0 %v6166
          %v6168 = vpop.xlane.xlu0 %6167
          %v6169 = vmul.f32 %v6168, %v1230
          %v6170 = vadd.f32 %v6169, 1e-05
          %v6171 = vrsqrt.pop %v6170
          %v6172 = vmul.f32 %v6160, %v6171
          %v6173 = vmul.f32 %v6161, %v6171
          %v6174 = vunpack.c.l.bf16 %v6151
          %v6176 = vlaneseq
          %v6177 = vshrl.u32 %v6176, 7
          %v6178 = vsub.s32 0, %v6177
          %v6179 = vrot.slane %v6174, %v6178
          %v6180 = vlaneseq
          %v6181 = vshrl.u32 %v6180, 7
          %v6182 = vsub.s32 2, %v6181
          %v6183 = vrot.slane %v6174, %v6182
          %v6186 = vlaneseq
          %v6187 = vshrl.u32 %v6186, 7
          %v6188 = vsub.s32 0, %v6187
          %v6189 = vrot.slane %v6179, %v6188
          %v6190 = vlaneseq
          %v6191 = vshrl.u32 %v6190, 7
          %v6192 = vsub.s32 0, %v6191
          %v6193 = vrot.slane %v6183, %v6192
          %v6194 = vmul.f32 %v6172, %v6189
          %v6195 = vmul.f32 %v6173, %v6193
          %v6196 = vunpack.c.l.bf16 %v6152
          %v6198 = vlaneseq
          %v6199 = vshrl.u32 %v6198, 7
          %v6200 = vsub.s32 0, %v6199
          %v6201 = vrot.slane %v6196, %v6200
          %v6202 = vlaneseq
          %v6203 = vshrl.u32 %v6202, 7
          %v6204 = vsub.s32 2, %v6203
          %v6205 = vrot.slane %v6196, %v6204
          %v6208 = vlaneseq
          %v6209 = vshrl.u32 %v6208, 7
          %v6210 = vsub.s32 0, %v6209
          %v6211 = vrot.slane %v6201, %v6210
          %v6212 = vlaneseq
          %v6213 = vshrl.u32 %v6212, 7
          %v6214 = vsub.s32 0, %v6213
          %v6215 = vrot.slane %v6205, %v6214
          %v6216 = vadd.f32 %v6194, %v6211
          %v6217 = vadd.f32 %v6195, %v6215
          %v6218 = vpack.c.bf16 %v6216, %v6216
          %v6219 = vpack.c.bf16 %v6217, %v6217
          %v6220 = vld [vmem:[%s16] sm:$0xf]
          %v6221 = vld [vmem:[%s16 + $0x4] sm:$0xf]
          %v6222 = vld [vmem:[%s16 + $0x8] sm:$0xf]
          %v6223 = vld [vmem:[%s16 + $0xc] sm:$0xf]
          %v6224 = vld [vmem:[%s16 + $0x10] sm:$0xf]
          %v6225 = vld [vmem:[%s16 + $0x14] sm:$0xf]
          %v6226 = vld [vmem:[%s16 + $0x18] sm:$0xf]
          %v6227 = vld [vmem:[%s16 + $0x1c] sm:$0xf]
          %v6228 = vld [vmem:[%s16 + $0x20] sm:$0xf]
          %v6229 = vld [vmem:[%s16 + $0x24] sm:$0xf]
          %v6230 = vld [vmem:[%s16 + $0x28] sm:$0xf]
          %v6231 = vld [vmem:[%s16 + $0x2c] sm:$0xf]
          %v6232 = vld [vmem:[%s16 + $0x30] sm:$0xf]
          %v6233 = vld [vmem:[%s16 + $0x34] sm:$0xf]
          %v6234 = vld [vmem:[%s16 + $0x38] sm:$0xf]
          %v6235 = vld [vmem:[%s16 + $0x3c] sm:$0xf]
          %v6236 = vld [vmem:[%s16 + $0x40] sm:$0xf]
          %v6237 = vld [vmem:[%s16 + $0x44] sm:$0xf]
          %v6238 = vld [vmem:[%s16 + $0x48] sm:$0xf]
          %v6239 = vld [vmem:[%s16 + $0x4c] sm:$0xf]
          %v6240 = vld [vmem:[%s16 + $0x50] sm:$0xf]
          %v6241 = vld [vmem:[%s16 + $0x54] sm:$0xf]
          %v6242 = vld [vmem:[%s16 + $0x58] sm:$0xf]
          %v6243 = vld [vmem:[%s16 + $0x5c] sm:$0xf]
          %v6244 = vld [vmem:[%s16 + $0x60] sm:$0xf]
          %v6245 = vld [vmem:[%s16 + $0x64] sm:$0xf]
          %v6246 = vld [vmem:[%s16 + $0x68] sm:$0xf]
          %v6247 = vld [vmem:[%s16 + $0x6c] sm:$0xf]
          %v6248 = vld [vmem:[%s16 + $0x70] sm:$0xf]
          %v6249 = vld [vmem:[%s16 + $0x74] sm:$0xf]
          %v6250 = vld [vmem:[%s16 + $0x78] sm:$0xf]
          %v6251 = vld [vmem:[%s16 + $0x7c] sm:$0xf]
          %v6284 = vunpack.c.l.b16 %v6220
          %v6285 = vunpack.c.l.b16 %v6221
          %v6286 = vunpack.c.l.b16 %v6222
          %v6287 = vunpack.c.l.b16 %v6223
          %v6288 = vunpack.c.l.b16 %v6224
          %v6289 = vunpack.c.l.b16 %v6225
          %v6290 = vunpack.c.l.b16 %v6226
          %v6291 = vunpack.c.l.b16 %v6227
          %v6292 = vunpack.c.l.b16 %v6228
          %v6293 = vunpack.c.l.b16 %v6229
          %v6294 = vunpack.c.l.b16 %v6230
          %v6295 = vunpack.c.l.b16 %v6231
          %v6296 = vunpack.c.l.b16 %v6232
          %v6297 = vunpack.c.l.b16 %v6233
          %v6298 = vunpack.c.l.b16 %v6234
          %v6299 = vunpack.c.l.b16 %v6235
          %v6300 = vunpack.c.l.b16 %v6236
          %v6301 = vunpack.c.l.b16 %v6237
          %v6302 = vunpack.c.l.b16 %v6238
          %v6303 = vunpack.c.l.b16 %v6239
          %v6304 = vunpack.c.l.b16 %v6240
          %v6305 = vunpack.c.l.b16 %v6241
          %v6306 = vunpack.c.l.b16 %v6242
          %v6307 = vunpack.c.l.b16 %v6243
          %v6308 = vunpack.c.l.b16 %v6244
          %v6309 = vunpack.c.l.b16 %v6245
          %v6310 = vunpack.c.l.b16 %v6246
          %v6311 = vunpack.c.l.b16 %v6247
          %v6312 = vunpack.c.l.b16 %v6248
          %v6313 = vunpack.c.l.b16 %v6249
          %v6314 = vunpack.c.l.b16 %v6250
          %v6315 = vunpack.c.l.b16 %v6251
          %v6316 = vpack.c.b16 %v6285, %v6284
          %v6317 = vpack.c.b16 %v6287, %v6286
          %v6318 = vpack.c.b16 %v6289, %v6288
          %v6319 = vpack.c.b16 %v6291, %v6290
          %v6320 = vpack.c.b16 %v6293, %v6292
          %v6321 = vpack.c.b16 %v6295, %v6294
          %v6322 = vpack.c.b16 %v6297, %v6296
          %v6323 = vpack.c.b16 %v6299, %v6298
          %v6324 = vpack.c.b16 %v6301, %v6300
          %v6325 = vpack.c.b16 %v6303, %v6302
          %v6326 = vpack.c.b16 %v6305, %v6304
          %v6327 = vpack.c.b16 %v6307, %v6306
          %v6328 = vpack.c.b16 %v6309, %v6308
          %v6329 = vpack.c.b16 %v6311, %v6310
          %v6330 = vpack.c.b16 %v6313, %v6312
          %v6331 = vpack.c.b16 %v6315, %v6314
          %6348 = vmatprep.subr.bf16.mxu0 0
          %6349 = vmatpush1.bf16.msra.mxu0 %v6323
          %6350 = vmatprep.subr.bf16.mxu0 0
          %6351 = vmatpush1.bf16.msra.mxu0 %v6322
          %6352 = vmatprep.subr.bf16.mxu0 0
          %6353 = vmatpush1.bf16.msra.mxu0 %v6321
          %6354 = vmatprep.subr.bf16.mxu0 0
          %6355 = vmatpush1.bf16.msra.mxu0 %v6320
          %6356 = vmatprep.subr.bf16.mxu0 0
          %6357 = vmatpush1.bf16.msra.mxu0 %v6319
          %6358 = vmatprep.subr.bf16.mxu0 0
          %6359 = vmatpush1.bf16.msra.mxu0 %v6318
          %6360 = vmatprep.subr.bf16.mxu0 0
          %6361 = vmatpush1.bf16.msra.mxu0 %v6317
          %6362 = vmatprep.subr.bf16.mxu0 0
          %6363 = vmatpush1.bf16.msra.mxu0 %v6316
          %6364 = vmatprep.subr.bf16.mxu0 0
          %6365 = vmatpush2.bf16.msra.mxu0 %v6331
          %6366 = vmatprep.subr.bf16.mxu0 0
          %6367 = vmatpush2.bf16.msra.mxu0 %v6330
          %6368 = vmatprep.subr.bf16.mxu0 0
          %6369 = vmatpush2.bf16.msra.mxu0 %v6329
          %6370 = vmatprep.subr.bf16.mxu0 0
          %6371 = vmatpush2.bf16.msra.mxu0 %v6328
          %6372 = vmatprep.subr.bf16.mxu0 0
          %6373 = vmatpush2.bf16.msra.mxu0 %v6327
          %6374 = vmatprep.subr.bf16.mxu0 0
          %6375 = vmatpush2.bf16.msra.mxu0 %v6326
          %6376 = vmatprep.subr.bf16.mxu0 0
          %6377 = vmatpush2.bf16.msra.mxu0 %v6325
          %6378 = vmatprep.subr.bf16.mxu0 0
          %6379 = vmatpush2.bf16.msra.mxu0 %v6324
          %6380 = vmatprep.mubr.bf16.mxu0 %v6219
          %6381 = vmatmul.mubr.bf16.gmra.mxu0 %v6218
          %v6382 = vpop.f32.mrf.mxu0
          %v6383 = vadd.f32 0.0, %v6382
          %v6384 = vpop.f32.mrf.mxu0
          %v6385 = vpop.f32.mrf.mxu0
          %v6386 = vpop.f32.mrf.mxu0
          %6387 = vdwg.mxu0
          %6388 = vst [vmem:[#allocation13] sm:$0x3] %v6383
        $region112: #{xl_text_encoder_forward.3} parent=83 // pred_fallthru
          _
        // Predicated region
        $region113: #{xl_text_encoder_forward.3} parent=83 // pred_check
          %p6389 = pneg %p455
        $region114: #{xl_text_encoder_forward.3} parent=83 // pred_check_branch
          %6391 = sbr.rel (%p6389) target = $region116
        $region115: #{xl_text_encoder_forward.3} parent=83 // pred_region
          _
        $region116: #{xl_text_encoder_forward.3} parent=83 // pred_fallthru
          _
        // Predicated region
        $region117: #{xl_text_encoder_forward.3} parent=83 // pred_check
          %p6392 = pneg %p476
        $region118: #{xl_text_encoder_forward.3} parent=83 // pred_check_branch
          %6394 = sbr.rel (%p6392) target = $region120
        $region119: #{xl_text_encoder_forward.3} parent=83 // pred_region
          %s6396 = ssub.s32 32, 32
          %6397 = vsyncadd [#allocation7], %s6396
          %s6399 = sshll.u32 [#allocation13], 4
          %s6400 = int_to_ptr.vmem [resolvable:$true] %s6399
          %6402 = dma.vmem_to_hbm [thread:$0]  %s6400, 32, %s18, [#allocation7]
        $region120: #{xl_text_encoder_forward.3} parent=83 // pred_fallthru
          _
        // Predicated region
        $region121: #{xl_text_encoder_forward.3} parent=83 // pred_check
          %p6403 = pneg %p455
        $region122: #{xl_text_encoder_forward.3} parent=83 // pred_check_branch
          %6405 = sbr.rel (%p6403) target = $region124
        $region123: #{xl_text_encoder_forward.3} parent=83 // pred_region
          _
        $region124: #{xl_text_encoder_forward.3} parent=83 // pred_fallthru
          _
        // Predicated region
        $region125: #{xl_text_encoder_forward.3} parent=83 // pred_check
          %p6406 = pneg %p476
        $region126: #{xl_text_encoder_forward.3} parent=83 // pred_check_branch
          %6408 = sbr.rel (%p6406) target = $region128
        $region127: #{xl_text_encoder_forward.3} parent=83 // pred_region
          %6409 = dma.done [#allocation7], 32
        $region128: #{xl_text_encoder_forward.3} parent=83 // pred_fallthru
          _
      $region84: #{xl_text_encoder_forward.3} parent=5 // pred_fallthru
        _
      %p6410 = scmp.le.s32.totalorder 2, %s41
      // Predicated region
      $region129: #{xl_text_encoder_forward.3} parent=5 // pred_check
        %p6411 = pneg %p6410
      $region130: #{xl_text_encoder_forward.3} parent=5 // pred_check_branch
        %6413 = sbr.rel (%p6411) target = $region132
      $region131: #{xl_text_encoder_forward.3} parent=5 // pred_region
        %s6414 = ssub.s32 %s41, 2
      $region132: #{xl_text_encoder_forward.3} parent=5 // pred_fallthru
        _
    $region6: #{xl_text_encoder_forward.3} parent=1 // loop_footer
      %s45 = sadd.s32 1, %s41
    $region7: #{xl_text_encoder_forward.3} parent=1 // loop_footer_branch
      %40 = sbr.rel target = $region3
    $region8: #{xl_text_encoder_forward.3} parent=1 // loop_exit
      _
    %6415 = vsyncpa [#allocation6], 1
    %s6416 = scalar_lea.sflag [#allocation6], 1
    %6417 = vsyncpa %s6416, 1
    %6418 = vsyncpa [#allocation9], 1
    %s6419 = scalar_lea.sflag [#allocation9], 1
    %6420 = vsyncpa %s6419, 1
    %6421 = vsyncpa [#allocation12], 1
    %s6422 = scalar_lea.sflag [#allocation12], 1
    %6423 = vsyncpa %s6422, 1
    %6424 = vsyncpa [#allocation7], 1
    %s6425 = scalar_lea.sflag [#allocation7], 1
    %6426 = vsyncpa %s6425, 1

</llo_original>
